<compile_context>
chip_gen: v5e
topology: v5e:2x2
jax: 0.10.0
libtpu: 0.0.40
codegen_flags: <defaults>
</compile_context>

<pallas_src>
import functools

import jax
import jax.numpy as jnp
from jax.experimental import pallas as pl
from jax.experimental.pallas import tpu as pltpu

EPS = 1e-5                      # PyTorch BatchNorm2d default
LANE = 128                      # TPU lane width
A2_DTYPE = jnp.float32          # storage dtype of the conv2 intermediate (see header)


def _round_up(x, m):
    return (x + m - 1) // m * m


def _vmem_limit_bytes():
    """Scoped-VMEM limit: ~3/4 of physical VMEM (v7x: 64 MiB, v5e/v6e: 128 MiB)."""
    try:
        cap = int(pltpu.get_tpu_info().vmem_capacity_bytes)
    except Exception:
        cap = 64 * 1024 * 1024                 # conservative fallback (works on v7x too)
    return int(min(max(cap * 3 // 4, 32 * 1024 * 1024), 100 * 1024 * 1024))


def _pick_tile(n, cap, preferred):
    """Largest divisor of n that is <= cap, preferring the listed candidates."""
    cap = max(1, min(cap, n))
    for c in preferred:
        if c <= cap and n % c == 0:
            return c
    for c in range(cap, 0, -1):
        if n % c == 0:
            return c
    return 1


def _pick_tile_h(h, w, wp, cin_p, cmid_p, a2_bytes, budget):
    """Largest divisor of h whose pass-2 working set fits the VMEM budget."""
    def need(th):
        halo = (th + 2) * wp * cin_p * 4          # one halo slab (f32)
        return (3 * halo                          # xbuf double-buffer + a1buf
                + 2 * th * w * cmid_p * a2_bytes  # a2 output block (double-buffered)
                + th * w * cmid_p * 4             # f32 accumulator value
                + 2 * 9 * cin_p * cmid_p * 4      # 3x3 taps (double-buffered)
                + 2 * cin_p * cin_p * 4)          # w1 (double-buffered)

    divisors = [d for d in range(h, 0, -1) if h % d == 0]
    for th in divisors:                           # prefer sublane-friendly tiles
        if need(th) <= budget and (th * w) % 8 == 0:
            return th
    for th in divisors:
        if need(th) <= budget:
            return th
    return 1


# ------------------- pass 1: 1x1 conv -> BN stats (skip-branch fused) -------------------

def _stats1_kernel(x_ref, w_ref, ps_ref, pq_ref):
    y = jnp.dot(x_ref[...], w_ref[...], preferred_element_type=jnp.float32)
    ps_ref[0, :, :] = jnp.sum(y, axis=0, keepdims=True)
    pq_ref[0, :, :] = jnp.sum(y * y, axis=0, keepdims=True)


def _stats1_skip_kernel(x_ref, w1_ref, ws_ref, p1s_ref, p1q_ref, pss_ref, psq_ref):
    x = x_ref[...]
    y = jnp.dot(x, w1_ref[...], preferred_element_type=jnp.float32)
    p1s_ref[0, :, :] = jnp.sum(y, axis=0, keepdims=True)
    p1q_ref[0, :, :] = jnp.sum(y * y, axis=0, keepdims=True)
    z = jnp.dot(x, ws_ref[...], preferred_element_type=jnp.float32)
    pss_ref[0, :, :] = jnp.sum(z, axis=0, keepdims=True)
    psq_ref[0, :, :] = jnp.sum(z * z, axis=0, keepdims=True)


def _conv1_stats(x2d, w1, ws, tile_m, vmem_limit):
    m, cin_p = x2d.shape
    nt = m // tile_m
    c1 = w1.shape[1]

    def part(c):
        return (jax.ShapeDtypeStruct((nt, 1, c), jnp.float32),
                jax.ShapeDtypeStruct((nt, 1, c), jnp.float32))

    def pspec(c):
        return pl.BlockSpec((1, 1, c), lambda i: (i, 0, 0))

    cp = pltpu.CompilerParams(dimension_semantics=("parallel",),
                              vmem_limit_bytes=vmem_limit)
    if ws is None:
        return pl.pallas_call(
            _stats1_kernel,
            out_shape=part(c1),
            grid=(nt,),
            in_specs=[pl.BlockSpec((tile_m, cin_p), lambda i: (i, 0)),
                      pl.BlockSpec((cin_p, c1), lambda i: (0, 0))],
            out_specs=(pspec(c1), pspec(c1)),
            compiler_params=cp,
        )(x2d, w1)

    cs = ws.shape[1]
    return pl.pallas_call(
        _stats1_skip_kernel,
        out_shape=part(c1) + part(cs),
        grid=(nt,),
        in_specs=[pl.BlockSpec((tile_m, cin_p), lambda i: (i, 0)),
                  pl.BlockSpec((cin_p, c1), lambda i: (0, 0)),
                  pl.BlockSpec((cin_p, cs), lambda i: (0, 0))],
        out_specs=(pspec(c1), pspec(c1), pspec(cs), pspec(cs)),
        compiler_params=cp,
    )(x2d, w1, ws)


# ---- pass 2: conv1(1x1)+BN1+ReLU fused with 3x3 conv (VMEM im2col) + BN2 partial stats ----

def _conv3x3_stats_kernel(x_halo_hbm, w1_ref, s1_ref, t1_ref, w2_ref,
                          a2_ref, psum_ref, psq_ref,
                          xbuf, a1buf, sem,
                          *, tile_h, full_h, full_w, wp, n_rt, n_steps):
    img = pl.program_id(0)
    rt = pl.program_id(1)
    step = img * n_rt + rt
    slot = step % 2
    halo = tile_h + 2
    cin_p = w1_ref.shape[0]
    cmid_p = psum_ref.shape[-1]

    def fetch(i, r, s):
        pltpu.make_async_copy(
            x_halo_hbm.at[i, pl.ds(r * tile_h, halo)],
            xbuf.at[s], sem.at[s]).start()

    # prime the double buffer on the very first grid step
    @pl.when(step == 0)
    def _():
        fetch(img, rt, slot)

    # prefetch the next row-tile / image; overlaps with this step's compute
    @pl.when(step + 1 < n_steps)
    def _():
        last_rt = rt == n_rt - 1
        fetch(jnp.where(last_rt, img + 1, img),
              jnp.where(last_rt, 0, rt + 1),
              1 - slot)

    # wait for the current tile's halo rows
    pltpu.make_async_copy(
        x_halo_hbm.at[img, pl.ds(rt * tile_h, halo)],
        xbuf.at[slot], sem.at[slot]).wait()

    # ---- conv1 (1x1) + BN1 + ReLU over the whole halo slab in ONE matmul ----
    xs = xbuf[slot].reshape(halo * wp, cin_p)
    y1 = jnp.dot(xs, w1_ref[...], preferred_element_type=jnp.float32)
    a1 = jnp.maximum(y1 * s1_ref[...] + t1_ref[...], 0.0)
    a1 = a1.reshape(halo, wp, cin_p)

    # zero the 3x3 conv's zero-padding columns (left ring + sublane-alignment columns)
    col = jax.lax.broadcasted_iota(jnp.int32, (wp, 1), 0)
    col_valid = jnp.logical_and(col >= 1, col <= full_w)
    a1buf[...] = jnp.where(col_valid[None, :, :], a1, 0.0)

    # ... and the top / bottom padding rows (only present in the first / last row-tile)
    @pl.when(rt == 0)
    def _():
        a1buf[0, :, :] = jnp.zeros((wp, cin_p), jnp.float32)

    @pl.when(rt == n_rt - 1)
    def _():
        a1buf[tile_h + 1, :, :] = jnp.zeros((wp, cin_p), jnp.float32)

    # ---- 3x3 conv as 9 shifted-tap matmuls over (tile_h*W, Cin_p) ----
    acc = jnp.zeros((tile_h * full_w, cmid_p), jnp.float32)
    for kh in range(3):
        for kw in range(3):
            patch = a1buf[kh:kh + tile_h, kw:kw + full_w, :]
            acc = acc + jnp.dot(patch.reshape(tile_h * full_w, cin_p),
                                w2_ref[3 * kh + kw],
                                preferred_element_type=jnp.float32)

    a2_ref[...] = acc.astype(a2_ref.dtype)
    psum_ref[0, :, :] = jnp.sum(acc, axis=0, keepdims=True)
    psq_ref[0, :, :] = jnp.sum(acc * acc, axis=0, keepdims=True)


def _conv3x3_and_stats(x_halo, w1, s1, t1, w2, *, full_w, tile_h, a2_dtype, vmem_limit):
    n, hp2, wp, cin_p = x_halo.shape
    h = hp2 - 2
    cmid_p = w2.shape[-1]
    n_rt = h // tile_h
    n_steps = n * n_rt
    m = n * h * full_w
    rows = tile_h * full_w
    kern = functools.partial(_conv3x3_stats_kernel, tile_h=tile_h, full_h=h,
                             full_w=full_w, wp=wp, n_rt=n_rt, n_steps=n_steps)
    return pl.pallas_call(
        kern,
        out_shape=(jax.ShapeDtypeStruct((m, cmid_p), a2_dtype),
                   jax.ShapeDtypeStruct((n_steps, 1, cmid_p), jnp.float32),
                   jax.ShapeDtypeStruct((n_steps, 1, cmid_p), jnp.float32)),
        grid=(n, n_rt),
        in_specs=[
            pl.BlockSpec(memory_space=pl.ANY),                         # padded x in HBM
            pl.BlockSpec((cin_p, cin_p), lambda i, j: (0, 0)),         # w1
            pl.BlockSpec((1, cin_p), lambda i, j: (0, 0)),             # BN1 scale
            pl.BlockSpec((1, cin_p), lambda i, j: (0, 0)),             # BN1 shift
            pl.BlockSpec((9, cin_p, cmid_p), lambda i, j: (0, 0, 0)),  # 3x3 taps
        ],
        out_specs=(
            pl.BlockSpec((rows, cmid_p), lambda i, j: (i * n_rt + j, 0)),
            pl.BlockSpec((1, 1, cmid_p), lambda i, j: (i * n_rt + j, 0, 0)),
            pl.BlockSpec((1, 1, cmid_p), lambda i, j: (i * n_rt + j, 0, 0)),
        ),
        scratch_shapes=[
            pltpu.VMEM((2, tile_h + 2, wp, cin_p), jnp.float32),       # halo double buffer
            pltpu.VMEM((tile_h + 2, wp, cin_p), jnp.float32),          # a1 (post BN1+ReLU)
            pltpu.SemaphoreType.DMA((2,)),
        ],
        compiler_params=pltpu.CompilerParams(
            # 'arbitrary' is required: the manual double-buffer assumes sequential steps.
            dimension_semantics=("arbitrary", "arbitrary"),
            vmem_limit_bytes=vmem_limit),
    )(x_halo, w1, s1, t1, w2)


# ----------------- pass 3: BN2-apply + ReLU + 1x1 conv -> BN3 partial stats -----------------

def _stats3_kernel(a_ref, s_ref, t_ref, w_ref, ps_ref, pq_ref):
    a = a_ref[...].astype(jnp.float32)
    y = jnp.maximum(a * s_ref[...] + t_ref[...], 0.0)
    z = jnp.dot(y, w_ref[...], preferred_element_type=jnp.float32)
    ps_ref[0, :, :] = jnp.sum(z, axis=0, keepdims=True)
    pq_ref[0, :, :] = jnp.sum(z * z, axis=0, keepdims=True)


def _bn_relu_conv_stats(a2d, s2, t2, w3, tile_m, vmem_limit):
    m, cmid_p = a2d.shape
    cout_p = w3.shape[1]
    nt = m // tile_m
    return pl.pallas_call(
        _stats3_kernel,
        out_shape=(jax.ShapeDtypeStruct((nt, 1, cout_p), jnp.float32),
                   jax.ShapeDtypeStruct((nt, 1, cout_p), jnp.float32)),
        grid=(nt,),
        in_specs=[pl.BlockSpec((tile_m, cmid_p), lambda i: (i, 0)),
                  pl.BlockSpec((1, cmid_p), lambda i: (0, 0)),
                  pl.BlockSpec((1, cmid_p), lambda i: (0, 0)),
                  pl.BlockSpec((cmid_p, cout_p), lambda i: (0, 0))],
        out_specs=(pl.BlockSpec((1, 1, cout_p), lambda i: (i, 0, 0)),
                   pl.BlockSpec((1, 1, cout_p), lambda i: (i, 0, 0))),
        compiler_params=pltpu.CompilerParams(
            dimension_semantics=("parallel",),
            vmem_limit_bytes=vmem_limit),
    )(a2d, s2, t2, w3)


# ---- pass 4: BN2+ReLU -> 1x1 conv -> BN3 -> (+skip-conv BN) -> +residual -> ReLU ----

def _final_kernel(a_ref, x_ref, s2_ref, t2_ref, w3_ref, s3_ref, t3_ref, o_ref):
    a = a_ref[...].astype(jnp.float32)
    y2 = jnp.maximum(a * s2_ref[...] + t2_ref[...], 0.0)
    f = jnp.dot(y2, w3_ref[...], preferred_element_type=jnp.float32)
    f = f * s3_ref[...] + t3_ref[...]
    o_ref[...] = jnp.maximum(f + x_ref[...], 0.0).astype(o_ref.dtype)


def _final_kernel_skip(a_ref, x_ref, s2_ref, t2_ref, w3_ref, s3_ref, t3_ref,
                       ws_ref, ss_ref, ts_ref, o_ref):
    a = a_ref[...].astype(jnp.float32)
    y2 = jnp.maximum(a * s2_ref[...] + t2_ref[...], 0.0)
    f = jnp.dot(y2, w3_ref[...], preferred_element_type=jnp.float32)
    f = f * s3_ref[...] + t3_ref[...]
    r = jnp.dot(x_ref[...], ws_ref[...], preferred_element_type=jnp.float32)
    r = r * ss_ref[...] + ts_ref[...]
    o_ref[...] = jnp.maximum(f + r, 0.0).astype(o_ref.dtype)


def _final_apply(a2d, x2d, s2, t2, w3, s3, t3, skip, tile_m, vmem_limit):
    m, cmid_p = a2d.shape
    cin_p = x2d.shape[1]
    cout_p = w3.shape[1]

    def vec(c):
        return pl.BlockSpec((1, c), lambda i: (0, 0))

    in_specs = [pl.BlockSpec((tile_m, cmid_p), lambda i: (i, 0)),
                pl.BlockSpec((tile_m, cin_p), lambda i: (i, 0)),
                vec(cmid_p), vec(cmid_p),
                pl.BlockSpec((cmid_p, cout_p), lambda i: (0, 0)),
                vec(cout_p), vec(cout_p)]
    args = [a2d, x2d, s2, t2, w3, s3, t3]
    if skip is None:
        kern = _final_kernel
    else:
        ws, ss, ts = skip
        kern = _final_kernel_skip
        in_specs += [pl.BlockSpec((cin_p, cout_p), lambda i: (0, 0)), vec(cout_p), vec(cout_p)]
        args += [ws, ss, ts]

    return pl.pallas_call(
        kern,
        out_shape=jax.ShapeDtypeStruct((m, cout_p), jnp.float32),
        grid=(m // tile_m,),
        in_specs=in_specs,
        out_specs=pl.BlockSpec((tile_m, cout_p), lambda i: (i, 0)),
        compiler_params=pltpu.CompilerParams(
            dimension_semantics=("parallel",),       # megacore-friendly on v7x
            vmem_limit_bytes=vmem_limit),
    )(*args)


# -------------------------------------- parameters --------------------------------------

def init_params(key, in_ch, out_ch):
    """Synthetic parameters (PyTorch conv layouts converted to matmul layouts)."""
    ks = jax.random.split(key, 12)
    w1_t = 0.1 * jax.random.normal(ks[0], (in_ch, in_ch, 1, 1), jnp.float32)   # (Cout,Cin,1,1)
    w2_t = 0.1 * jax.random.normal(ks[1], (in_ch, in_ch, 3, 3), jnp.float32)   # (Cout,Cin,3,3)
    w3_t = 0.1 * jax.random.normal(ks[2], (out_ch, in_ch, 1, 1), jnp.float32)
    ws_t = 0.1 * jax.random.normal(ks[3], (out_ch, in_ch, 1, 1), jnp.float32)

    def bn_p(kg, kb, ch):
        return (1.0 + 0.1 * jax.random.normal(kg, (1, ch), jnp.float32),
                0.1 * jax.random.normal(kb, (1, ch), jnp.float32))

    g1, b1 = bn_p(ks[4], ks[5], in_ch)
    g2, b2 = bn_p(ks[6], ks[7], in_ch)
    g3, b3 = bn_p(ks[8], ks[9], out_ch)
    gs, bs = bn_p(ks[10], ks[11], out_ch)

    return dict(
        w1=w1_t[:, :, 0, 0].T,                                           # (Cin, Cin)
        w2=jnp.transpose(w2_t, (2, 3, 1, 0)).reshape(9, in_ch, in_ch),   # (tap, Cin, Cin)
        w3=w3_t[:, :, 0, 0].T,                                           # (Cin, Cout)
        ws=ws_t[:, :, 0, 0].T,                                           # (Cin, Cout)
        g1=g1, b1=b1, g2=g2, b2=b2, g3=g3, b3=b3, gs=gs, bs=bs,
    )


# ---------------------------------------- forward ----------------------------------------

@functools.partial(jax.jit, static_argnames=("skip_conv",))
def res_bottle_block(x_nchw, params, skip_conv=False):
    """Forward pass of ResBottleBlock (kernel_size=1, padding=0, stride=1 defaults)."""
    x = jnp.transpose(x_nchw, (0, 2, 3, 1)).astype(jnp.float32)      # NCHW -> NHWC
    n, h, w, cin = x.shape
    cout = params['w3'].shape[1]
    if (not skip_conv) and cin != cout:
        raise ValueError("residual add needs in_ch == out_ch when skip_conv=False")

    cin_p = _round_up(cin, LANE)
    cout_p = _round_up(cout, LANE)
    wp = _round_up(w + 2, 8)                      # sublane-aligned padded width
    m = n * h * w

    def padc(a, c_to):                            # zero-pad channel (last) axis
        return jnp.pad(a, [(0, 0)] * (a.ndim - 1) + [(0, c_to - a.shape[-1])])

    def padw(a, r_to, c_to):                      # zero-pad last two axes of a weight tensor
        pads = ([(0, 0)] * (a.ndim - 2)
                + [(0, r_to - a.shape[-2]), (0, c_to - a.shape[-1])])
        return jnp.pad(a, pads)

    w1 = padw(params['w1'], cin_p, cin_p)
    w2 = padw(params['w2'], cin_p, cin_p)
    w3 = padw(params['w3'], cin_p, cout_p)
    g1, b1 = padc(params['g1'], cin_p), padc(params['b1'], cin_p)
    g2, b2 = padc(params['g2'], cin_p), padc(params['b2'], cin_p)
    g3, b3 = padc(params['g3'], cout_p), padc(params['b3'], cout_p)

    # channel-padded activations + channel/spatial/sublane-padded halo copy (one pad each)
    x2d = jnp.pad(x, ((0, 0), (0, 0), (0, 0), (0, cin_p - cin))).reshape(m, cin_p)
    x_halo = jnp.pad(x, ((0, 0), (1, 1), (1, wp - w - 1), (0, cin_p - cin)))

    vmem_limit = _vmem_limit_bytes()
    budget = vmem_limit // 2
    a2_bytes = jnp.dtype(A2_DTYPE).itemsize
    tile_m = _pick_tile(m, budget // (2 * 4 * (2 * cin_p + cout_p)),
                        (4096, 2048, 1024, 512, 256, 128, 64, 32, 16, 8))
    tile_h = _pick_tile_h(h, w, wp, cin_p, cin_p, a2_bytes, budget)

    def bn_affine(psum, psq, gamma, beta):
        # TODO(synk): E[y^2]-E[y]^2 in f32 can cancel for large-mean activations; a shifted
        #             two-pass accumulation would tighten agreement with PyTorch further.
        s = jnp.sum(psum, axis=0)                                    # (1, C)
        q = jnp.sum(psq, axis=0)
        mean = s / m
        var = jnp.maximum(q / m - mean * mean, 0.0)                  # biased variance
        scale = gamma * jax.lax.rsqrt(var + EPS)
        return scale, beta - mean * scale

    # pass 1: BN1 statistics (+ skip-branch BN statistics fused into the same x sweep)
    if skip_conv:
        ws = padw(params['ws'], cin_p, cout_p)
        gs, bs = padc(params['gs'], cout_p), padc(params['bs'], cout_p)
        p1s, p1q, pss, psq_ = _conv1_stats(x2d, w1, ws, tile_m, vmem_limit)
        s1, t1 = bn_affine(p1s, p1q, g1, b1)
        ss, ts = bn_affine(pss, psq_, gs, bs)
        skip = (ws, ss, ts)
    else:
        p1s, p1q = _conv1_stats(x2d, w1, None, tile_m, vmem_limit)
        s1, t1 = bn_affine(p1s, p1q, g1, b1)
        skip = None

    # pass 2: conv1+BN1+ReLU fused with the 3x3 conv (VMEM im2col) + BN2 statistics
    a2d, p2s, p2q = _conv3x3_and_stats(x_halo, w1, s1, t1, w2, full_w=w,
                                       tile_h=tile_h, a2_dtype=A2_DTYPE,
                                       vmem_limit=vmem_limit)
    s2, t2 = bn_affine(p2s, p2q, g2, b2)

    # pass 3: BN3 statistics of conv3(relu(bn2(a2)))
    p3s, p3q = _bn_relu_conv_stats(a2d, s2, t2, w3, tile_m, vmem_limit)
    s3, t3 = bn_affine(p3s, p3q, g3, b3)

    # pass 4: BN2+ReLU -> conv3 (1x1) -> BN3 -> +residual -> ReLU
    out2d = _final_apply(a2d, x2d, s2, t2, w3, s3, t3, skip, tile_m, vmem_limit)

    out = out2d.reshape(n, h, w, cout_p)[..., :cout]
    return jnp.transpose(out, (0, 3, 1, 2))                          # NHWC -> NCHW


# ------------------------------------ pure-JAX reference ------------------------------------

def _ref_forward(x_nchw, params, skip_conv=False):
    x = jnp.transpose(x_nchw, (0, 2, 3, 1)).astype(jnp.float32)
    n, h, w, c = x.shape
    m = n * h * w

    def bn(y, g, b):
        mu = jnp.mean(y, axis=0, keepdims=True)
        var = jnp.mean((y - mu) ** 2, axis=0, keepdims=True)
        return (y - mu) * (g * jax.lax.rsqrt(var + EPS)) + b

    x2d = x.reshape(m, c)
    a1 = jnp.maximum(bn(x2d @ params['w1'], params['g1'], params['b1']), 0.0)
    k2 = params['w2'].reshape(3, 3, c, c)                            # HWIO
    y2 = jax.lax.conv_general_dilated(
        a1.reshape(n, h, w, c), k2, window_strides=(1, 1), padding='SAME',
        dimension_numbers=('NHWC', 'HWIO', 'NHWC'),
        precision=jax.lax.Precision.HIGHEST)
    a2 = jnp.maximum(bn(y2.reshape(m, c), params['g2'], params['b2']), 0.0)
    f = bn(a2 @ params['w3'], params['g3'], params['b3'])
    res = bn(x2d @ params['ws'], params['gs'], params['bs']) if skip_conv else x2d
    out = jnp.maximum(f + res, 0.0)
    return jnp.transpose(out.reshape(n, h, w, -1), (0, 3, 1, 2))


# -------------------------------------------- main --------------------------------------------

if __name__ == "__main__":
    key = jax.random.PRNGKey(0)
    k_x, k_p, k_x2, k_p2 = jax.random.split(key, 4)

    # default configuration: in_ch = out_ch = 4, skip_conv=False
    N, C, H, W = 2, 4, 16, 16
    x = jax.random.normal(k_x, (N, C, H, W), jnp.float32)
    params = init_params(k_p, in_ch=C, out_ch=C)

    out = jax.block_until_ready(res_bottle_block(x, params, skip_conv=False))
    assert out.shape == (N, C, H, W), out.shape
    ref = jax.block_until_ready(_ref_forward(x, params, skip_conv=False))
    if not jnp.allclose(out, ref, rtol=1e-2, atol=1e-2):
        err = float(jnp.max(jnp.abs(out - ref)))
        raise AssertionError(f"mismatch vs reference (skip_conv=False), max|err|={err}")

    # skip-connection conv variant (in_ch != out_ch)
    C_OUT = 8
    x2 = jax.random.normal(k_x2, (N, C, H, W), jnp.float32)
    params2 = init_params(k_p2, in_ch=C, out_ch=C_OUT)
    out2 = jax.block_until_ready(res_bottle_block(x2, params2, skip_conv=True))
    assert out2.shape == (N, C_OUT, H, W), out2.shape
    ref2 = jax.block_until_ready(_ref_forward(x2, params2, skip_conv=True))
    if not jnp.allclose(out2, ref2, rtol=1e-2, atol=1e-2):
        err = float(jnp.max(jnp.abs(out2 - ref2)))
        raise AssertionError(f"mismatch vs reference (skip_conv=True), max|err|={err}")

    print("KERNEL_OK")
</pallas_src>

<mosaic_0001>
module attributes {stable_mosaic.version = 11 : i64} {
  func.func @_stats1_kernel(%arg0: i32, %arg1: memref<512x128xf32, #tpu.memory_space<vmem>>, %arg2: memref<128x128xf32, #tpu.memory_space<vmem>>, %arg3: memref<1x1x128xf32, #tpu.memory_space<vmem>>, %arg4: memref<1x1x128xf32, #tpu.memory_space<vmem>>) attributes {dimension_semantics = [#tpu.dimension_semantics<parallel>], iteration_bounds = array<i64: 1>, scalar_prefetch = 0 : i64, scratch_operands = 0 : i64, tpu.core_type = #tpu.core_type<tc>, window_params = [{transform_indices = @transform_0, window_bounds = array<i64: 512, 128>}, {pipeline_mode = #tpu.pipeline_mode<synchronous>, transform_indices = @transform_1, window_bounds = array<i64: 128, 128>}, {transform_indices = @transform_2, window_bounds = array<i64: 1, 1, 128>}, {transform_indices = @transform_3, window_bounds = array<i64: 1, 1, 128>}]} {
    %c0 = arith.constant 0 : index
    %c0_0 = arith.constant 0 : index
    %0 = vector.load %arg1[%c0, %c0_0] : memref<512x128xf32, #tpu.memory_space<vmem>>, vector<512x128xf32>
    %c0_1 = arith.constant 0 : index
    %c0_2 = arith.constant 0 : index
    %1 = vector.load %arg2[%c0_1, %c0_2] : memref<128x128xf32, #tpu.memory_space<vmem>>, vector<128x128xf32>
    %cst = arith.constant dense<0.000000e+00> : vector<512x128xf32>
    %2 = tpu.matmul %0, %1, %cst {dimension_numbers = #tpu.dot_dimension_numbers<[1], [0], [0], [1], [0, 0, 1, 1], [], []>} : vector<512x128xf32>, vector<128x128xf32>, vector<512x128xf32> -> vector<512x128xf32>
    %cst_3 = arith.constant dense<0.000000e+00> : vector<128xf32>
    %3 = vector.multi_reduction <add>, %2, %cst_3 [0] : vector<512x128xf32> to vector<128xf32>
    %4 = vector.shape_cast %3 : vector<128xf32> to vector<1x128xf32>
    %c0_4 = arith.constant 0 : index
    %c0_5 = arith.constant 0 : index
    %c0_6 = arith.constant 0 : index
    %5 = vector.load %arg3[%c0_4, %c0_5, %c0_6] : memref<1x1x128xf32, #tpu.memory_space<vmem>>, vector<1x1x128xf32>
    %6 = vector.shape_cast %5 : vector<1x1x128xf32> to vector<1x128xf32>
    %7 = vector.shape_cast %4 : vector<1x128xf32> to vector<1x1x128xf32>
    tpu.vector_store %arg3[%c0_4, %c0_5, %c0_6], %7 {strides = array<i32>} : memref<1x1x128xf32, #tpu.memory_space<vmem>>, vector<1x1x128xf32>,
    %8 = arith.mulf %2, %2 : vector<512x128xf32>
    %cst_7 = arith.constant dense<0.000000e+00> : vector<128xf32>
    %9 = vector.multi_reduction <add>, %8, %cst_7 [0] : vector<512x128xf32> to vector<128xf32>
    %10 = vector.shape_cast %9 : vector<128xf32> to vector<1x128xf32>
    %c0_8 = arith.constant 0 : index
    %c0_9 = arith.constant 0 : index
    %c0_10 = arith.constant 0 : index
    %11 = vector.load %arg4[%c0_8, %c0_9, %c0_10] : memref<1x1x128xf32, #tpu.memory_space<vmem>>, vector<1x1x128xf32>
    %12 = vector.shape_cast %11 : vector<1x1x128xf32> to vector<1x128xf32>
    %13 = vector.shape_cast %10 : vector<1x128xf32> to vector<1x1x128xf32>
    tpu.vector_store %arg4[%c0_8, %c0_9, %c0_10], %13 {strides = array<i32>} : memref<1x1x128xf32, #tpu.memory_space<vmem>>, vector<1x1x128xf32>,
    return
  }
  func.func @transform_0(%arg0: i32) -> (i32, i32) {
    %c0_i32 = arith.constant 0 : i32
    %c0_i32_0 = arith.constant 0 : i32
    return %arg0, %c0_i32 : i32, i32
  }
  func.func @transform_1(%arg0: i32) -> (i32, i32) {
    %c0_i32 = arith.constant 0 : i32
    %c0_i32_0 = arith.constant 0 : i32
    %c0_i32_1 = arith.constant 0 : i32
    return %c0_i32, %c0_i32_0 : i32, i32
  }
  func.func @transform_2(%arg0: i32) -> (i32, i32, i32) {
    %c0_i32 = arith.constant 0 : i32
    %c0_i32_0 = arith.constant 0 : i32
    %c0_i32_1 = arith.constant 0 : i32
    return %arg0, %c0_i32, %c0_i32_0 : i32, i32, i32
  }
  func.func @transform_3(%arg0: i32) -> (i32, i32, i32) {
    %c0_i32 = arith.constant 0 : i32
    %c0_i32_0 = arith.constant 0 : i32
    %c0_i32_1 = arith.constant 0 : i32
    return %arg0, %c0_i32, %c0_i32_0 : i32, i32, i32
  }
}

module attributes {stable_mosaic.version = 11 : i64} {
  func.func @_conv3x3_stats_kernel(%arg0: i32, %arg1: i32, %arg2: memref<2x18x24x128xf32, #tpu.memory_space<any>>, %arg3: memref<128x128xf32, #tpu.memory_space<vmem>>, %arg4: memref<1x128xf32, #tpu.memory_space<vmem>>, %arg5: memref<1x128xf32, #tpu.memory_space<vmem>>, %arg6: memref<9x128x128xf32, #tpu.memory_space<vmem>>, %arg7: memref<256x128xf32, #tpu.memory_space<vmem>>, %arg8: memref<1x1x128xf32, #tpu.memory_space<vmem>>, %arg9: memref<1x1x128xf32, #tpu.memory_space<vmem>>, %arg10: memref<2x18x24x128xf32, #tpu.memory_space<vmem>>, %arg11: memref<18x24x128xf32, #tpu.memory_space<vmem>>, %arg12: memref<2x!tpu.dma_semaphore, #tpu.memory_space<semaphore_mem>>) attributes {dimension_semantics = [#tpu.dimension_semantics<arbitrary>, #tpu.dimension_semantics<arbitrary>], iteration_bounds = array<i64: 2, 1>, scalar_prefetch = 0 : i64, scratch_operands = 3 : i64, tpu.core_type = #tpu.core_type<tc>, window_params = [{}, {pipeline_mode = #tpu.pipeline_mode<synchronous>, transform_indices = @transform_1, window_bounds = array<i64: 128, 128>}, {pipeline_mode = #tpu.pipeline_mode<synchronous>, transform_indices = @transform_2, window_bounds = array<i64: 1, 128>}, {pipeline_mode = #tpu.pipeline_mode<synchronous>, transform_indices = @transform_3, window_bounds = array<i64: 1, 128>}, {pipeline_mode = #tpu.pipeline_mode<synchronous>, transform_indices = @transform_4, window_bounds = array<i64: 9, 128, 128>}, {transform_indices = @transform_5, window_bounds = array<i64: 256, 128>}, {transform_indices = @transform_6, window_bounds = array<i64: 1, 1, 128>}, {transform_indices = @transform_7, window_bounds = array<i64: 1, 1, 128>}]} {
    %c1_i32 = arith.constant 1 : i32
    %0 = arith.muli %arg0, %c1_i32 : i32
    %1 = arith.addi %0, %arg1 : i32
    %c2_i32 = arith.constant 2 : i32
    %c0_i32 = arith.constant 0 : i32
    %2 = arith.cmpi eq, %c2_i32, %c0_i32 : i32
    %c1_i32_0 = arith.constant 1 : i32
    %3 = arith.select %2, %c1_i32_0, %c2_i32 : i32
    %4 = arith.remsi %1, %3 : i32
    %c0_i32_1 = arith.constant 0 : i32
    %5 = arith.cmpi ne, %4, %c0_i32_1 : i32
    %c0_i32_2 = arith.constant 0 : i32
    %6 = arith.cmpi slt, %4, %c0_i32_2 : i32
    %c0_i32_3 = arith.constant 0 : i32
    %7 = arith.cmpi slt, %3, %c0_i32_3 : i32
    %8 = arith.xori %6, %7 : i1
    %9 = arith.andi %8, %5 : i1
    %10 = arith.addi %4, %3 : i32
    %11 = arith.select %9, %10, %4 : i32
    %c0_i32_4 = arith.constant 0 : i32
    %12 = arith.cmpi eq, %1, %c0_i32_4 : i32
    %13 = arith.extui %12 : i1 to i32
    %c0_i32_5 = arith.constant 0 : i32
    %14 = arith.cmpi ne, %13, %c0_i32_5 : i32
    scf.if %14 {
      %c16_i32_99 = arith.constant 16 : i32
      %126 = arith.muli %arg1, %c16_i32_99 : i32
      %c0_i32_100 = arith.constant 0 : i32
      %c0_i32_101 = arith.constant 0 : i32
      %127 = tpu.memref_slice %arg2[%arg0, %126, %c0_i32_100, %c0_i32_101] : memref<2x18x24x128xf32, #tpu.memory_space<any>> -> memref<1x18x24x128xf32, #tpu.memory_space<any>>
      %128 = tpu.memref_squeeze %127 : memref<1x18x24x128xf32, #tpu.memory_space<any>> -> memref<18x24x128xf32, #tpu.memory_space<any>>
      %c0_i32_102 = arith.constant 0 : i32
      %c0_i32_103 = arith.constant 0 : i32
      %c0_i32_104 = arith.constant 0 : i32
      %129 = tpu.memref_slice %arg10[%11, %c0_i32_102, %c0_i32_103, %c0_i32_104] : memref<2x18x24x128xf32, #tpu.memory_space<vmem>> -> memref<1x18x24x128xf32, #tpu.memory_space<vmem>>
      %130 = tpu.memref_squeeze %129 : memref<1x18x24x128xf32, #tpu.memory_space<vmem>> -> memref<18x24x128xf32, #tpu.memory_space<vmem>>
      %131 = tpu.memref_slice %arg12[%11] : memref<2x!tpu.dma_semaphore, #tpu.memory_space<semaphore_mem>> -> memref<1x!tpu.dma_semaphore, #tpu.memory_space<semaphore_mem>>
      %132 = tpu.memref_squeeze %131 : memref<1x!tpu.dma_semaphore, #tpu.memory_space<semaphore_mem>> -> memref<!tpu.dma_semaphore, #tpu.memory_space<semaphore_mem>>
      tpu.enqueue_dma source(%128 : memref<18x24x128xf32, #tpu.memory_space<any>>) target(%130 : memref<18x24x128xf32, #tpu.memory_space<vmem>>) target_semaphore(%132 : memref<!tpu.dma_semaphore, #tpu.memory_space<semaphore_mem>>)
    } else {
    }
    %c1_i32_6 = arith.constant 1 : i32
    %15 = arith.addi %1, %c1_i32_6 : i32
    %c2_i32_7 = arith.constant 2 : i32
    %16 = arith.cmpi slt, %15, %c2_i32_7 : i32
    %17 = arith.extui %16 : i1 to i32
    %c0_i32_8 = arith.constant 0 : i32
    %18 = arith.cmpi ne, %17, %c0_i32_8 : i32
    scf.if %18 {
      %c0_i32_99 = arith.constant 0 : i32
      %126 = arith.cmpi eq, %arg1, %c0_i32_99 : i32
      %c1_i32_100 = arith.constant 1 : i32
      %127 = arith.addi %arg0, %c1_i32_100 : i32
      %128 = arith.select %126, %127, %arg0 : i32
      %c1_i32_101 = arith.constant 1 : i32
      %129 = arith.addi %arg1, %c1_i32_101 : i32
      %c0_i32_102 = arith.constant 0 : i32
      %130 = arith.select %126, %c0_i32_102, %129 : i32
      %c1_i32_103 = arith.constant 1 : i32
      %131 = arith.subi %c1_i32_103, %11 : i32
      %c16_i32_104 = arith.constant 16 : i32
      %132 = arith.muli %130, %c16_i32_104 : i32
      %c0_i32_105 = arith.constant 0 : i32
      %c0_i32_106 = arith.constant 0 : i32
      %133 = tpu.memref_slice %arg2[%128, %132, %c0_i32_105, %c0_i32_106] : memref<2x18x24x128xf32, #tpu.memory_space<any>> -> memref<1x18x24x128xf32, #tpu.memory_space<any>>
      %134 = tpu.memref_squeeze %133 : memref<1x18x24x128xf32, #tpu.memory_space<any>> -> memref<18x24x128xf32, #tpu.memory_space<any>>
      %c0_i32_107 = arith.constant 0 : i32
      %c0_i32_108 = arith.constant 0 : i32
      %c0_i32_109 = arith.constant 0 : i32
      %135 = tpu.memref_slice %arg10[%131, %c0_i32_107, %c0_i32_108, %c0_i32_109] : memref<2x18x24x128xf32, #tpu.memory_space<vmem>> -> memref<1x18x24x128xf32, #tpu.memory_space<vmem>>
      %136 = tpu.memref_squeeze %135 : memref<1x18x24x128xf32, #tpu.memory_space<vmem>> -> memref<18x24x128xf32, #tpu.memory_space<vmem>>
      %137 = tpu.memref_slice %arg12[%131] : memref<2x!tpu.dma_semaphore, #tpu.memory_space<semaphore_mem>> -> memref<1x!tpu.dma_semaphore, #tpu.memory_space<semaphore_mem>>
      %138 = tpu.memref_squeeze %137 : memref<1x!tpu.dma_semaphore, #tpu.memory_space<semaphore_mem>> -> memref<!tpu.dma_semaphore, #tpu.memory_space<semaphore_mem>>
      tpu.enqueue_dma source(%134 : memref<18x24x128xf32, #tpu.memory_space<any>>) target(%136 : memref<18x24x128xf32, #tpu.memory_space<vmem>>) target_semaphore(%138 : memref<!tpu.dma_semaphore, #tpu.memory_space<semaphore_mem>>)
    } else {
    }
    %c16_i32 = arith.constant 16 : i32
    %19 = arith.muli %arg1, %c16_i32 : i32
    %c0_i32_9 = arith.constant 0 : i32
    %c0_i32_10 = arith.constant 0 : i32
    %20 = tpu.memref_slice %arg2[%arg0, %19, %c0_i32_9, %c0_i32_10] : memref<2x18x24x128xf32, #tpu.memory_space<any>> -> memref<1x18x24x128xf32, #tpu.memory_space<any>>
    %21 = tpu.memref_squeeze %20 : memref<1x18x24x128xf32, #tpu.memory_space<any>> -> memref<18x24x128xf32, #tpu.memory_space<any>>
    %c0_i32_11 = arith.constant 0 : i32
    %c0_i32_12 = arith.constant 0 : i32
    %c0_i32_13 = arith.constant 0 : i32
    %22 = tpu.memref_slice %arg10[%11, %c0_i32_11, %c0_i32_12, %c0_i32_13] : memref<2x18x24x128xf32, #tpu.memory_space<vmem>> -> memref<1x18x24x128xf32, #tpu.memory_space<vmem>>
    %23 = tpu.memref_squeeze %22 : memref<1x18x24x128xf32, #tpu.memory_space<vmem>> -> memref<18x24x128xf32, #tpu.memory_space<vmem>>
    %24 = tpu.memref_slice %arg12[%11] : memref<2x!tpu.dma_semaphore, #tpu.memory_space<semaphore_mem>> -> memref<1x!tpu.dma_semaphore, #tpu.memory_space<semaphore_mem>>
    %25 = tpu.memref_squeeze %24 : memref<1x!tpu.dma_semaphore, #tpu.memory_space<semaphore_mem>> -> memref<!tpu.dma_semaphore, #tpu.memory_space<semaphore_mem>>
    tpu.wait_dma2 semaphore(%25 : memref<!tpu.dma_semaphore, #tpu.memory_space<semaphore_mem>>) src(%21 : memref<18x24x128xf32, #tpu.memory_space<any>>) dst(%23 : memref<18x24x128xf32, #tpu.memory_space<vmem>>)
    %26 = arith.index_cast %11 : i32 to index
    %c0 = arith.constant 0 : index
    %c0_14 = arith.constant 0 : index
    %c0_15 = arith.constant 0 : index
    %27 = vector.load %arg10[%26, %c0, %c0_14, %c0_15] : memref<2x18x24x128xf32, #tpu.memory_space<vmem>>, vector<1x18x24x128xf32>
    %28 = vector.shape_cast %27 : vector<1x18x24x128xf32> to vector<18x24x128xf32>
    %29 = vector.shape_cast %28 : vector<18x24x128xf32> to vector<432x128xf32>
    %c0_16 = arith.constant 0 : index
    %c0_17 = arith.constant 0 : index
    %30 = vector.load %arg3[%c0_16, %c0_17] : memref<128x128xf32, #tpu.memory_space<vmem>>, vector<128x128xf32>
    %cst = arith.constant dense<0.000000e+00> : vector<432x128xf32>
    %31 = tpu.matmul %29, %30, %cst {dimension_numbers = #tpu.dot_dimension_numbers<[1], [0], [0], [1], [0, 0, 1, 1], [], []>} : vector<432x128xf32>, vector<128x128xf32>, vector<432x128xf32> -> vector<432x128xf32>
    %c0_18 = arith.constant 0 : index
    %c0_19 = arith.constant 0 : index
    %32 = vector.load %arg4[%c0_18, %c0_19] : memref<1x128xf32, #tpu.memory_space<vmem>>, vector<1x128xf32>
    %33 = vector.broadcast %32 : vector<1x128xf32> to vector<432x128xf32>
    %34 = arith.mulf %31, %33 : vector<432x128xf32>
    %c0_20 = arith.constant 0 : index
    %c0_21 = arith.constant 0 : index
    %35 = vector.load %arg5[%c0_20, %c0_21] : memref<1x128xf32, #tpu.memory_space<vmem>>, vector<1x128xf32>
    %36 = vector.broadcast %35 : vector<1x128xf32> to vector<432x128xf32>
    %37 = arith.addf %34, %36 : vector<432x128xf32>
    %cst_22 = arith.constant 0.000000e+00 : f32
    %38 = vector.broadcast %cst_22 : f32 to vector<432x128xf32>
    %39 = arith.maximumf %37, %38 : vector<432x128xf32>
    %40 = vector.shape_cast %39 : vector<432x128xf32> to vector<18x24x128xf32>
    %41 = tpu.iota {dimensions = array<i32: 0>} : vector<24x1xi32>
    %c1_i32_23 = arith.constant 1 : i32
    %42 = vector.broadcast %c1_i32_23 : i32 to vector<24x1xi32>
    %43 = arith.cmpi sge, %41, %42 : vector<24x1xi32>
    %c16_i32_24 = arith.constant 16 : i32
    %44 = vector.broadcast %c16_i32_24 : i32 to vector<24x1xi32>
    %45 = arith.cmpi sle, %41, %44 : vector<24x1xi32>
    %46 = arith.andi %43, %45 : vector<24x1xi1>
    %47 = vector.shape_cast %46 : vector<24x1xi1> to vector<1x24x1xi1>
    %cst_25 = arith.constant 0.000000e+00 : f32
    %48 = vector.shape_cast %47 : vector<1x24x1xi1> to vector<1x24x1xi1>
    %49 = vector.broadcast %48 : vector<1x24x1xi1> to vector<18x24x128xi1>
    %50 = vector.broadcast %cst_25 : f32 to vector<18x24x128xf32>
    %51 = arith.select %49, %40, %50 : vector<18x24x128xi1>, vector<18x24x128xf32>
    %c0_26 = arith.constant 0 : index
    %c0_27 = arith.constant 0 : index
    %c0_28 = arith.constant 0 : index
    %52 = vector.load %arg11[%c0_26, %c0_27, %c0_28] : memref<18x24x128xf32, #tpu.memory_space<vmem>>, vector<18x24x128xf32>
    tpu.vector_store %arg11[%c0_26, %c0_27, %c0_28], %51 {strides = array<i32>} : memref<18x24x128xf32, #tpu.memory_space<vmem>>, vector<18x24x128xf32>,
    %c0_i32_29 = arith.constant 0 : i32
    %53 = arith.cmpi eq, %arg1, %c0_i32_29 : i32
    %54 = arith.extui %53 : i1 to i32
    %c0_i32_30 = arith.constant 0 : i32
    %55 = arith.cmpi ne, %54, %c0_i32_30 : i32
    scf.if %55 {
      %cst_99 = arith.constant 0.000000e+00 : f32
      %126 = vector.broadcast %cst_99 : f32 to vector<24x128xf32>
      %c0_100 = arith.constant 0 : index
      %c0_101 = arith.constant 0 : index
      %c0_102 = arith.constant 0 : index
      %127 = vector.load %arg11[%c0_100, %c0_101, %c0_102] : memref<18x24x128xf32, #tpu.memory_space<vmem>>, vector<1x24x128xf32>
      %128 = vector.shape_cast %127 : vector<1x24x128xf32> to vector<24x128xf32>
      %129 = vector.shape_cast %126 : vector<24x128xf32> to vector<1x24x128xf32>
      tpu.vector_store %arg11[%c0_100, %c0_101, %c0_102], %129 {strides = array<i32>} : memref<18x24x128xf32, #tpu.memory_space<vmem>>, vector<1x24x128xf32>,
    } else {
    }
    %c0_i32_31 = arith.constant 0 : i32
    %56 = arith.cmpi eq, %arg1, %c0_i32_31 : i32
    %57 = arith.extui %56 : i1 to i32
    %c0_i32_32 = arith.constant 0 : i32
    %58 = arith.cmpi ne, %57, %c0_i32_32 : i32
    scf.if %58 {
      %cst_99 = arith.constant 0.000000e+00 : f32
      %126 = vector.broadcast %cst_99 : f32 to vector<24x128xf32>
      %c17 = arith.constant 17 : index
      %c0_100 = arith.constant 0 : index
      %c0_101 = arith.constant 0 : index
      %127 = vector.load %arg11[%c17, %c0_100, %c0_101] : memref<18x24x128xf32, #tpu.memory_space<vmem>>, vector<1x24x128xf32>
      %128 = vector.shape_cast %127 : vector<1x24x128xf32> to vector<24x128xf32>
      %129 = vector.shape_cast %126 : vector<24x128xf32> to vector<1x24x128xf32>
      tpu.vector_store %arg11[%c17, %c0_100, %c0_101], %129 {strides = array<i32>} : memref<18x24x128xf32, #tpu.memory_space<vmem>>, vector<1x24x128xf32>,
    } else {
    }
    %cst_33 = arith.constant 0.000000e+00 : f32
    %59 = vector.broadcast %cst_33 : f32 to vector<256x128xf32>
    %c0_34 = arith.constant 0 : index
    %c0_35 = arith.constant 0 : index
    %c0_36 = arith.constant 0 : index
    %60 = vector.load %arg11[%c0_34, %c0_35, %c0_36] : memref<18x24x128xf32, #tpu.memory_space<vmem>>, vector<16x16x128xf32>
    %61 = vector.shape_cast %60 : vector<16x16x128xf32> to vector<256x128xf32>
    %c0_37 = arith.constant 0 : index
    %c0_38 = arith.constant 0 : index
    %c0_39 = arith.constant 0 : index
    %62 = vector.load %arg6[%c0_37, %c0_38, %c0_39] : memref<9x128x128xf32, #tpu.memory_space<vmem>>, vector<1x128x128xf32>
    %63 = vector.shape_cast %62 : vector<1x128x128xf32> to vector<128x128xf32>
    %cst_40 = arith.constant dense<0.000000e+00> : vector<256x128xf32>
    %64 = tpu.matmul %61, %63, %cst_40 {dimension_numbers = #tpu.dot_dimension_numbers<[1], [0], [0], [1], [0, 0, 1, 1], [], []>} : vector<256x128xf32>, vector<128x128xf32>, vector<256x128xf32> -> vector<256x128xf32>
    %65 = arith.addf %59, %64 : vector<256x128xf32>
    %c0_41 = arith.constant 0 : index
    %c1 = arith.constant 1 : index
    %c0_42 = arith.constant 0 : index
    %66 = vector.load %arg11[%c0_41, %c1, %c0_42] : memref<18x24x128xf32, #tpu.memory_space<vmem>>, vector<16x16x128xf32>
    %67 = vector.shape_cast %66 : vector<16x16x128xf32> to vector<256x128xf32>
    %c1_43 = arith.constant 1 : index
    %c0_44 = arith.constant 0 : index
    %c0_45 = arith.constant 0 : index
    %68 = vector.load %arg6[%c1_43, %c0_44, %c0_45] : memref<9x128x128xf32, #tpu.memory_space<vmem>>, vector<1x128x128xf32>
    %69 = vector.shape_cast %68 : vector<1x128x128xf32> to vector<128x128xf32>
    %cst_46 = arith.constant dense<0.000000e+00> : vector<256x128xf32>
    %70 = tpu.matmul %67, %69, %cst_46 {dimension_numbers = #tpu.dot_dimension_numbers<[1], [0], [0], [1], [0, 0, 1, 1], [], []>} : vector<256x128xf32>, vector<128x128xf32>, vector<256x128xf32> -> vector<256x128xf32>
    %71 = arith.addf %65, %70 : vector<256x128xf32>
    %c0_47 = arith.constant 0 : index
    %c2 = arith.constant 2 : index
    %c0_48 = arith.constant 0 : index
    %72 = vector.load %arg11[%c0_47, %c2, %c0_48] : memref<18x24x128xf32, #tpu.memory_space<vmem>>, vector<16x16x128xf32>
    %73 = vector.shape_cast %72 : vector<16x16x128xf32> to vector<256x128xf32>
    %c2_49 = arith.constant 2 : index
    %c0_50 = arith.constant 0 : index
    %c0_51 = arith.constant 0 : index
    %74 = vector.load %arg6[%c2_49, %c0_50, %c0_51] : memref<9x128x128xf32, #tpu.memory_space<vmem>>, vector<1x128x128xf32>
    %75 = vector.shape_cast %74 : vector<1x128x128xf32> to vector<128x128xf32>
    %cst_52 = arith.constant dense<0.000000e+00> : vector<256x128xf32>
    %76 = tpu.matmul %73, %75, %cst_52 {dimension_numbers = #tpu.dot_dimension_numbers<[1], [0], [0], [1], [0, 0, 1, 1], [], []>} : vector<256x128xf32>, vector<128x128xf32>, vector<256x128xf32> -> vector<256x128xf32>
    %77 = arith.addf %71, %76 : vector<256x128xf32>
    %c1_53 = arith.constant 1 : index
    %c0_54 = arith.constant 0 : index
    %c0_55 = arith.constant 0 : index
    %78 = vector.load %arg11[%c1_53, %c0_54, %c0_55] : memref<18x24x128xf32, #tpu.memory_space<vmem>>, vector<16x16x128xf32>
    %79 = vector.shape_cast %78 : vector<16x16x128xf32> to vector<256x128xf32>
    %c3 = arith.constant 3 : index
    %c0_56 = arith.constant 0 : index
    %c0_57 = arith.constant 0 : index
    %80 = vector.load %arg6[%c3, %c0_56, %c0_57] : memref<9x128x128xf32, #tpu.memory_space<vmem>>, vector<1x128x128xf32>
    %81 = vector.shape_cast %80 : vector<1x128x128xf32> to vector<128x128xf32>
    %cst_58 = arith.constant dense<0.000000e+00> : vector<256x128xf32>
    %82 = tpu.matmul %79, %81, %cst_58 {dimension_numbers = #tpu.dot_dimension_numbers<[1], [0], [0], [1], [0, 0, 1, 1], [], []>} : vector<256x128xf32>, vector<128x128xf32>, vector<256x128xf32> -> vector<256x128xf32>
    %83 = arith.addf %77, %82 : vector<256x128xf32>
    %c1_59 = arith.constant 1 : index
    %c1_60 = arith.constant 1 : index
    %c0_61 = arith.constant 0 : index
    %84 = vector.load %arg11[%c1_59, %c1_60, %c0_61] : memref<18x24x128xf32, #tpu.memory_space<vmem>>, vector<16x16x128xf32>
    %85 = vector.shape_cast %84 : vector<16x16x128xf32> to vector<256x128xf32>
    %c4 = arith.constant 4 : index
    %c0_62 = arith.constant 0 : index
    %c0_63 = arith.constant 0 : index
    %86 = vector.load %arg6[%c4, %c0_62, %c0_63] : memref<9x128x128xf32, #tpu.memory_space<vmem>>, vector<1x128x128xf32>
    %87 = vector.shape_cast %86 : vector<1x128x128xf32> to vector<128x128xf32>
    %cst_64 = arith.constant dense<0.000000e+00> : vector<256x128xf32>
    %88 = tpu.matmul %85, %87, %cst_64 {dimension_numbers = #tpu.dot_dimension_numbers<[1], [0], [0], [1], [0, 0, 1, 1], [], []>} : vector<256x128xf32>, vector<128x128xf32>, vector<256x128xf32> -> vector<256x128xf32>
    %89 = arith.addf %83, %88 : vector<256x128xf32>
    %c1_65 = arith.constant 1 : index
    %c2_66 = arith.constant 2 : index
    %c0_67 = arith.constant 0 : index
    %90 = vector.load %arg11[%c1_65, %c2_66, %c0_67] : memref<18x24x128xf32, #tpu.memory_space<vmem>>, vector<16x16x128xf32>
    %91 = vector.shape_cast %90 : vector<16x16x128xf32> to vector<256x128xf32>
    %c5 = arith.constant 5 : index
    %c0_68 = arith.constant 0 : index
    %c0_69 = arith.constant 0 : index
    %92 = vector.load %arg6[%c5, %c0_68, %c0_69] : memref<9x128x128xf32, #tpu.memory_space<vmem>>, vector<1x128x128xf32>
    %93 = vector.shape_cast %92 : vector<1x128x128xf32> to vector<128x128xf32>
    %cst_70 = arith.constant dense<0.000000e+00> : vector<256x128xf32>
    %94 = tpu.matmul %91, %93, %cst_70 {dimension_numbers = #tpu.dot_dimension_numbers<[1], [0], [0], [1], [0, 0, 1, 1], [], []>} : vector<256x128xf32>, vector<128x128xf32>, vector<256x128xf32> -> vector<256x128xf32>
    %95 = arith.addf %89, %94 : vector<256x128xf32>
    %c2_71 = arith.constant 2 : index
    %c0_72 = arith.constant 0 : index
    %c0_73 = arith.constant 0 : index
    %96 = vector.load %arg11[%c2_71, %c0_72, %c0_73] : memref<18x24x128xf32, #tpu.memory_space<vmem>>, vector<16x16x128xf32>
    %97 = vector.shape_cast %96 : vector<16x16x128xf32> to vector<256x128xf32>
    %c6 = arith.constant 6 : index
    %c0_74 = arith.constant 0 : index
    %c0_75 = arith.constant 0 : index
    %98 = vector.load %arg6[%c6, %c0_74, %c0_75] : memref<9x128x128xf32, #tpu.memory_space<vmem>>, vector<1x128x128xf32>
    %99 = vector.shape_cast %98 : vector<1x128x128xf32> to vector<128x128xf32>
    %cst_76 = arith.constant dense<0.000000e+00> : vector<256x128xf32>
    %100 = tpu.matmul %97, %99, %cst_76 {dimension_numbers = #tpu.dot_dimension_numbers<[1], [0], [0], [1], [0, 0, 1, 1], [], []>} : vector<256x128xf32>, vector<128x128xf32>, vector<256x128xf32> -> vector<256x128xf32>
    %101 = arith.addf %95, %100 : vector<256x128xf32>
    %c2_77 = arith.constant 2 : index
    %c1_78 = arith.constant 1 : index
    %c0_79 = arith.constant 0 : index
    %102 = vector.load %arg11[%c2_77, %c1_78, %c0_79] : memref<18x24x128xf32, #tpu.memory_space<vmem>>, vector<16x16x128xf32>
    %103 = vector.shape_cast %102 : vector<16x16x128xf32> to vector<256x128xf32>
    %c7 = arith.constant 7 : index
    %c0_80 = arith.constant 0 : index
    %c0_81 = arith.constant 0 : index
    %104 = vector.load %arg6[%c7, %c0_80, %c0_81] : memref<9x128x128xf32, #tpu.memory_space<vmem>>, vector<1x128x128xf32>
    %105 = vector.shape_cast %104 : vector<1x128x128xf32> to vector<128x128xf32>
    %cst_82 = arith.constant dense<0.000000e+00> : vector<256x128xf32>
    %106 = tpu.matmul %103, %105, %cst_82 {dimension_numbers = #tpu.dot_dimension_numbers<[1], [0], [0], [1], [0, 0, 1, 1], [], []>} : vector<256x128xf32>, vector<128x128xf32>, vector<256x128xf32> -> vector<256x128xf32>
    %107 = arith.addf %101, %106 : vector<256x128xf32>
    %c2_83 = arith.constant 2 : index
    %c2_84 = arith.constant 2 : index
    %c0_85 = arith.constant 0 : index
    %108 = vector.load %arg11[%c2_83, %c2_84, %c0_85] : memref<18x24x128xf32, #tpu.memory_space<vmem>>, vector<16x16x128xf32>
    %109 = vector.shape_cast %108 : vector<16x16x128xf32> to vector<256x128xf32>
    %c8 = arith.constant 8 : index
    %c0_86 = arith.constant 0 : index
    %c0_87 = arith.constant 0 : index
    %110 = vector.load %arg6[%c8, %c0_86, %c0_87] : memref<9x128x128xf32, #tpu.memory_space<vmem>>, vector<1x128x128xf32>
    %111 = vector.shape_cast %110 : vector<1x128x128xf32> to vector<128x128xf32>
    %cst_88 = arith.constant dense<0.000000e+00> : vector<256x128xf32>
    %112 = tpu.matmul %109, %111, %cst_88 {dimension_numbers = #tpu.dot_dimension_numbers<[1], [0], [0], [1], [0, 0, 1, 1], [], []>} : vector<256x128xf32>, vector<128x128xf32>, vector<256x128xf32> -> vector<256x128xf32>
    %113 = arith.addf %107, %112 : vector<256x128xf32>
    %c0_89 = arith.constant 0 : index
    %c0_90 = arith.constant 0 : index
    %114 = vector.load %arg7[%c0_89, %c0_90] : memref<256x128xf32, #tpu.memory_space<vmem>>, vector<256x128xf32>
    tpu.vector_store %arg7[%c0_89, %c0_90], %113 {strides = array<i32>} : memref<256x128xf32, #tpu.memory_space<vmem>>, vector<256x128xf32>,
    %cst_91 = arith.constant dense<0.000000e+00> : vector<128xf32>
    %115 = vector.multi_reduction <add>, %113, %cst_91 [0] : vector<256x128xf32> to vector<128xf32>
    %116 = vector.shape_cast %115 : vector<128xf32> to vector<1x128xf32>
    %c0_92 = arith.constant 0 : index
    %c0_93 = arith.constant 0 : index
    %c0_94 = arith.constant 0 : index
    %117 = vector.load %arg8[%c0_92, %c0_93, %c0_94] : memref<1x1x128xf32, #tpu.memory_space<vmem>>, vector<1x1x128xf32>
    %118 = vector.shape_cast %117 : vector<1x1x128xf32> to vector<1x128xf32>
    %119 = vector.shape_cast %116 : vector<1x128xf32> to vector<1x1x128xf32>
    tpu.vector_store %arg8[%c0_92, %c0_93, %c0_94], %119 {strides = array<i32>} : memref<1x1x128xf32, #tpu.memory_space<vmem>>, vector<1x1x128xf32>,
    %120 = arith.mulf %113, %113 : vector<256x128xf32>
    %cst_95 = arith.constant dense<0.000000e+00> : vector<128xf32>
    %121 = vector.multi_reduction <add>, %120, %cst_95 [0] : vector<256x128xf32> to vector<128xf32>
    %122 = vector.shape_cast %121 : vector<128xf32> to vector<1x128xf32>
    %c0_96 = arith.constant 0 : index
    %c0_97 = arith.constant 0 : index
    %c0_98 = arith.constant 0 : index
    %123 = vector.load %arg9[%c0_96, %c0_97, %c0_98] : memref<1x1x128xf32, #tpu.memory_space<vmem>>, vector<1x1x128xf32>
    %124 = vector.shape_cast %123 : vector<1x1x128xf32> to vector<1x128xf32>
    %125 = vector.shape_cast %122 : vector<1x128xf32> to vector<1x1x128xf32>
    tpu.vector_store %arg9[%c0_96, %c0_97, %c0_98], %125 {strides = array<i32>} : memref<1x1x128xf32, #tpu.memory_space<vmem>>, vector<1x1x128xf32>,
    return
  }
  func.func @transform_1(%arg0: i32, %arg1: i32) -> (i32, i32) {
    %c0_i32 = arith.constant 0 : i32
    %c0_i32_0 = arith.constant 0 : i32
    %c0_i32_1 = arith.constant 0 : i32
    return %c0_i32, %c0_i32_0 : i32, i32
  }
  func.func @transform_2(%arg0: i32, %arg1: i32) -> (i32, i32) {
    %c0_i32 = arith.constant 0 : i32
    %c0_i32_0 = arith.constant 0 : i32
    %c0_i32_1 = arith.constant 0 : i32
    return %c0_i32, %c0_i32_0 : i32, i32
  }
  func.func @transform_3(%arg0: i32, %arg1: i32) -> (i32, i32) {
    %c0_i32 = arith.constant 0 : i32
    %c0_i32_0 = arith.constant 0 : i32
    %c0_i32_1 = arith.constant 0 : i32
    return %c0_i32, %c0_i32_0 : i32, i32
  }
  func.func @transform_4(%arg0: i32, %arg1: i32) -> (i32, i32, i32) {
    %c0_i32 = arith.constant 0 : i32
    %c0_i32_0 = arith.constant 0 : i32
    %c0_i32_1 = arith.constant 0 : i32
    %c0_i32_2 = arith.constant 0 : i32
    return %c0_i32, %c0_i32_0, %c0_i32_1 : i32, i32, i32
  }
  func.func @transform_5(%arg0: i32, %arg1: i32) -> (i32, i32) {
    %c1_i32 = arith.constant 1 : i32
    %0 = arith.muli %arg0, %c1_i32 : i32
    %1 = arith.addi %0, %arg1 : i32
    %c0_i32 = arith.constant 0 : i32
    %c0_i32_0 = arith.constant 0 : i32
    return %1, %c0_i32 : i32, i32
  }
  func.func @transform_6(%arg0: i32, %arg1: i32) -> (i32, i32, i32) {
    %c1_i32 = arith.constant 1 : i32
    %0 = arith.muli %arg0, %c1_i32 : i32
    %1 = arith.addi %0, %arg1 : i32
    %c0_i32 = arith.constant 0 : i32
    %c0_i32_0 = arith.constant 0 : i32
    %c0_i32_1 = arith.constant 0 : i32
    return %1, %c0_i32, %c0_i32_0 : i32, i32, i32
  }
  func.func @transform_7(%arg0: i32, %arg1: i32) -> (i32, i32, i32) {
    %c1_i32 = arith.constant 1 : i32
    %0 = arith.muli %arg0, %c1_i32 : i32
    %1 = arith.addi %0, %arg1 : i32
    %c0_i32 = arith.constant 0 : i32
    %c0_i32_0 = arith.constant 0 : i32
    %c0_i32_1 = arith.constant 0 : i32
    return %1, %c0_i32, %c0_i32_0 : i32, i32, i32
  }
}

module attributes {stable_mosaic.version = 11 : i64} {
  func.func @_stats3_kernel(%arg0: i32, %arg1: memref<512x128xf32, #tpu.memory_space<vmem>>, %arg2: memref<1x128xf32, #tpu.memory_space<vmem>>, %arg3: memref<1x128xf32, #tpu.memory_space<vmem>>, %arg4: memref<128x128xf32, #tpu.memory_space<vmem>>, %arg5: memref<1x1x128xf32, #tpu.memory_space<vmem>>, %arg6: memref<1x1x128xf32, #tpu.memory_space<vmem>>) attributes {dimension_semantics = [#tpu.dimension_semantics<parallel>], iteration_bounds = array<i64: 1>, scalar_prefetch = 0 : i64, scratch_operands = 0 : i64, tpu.core_type = #tpu.core_type<tc>, window_params = [{transform_indices = @transform_0, window_bounds = array<i64: 512, 128>}, {pipeline_mode = #tpu.pipeline_mode<synchronous>, transform_indices = @transform_1, window_bounds = array<i64: 1, 128>}, {pipeline_mode = #tpu.pipeline_mode<synchronous>, transform_indices = @transform_2, window_bounds = array<i64: 1, 128>}, {pipeline_mode = #tpu.pipeline_mode<synchronous>, transform_indices = @transform_3, window_bounds = array<i64: 128, 128>}, {transform_indices = @transform_4, window_bounds = array<i64: 1, 1, 128>}, {transform_indices = @transform_5, window_bounds = array<i64: 1, 1, 128>}]} {
    %c0 = arith.constant 0 : index
    %c0_0 = arith.constant 0 : index
    %0 = vector.load %arg1[%c0, %c0_0] : memref<512x128xf32, #tpu.memory_space<vmem>>, vector<512x128xf32>
    %c0_1 = arith.constant 0 : index
    %c0_2 = arith.constant 0 : index
    %1 = vector.load %arg2[%c0_1, %c0_2] : memref<1x128xf32, #tpu.memory_space<vmem>>, vector<1x128xf32>
    %2 = vector.broadcast %1 : vector<1x128xf32> to vector<512x128xf32>
    %3 = arith.mulf %0, %2 : vector<512x128xf32>
    %c0_3 = arith.constant 0 : index
    %c0_4 = arith.constant 0 : index
    %4 = vector.load %arg3[%c0_3, %c0_4] : memref<1x128xf32, #tpu.memory_space<vmem>>, vector<1x128xf32>
    %5 = vector.broadcast %4 : vector<1x128xf32> to vector<512x128xf32>
    %6 = arith.addf %3, %5 : vector<512x128xf32>
    %cst = arith.constant 0.000000e+00 : f32
    %7 = vector.broadcast %cst : f32 to vector<512x128xf32>
    %8 = arith.maximumf %6, %7 : vector<512x128xf32>
    %c0_5 = arith.constant 0 : index
    %c0_6 = arith.constant 0 : index
    %9 = vector.load %arg4[%c0_5, %c0_6] : memref<128x128xf32, #tpu.memory_space<vmem>>, vector<128x128xf32>
    %cst_7 = arith.constant dense<0.000000e+00> : vector<512x128xf32>
    %10 = tpu.matmul %8, %9, %cst_7 {dimension_numbers = #tpu.dot_dimension_numbers<[1], [0], [0], [1], [0, 0, 1, 1], [], []>} : vector<512x128xf32>, vector<128x128xf32>, vector<512x128xf32> -> vector<512x128xf32>
    %cst_8 = arith.constant dense<0.000000e+00> : vector<128xf32>
    %11 = vector.multi_reduction <add>, %10, %cst_8 [0] : vector<512x128xf32> to vector<128xf32>
    %12 = vector.shape_cast %11 : vector<128xf32> to vector<1x128xf32>
    %c0_9 = arith.constant 0 : index
    %c0_10 = arith.constant 0 : index
    %c0_11 = arith.constant 0 : index
    %13 = vector.load %arg5[%c0_9, %c0_10, %c0_11] : memref<1x1x128xf32, #tpu.memory_space<vmem>>, vector<1x1x128xf32>
    %14 = vector.shape_cast %13 : vector<1x1x128xf32> to vector<1x128xf32>
    %15 = vector.shape_cast %12 : vector<1x128xf32> to vector<1x1x128xf32>
    tpu.vector_store %arg5[%c0_9, %c0_10, %c0_11], %15 {strides = array<i32>} : memref<1x1x128xf32, #tpu.memory_space<vmem>>, vector<1x1x128xf32>,
    %16 = arith.mulf %10, %10 : vector<512x128xf32>
    %cst_12 = arith.constant dense<0.000000e+00> : vector<128xf32>
    %17 = vector.multi_reduction <add>, %16, %cst_12 [0] : vector<512x128xf32> to vector<128xf32>
    %18 = vector.shape_cast %17 : vector<128xf32> to vector<1x128xf32>
    %c0_13 = arith.constant 0 : index
    %c0_14 = arith.constant 0 : index
    %c0_15 = arith.constant 0 : index
    %19 = vector.load %arg6[%c0_13, %c0_14, %c0_15] : memref<1x1x128xf32, #tpu.memory_space<vmem>>, vector<1x1x128xf32>
    %20 = vector.shape_cast %19 : vector<1x1x128xf32> to vector<1x128xf32>
    %21 = vector.shape_cast %18 : vector<1x128xf32> to vector<1x1x128xf32>
    tpu.vector_store %arg6[%c0_13, %c0_14, %c0_15], %21 {strides = array<i32>} : memref<1x1x128xf32, #tpu.memory_space<vmem>>, vector<1x1x128xf32>,
    return
  }
  func.func @transform_0(%arg0: i32) -> (i32, i32) {
    %c0_i32 = arith.constant 0 : i32
    %c0_i32_0 = arith.constant 0 : i32
    return %arg0, %c0_i32 : i32, i32
  }
  func.func @transform_1(%arg0: i32) -> (i32, i32) {
    %c0_i32 = arith.constant 0 : i32
    %c0_i32_0 = arith.constant 0 : i32
    %c0_i32_1 = arith.constant 0 : i32
    return %c0_i32, %c0_i32_0 : i32, i32
  }
  func.func @transform_2(%arg0: i32) -> (i32, i32) {
    %c0_i32 = arith.constant 0 : i32
    %c0_i32_0 = arith.constant 0 : i32
    %c0_i32_1 = arith.constant 0 : i32
    return %c0_i32, %c0_i32_0 : i32, i32
  }
  func.func @transform_3(%arg0: i32) -> (i32, i32) {
    %c0_i32 = arith.constant 0 : i32
    %c0_i32_0 = arith.constant 0 : i32
    %c0_i32_1 = arith.constant 0 : i32
    return %c0_i32, %c0_i32_0 : i32, i32
  }
  func.func @transform_4(%arg0: i32) -> (i32, i32, i32) {
    %c0_i32 = arith.constant 0 : i32
    %c0_i32_0 = arith.constant 0 : i32
    %c0_i32_1 = arith.constant 0 : i32
    return %arg0, %c0_i32, %c0_i32_0 : i32, i32, i32
  }
  func.func @transform_5(%arg0: i32) -> (i32, i32, i32) {
    %c0_i32 = arith.constant 0 : i32
    %c0_i32_0 = arith.constant 0 : i32
    %c0_i32_1 = arith.constant 0 : i32
    return %arg0, %c0_i32, %c0_i32_0 : i32, i32, i32
  }
}

module attributes {stable_mosaic.version = 11 : i64} {
  func.func @_final_kernel(%arg0: i32, %arg1: memref<512x128xf32, #tpu.memory_space<vmem>>, %arg2: memref<512x128xf32, #tpu.memory_space<vmem>>, %arg3: memref<1x128xf32, #tpu.memory_space<vmem>>, %arg4: memref<1x128xf32, #tpu.memory_space<vmem>>, %arg5: memref<128x128xf32, #tpu.memory_space<vmem>>, %arg6: memref<1x128xf32, #tpu.memory_space<vmem>>, %arg7: memref<1x128xf32, #tpu.memory_space<vmem>>, %arg8: memref<512x128xf32, #tpu.memory_space<vmem>>) attributes {dimension_semantics = [#tpu.dimension_semantics<parallel>], iteration_bounds = array<i64: 1>, scalar_prefetch = 0 : i64, scratch_operands = 0 : i64, tpu.core_type = #tpu.core_type<tc>, window_params = [{transform_indices = @transform_0, window_bounds = array<i64: 512, 128>}, {transform_indices = @transform_1, window_bounds = array<i64: 512, 128>}, {pipeline_mode = #tpu.pipeline_mode<synchronous>, transform_indices = @transform_2, window_bounds = array<i64: 1, 128>}, {pipeline_mode = #tpu.pipeline_mode<synchronous>, transform_indices = @transform_3, window_bounds = array<i64: 1, 128>}, {pipeline_mode = #tpu.pipeline_mode<synchronous>, transform_indices = @transform_4, window_bounds = array<i64: 128, 128>}, {pipeline_mode = #tpu.pipeline_mode<synchronous>, transform_indices = @transform_5, window_bounds = array<i64: 1, 128>}, {pipeline_mode = #tpu.pipeline_mode<synchronous>, transform_indices = @transform_6, window_bounds = array<i64: 1, 128>}, {transform_indices = @transform_7, window_bounds = array<i64: 512, 128>}]} {
    %c0 = arith.constant 0 : index
    %c0_0 = arith.constant 0 : index
    %0 = vector.load %arg1[%c0, %c0_0] : memref<512x128xf32, #tpu.memory_space<vmem>>, vector<512x128xf32>
    %c0_1 = arith.constant 0 : index
    %c0_2 = arith.constant 0 : index
    %1 = vector.load %arg3[%c0_1, %c0_2] : memref<1x128xf32, #tpu.memory_space<vmem>>, vector<1x128xf32>
    %2 = vector.broadcast %1 : vector<1x128xf32> to vector<512x128xf32>
    %3 = arith.mulf %0, %2 : vector<512x128xf32>
    %c0_3 = arith.constant 0 : index
    %c0_4 = arith.constant 0 : index
    %4 = vector.load %arg4[%c0_3, %c0_4] : memref<1x128xf32, #tpu.memory_space<vmem>>, vector<1x128xf32>
    %5 = vector.broadcast %4 : vector<1x128xf32> to vector<512x128xf32>
    %6 = arith.addf %3, %5 : vector<512x128xf32>
    %cst = arith.constant 0.000000e+00 : f32
    %7 = vector.broadcast %cst : f32 to vector<512x128xf32>
    %8 = arith.maximumf %6, %7 : vector<512x128xf32>
    %c0_5 = arith.constant 0 : index
    %c0_6 = arith.constant 0 : index
    %9 = vector.load %arg5[%c0_5, %c0_6] : memref<128x128xf32, #tpu.memory_space<vmem>>, vector<128x128xf32>
    %cst_7 = arith.constant dense<0.000000e+00> : vector<512x128xf32>
    %10 = tpu.matmul %8, %9, %cst_7 {dimension_numbers = #tpu.dot_dimension_numbers<[1], [0], [0], [1], [0, 0, 1, 1], [], []>} : vector<512x128xf32>, vector<128x128xf32>, vector<512x128xf32> -> vector<512x128xf32>
    %c0_8 = arith.constant 0 : index
    %c0_9 = arith.constant 0 : index
    %11 = vector.load %arg6[%c0_8, %c0_9] : memref<1x128xf32, #tpu.memory_space<vmem>>, vector<1x128xf32>
    %12 = vector.broadcast %11 : vector<1x128xf32> to vector<512x128xf32>
    %13 = arith.mulf %10, %12 : vector<512x128xf32>
    %c0_10 = arith.constant 0 : index
    %c0_11 = arith.constant 0 : index
    %14 = vector.load %arg7[%c0_10, %c0_11] : memref<1x128xf32, #tpu.memory_space<vmem>>, vector<1x128xf32>
    %15 = vector.broadcast %14 : vector<1x128xf32> to vector<512x128xf32>
    %16 = arith.addf %13, %15 : vector<512x128xf32>
    %c0_12 = arith.constant 0 : index
    %c0_13 = arith.constant 0 : index
    %17 = vector.load %arg2[%c0_12, %c0_13] : memref<512x128xf32, #tpu.memory_space<vmem>>, vector<512x128xf32>
    %18 = arith.addf %16, %17 : vector<512x128xf32>
    %cst_14 = arith.constant 0.000000e+00 : f32
    %19 = vector.broadcast %cst_14 : f32 to vector<512x128xf32>
    %20 = arith.maximumf %18, %19 : vector<512x128xf32>
    %c0_15 = arith.constant 0 : index
    %c0_16 = arith.constant 0 : index
    %21 = vector.load %arg8[%c0_15, %c0_16] : memref<512x128xf32, #tpu.memory_space<vmem>>, vector<512x128xf32>
    tpu.vector_store %arg8[%c0_15, %c0_16], %20 {strides = array<i32>} : memref<512x128xf32, #tpu.memory_space<vmem>>, vector<512x128xf32>,
    return
  }
  func.func @transform_0(%arg0: i32) -> (i32, i32) {
    %c0_i32 = arith.constant 0 : i32
    %c0_i32_0 = arith.constant 0 : i32
    return %arg0, %c0_i32 : i32, i32
  }
  func.func @transform_1(%arg0: i32) -> (i32, i32) {
    %c0_i32 = arith.constant 0 : i32
    %c0_i32_0 = arith.constant 0 : i32
    return %arg0, %c0_i32 : i32, i32
  }
  func.func @transform_2(%arg0: i32) -> (i32, i32) {
    %c0_i32 = arith.constant 0 : i32
    %c0_i32_0 = arith.constant 0 : i32
    %c0_i32_1 = arith.constant 0 : i32
    return %c0_i32, %c0_i32_0 : i32, i32
  }
  func.func @transform_3(%arg0: i32) -> (i32, i32) {
    %c0_i32 = arith.constant 0 : i32
    %c0_i32_0 = arith.constant 0 : i32
    %c0_i32_1 = arith.constant 0 : i32
    return %c0_i32, %c0_i32_0 : i32, i32
  }
  func.func @transform_4(%arg0: i32) -> (i32, i32) {
    %c0_i32 = arith.constant 0 : i32
    %c0_i32_0 = arith.constant 0 : i32
    %c0_i32_1 = arith.constant 0 : i32
    return %c0_i32, %c0_i32_0 : i32, i32
  }
  func.func @transform_5(%arg0: i32) -> (i32, i32) {
    %c0_i32 = arith.constant 0 : i32
    %c0_i32_0 = arith.constant 0 : i32
    %c0_i32_1 = arith.constant 0 : i32
    return %c0_i32, %c0_i32_0 : i32, i32
  }
  func.func @transform_6(%arg0: i32) -> (i32, i32) {
    %c0_i32 = arith.constant 0 : i32
    %c0_i32_0 = arith.constant 0 : i32
    %c0_i32_1 = arith.constant 0 : i32
    return %c0_i32, %c0_i32_0 : i32, i32
  }
  func.func @transform_7(%arg0: i32) -> (i32, i32) {
    %c0_i32 = arith.constant 0 : i32
    %c0_i32_0 = arith.constant 0 : i32
    return %arg0, %c0_i32 : i32, i32
  }
}

</mosaic_0001>

<llo_original>
// kernel: res_bottle_block.4
$region0: #{res_bottle_block.4}
  #allocation0 [shape = 'u32[]', space=smem, size = 0x4, offset = 0x4, fixed_abs, tag = 'smem constant byte address 0x4 - core index']
  #allocation1 [shape = 'u32[72,128]{1,0:T(1,128)}', space=vmem, size = 0x9000, scoped, tag = 'internal scratch']
  %s0 = inlined_call_operand.vmem [shape: f32[512,128], index: 0, kind: input, shape index: {}]
  %s1 = inlined_call_operand.vmem [shape: f32[128,128], index: 1, kind: input, shape index: {}]
  %s2 = inlined_call_operand.vmem [shape: f32[1,1,128], index: 2, kind: output, shape index: {0}]
  %s3 = inlined_call_operand.vmem [shape: f32[1,1,128], index: 3, kind: output, shape index: {1}]
  %4 = xla_tuple %s2, %s3
  %s5 = sld [smem:[#allocation0]]
  $region26: #{res_bottle_block.4} parent=0
    _
  %s7 = ssub.s32 1, %s5
  %s8 = scalar_select 0, %s7, %s5
  // Predicated region
  $region2: #{res_bottle_block.4} parent=0 // pred_check
    _
  $region3: #{res_bottle_block.4} parent=0 // pred_check_branch
    %10 = sbr.rel (0) target = $region5
  $region4: #{res_bottle_block.4} parent=0 // pred_region
    _
  $region5: #{res_bottle_block.4} parent=0 // pred_fallthru
    _
  // Predicated region
  $region6: #{res_bottle_block.4} parent=0 // pred_check
    _
  $region7: #{res_bottle_block.4} parent=0 // pred_check_branch
    %12 = sbr.rel (0) target = $region9
  $region8: #{res_bottle_block.4} parent=0 // pred_region
    _
  $region9: #{res_bottle_block.4} parent=0 // pred_fallthru
    _
  %v13 = vld [vmem:[%s0] sm:$0xff]
  %v14 = vld [vmem:[%s0 + $0x8] sm:$0xff]
  %v15 = vld [vmem:[%s0 + $0x10] sm:$0xff]
  %v16 = vld [vmem:[%s0 + $0x18] sm:$0xff]
  %v17 = vld [vmem:[%s0 + $0x20] sm:$0xff]
  %v18 = vld [vmem:[%s0 + $0x28] sm:$0xff]
  %v19 = vld [vmem:[%s0 + $0x30] sm:$0xff]
  %v20 = vld [vmem:[%s0 + $0x38] sm:$0xff]
  %v21 = vld [vmem:[%s0 + $0x40] sm:$0xff]
  %v22 = vld [vmem:[%s0 + $0x48] sm:$0xff]
  %v23 = vld [vmem:[%s0 + $0x50] sm:$0xff]
  %v24 = vld [vmem:[%s0 + $0x58] sm:$0xff]
  %v25 = vld [vmem:[%s0 + $0x60] sm:$0xff]
  %v26 = vld [vmem:[%s0 + $0x68] sm:$0xff]
  %v27 = vld [vmem:[%s0 + $0x70] sm:$0xff]
  %v28 = vld [vmem:[%s0 + $0x78] sm:$0xff]
  %v29 = vld [vmem:[%s0 + $0x80] sm:$0xff]
  %v30 = vld [vmem:[%s0 + $0x88] sm:$0xff]
  %v31 = vld [vmem:[%s0 + $0x90] sm:$0xff]
  %v32 = vld [vmem:[%s0 + $0x98] sm:$0xff]
  %v33 = vld [vmem:[%s0 + $0xa0] sm:$0xff]
  %v34 = vld [vmem:[%s0 + $0xa8] sm:$0xff]
  %v35 = vld [vmem:[%s0 + $0xb0] sm:$0xff]
  %v36 = vld [vmem:[%s0 + $0xb8] sm:$0xff]
  %v37 = vld [vmem:[%s0 + $0xc0] sm:$0xff]
  %v38 = vld [vmem:[%s0 + $0xc8] sm:$0xff]
  %v39 = vld [vmem:[%s0 + $0xd0] sm:$0xff]
  %v40 = vld [vmem:[%s0 + $0xd8] sm:$0xff]
  %v41 = vld [vmem:[%s0 + $0xe0] sm:$0xff]
  %v42 = vld [vmem:[%s0 + $0xe8] sm:$0xff]
  %v43 = vld [vmem:[%s0 + $0xf0] sm:$0xff]
  %v44 = vld [vmem:[%s0 + $0xf8] sm:$0xff]
  %v45 = vld [vmem:[%s0 + $0x100] sm:$0xff]
  %v46 = vld [vmem:[%s0 + $0x108] sm:$0xff]
  %v47 = vld [vmem:[%s0 + $0x110] sm:$0xff]
  %v48 = vld [vmem:[%s0 + $0x118] sm:$0xff]
  %v49 = vld [vmem:[%s0 + $0x120] sm:$0xff]
  %v50 = vld [vmem:[%s0 + $0x128] sm:$0xff]
  %v51 = vld [vmem:[%s0 + $0x130] sm:$0xff]
  %v52 = vld [vmem:[%s0 + $0x138] sm:$0xff]
  %v53 = vld [vmem:[%s0 + $0x140] sm:$0xff]
  %v54 = vld [vmem:[%s0 + $0x148] sm:$0xff]
  %v55 = vld [vmem:[%s0 + $0x150] sm:$0xff]
  %v56 = vld [vmem:[%s0 + $0x158] sm:$0xff]
  %v57 = vld [vmem:[%s0 + $0x160] sm:$0xff]
  %v58 = vld [vmem:[%s0 + $0x168] sm:$0xff]
  %v59 = vld [vmem:[%s0 + $0x170] sm:$0xff]
  %v60 = vld [vmem:[%s0 + $0x178] sm:$0xff]
  %v61 = vld [vmem:[%s0 + $0x180] sm:$0xff]
  %v62 = vld [vmem:[%s0 + $0x188] sm:$0xff]
  %v63 = vld [vmem:[%s0 + $0x190] sm:$0xff]
  %v64 = vld [vmem:[%s0 + $0x198] sm:$0xff]
  %v65 = vld [vmem:[%s0 + $0x1a0] sm:$0xff]
  %v66 = vld [vmem:[%s0 + $0x1a8] sm:$0xff]
  %v67 = vld [vmem:[%s0 + $0x1b0] sm:$0xff]
  %v68 = vld [vmem:[%s0 + $0x1b8] sm:$0xff]
  %v69 = vld [vmem:[%s0 + $0x1c0] sm:$0xff]
  %v70 = vld [vmem:[%s0 + $0x1c8] sm:$0xff]
  %v71 = vld [vmem:[%s0 + $0x1d0] sm:$0xff]
  %v72 = vld [vmem:[%s0 + $0x1d8] sm:$0xff]
  %v73 = vld [vmem:[%s0 + $0x1e0] sm:$0xff]
  %v74 = vld [vmem:[%s0 + $0x1e8] sm:$0xff]
  %v75 = vld [vmem:[%s0 + $0x1f0] sm:$0xff]
  %v76 = vld [vmem:[%s0 + $0x1f8] sm:$0xff]
  %v77 = vld [vmem:[%s1] sm:$0xff]
  %v78 = vld [vmem:[%s1 + $0x8] sm:$0xff]
  %v79 = vld [vmem:[%s1 + $0x10] sm:$0xff]
  %v80 = vld [vmem:[%s1 + $0x18] sm:$0xff]
  %v81 = vld [vmem:[%s1 + $0x20] sm:$0xff]
  %v82 = vld [vmem:[%s1 + $0x28] sm:$0xff]
  %v83 = vld [vmem:[%s1 + $0x30] sm:$0xff]
  %v84 = vld [vmem:[%s1 + $0x38] sm:$0xff]
  %v85 = vld [vmem:[%s1 + $0x40] sm:$0xff]
  %v86 = vld [vmem:[%s1 + $0x48] sm:$0xff]
  %v87 = vld [vmem:[%s1 + $0x50] sm:$0xff]
  %v88 = vld [vmem:[%s1 + $0x58] sm:$0xff]
  %v89 = vld [vmem:[%s1 + $0x60] sm:$0xff]
  %v90 = vld [vmem:[%s1 + $0x68] sm:$0xff]
  %v91 = vld [vmem:[%s1 + $0x70] sm:$0xff]
  %v92 = vld [vmem:[%s1 + $0x78] sm:$0xff]
  %93 = vmatpush.msra.mxu0 %v92
  %94 = vmatpush.msra.mxu0 %v91
  %95 = vmatpush.msra.mxu0 %v90
  %96 = vmatpush.msra.mxu0 %v89
  %97 = vmatpush.msra.mxu0 %v88
  %98 = vmatpush.msra.mxu0 %v87
  %99 = vmatpush.msra.mxu0 %v86
  %100 = vmatpush.msra.mxu0 %v85
  %101 = vmatpush.msra.mxu0 %v84
  %102 = vmatpush.msra.mxu0 %v83
  %103 = vmatpush.msra.mxu0 %v82
  %104 = vmatpush.msra.mxu0 %v81
  %105 = vmatpush.msra.mxu0 %v80
  %106 = vmatpush.msra.mxu0 %v79
  %107 = vmatpush.msra.mxu0 %v78
  %108 = vmatpush.msra.mxu0 %v77
  %109 = vmatmul.f32.gmra.mxu0 %v13
  %v110 = vpop.f32.mrf.mxu0
  %v111 = vadd.f32 0.0, %v110
  %112 = vmatmul.f32.gmra.mxu0 %v14
  %v113 = vpop.f32.mrf.mxu0
  %v114 = vadd.f32 0.0, %v113
  %115 = vmatmul.f32.gmra.mxu0 %v15
  %v116 = vpop.f32.mrf.mxu0
  %v117 = vadd.f32 0.0, %v116
  %118 = vmatmul.f32.gmra.mxu0 %v16
  %v119 = vpop.f32.mrf.mxu0
  %v120 = vadd.f32 0.0, %v119
  %121 = vmatmul.f32.gmra.mxu0 %v17
  %v122 = vpop.f32.mrf.mxu0
  %v123 = vadd.f32 0.0, %v122
  %124 = vmatmul.f32.gmra.mxu0 %v18
  %v125 = vpop.f32.mrf.mxu0
  %v126 = vadd.f32 0.0, %v125
  %127 = vmatmul.f32.gmra.mxu0 %v19
  %v128 = vpop.f32.mrf.mxu0
  %v129 = vadd.f32 0.0, %v128
  %130 = vmatmul.f32.gmra.mxu0 %v20
  %v131 = vpop.f32.mrf.mxu0
  %v132 = vadd.f32 0.0, %v131
  %133 = vmatmul.f32.gmra.mxu0 %v21
  %v134 = vpop.f32.mrf.mxu0
  %v135 = vadd.f32 0.0, %v134
  %136 = vmatmul.f32.gmra.mxu0 %v22
  %v137 = vpop.f32.mrf.mxu0
  %v138 = vadd.f32 0.0, %v137
  %139 = vmatmul.f32.gmra.mxu0 %v23
  %v140 = vpop.f32.mrf.mxu0
  %v141 = vadd.f32 0.0, %v140
  %142 = vmatmul.f32.gmra.mxu0 %v24
  %v143 = vpop.f32.mrf.mxu0
  %v144 = vadd.f32 0.0, %v143
  %145 = vmatmul.f32.gmra.mxu0 %v25
  %v146 = vpop.f32.mrf.mxu0
  %v147 = vadd.f32 0.0, %v146
  %148 = vmatmul.f32.gmra.mxu0 %v26
  %v149 = vpop.f32.mrf.mxu0
  %v150 = vadd.f32 0.0, %v149
  %151 = vmatmul.f32.gmra.mxu0 %v27
  %v152 = vpop.f32.mrf.mxu0
  %v153 = vadd.f32 0.0, %v152
  %154 = vmatmul.f32.gmra.mxu0 %v28
  %v155 = vpop.f32.mrf.mxu0
  %v156 = vadd.f32 0.0, %v155
  %157 = vmatmul.f32.gmra.mxu0 %v29
  %v158 = vpop.f32.mrf.mxu0
  %v159 = vadd.f32 0.0, %v158
  %160 = vmatmul.f32.gmra.mxu0 %v30
  %v161 = vpop.f32.mrf.mxu0
  %v162 = vadd.f32 0.0, %v161
  %163 = vmatmul.f32.gmra.mxu0 %v31
  %v164 = vpop.f32.mrf.mxu0
  %v165 = vadd.f32 0.0, %v164
  %166 = vmatmul.f32.gmra.mxu0 %v32
  %v167 = vpop.f32.mrf.mxu0
  %v168 = vadd.f32 0.0, %v167
  %169 = vmatmul.f32.gmra.mxu0 %v33
  %v170 = vpop.f32.mrf.mxu0
  %v171 = vadd.f32 0.0, %v170
  %172 = vmatmul.f32.gmra.mxu0 %v34
  %v173 = vpop.f32.mrf.mxu0
  %v174 = vadd.f32 0.0, %v173
  %175 = vmatmul.f32.gmra.mxu0 %v35
  %v176 = vpop.f32.mrf.mxu0
  %v177 = vadd.f32 0.0, %v176
  %178 = vmatmul.f32.gmra.mxu0 %v36
  %v179 = vpop.f32.mrf.mxu0
  %v180 = vadd.f32 0.0, %v179
  %181 = vmatmul.f32.gmra.mxu0 %v37
  %v182 = vpop.f32.mrf.mxu0
  %v183 = vadd.f32 0.0, %v182
  %184 = vmatmul.f32.gmra.mxu0 %v38
  %v185 = vpop.f32.mrf.mxu0
  %v186 = vadd.f32 0.0, %v185
  %187 = vmatmul.f32.gmra.mxu0 %v39
  %v188 = vpop.f32.mrf.mxu0
  %v189 = vadd.f32 0.0, %v188
  %190 = vmatmul.f32.gmra.mxu0 %v40
  %v191 = vpop.f32.mrf.mxu0
  %v192 = vadd.f32 0.0, %v191
  %193 = vmatmul.f32.gmra.mxu0 %v41
  %v194 = vpop.f32.mrf.mxu0
  %v195 = vadd.f32 0.0, %v194
  %196 = vmatmul.f32.gmra.mxu0 %v42
  %v197 = vpop.f32.mrf.mxu0
  %v198 = vadd.f32 0.0, %v197
  %199 = vmatmul.f32.gmra.mxu0 %v43
  %v200 = vpop.f32.mrf.mxu0
  %v201 = vadd.f32 0.0, %v200
  %202 = vmatmul.f32.gmra.mxu0 %v44
  %v203 = vpop.f32.mrf.mxu0
  %v204 = vadd.f32 0.0, %v203
  %205 = vmatmul.f32.gmra.mxu0 %v45
  %v206 = vpop.f32.mrf.mxu0
  %v207 = vadd.f32 0.0, %v206
  %208 = vmatmul.f32.gmra.mxu0 %v46
  %v209 = vpop.f32.mrf.mxu0
  %v210 = vadd.f32 0.0, %v209
  %211 = vmatmul.f32.gmra.mxu0 %v47
  %v212 = vpop.f32.mrf.mxu0
  %v213 = vadd.f32 0.0, %v212
  %214 = vmatmul.f32.gmra.mxu0 %v48
  %v215 = vpop.f32.mrf.mxu0
  %v216 = vadd.f32 0.0, %v215
  %217 = vmatmul.f32.gmra.mxu0 %v49
  %v218 = vpop.f32.mrf.mxu0
  %v219 = vadd.f32 0.0, %v218
  %220 = vmatmul.f32.gmra.mxu0 %v50
  %v221 = vpop.f32.mrf.mxu0
  %v222 = vadd.f32 0.0, %v221
  %223 = vmatmul.f32.gmra.mxu0 %v51
  %v224 = vpop.f32.mrf.mxu0
  %v225 = vadd.f32 0.0, %v224
  %226 = vmatmul.f32.gmra.mxu0 %v52
  %v227 = vpop.f32.mrf.mxu0
  %v228 = vadd.f32 0.0, %v227
  %229 = vmatmul.f32.gmra.mxu0 %v53
  %v230 = vpop.f32.mrf.mxu0
  %v231 = vadd.f32 0.0, %v230
  %232 = vmatmul.f32.gmra.mxu0 %v54
  %v233 = vpop.f32.mrf.mxu0
  %v234 = vadd.f32 0.0, %v233
  %235 = vmatmul.f32.gmra.mxu0 %v55
  %v236 = vpop.f32.mrf.mxu0
  %v237 = vadd.f32 0.0, %v236
  %238 = vmatmul.f32.gmra.mxu0 %v56
  %v239 = vpop.f32.mrf.mxu0
  %v240 = vadd.f32 0.0, %v239
  %241 = vmatmul.f32.gmra.mxu0 %v57
  %v242 = vpop.f32.mrf.mxu0
  %v243 = vadd.f32 0.0, %v242
  %244 = vmatmul.f32.gmra.mxu0 %v58
  %v245 = vpop.f32.mrf.mxu0
  %v246 = vadd.f32 0.0, %v245
  %247 = vmatmul.f32.gmra.mxu0 %v59
  %v248 = vpop.f32.mrf.mxu0
  %v249 = vadd.f32 0.0, %v248
  %250 = vmatmul.f32.gmra.mxu0 %v60
  %v251 = vpop.f32.mrf.mxu0
  %v252 = vadd.f32 0.0, %v251
  %253 = vmatmul.f32.gmra.mxu0 %v61
  %v254 = vpop.f32.mrf.mxu0
  %v255 = vadd.f32 0.0, %v254
  %256 = vmatmul.f32.gmra.mxu0 %v62
  %v257 = vpop.f32.mrf.mxu0
  %v258 = vadd.f32 0.0, %v257
  %259 = vmatmul.f32.gmra.mxu0 %v63
  %v260 = vpop.f32.mrf.mxu0
  %v261 = vadd.f32 0.0, %v260
  %262 = vmatmul.f32.gmra.mxu0 %v64
  %v263 = vpop.f32.mrf.mxu0
  %v264 = vadd.f32 0.0, %v263
  %265 = vmatmul.f32.gmra.mxu0 %v65
  %v266 = vpop.f32.mrf.mxu0
  %v267 = vadd.f32 0.0, %v266
  %268 = vmatmul.f32.gmra.mxu0 %v66
  %v269 = vpop.f32.mrf.mxu0
  %v270 = vadd.f32 0.0, %v269
  %271 = vmatmul.f32.gmra.mxu0 %v67
  %v272 = vpop.f32.mrf.mxu0
  %v273 = vadd.f32 0.0, %v272
  %274 = vmatmul.f32.gmra.mxu0 %v68
  %v275 = vpop.f32.mrf.mxu0
  %v276 = vadd.f32 0.0, %v275
  %277 = vmatmul.f32.gmra.mxu0 %v69
  %v278 = vpop.f32.mrf.mxu0
  %v279 = vadd.f32 0.0, %v278
  %280 = vmatmul.f32.gmra.mxu0 %v70
  %v281 = vpop.f32.mrf.mxu0
  %v282 = vadd.f32 0.0, %v281
  %283 = vmatmul.f32.gmra.mxu0 %v71
  %v284 = vpop.f32.mrf.mxu0
  %v285 = vadd.f32 0.0, %v284
  %286 = vmatmul.f32.gmra.mxu0 %v72
  %v287 = vpop.f32.mrf.mxu0
  %v288 = vadd.f32 0.0, %v287
  %289 = vmatmul.f32.gmra.mxu0 %v73
  %v290 = vpop.f32.mrf.mxu0
  %v291 = vadd.f32 0.0, %v290
  %292 = vmatmul.f32.gmra.mxu0 %v74
  %v293 = vpop.f32.mrf.mxu0
  %v294 = vadd.f32 0.0, %v293
  %295 = vmatmul.f32.gmra.mxu0 %v75
  %v296 = vpop.f32.mrf.mxu0
  %v297 = vadd.f32 0.0, %v296
  %298 = vmatmul.f32.gmra.mxu0 %v76
  %v299 = vpop.f32.mrf.mxu0
  %v300 = vadd.f32 0.0, %v299
  %301 = vdwg.mxu0
  %v302 = vadd.f32 %v111, %v114
  %v303 = vadd.f32 %v302, %v117
  %v304 = vadd.f32 %v303, %v120
  %v305 = vadd.f32 %v304, %v123
  %v306 = vadd.f32 %v305, %v126
  %v307 = vadd.f32 %v306, %v129
  %v308 = vadd.f32 %v307, %v132
  %v309 = vadd.f32 %v308, %v135
  %v310 = vadd.f32 %v309, %v138
  %v311 = vadd.f32 %v310, %v141
  %v312 = vadd.f32 %v311, %v144
  %v313 = vadd.f32 %v312, %v147
  %v314 = vadd.f32 %v313, %v150
  %v315 = vadd.f32 %v314, %v153
  %v316 = vadd.f32 %v315, %v156
  %v317 = vadd.f32 %v316, %v159
  %v318 = vadd.f32 %v317, %v162
  %v319 = vadd.f32 %v318, %v165
  %v320 = vadd.f32 %v319, %v168
  %v321 = vadd.f32 %v320, %v171
  %v322 = vadd.f32 %v321, %v174
  %v323 = vadd.f32 %v322, %v177
  %v324 = vadd.f32 %v323, %v180
  %v325 = vadd.f32 %v324, %v183
  %v326 = vadd.f32 %v325, %v186
  %v327 = vadd.f32 %v326, %v189
  %v328 = vadd.f32 %v327, %v192
  %v329 = vadd.f32 %v328, %v195
  %v330 = vadd.f32 %v329, %v198
  %v331 = vadd.f32 %v330, %v201
  %v332 = vadd.f32 %v331, %v204
  %v333 = vadd.f32 %v332, %v207
  %v334 = vadd.f32 %v333, %v210
  %v335 = vadd.f32 %v334, %v213
  %v336 = vadd.f32 %v335, %v216
  %v337 = vadd.f32 %v336, %v219
  %v338 = vadd.f32 %v337, %v222
  %v339 = vadd.f32 %v338, %v225
  %v340 = vadd.f32 %v339, %v228
  %v341 = vadd.f32 %v340, %v231
  %v342 = vadd.f32 %v341, %v234
  %v343 = vadd.f32 %v342, %v237
  %v344 = vadd.f32 %v343, %v240
  %v345 = vadd.f32 %v344, %v243
  %v346 = vadd.f32 %v345, %v246
  %v347 = vadd.f32 %v346, %v249
  %v348 = vadd.f32 %v347, %v252
  %v349 = vadd.f32 %v348, %v255
  %v350 = vadd.f32 %v349, %v258
  %v351 = vadd.f32 %v350, %v261
  %v352 = vadd.f32 %v351, %v264
  %v353 = vadd.f32 %v352, %v267
  %v354 = vadd.f32 %v353, %v270
  %v355 = vadd.f32 %v354, %v273
  %v356 = vadd.f32 %v355, %v276
  %v357 = vadd.f32 %v356, %v279
  %v358 = vadd.f32 %v357, %v282
  %v359 = vadd.f32 %v358, %v285
  %v360 = vadd.f32 %v359, %v288
  %v361 = vadd.f32 %v360, %v291
  %v362 = vadd.f32 %v361, %v294
  %v363 = vadd.f32 %v362, %v297
  %v364 = vadd.f32 %v363, %v300
  %v365 = vrot.slane %v364, 4
  %v366 = vadd.f32 %v364, %v365
  %v367 = vrot.slane %v366, 2
  %v368 = vadd.f32 %v366, %v367
  %v369 = vrot.slane %v368, 1
  %v370 = vadd.f32 %v368, %v369
  %371 = vst [vmem:[%s2] sm:$0x1] %v370
  %v372 = vmul.f32 %v111, %v111
  %v373 = vmul.f32 %v114, %v114
  %v374 = vmul.f32 %v117, %v117
  %v375 = vmul.f32 %v120, %v120
  %v376 = vmul.f32 %v123, %v123
  %v377 = vmul.f32 %v126, %v126
  %v378 = vmul.f32 %v129, %v129
  %v379 = vmul.f32 %v132, %v132
  %v380 = vmul.f32 %v135, %v135
  %v381 = vmul.f32 %v138, %v138
  %v382 = vmul.f32 %v141, %v141
  %v383 = vmul.f32 %v144, %v144
  %v384 = vmul.f32 %v147, %v147
  %v385 = vmul.f32 %v150, %v150
  %v386 = vmul.f32 %v153, %v153
  %v387 = vmul.f32 %v156, %v156
  %v388 = vmul.f32 %v159, %v159
  %v389 = vmul.f32 %v162, %v162
  %v390 = vmul.f32 %v165, %v165
  %v391 = vmul.f32 %v168, %v168
  %v392 = vmul.f32 %v171, %v171
  %v393 = vmul.f32 %v174, %v174
  %v394 = vmul.f32 %v177, %v177
  %v395 = vmul.f32 %v180, %v180
  %v396 = vmul.f32 %v183, %v183
  %v397 = vmul.f32 %v186, %v186
  %v398 = vmul.f32 %v189, %v189
  %v399 = vmul.f32 %v192, %v192
  %v400 = vmul.f32 %v195, %v195
  %v401 = vmul.f32 %v198, %v198
  %v402 = vmul.f32 %v201, %v201
  %v403 = vmul.f32 %v204, %v204
  %v404 = vmul.f32 %v207, %v207
  %v405 = vmul.f32 %v210, %v210
  %v406 = vmul.f32 %v213, %v213
  %v407 = vmul.f32 %v216, %v216
  %v408 = vmul.f32 %v219, %v219
  %v409 = vmul.f32 %v222, %v222
  %v410 = vmul.f32 %v225, %v225
  %v411 = vmul.f32 %v228, %v228
  %v412 = vmul.f32 %v231, %v231
  %v413 = vmul.f32 %v234, %v234
  %v414 = vmul.f32 %v237, %v237
  %v415 = vmul.f32 %v240, %v240
  %v416 = vmul.f32 %v243, %v243
  %v417 = vmul.f32 %v246, %v246
  %v418 = vmul.f32 %v249, %v249
  %v419 = vmul.f32 %v252, %v252
  %v420 = vmul.f32 %v255, %v255
  %v421 = vmul.f32 %v258, %v258
  %v422 = vmul.f32 %v261, %v261
  %v423 = vmul.f32 %v264, %v264
  %v424 = vmul.f32 %v267, %v267
  %v425 = vmul.f32 %v270, %v270
  %v426 = vmul.f32 %v273, %v273
  %v427 = vmul.f32 %v276, %v276
  %v428 = vmul.f32 %v279, %v279
  %v429 = vmul.f32 %v282, %v282
  %v430 = vmul.f32 %v285, %v285
  %v431 = vmul.f32 %v288, %v288
  %v432 = vmul.f32 %v291, %v291
  %v433 = vmul.f32 %v294, %v294
  %v434 = vmul.f32 %v297, %v297
  %v435 = vmul.f32 %v300, %v300
  %v436 = vadd.f32 %v372, %v373
  %v437 = vadd.f32 %v436, %v374
  %v438 = vadd.f32 %v437, %v375
  %v439 = vadd.f32 %v438, %v376
  %v440 = vadd.f32 %v439, %v377
  %v441 = vadd.f32 %v440, %v378
  %v442 = vadd.f32 %v441, %v379
  %v443 = vadd.f32 %v442, %v380
  %v444 = vadd.f32 %v443, %v381
  %v445 = vadd.f32 %v444, %v382
  %v446 = vadd.f32 %v445, %v383
  %v447 = vadd.f32 %v446, %v384
  %v448 = vadd.f32 %v447, %v385
  %v449 = vadd.f32 %v448, %v386
  %v450 = vadd.f32 %v449, %v387
  %v451 = vadd.f32 %v450, %v388
  %v452 = vadd.f32 %v451, %v389
  %v453 = vadd.f32 %v452, %v390
  %v454 = vadd.f32 %v453, %v391
  %v455 = vadd.f32 %v454, %v392
  %v456 = vadd.f32 %v455, %v393
  %v457 = vadd.f32 %v456, %v394
  %v458 = vadd.f32 %v457, %v395
  %v459 = vadd.f32 %v458, %v396
  %v460 = vadd.f32 %v459, %v397
  %v461 = vadd.f32 %v460, %v398
  %v462 = vadd.f32 %v461, %v399
  %v463 = vadd.f32 %v462, %v400
  %v464 = vadd.f32 %v463, %v401
  %v465 = vadd.f32 %v464, %v402
  %v466 = vadd.f32 %v465, %v403
  %v467 = vadd.f32 %v466, %v404
  %v468 = vadd.f32 %v467, %v405
  %v469 = vadd.f32 %v468, %v406
  %v470 = vadd.f32 %v469, %v407
  %v471 = vadd.f32 %v470, %v408
  %v472 = vadd.f32 %v471, %v409
  %v473 = vadd.f32 %v472, %v410
  %v474 = vadd.f32 %v473, %v411
  %v475 = vadd.f32 %v474, %v412
  %v476 = vadd.f32 %v475, %v413
  %v477 = vadd.f32 %v476, %v414
  %v478 = vadd.f32 %v477, %v415
  %v479 = vadd.f32 %v478, %v416
  %v480 = vadd.f32 %v479, %v417
  %v481 = vadd.f32 %v480, %v418
  %v482 = vadd.f32 %v481, %v419
  %v483 = vadd.f32 %v482, %v420
  %v484 = vadd.f32 %v483, %v421
  %v485 = vadd.f32 %v484, %v422
  %v486 = vadd.f32 %v485, %v423
  %v487 = vadd.f32 %v486, %v424
  %v488 = vadd.f32 %v487, %v425
  %v489 = vadd.f32 %v488, %v426
  %v490 = vadd.f32 %v489, %v427
  %v491 = vadd.f32 %v490, %v428
  %v492 = vadd.f32 %v491, %v429
  %v493 = vadd.f32 %v492, %v430
  %v494 = vadd.f32 %v493, %v431
  %v495 = vadd.f32 %v494, %v432
  %v496 = vadd.f32 %v495, %v433
  %v497 = vadd.f32 %v496, %v434
  %v498 = vadd.f32 %v497, %v435
  %v499 = vrot.slane %v498, 4
  %v500 = vadd.f32 %v498, %v499
  %v501 = vrot.slane %v500, 2
  %v502 = vadd.f32 %v500, %v501
  %v503 = vrot.slane %v502, 1
  %v504 = vadd.f32 %v502, %v503
  %505 = vst [vmem:[%s3] sm:$0x1] %v504
  // Predicated region
  $region10: #{res_bottle_block.4} parent=0 // pred_check
    _
  $region11: #{res_bottle_block.4} parent=0 // pred_check_branch
    %507 = sbr.rel (0) target = $region13
  $region12: #{res_bottle_block.4} parent=0 // pred_region
    _
  $region13: #{res_bottle_block.4} parent=0 // pred_fallthru
    _
  // Predicated region
  $region14: #{res_bottle_block.4} parent=0 // pred_check
    _
  $region15: #{res_bottle_block.4} parent=0 // pred_check_branch
    %509 = sbr.rel (0) target = $region17
  $region16: #{res_bottle_block.4} parent=0 // pred_region
    _
  $region17: #{res_bottle_block.4} parent=0 // pred_fallthru
    _
  // Predicated region
  $region18: #{res_bottle_block.4} parent=0 // pred_check
    _
  $region19: #{res_bottle_block.4} parent=0 // pred_check_branch
    %511 = sbr.rel (0) target = $region21
  $region20: #{res_bottle_block.4} parent=0 // pred_region
    _
  $region21: #{res_bottle_block.4} parent=0 // pred_fallthru
    _
  // Predicated region
  $region22: #{res_bottle_block.4} parent=0 // pred_check
    _
  $region23: #{res_bottle_block.4} parent=0 // pred_check_branch
    %513 = sbr.rel (0) target = $region25
  $region24: #{res_bottle_block.4} parent=0 // pred_region
    _
  $region25: #{res_bottle_block.4} parent=0 // pred_fallthru
    _

// kernel: res_bottle_block.6
$region0: #{res_bottle_block.6}
  #allocation0 [shape = 'u32[]', space=smem, size = 0x4, offset = 0x4, fixed_abs, tag = 'smem constant byte address 0x4 - core index']
  #allocation1 [shape = 'u32[72,128]{1,0:T(1,128)}', space=vmem, size = 0x9000, scoped, tag = 'internal scratch']
  %s0 = inlined_call_operand.vmem [shape: f32[512,128], index: 0, kind: input, shape index: {}]
  %s1 = inlined_call_operand.vmem [shape: f32[1,128], index: 1, kind: input, shape index: {}]
  %s2 = inlined_call_operand.vmem [shape: f32[1,128], index: 2, kind: input, shape index: {}]
  %s3 = inlined_call_operand.vmem [shape: f32[128,128], index: 3, kind: input, shape index: {}]
  %s4 = inlined_call_operand.vmem [shape: f32[1,1,128], index: 4, kind: output, shape index: {0}]
  %s5 = inlined_call_operand.vmem [shape: f32[1,1,128], index: 5, kind: output, shape index: {1}]
  %6 = xla_tuple %s4, %s5
  %s7 = sld [smem:[#allocation0]]
  $region34: #{res_bottle_block.6} parent=0
    _
  %s9 = ssub.s32 1, %s7
  %s10 = scalar_select 0, %s9, %s7
  // Predicated region
  $region2: #{res_bottle_block.6} parent=0 // pred_check
    _
  $region3: #{res_bottle_block.6} parent=0 // pred_check_branch
    %12 = sbr.rel (0) target = $region5
  $region4: #{res_bottle_block.6} parent=0 // pred_region
    _
  $region5: #{res_bottle_block.6} parent=0 // pred_fallthru
    _
  // Predicated region
  $region6: #{res_bottle_block.6} parent=0 // pred_check
    _
  $region7: #{res_bottle_block.6} parent=0 // pred_check_branch
    %14 = sbr.rel (0) target = $region9
  $region8: #{res_bottle_block.6} parent=0 // pred_region
    _
  $region9: #{res_bottle_block.6} parent=0 // pred_fallthru
    _
  // Predicated region
  $region10: #{res_bottle_block.6} parent=0 // pred_check
    _
  $region11: #{res_bottle_block.6} parent=0 // pred_check_branch
    %16 = sbr.rel (0) target = $region13
  $region12: #{res_bottle_block.6} parent=0 // pred_region
    _
  $region13: #{res_bottle_block.6} parent=0 // pred_fallthru
    _
  // Predicated region
  $region14: #{res_bottle_block.6} parent=0 // pred_check
    _
  $region15: #{res_bottle_block.6} parent=0 // pred_check_branch
    %18 = sbr.rel (0) target = $region17
  $region16: #{res_bottle_block.6} parent=0 // pred_region
    _
  $region17: #{res_bottle_block.6} parent=0 // pred_fallthru
    _
  %v19 = vld [vmem:[%s0] sm:$0xff]
  %v20 = vld [vmem:[%s0 + $0x8] sm:$0xff]
  %v21 = vld [vmem:[%s0 + $0x10] sm:$0xff]
  %v22 = vld [vmem:[%s0 + $0x18] sm:$0xff]
  %v23 = vld [vmem:[%s0 + $0x20] sm:$0xff]
  %v24 = vld [vmem:[%s0 + $0x28] sm:$0xff]
  %v25 = vld [vmem:[%s0 + $0x30] sm:$0xff]
  %v26 = vld [vmem:[%s0 + $0x38] sm:$0xff]
  %v27 = vld [vmem:[%s0 + $0x40] sm:$0xff]
  %v28 = vld [vmem:[%s0 + $0x48] sm:$0xff]
  %v29 = vld [vmem:[%s0 + $0x50] sm:$0xff]
  %v30 = vld [vmem:[%s0 + $0x58] sm:$0xff]
  %v31 = vld [vmem:[%s0 + $0x60] sm:$0xff]
  %v32 = vld [vmem:[%s0 + $0x68] sm:$0xff]
  %v33 = vld [vmem:[%s0 + $0x70] sm:$0xff]
  %v34 = vld [vmem:[%s0 + $0x78] sm:$0xff]
  %v35 = vld [vmem:[%s0 + $0x80] sm:$0xff]
  %v36 = vld [vmem:[%s0 + $0x88] sm:$0xff]
  %v37 = vld [vmem:[%s0 + $0x90] sm:$0xff]
  %v38 = vld [vmem:[%s0 + $0x98] sm:$0xff]
  %v39 = vld [vmem:[%s0 + $0xa0] sm:$0xff]
  %v40 = vld [vmem:[%s0 + $0xa8] sm:$0xff]
  %v41 = vld [vmem:[%s0 + $0xb0] sm:$0xff]
  %v42 = vld [vmem:[%s0 + $0xb8] sm:$0xff]
  %v43 = vld [vmem:[%s0 + $0xc0] sm:$0xff]
  %v44 = vld [vmem:[%s0 + $0xc8] sm:$0xff]
  %v45 = vld [vmem:[%s0 + $0xd0] sm:$0xff]
  %v46 = vld [vmem:[%s0 + $0xd8] sm:$0xff]
  %v47 = vld [vmem:[%s0 + $0xe0] sm:$0xff]
  %v48 = vld [vmem:[%s0 + $0xe8] sm:$0xff]
  %v49 = vld [vmem:[%s0 + $0xf0] sm:$0xff]
  %v50 = vld [vmem:[%s0 + $0xf8] sm:$0xff]
  %v51 = vld [vmem:[%s0 + $0x100] sm:$0xff]
  %v52 = vld [vmem:[%s0 + $0x108] sm:$0xff]
  %v53 = vld [vmem:[%s0 + $0x110] sm:$0xff]
  %v54 = vld [vmem:[%s0 + $0x118] sm:$0xff]
  %v55 = vld [vmem:[%s0 + $0x120] sm:$0xff]
  %v56 = vld [vmem:[%s0 + $0x128] sm:$0xff]
  %v57 = vld [vmem:[%s0 + $0x130] sm:$0xff]
  %v58 = vld [vmem:[%s0 + $0x138] sm:$0xff]
  %v59 = vld [vmem:[%s0 + $0x140] sm:$0xff]
  %v60 = vld [vmem:[%s0 + $0x148] sm:$0xff]
  %v61 = vld [vmem:[%s0 + $0x150] sm:$0xff]
  %v62 = vld [vmem:[%s0 + $0x158] sm:$0xff]
  %v63 = vld [vmem:[%s0 + $0x160] sm:$0xff]
  %v64 = vld [vmem:[%s0 + $0x168] sm:$0xff]
  %v65 = vld [vmem:[%s0 + $0x170] sm:$0xff]
  %v66 = vld [vmem:[%s0 + $0x178] sm:$0xff]
  %v67 = vld [vmem:[%s0 + $0x180] sm:$0xff]
  %v68 = vld [vmem:[%s0 + $0x188] sm:$0xff]
  %v69 = vld [vmem:[%s0 + $0x190] sm:$0xff]
  %v70 = vld [vmem:[%s0 + $0x198] sm:$0xff]
  %v71 = vld [vmem:[%s0 + $0x1a0] sm:$0xff]
  %v72 = vld [vmem:[%s0 + $0x1a8] sm:$0xff]
  %v73 = vld [vmem:[%s0 + $0x1b0] sm:$0xff]
  %v74 = vld [vmem:[%s0 + $0x1b8] sm:$0xff]
  %v75 = vld [vmem:[%s0 + $0x1c0] sm:$0xff]
  %v76 = vld [vmem:[%s0 + $0x1c8] sm:$0xff]
  %v77 = vld [vmem:[%s0 + $0x1d0] sm:$0xff]
  %v78 = vld [vmem:[%s0 + $0x1d8] sm:$0xff]
  %v79 = vld [vmem:[%s0 + $0x1e0] sm:$0xff]
  %v80 = vld [vmem:[%s0 + $0x1e8] sm:$0xff]
  %v81 = vld [vmem:[%s0 + $0x1f0] sm:$0xff]
  %v82 = vld [vmem:[%s0 + $0x1f8] sm:$0xff]
  %v83 = vld [vmem:[%s1] sm:$0x1]
  %v85 = vperm.slane %v83, 0
  %v87 = vmul.f32 %v19, %v85
  %v88 = vmul.f32 %v20, %v85
  %v89 = vmul.f32 %v21, %v85
  %v90 = vmul.f32 %v22, %v85
  %v91 = vmul.f32 %v23, %v85
  %v92 = vmul.f32 %v24, %v85
  %v93 = vmul.f32 %v25, %v85
  %v94 = vmul.f32 %v26, %v85
  %v95 = vmul.f32 %v27, %v85
  %v96 = vmul.f32 %v28, %v85
  %v97 = vmul.f32 %v29, %v85
  %v98 = vmul.f32 %v30, %v85
  %v99 = vmul.f32 %v31, %v85
  %v100 = vmul.f32 %v32, %v85
  %v101 = vmul.f32 %v33, %v85
  %v102 = vmul.f32 %v34, %v85
  %v103 = vmul.f32 %v35, %v85
  %v104 = vmul.f32 %v36, %v85
  %v105 = vmul.f32 %v37, %v85
  %v106 = vmul.f32 %v38, %v85
  %v107 = vmul.f32 %v39, %v85
  %v108 = vmul.f32 %v40, %v85
  %v109 = vmul.f32 %v41, %v85
  %v110 = vmul.f32 %v42, %v85
  %v111 = vmul.f32 %v43, %v85
  %v112 = vmul.f32 %v44, %v85
  %v113 = vmul.f32 %v45, %v85
  %v114 = vmul.f32 %v46, %v85
  %v115 = vmul.f32 %v47, %v85
  %v116 = vmul.f32 %v48, %v85
  %v117 = vmul.f32 %v49, %v85
  %v118 = vmul.f32 %v50, %v85
  %v119 = vmul.f32 %v51, %v85
  %v120 = vmul.f32 %v52, %v85
  %v121 = vmul.f32 %v53, %v85
  %v122 = vmul.f32 %v54, %v85
  %v123 = vmul.f32 %v55, %v85
  %v124 = vmul.f32 %v56, %v85
  %v125 = vmul.f32 %v57, %v85
  %v126 = vmul.f32 %v58, %v85
  %v127 = vmul.f32 %v59, %v85
  %v128 = vmul.f32 %v60, %v85
  %v129 = vmul.f32 %v61, %v85
  %v130 = vmul.f32 %v62, %v85
  %v131 = vmul.f32 %v63, %v85
  %v132 = vmul.f32 %v64, %v85
  %v133 = vmul.f32 %v65, %v85
  %v134 = vmul.f32 %v66, %v85
  %v135 = vmul.f32 %v67, %v85
  %v136 = vmul.f32 %v68, %v85
  %v137 = vmul.f32 %v69, %v85
  %v138 = vmul.f32 %v70, %v85
  %v139 = vmul.f32 %v71, %v85
  %v140 = vmul.f32 %v72, %v85
  %v141 = vmul.f32 %v73, %v85
  %v142 = vmul.f32 %v74, %v85
  %v143 = vmul.f32 %v75, %v85
  %v144 = vmul.f32 %v76, %v85
  %v145 = vmul.f32 %v77, %v85
  %v146 = vmul.f32 %v78, %v85
  %v147 = vmul.f32 %v79, %v85
  %v148 = vmul.f32 %v80, %v85
  %v149 = vmul.f32 %v81, %v85
  %v150 = vmul.f32 %v82, %v85
  %v151 = vld [vmem:[%s2] sm:$0x1]
  %v153 = vperm.slane %v151, 0
  %v155 = vadd.f32 %v87, %v153
  %v156 = vadd.f32 %v88, %v153
  %v157 = vadd.f32 %v89, %v153
  %v158 = vadd.f32 %v90, %v153
  %v159 = vadd.f32 %v91, %v153
  %v160 = vadd.f32 %v92, %v153
  %v161 = vadd.f32 %v93, %v153
  %v162 = vadd.f32 %v94, %v153
  %v163 = vadd.f32 %v95, %v153
  %v164 = vadd.f32 %v96, %v153
  %v165 = vadd.f32 %v97, %v153
  %v166 = vadd.f32 %v98, %v153
  %v167 = vadd.f32 %v99, %v153
  %v168 = vadd.f32 %v100, %v153
  %v169 = vadd.f32 %v101, %v153
  %v170 = vadd.f32 %v102, %v153
  %v171 = vadd.f32 %v103, %v153
  %v172 = vadd.f32 %v104, %v153
  %v173 = vadd.f32 %v105, %v153
  %v174 = vadd.f32 %v106, %v153
  %v175 = vadd.f32 %v107, %v153
  %v176 = vadd.f32 %v108, %v153
  %v177 = vadd.f32 %v109, %v153
  %v178 = vadd.f32 %v110, %v153
  %v179 = vadd.f32 %v111, %v153
  %v180 = vadd.f32 %v112, %v153
  %v181 = vadd.f32 %v113, %v153
  %v182 = vadd.f32 %v114, %v153
  %v183 = vadd.f32 %v115, %v153
  %v184 = vadd.f32 %v116, %v153
  %v185 = vadd.f32 %v117, %v153
  %v186 = vadd.f32 %v118, %v153
  %v187 = vadd.f32 %v119, %v153
  %v188 = vadd.f32 %v120, %v153
  %v189 = vadd.f32 %v121, %v153
  %v190 = vadd.f32 %v122, %v153
  %v191 = vadd.f32 %v123, %v153
  %v192 = vadd.f32 %v124, %v153
  %v193 = vadd.f32 %v125, %v153
  %v194 = vadd.f32 %v126, %v153
  %v195 = vadd.f32 %v127, %v153
  %v196 = vadd.f32 %v128, %v153
  %v197 = vadd.f32 %v129, %v153
  %v198 = vadd.f32 %v130, %v153
  %v199 = vadd.f32 %v131, %v153
  %v200 = vadd.f32 %v132, %v153
  %v201 = vadd.f32 %v133, %v153
  %v202 = vadd.f32 %v134, %v153
  %v203 = vadd.f32 %v135, %v153
  %v204 = vadd.f32 %v136, %v153
  %v205 = vadd.f32 %v137, %v153
  %v206 = vadd.f32 %v138, %v153
  %v207 = vadd.f32 %v139, %v153
  %v208 = vadd.f32 %v140, %v153
  %v209 = vadd.f32 %v141, %v153
  %v210 = vadd.f32 %v142, %v153
  %v211 = vadd.f32 %v143, %v153
  %v212 = vadd.f32 %v144, %v153
  %v213 = vadd.f32 %v145, %v153
  %v214 = vadd.f32 %v146, %v153
  %v215 = vadd.f32 %v147, %v153
  %v216 = vadd.f32 %v148, %v153
  %v217 = vadd.f32 %v149, %v153
  %v218 = vadd.f32 %v150, %v153
  %v219 = vmax.f32 %v155, 0.0
  %v220 = vmax.f32 %v156, 0.0
  %v221 = vmax.f32 %v157, 0.0
  %v222 = vmax.f32 %v158, 0.0
  %v223 = vmax.f32 %v159, 0.0
  %v224 = vmax.f32 %v160, 0.0
  %v225 = vmax.f32 %v161, 0.0
  %v226 = vmax.f32 %v162, 0.0
  %v227 = vmax.f32 %v163, 0.0
  %v228 = vmax.f32 %v164, 0.0
  %v229 = vmax.f32 %v165, 0.0
  %v230 = vmax.f32 %v166, 0.0
  %v231 = vmax.f32 %v167, 0.0
  %v232 = vmax.f32 %v168, 0.0
  %v233 = vmax.f32 %v169, 0.0
  %v234 = vmax.f32 %v170, 0.0
  %v235 = vmax.f32 %v171, 0.0
  %v236 = vmax.f32 %v172, 0.0
  %v237 = vmax.f32 %v173, 0.0
  %v238 = vmax.f32 %v174, 0.0
  %v239 = vmax.f32 %v175, 0.0
  %v240 = vmax.f32 %v176, 0.0
  %v241 = vmax.f32 %v177, 0.0
  %v242 = vmax.f32 %v178, 0.0
  %v243 = vmax.f32 %v179, 0.0
  %v244 = vmax.f32 %v180, 0.0
  %v245 = vmax.f32 %v181, 0.0
  %v246 = vmax.f32 %v182, 0.0
  %v247 = vmax.f32 %v183, 0.0
  %v248 = vmax.f32 %v184, 0.0
  %v249 = vmax.f32 %v185, 0.0
  %v250 = vmax.f32 %v186, 0.0
  %v251 = vmax.f32 %v187, 0.0
  %v252 = vmax.f32 %v188, 0.0
  %v253 = vmax.f32 %v189, 0.0
  %v254 = vmax.f32 %v190, 0.0
  %v255 = vmax.f32 %v191, 0.0
  %v256 = vmax.f32 %v192, 0.0
  %v257 = vmax.f32 %v193, 0.0
  %v258 = vmax.f32 %v194, 0.0
  %v259 = vmax.f32 %v195, 0.0
  %v260 = vmax.f32 %v196, 0.0
  %v261 = vmax.f32 %v197, 0.0
  %v262 = vmax.f32 %v198, 0.0
  %v263 = vmax.f32 %v199, 0.0
  %v264 = vmax.f32 %v200, 0.0
  %v265 = vmax.f32 %v201, 0.0
  %v266 = vmax.f32 %v202, 0.0
  %v267 = vmax.f32 %v203, 0.0
  %v268 = vmax.f32 %v204, 0.0
  %v269 = vmax.f32 %v205, 0.0
  %v270 = vmax.f32 %v206, 0.0
  %v271 = vmax.f32 %v207, 0.0
  %v272 = vmax.f32 %v208, 0.0
  %v273 = vmax.f32 %v209, 0.0
  %v274 = vmax.f32 %v210, 0.0
  %v275 = vmax.f32 %v211, 0.0
  %v276 = vmax.f32 %v212, 0.0
  %v277 = vmax.f32 %v213, 0.0
  %v278 = vmax.f32 %v214, 0.0
  %v279 = vmax.f32 %v215, 0.0
  %v280 = vmax.f32 %v216, 0.0
  %v281 = vmax.f32 %v217, 0.0
  %v282 = vmax.f32 %v218, 0.0
  %v283 = vld [vmem:[%s3] sm:$0xff]
  %v284 = vld [vmem:[%s3 + $0x8] sm:$0xff]
  %v285 = vld [vmem:[%s3 + $0x10] sm:$0xff]
  %v286 = vld [vmem:[%s3 + $0x18] sm:$0xff]
  %v287 = vld [vmem:[%s3 + $0x20] sm:$0xff]
  %v288 = vld [vmem:[%s3 + $0x28] sm:$0xff]
  %v289 = vld [vmem:[%s3 + $0x30] sm:$0xff]
  %v290 = vld [vmem:[%s3 + $0x38] sm:$0xff]
  %v291 = vld [vmem:[%s3 + $0x40] sm:$0xff]
  %v292 = vld [vmem:[%s3 + $0x48] sm:$0xff]
  %v293 = vld [vmem:[%s3 + $0x50] sm:$0xff]
  %v294 = vld [vmem:[%s3 + $0x58] sm:$0xff]
  %v295 = vld [vmem:[%s3 + $0x60] sm:$0xff]
  %v296 = vld [vmem:[%s3 + $0x68] sm:$0xff]
  %v297 = vld [vmem:[%s3 + $0x70] sm:$0xff]
  %v298 = vld [vmem:[%s3 + $0x78] sm:$0xff]
  %299 = vmatpush.msra.mxu0 %v298
  %300 = vmatpush.msra.mxu0 %v297
  %301 = vmatpush.msra.mxu0 %v296
  %302 = vmatpush.msra.mxu0 %v295
  %303 = vmatpush.msra.mxu0 %v294
  %304 = vmatpush.msra.mxu0 %v293
  %305 = vmatpush.msra.mxu0 %v292
  %306 = vmatpush.msra.mxu0 %v291
  %307 = vmatpush.msra.mxu0 %v290
  %308 = vmatpush.msra.mxu0 %v289
  %309 = vmatpush.msra.mxu0 %v288
  %310 = vmatpush.msra.mxu0 %v287
  %311 = vmatpush.msra.mxu0 %v286
  %312 = vmatpush.msra.mxu0 %v285
  %313 = vmatpush.msra.mxu0 %v284
  %314 = vmatpush.msra.mxu0 %v283
  %315 = vmatmul.f32.gmra.mxu0 %v219
  %v316 = vpop.f32.mrf.mxu0
  %v317 = vadd.f32 0.0, %v316
  %318 = vmatmul.f32.gmra.mxu0 %v220
  %v319 = vpop.f32.mrf.mxu0
  %v320 = vadd.f32 0.0, %v319
  %321 = vmatmul.f32.gmra.mxu0 %v221
  %v322 = vpop.f32.mrf.mxu0
  %v323 = vadd.f32 0.0, %v322
  %324 = vmatmul.f32.gmra.mxu0 %v222
  %v325 = vpop.f32.mrf.mxu0
  %v326 = vadd.f32 0.0, %v325
  %327 = vmatmul.f32.gmra.mxu0 %v223
  %v328 = vpop.f32.mrf.mxu0
  %v329 = vadd.f32 0.0, %v328
  %330 = vmatmul.f32.gmra.mxu0 %v224
  %v331 = vpop.f32.mrf.mxu0
  %v332 = vadd.f32 0.0, %v331
  %333 = vmatmul.f32.gmra.mxu0 %v225
  %v334 = vpop.f32.mrf.mxu0
  %v335 = vadd.f32 0.0, %v334
  %336 = vmatmul.f32.gmra.mxu0 %v226
  %v337 = vpop.f32.mrf.mxu0
  %v338 = vadd.f32 0.0, %v337
  %339 = vmatmul.f32.gmra.mxu0 %v227
  %v340 = vpop.f32.mrf.mxu0
  %v341 = vadd.f32 0.0, %v340
  %342 = vmatmul.f32.gmra.mxu0 %v228
  %v343 = vpop.f32.mrf.mxu0
  %v344 = vadd.f32 0.0, %v343
  %345 = vmatmul.f32.gmra.mxu0 %v229
  %v346 = vpop.f32.mrf.mxu0
  %v347 = vadd.f32 0.0, %v346
  %348 = vmatmul.f32.gmra.mxu0 %v230
  %v349 = vpop.f32.mrf.mxu0
  %v350 = vadd.f32 0.0, %v349
  %351 = vmatmul.f32.gmra.mxu0 %v231
  %v352 = vpop.f32.mrf.mxu0
  %v353 = vadd.f32 0.0, %v352
  %354 = vmatmul.f32.gmra.mxu0 %v232
  %v355 = vpop.f32.mrf.mxu0
  %v356 = vadd.f32 0.0, %v355
  %357 = vmatmul.f32.gmra.mxu0 %v233
  %v358 = vpop.f32.mrf.mxu0
  %v359 = vadd.f32 0.0, %v358
  %360 = vmatmul.f32.gmra.mxu0 %v234
  %v361 = vpop.f32.mrf.mxu0
  %v362 = vadd.f32 0.0, %v361
  %363 = vmatmul.f32.gmra.mxu0 %v235
  %v364 = vpop.f32.mrf.mxu0
  %v365 = vadd.f32 0.0, %v364
  %366 = vmatmul.f32.gmra.mxu0 %v236
  %v367 = vpop.f32.mrf.mxu0
  %v368 = vadd.f32 0.0, %v367
  %369 = vmatmul.f32.gmra.mxu0 %v237
  %v370 = vpop.f32.mrf.mxu0
  %v371 = vadd.f32 0.0, %v370
  %372 = vmatmul.f32.gmra.mxu0 %v238
  %v373 = vpop.f32.mrf.mxu0
  %v374 = vadd.f32 0.0, %v373
  %375 = vmatmul.f32.gmra.mxu0 %v239
  %v376 = vpop.f32.mrf.mxu0
  %v377 = vadd.f32 0.0, %v376
  %378 = vmatmul.f32.gmra.mxu0 %v240
  %v379 = vpop.f32.mrf.mxu0
  %v380 = vadd.f32 0.0, %v379
  %381 = vmatmul.f32.gmra.mxu0 %v241
  %v382 = vpop.f32.mrf.mxu0
  %v383 = vadd.f32 0.0, %v382
  %384 = vmatmul.f32.gmra.mxu0 %v242
  %v385 = vpop.f32.mrf.mxu0
  %v386 = vadd.f32 0.0, %v385
  %387 = vmatmul.f32.gmra.mxu0 %v243
  %v388 = vpop.f32.mrf.mxu0
  %v389 = vadd.f32 0.0, %v388
  %390 = vmatmul.f32.gmra.mxu0 %v244
  %v391 = vpop.f32.mrf.mxu0
  %v392 = vadd.f32 0.0, %v391
  %393 = vmatmul.f32.gmra.mxu0 %v245
  %v394 = vpop.f32.mrf.mxu0
  %v395 = vadd.f32 0.0, %v394
  %396 = vmatmul.f32.gmra.mxu0 %v246
  %v397 = vpop.f32.mrf.mxu0
  %v398 = vadd.f32 0.0, %v397
  %399 = vmatmul.f32.gmra.mxu0 %v247
  %v400 = vpop.f32.mrf.mxu0
  %v401 = vadd.f32 0.0, %v400
  %402 = vmatmul.f32.gmra.mxu0 %v248
  %v403 = vpop.f32.mrf.mxu0
  %v404 = vadd.f32 0.0, %v403
  %405 = vmatmul.f32.gmra.mxu0 %v249
  %v406 = vpop.f32.mrf.mxu0
  %v407 = vadd.f32 0.0, %v406
  %408 = vmatmul.f32.gmra.mxu0 %v250
  %v409 = vpop.f32.mrf.mxu0
  %v410 = vadd.f32 0.0, %v409
  %411 = vmatmul.f32.gmra.mxu0 %v251
  %v412 = vpop.f32.mrf.mxu0
  %v413 = vadd.f32 0.0, %v412
  %414 = vmatmul.f32.gmra.mxu0 %v252
  %v415 = vpop.f32.mrf.mxu0
  %v416 = vadd.f32 0.0, %v415
  %417 = vmatmul.f32.gmra.mxu0 %v253
  %v418 = vpop.f32.mrf.mxu0
  %v419 = vadd.f32 0.0, %v418
  %420 = vmatmul.f32.gmra.mxu0 %v254
  %v421 = vpop.f32.mrf.mxu0
  %v422 = vadd.f32 0.0, %v421
  %423 = vmatmul.f32.gmra.mxu0 %v255
  %v424 = vpop.f32.mrf.mxu0
  %v425 = vadd.f32 0.0, %v424
  %426 = vmatmul.f32.gmra.mxu0 %v256
  %v427 = vpop.f32.mrf.mxu0
  %v428 = vadd.f32 0.0, %v427
  %429 = vmatmul.f32.gmra.mxu0 %v257
  %v430 = vpop.f32.mrf.mxu0
  %v431 = vadd.f32 0.0, %v430
  %432 = vmatmul.f32.gmra.mxu0 %v258
  %v433 = vpop.f32.mrf.mxu0
  %v434 = vadd.f32 0.0, %v433
  %435 = vmatmul.f32.gmra.mxu0 %v259
  %v436 = vpop.f32.mrf.mxu0
  %v437 = vadd.f32 0.0, %v436
  %438 = vmatmul.f32.gmra.mxu0 %v260
  %v439 = vpop.f32.mrf.mxu0
  %v440 = vadd.f32 0.0, %v439
  %441 = vmatmul.f32.gmra.mxu0 %v261
  %v442 = vpop.f32.mrf.mxu0
  %v443 = vadd.f32 0.0, %v442
  %444 = vmatmul.f32.gmra.mxu0 %v262
  %v445 = vpop.f32.mrf.mxu0
  %v446 = vadd.f32 0.0, %v445
  %447 = vmatmul.f32.gmra.mxu0 %v263
  %v448 = vpop.f32.mrf.mxu0
  %v449 = vadd.f32 0.0, %v448
  %450 = vmatmul.f32.gmra.mxu0 %v264
  %v451 = vpop.f32.mrf.mxu0
  %v452 = vadd.f32 0.0, %v451
  %453 = vmatmul.f32.gmra.mxu0 %v265
  %v454 = vpop.f32.mrf.mxu0
  %v455 = vadd.f32 0.0, %v454
  %456 = vmatmul.f32.gmra.mxu0 %v266
  %v457 = vpop.f32.mrf.mxu0
  %v458 = vadd.f32 0.0, %v457
  %459 = vmatmul.f32.gmra.mxu0 %v267
  %v460 = vpop.f32.mrf.mxu0
  %v461 = vadd.f32 0.0, %v460
  %462 = vmatmul.f32.gmra.mxu0 %v268
  %v463 = vpop.f32.mrf.mxu0
  %v464 = vadd.f32 0.0, %v463
  %465 = vmatmul.f32.gmra.mxu0 %v269
  %v466 = vpop.f32.mrf.mxu0
  %v467 = vadd.f32 0.0, %v466
  %468 = vmatmul.f32.gmra.mxu0 %v270
  %v469 = vpop.f32.mrf.mxu0
  %v470 = vadd.f32 0.0, %v469
  %471 = vmatmul.f32.gmra.mxu0 %v271
  %v472 = vpop.f32.mrf.mxu0
  %v473 = vadd.f32 0.0, %v472
  %474 = vmatmul.f32.gmra.mxu0 %v272
  %v475 = vpop.f32.mrf.mxu0
  %v476 = vadd.f32 0.0, %v475
  %477 = vmatmul.f32.gmra.mxu0 %v273
  %v478 = vpop.f32.mrf.mxu0
  %v479 = vadd.f32 0.0, %v478
  %480 = vmatmul.f32.gmra.mxu0 %v274
  %v481 = vpop.f32.mrf.mxu0
  %v482 = vadd.f32 0.0, %v481
  %483 = vmatmul.f32.gmra.mxu0 %v275
  %v484 = vpop.f32.mrf.mxu0
  %v485 = vadd.f32 0.0, %v484
  %486 = vmatmul.f32.gmra.mxu0 %v276
  %v487 = vpop.f32.mrf.mxu0
  %v488 = vadd.f32 0.0, %v487
  %489 = vmatmul.f32.gmra.mxu0 %v277
  %v490 = vpop.f32.mrf.mxu0
  %v491 = vadd.f32 0.0, %v490
  %492 = vmatmul.f32.gmra.mxu0 %v278
  %v493 = vpop.f32.mrf.mxu0
  %v494 = vadd.f32 0.0, %v493
  %495 = vmatmul.f32.gmra.mxu0 %v279
  %v496 = vpop.f32.mrf.mxu0
  %v497 = vadd.f32 0.0, %v496
  %498 = vmatmul.f32.gmra.mxu0 %v280
  %v499 = vpop.f32.mrf.mxu0
  %v500 = vadd.f32 0.0, %v499
  %501 = vmatmul.f32.gmra.mxu0 %v281
  %v502 = vpop.f32.mrf.mxu0
  %v503 = vadd.f32 0.0, %v502
  %504 = vmatmul.f32.gmra.mxu0 %v282
  %v505 = vpop.f32.mrf.mxu0
  %v506 = vadd.f32 0.0, %v505
  %507 = vdwg.mxu0
  %v508 = vadd.f32 %v317, %v320
  %v509 = vadd.f32 %v508, %v323
  %v510 = vadd.f32 %v509, %v326
  %v511 = vadd.f32 %v510, %v329
  %v512 = vadd.f32 %v511, %v332
  %v513 = vadd.f32 %v512, %v335
  %v514 = vadd.f32 %v513, %v338
  %v515 = vadd.f32 %v514, %v341
  %v516 = vadd.f32 %v515, %v344
  %v517 = vadd.f32 %v516, %v347
  %v518 = vadd.f32 %v517, %v350
  %v519 = vadd.f32 %v518, %v353
  %v520 = vadd.f32 %v519, %v356
  %v521 = vadd.f32 %v520, %v359
  %v522 = vadd.f32 %v521, %v362
  %v523 = vadd.f32 %v522, %v365
  %v524 = vadd.f32 %v523, %v368
  %v525 = vadd.f32 %v524, %v371
  %v526 = vadd.f32 %v525, %v374
  %v527 = vadd.f32 %v526, %v377
  %v528 = vadd.f32 %v527, %v380
  %v529 = vadd.f32 %v528, %v383
  %v530 = vadd.f32 %v529, %v386
  %v531 = vadd.f32 %v530, %v389
  %v532 = vadd.f32 %v531, %v392
  %v533 = vadd.f32 %v532, %v395
  %v534 = vadd.f32 %v533, %v398
  %v535 = vadd.f32 %v534, %v401
  %v536 = vadd.f32 %v535, %v404
  %v537 = vadd.f32 %v536, %v407
  %v538 = vadd.f32 %v537, %v410
  %v539 = vadd.f32 %v538, %v413
  %v540 = vadd.f32 %v539, %v416
  %v541 = vadd.f32 %v540, %v419
  %v542 = vadd.f32 %v541, %v422
  %v543 = vadd.f32 %v542, %v425
  %v544 = vadd.f32 %v543, %v428
  %v545 = vadd.f32 %v544, %v431
  %v546 = vadd.f32 %v545, %v434
  %v547 = vadd.f32 %v546, %v437
  %v548 = vadd.f32 %v547, %v440
  %v549 = vadd.f32 %v548, %v443
  %v550 = vadd.f32 %v549, %v446
  %v551 = vadd.f32 %v550, %v449
  %v552 = vadd.f32 %v551, %v452
  %v553 = vadd.f32 %v552, %v455
  %v554 = vadd.f32 %v553, %v458
  %v555 = vadd.f32 %v554, %v461
  %v556 = vadd.f32 %v555, %v464
  %v557 = vadd.f32 %v556, %v467
  %v558 = vadd.f32 %v557, %v470
  %v559 = vadd.f32 %v558, %v473
  %v560 = vadd.f32 %v559, %v476
  %v561 = vadd.f32 %v560, %v479
  %v562 = vadd.f32 %v561, %v482
  %v563 = vadd.f32 %v562, %v485
  %v564 = vadd.f32 %v563, %v488
  %v565 = vadd.f32 %v564, %v491
  %v566 = vadd.f32 %v565, %v494
  %v567 = vadd.f32 %v566, %v497
  %v568 = vadd.f32 %v567, %v500
  %v569 = vadd.f32 %v568, %v503
  %v570 = vadd.f32 %v569, %v506
  %v571 = vrot.slane %v570, 4
  %v572 = vadd.f32 %v570, %v571
  %v573 = vrot.slane %v572, 2
  %v574 = vadd.f32 %v572, %v573
  %v575 = vrot.slane %v574, 1
  %v576 = vadd.f32 %v574, %v575
  %577 = vst [vmem:[%s4] sm:$0x1] %v576
  %v578 = vmul.f32 %v317, %v317
  %v579 = vmul.f32 %v320, %v320
  %v580 = vmul.f32 %v323, %v323
  %v581 = vmul.f32 %v326, %v326
  %v582 = vmul.f32 %v329, %v329
  %v583 = vmul.f32 %v332, %v332
  %v584 = vmul.f32 %v335, %v335
  %v585 = vmul.f32 %v338, %v338
  %v586 = vmul.f32 %v341, %v341
  %v587 = vmul.f32 %v344, %v344
  %v588 = vmul.f32 %v347, %v347
  %v589 = vmul.f32 %v350, %v350
  %v590 = vmul.f32 %v353, %v353
  %v591 = vmul.f32 %v356, %v356
  %v592 = vmul.f32 %v359, %v359
  %v593 = vmul.f32 %v362, %v362
  %v594 = vmul.f32 %v365, %v365
  %v595 = vmul.f32 %v368, %v368
  %v596 = vmul.f32 %v371, %v371
  %v597 = vmul.f32 %v374, %v374
  %v598 = vmul.f32 %v377, %v377
  %v599 = vmul.f32 %v380, %v380
  %v600 = vmul.f32 %v383, %v383
  %v601 = vmul.f32 %v386, %v386
  %v602 = vmul.f32 %v389, %v389
  %v603 = vmul.f32 %v392, %v392
  %v604 = vmul.f32 %v395, %v395
  %v605 = vmul.f32 %v398, %v398
  %v606 = vmul.f32 %v401, %v401
  %v607 = vmul.f32 %v404, %v404
  %v608 = vmul.f32 %v407, %v407
  %v609 = vmul.f32 %v410, %v410
  %v610 = vmul.f32 %v413, %v413
  %v611 = vmul.f32 %v416, %v416
  %v612 = vmul.f32 %v419, %v419
  %v613 = vmul.f32 %v422, %v422
  %v614 = vmul.f32 %v425, %v425
  %v615 = vmul.f32 %v428, %v428
  %v616 = vmul.f32 %v431, %v431
  %v617 = vmul.f32 %v434, %v434
  %v618 = vmul.f32 %v437, %v437
  %v619 = vmul.f32 %v440, %v440
  %v620 = vmul.f32 %v443, %v443
  %v621 = vmul.f32 %v446, %v446
  %v622 = vmul.f32 %v449, %v449
  %v623 = vmul.f32 %v452, %v452
  %v624 = vmul.f32 %v455, %v455
  %v625 = vmul.f32 %v458, %v458
  %v626 = vmul.f32 %v461, %v461
  %v627 = vmul.f32 %v464, %v464
  %v628 = vmul.f32 %v467, %v467
  %v629 = vmul.f32 %v470, %v470
  %v630 = vmul.f32 %v473, %v473
  %v631 = vmul.f32 %v476, %v476
  %v632 = vmul.f32 %v479, %v479
  %v633 = vmul.f32 %v482, %v482
  %v634 = vmul.f32 %v485, %v485
  %v635 = vmul.f32 %v488, %v488
  %v636 = vmul.f32 %v491, %v491
  %v637 = vmul.f32 %v494, %v494
  %v638 = vmul.f32 %v497, %v497
  %v639 = vmul.f32 %v500, %v500
  %v640 = vmul.f32 %v503, %v503
  %v641 = vmul.f32 %v506, %v506
  %v642 = vadd.f32 %v578, %v579
  %v643 = vadd.f32 %v642, %v580
  %v644 = vadd.f32 %v643, %v581
  %v645 = vadd.f32 %v644, %v582
  %v646 = vadd.f32 %v645, %v583
  %v647 = vadd.f32 %v646, %v584
  %v648 = vadd.f32 %v647, %v585
  %v649 = vadd.f32 %v648, %v586
  %v650 = vadd.f32 %v649, %v587
  %v651 = vadd.f32 %v650, %v588
  %v652 = vadd.f32 %v651, %v589
  %v653 = vadd.f32 %v652, %v590
  %v654 = vadd.f32 %v653, %v591
  %v655 = vadd.f32 %v654, %v592
  %v656 = vadd.f32 %v655, %v593
  %v657 = vadd.f32 %v656, %v594
  %v658 = vadd.f32 %v657, %v595
  %v659 = vadd.f32 %v658, %v596
  %v660 = vadd.f32 %v659, %v597
  %v661 = vadd.f32 %v660, %v598
  %v662 = vadd.f32 %v661, %v599
  %v663 = vadd.f32 %v662, %v600
  %v664 = vadd.f32 %v663, %v601
  %v665 = vadd.f32 %v664, %v602
  %v666 = vadd.f32 %v665, %v603
  %v667 = vadd.f32 %v666, %v604
  %v668 = vadd.f32 %v667, %v605
  %v669 = vadd.f32 %v668, %v606
  %v670 = vadd.f32 %v669, %v607
  %v671 = vadd.f32 %v670, %v608
  %v672 = vadd.f32 %v671, %v609
  %v673 = vadd.f32 %v672, %v610
  %v674 = vadd.f32 %v673, %v611
  %v675 = vadd.f32 %v674, %v612
  %v676 = vadd.f32 %v675, %v613
  %v677 = vadd.f32 %v676, %v614
  %v678 = vadd.f32 %v677, %v615
  %v679 = vadd.f32 %v678, %v616
  %v680 = vadd.f32 %v679, %v617
  %v681 = vadd.f32 %v680, %v618
  %v682 = vadd.f32 %v681, %v619
  %v683 = vadd.f32 %v682, %v620
  %v684 = vadd.f32 %v683, %v621
  %v685 = vadd.f32 %v684, %v622
  %v686 = vadd.f32 %v685, %v623
  %v687 = vadd.f32 %v686, %v624
  %v688 = vadd.f32 %v687, %v625
  %v689 = vadd.f32 %v688, %v626
  %v690 = vadd.f32 %v689, %v627
  %v691 = vadd.f32 %v690, %v628
  %v692 = vadd.f32 %v691, %v629
  %v693 = vadd.f32 %v692, %v630
  %v694 = vadd.f32 %v693, %v631
  %v695 = vadd.f32 %v694, %v632
  %v696 = vadd.f32 %v695, %v633
  %v697 = vadd.f32 %v696, %v634
  %v698 = vadd.f32 %v697, %v635
  %v699 = vadd.f32 %v698, %v636
  %v700 = vadd.f32 %v699, %v637
  %v701 = vadd.f32 %v700, %v638
  %v702 = vadd.f32 %v701, %v639
  %v703 = vadd.f32 %v702, %v640
  %v704 = vadd.f32 %v703, %v641
  %v705 = vrot.slane %v704, 4
  %v706 = vadd.f32 %v704, %v705
  %v707 = vrot.slane %v706, 2
  %v708 = vadd.f32 %v706, %v707
  %v709 = vrot.slane %v708, 1
  %v710 = vadd.f32 %v708, %v709
  %711 = vst [vmem:[%s5] sm:$0x1] %v710
  // Predicated region
  $region18: #{res_bottle_block.6} parent=0 // pred_check
    _
  $region19: #{res_bottle_block.6} parent=0 // pred_check_branch
    %713 = sbr.rel (0) target = $region21
  $region20: #{res_bottle_block.6} parent=0 // pred_region
    _
  $region21: #{res_bottle_block.6} parent=0 // pred_fallthru
    _
  // Predicated region
  $region22: #{res_bottle_block.6} parent=0 // pred_check
    _
  $region23: #{res_bottle_block.6} parent=0 // pred_check_branch
    %715 = sbr.rel (0) target = $region25
  $region24: #{res_bottle_block.6} parent=0 // pred_region
    _
  $region25: #{res_bottle_block.6} parent=0 // pred_fallthru
    _
  // Predicated region
  $region26: #{res_bottle_block.6} parent=0 // pred_check
    _
  $region27: #{res_bottle_block.6} parent=0 // pred_check_branch
    %717 = sbr.rel (0) target = $region29
  $region28: #{res_bottle_block.6} parent=0 // pred_region
    _
  $region29: #{res_bottle_block.6} parent=0 // pred_fallthru
    _
  // Predicated region
  $region30: #{res_bottle_block.6} parent=0 // pred_check
    _
  $region31: #{res_bottle_block.6} parent=0 // pred_check_branch
    %719 = sbr.rel (0) target = $region33
  $region32: #{res_bottle_block.6} parent=0 // pred_region
    _
  $region33: #{res_bottle_block.6} parent=0 // pred_fallthru
    _

// kernel: res_bottle_block.7
$region0: #{res_bottle_block.7}
  #allocation0 [shape = 'u32[]', space=smem, size = 0x4, offset = 0x4, fixed_abs, tag = 'smem constant byte address 0x4 - core index']
  #allocation1 [shape = 'u32[72,128]{1,0:T(1,128)}', space=vmem, size = 0x9000, scoped, tag = 'internal scratch']
  %s0 = inlined_call_operand.vmem [shape: f32[512,128], index: 0, kind: input, shape index: {}]
  %s1 = inlined_call_operand.vmem [shape: f32[512,128], index: 1, kind: input, shape index: {}]
  %s2 = inlined_call_operand.vmem [shape: f32[1,128], index: 2, kind: input, shape index: {}]
  %s3 = inlined_call_operand.vmem [shape: f32[1,128], index: 3, kind: input, shape index: {}]
  %s4 = inlined_call_operand.vmem [shape: f32[128,128], index: 4, kind: input, shape index: {}]
  %s5 = inlined_call_operand.vmem [shape: f32[1,128], index: 5, kind: input, shape index: {}]
  %s6 = inlined_call_operand.vmem [shape: f32[1,128], index: 6, kind: input, shape index: {}]
  %s7 = inlined_call_operand.vmem [shape: f32[512,128], index: 7, kind: output, shape index: {}]
  %s8 = sld [smem:[#allocation0]]
  $region38: #{res_bottle_block.7} parent=0
    _
  %s10 = ssub.s32 1, %s8
  %s11 = scalar_select 0, %s10, %s8
  // Predicated region
  $region2: #{res_bottle_block.7} parent=0 // pred_check
    _
  $region3: #{res_bottle_block.7} parent=0 // pred_check_branch
    %13 = sbr.rel (0) target = $region5
  $region4: #{res_bottle_block.7} parent=0 // pred_region
    _
  $region5: #{res_bottle_block.7} parent=0 // pred_fallthru
    _
  // Predicated region
  $region6: #{res_bottle_block.7} parent=0 // pred_check
    _
  $region7: #{res_bottle_block.7} parent=0 // pred_check_branch
    %15 = sbr.rel (0) target = $region9
  $region8: #{res_bottle_block.7} parent=0 // pred_region
    _
  $region9: #{res_bottle_block.7} parent=0 // pred_fallthru
    _
  // Predicated region
  $region10: #{res_bottle_block.7} parent=0 // pred_check
    _
  $region11: #{res_bottle_block.7} parent=0 // pred_check_branch
    %17 = sbr.rel (0) target = $region13
  $region12: #{res_bottle_block.7} parent=0 // pred_region
    _
  $region13: #{res_bottle_block.7} parent=0 // pred_fallthru
    _
  // Predicated region
  $region14: #{res_bottle_block.7} parent=0 // pred_check
    _
  $region15: #{res_bottle_block.7} parent=0 // pred_check_branch
    %19 = sbr.rel (0) target = $region17
  $region16: #{res_bottle_block.7} parent=0 // pred_region
    _
  $region17: #{res_bottle_block.7} parent=0 // pred_fallthru
    _
  // Predicated region
  $region18: #{res_bottle_block.7} parent=0 // pred_check
    _
  $region19: #{res_bottle_block.7} parent=0 // pred_check_branch
    %21 = sbr.rel (0) target = $region21
  $region20: #{res_bottle_block.7} parent=0 // pred_region
    _
  $region21: #{res_bottle_block.7} parent=0 // pred_fallthru
    _
  // Predicated region
  $region22: #{res_bottle_block.7} parent=0 // pred_check
    _
  $region23: #{res_bottle_block.7} parent=0 // pred_check_branch
    %23 = sbr.rel (0) target = $region25
  $region24: #{res_bottle_block.7} parent=0 // pred_region
    _
  $region25: #{res_bottle_block.7} parent=0 // pred_fallthru
    _
  // Predicated region
  $region26: #{res_bottle_block.7} parent=0 // pred_check
    _
  $region27: #{res_bottle_block.7} parent=0 // pred_check_branch
    %25 = sbr.rel (0) target = $region29
  $region28: #{res_bottle_block.7} parent=0 // pred_region
    _
  $region29: #{res_bottle_block.7} parent=0 // pred_fallthru
    _
  %v26 = vld [vmem:[%s0] sm:$0xff]
  %v27 = vld [vmem:[%s0 + $0x8] sm:$0xff]
  %v28 = vld [vmem:[%s0 + $0x10] sm:$0xff]
  %v29 = vld [vmem:[%s0 + $0x18] sm:$0xff]
  %v30 = vld [vmem:[%s0 + $0x20] sm:$0xff]
  %v31 = vld [vmem:[%s0 + $0x28] sm:$0xff]
  %v32 = vld [vmem:[%s0 + $0x30] sm:$0xff]
  %v33 = vld [vmem:[%s0 + $0x38] sm:$0xff]
  %v34 = vld [vmem:[%s0 + $0x40] sm:$0xff]
  %v35 = vld [vmem:[%s0 + $0x48] sm:$0xff]
  %v36 = vld [vmem:[%s0 + $0x50] sm:$0xff]
  %v37 = vld [vmem:[%s0 + $0x58] sm:$0xff]
  %v38 = vld [vmem:[%s0 + $0x60] sm:$0xff]
  %v39 = vld [vmem:[%s0 + $0x68] sm:$0xff]
  %v40 = vld [vmem:[%s0 + $0x70] sm:$0xff]
  %v41 = vld [vmem:[%s0 + $0x78] sm:$0xff]
  %v42 = vld [vmem:[%s0 + $0x80] sm:$0xff]
  %v43 = vld [vmem:[%s0 + $0x88] sm:$0xff]
  %v44 = vld [vmem:[%s0 + $0x90] sm:$0xff]
  %v45 = vld [vmem:[%s0 + $0x98] sm:$0xff]
  %v46 = vld [vmem:[%s0 + $0xa0] sm:$0xff]
  %v47 = vld [vmem:[%s0 + $0xa8] sm:$0xff]
  %v48 = vld [vmem:[%s0 + $0xb0] sm:$0xff]
  %v49 = vld [vmem:[%s0 + $0xb8] sm:$0xff]
  %v50 = vld [vmem:[%s0 + $0xc0] sm:$0xff]
  %v51 = vld [vmem:[%s0 + $0xc8] sm:$0xff]
  %v52 = vld [vmem:[%s0 + $0xd0] sm:$0xff]
  %v53 = vld [vmem:[%s0 + $0xd8] sm:$0xff]
  %v54 = vld [vmem:[%s0 + $0xe0] sm:$0xff]
  %v55 = vld [vmem:[%s0 + $0xe8] sm:$0xff]
  %v56 = vld [vmem:[%s0 + $0xf0] sm:$0xff]
  %v57 = vld [vmem:[%s0 + $0xf8] sm:$0xff]
  %v58 = vld [vmem:[%s0 + $0x100] sm:$0xff]
  %v59 = vld [vmem:[%s0 + $0x108] sm:$0xff]
  %v60 = vld [vmem:[%s0 + $0x110] sm:$0xff]
  %v61 = vld [vmem:[%s0 + $0x118] sm:$0xff]
  %v62 = vld [vmem:[%s0 + $0x120] sm:$0xff]
  %v63 = vld [vmem:[%s0 + $0x128] sm:$0xff]
  %v64 = vld [vmem:[%s0 + $0x130] sm:$0xff]
  %v65 = vld [vmem:[%s0 + $0x138] sm:$0xff]
  %v66 = vld [vmem:[%s0 + $0x140] sm:$0xff]
  %v67 = vld [vmem:[%s0 + $0x148] sm:$0xff]
  %v68 = vld [vmem:[%s0 + $0x150] sm:$0xff]
  %v69 = vld [vmem:[%s0 + $0x158] sm:$0xff]
  %v70 = vld [vmem:[%s0 + $0x160] sm:$0xff]
  %v71 = vld [vmem:[%s0 + $0x168] sm:$0xff]
  %v72 = vld [vmem:[%s0 + $0x170] sm:$0xff]
  %v73 = vld [vmem:[%s0 + $0x178] sm:$0xff]
  %v74 = vld [vmem:[%s0 + $0x180] sm:$0xff]
  %v75 = vld [vmem:[%s0 + $0x188] sm:$0xff]
  %v76 = vld [vmem:[%s0 + $0x190] sm:$0xff]
  %v77 = vld [vmem:[%s0 + $0x198] sm:$0xff]
  %v78 = vld [vmem:[%s0 + $0x1a0] sm:$0xff]
  %v79 = vld [vmem:[%s0 + $0x1a8] sm:$0xff]
  %v80 = vld [vmem:[%s0 + $0x1b0] sm:$0xff]
  %v81 = vld [vmem:[%s0 + $0x1b8] sm:$0xff]
  %v82 = vld [vmem:[%s0 + $0x1c0] sm:$0xff]
  %v83 = vld [vmem:[%s0 + $0x1c8] sm:$0xff]
  %v84 = vld [vmem:[%s0 + $0x1d0] sm:$0xff]
  %v85 = vld [vmem:[%s0 + $0x1d8] sm:$0xff]
  %v86 = vld [vmem:[%s0 + $0x1e0] sm:$0xff]
  %v87 = vld [vmem:[%s0 + $0x1e8] sm:$0xff]
  %v88 = vld [vmem:[%s0 + $0x1f0] sm:$0xff]
  %v89 = vld [vmem:[%s0 + $0x1f8] sm:$0xff]
  %v90 = vld [vmem:[%s2] sm:$0x1]
  %v92 = vperm.slane %v90, 0
  %v94 = vmul.f32 %v26, %v92
  %v95 = vmul.f32 %v27, %v92
  %v96 = vmul.f32 %v28, %v92
  %v97 = vmul.f32 %v29, %v92
  %v98 = vmul.f32 %v30, %v92
  %v99 = vmul.f32 %v31, %v92
  %v100 = vmul.f32 %v32, %v92
  %v101 = vmul.f32 %v33, %v92
  %v102 = vmul.f32 %v34, %v92
  %v103 = vmul.f32 %v35, %v92
  %v104 = vmul.f32 %v36, %v92
  %v105 = vmul.f32 %v37, %v92
  %v106 = vmul.f32 %v38, %v92
  %v107 = vmul.f32 %v39, %v92
  %v108 = vmul.f32 %v40, %v92
  %v109 = vmul.f32 %v41, %v92
  %v110 = vmul.f32 %v42, %v92
  %v111 = vmul.f32 %v43, %v92
  %v112 = vmul.f32 %v44, %v92
  %v113 = vmul.f32 %v45, %v92
  %v114 = vmul.f32 %v46, %v92
  %v115 = vmul.f32 %v47, %v92
  %v116 = vmul.f32 %v48, %v92
  %v117 = vmul.f32 %v49, %v92
  %v118 = vmul.f32 %v50, %v92
  %v119 = vmul.f32 %v51, %v92
  %v120 = vmul.f32 %v52, %v92
  %v121 = vmul.f32 %v53, %v92
  %v122 = vmul.f32 %v54, %v92
  %v123 = vmul.f32 %v55, %v92
  %v124 = vmul.f32 %v56, %v92
  %v125 = vmul.f32 %v57, %v92
  %v126 = vmul.f32 %v58, %v92
  %v127 = vmul.f32 %v59, %v92
  %v128 = vmul.f32 %v60, %v92
  %v129 = vmul.f32 %v61, %v92
  %v130 = vmul.f32 %v62, %v92
  %v131 = vmul.f32 %v63, %v92
  %v132 = vmul.f32 %v64, %v92
  %v133 = vmul.f32 %v65, %v92
  %v134 = vmul.f32 %v66, %v92
  %v135 = vmul.f32 %v67, %v92
  %v136 = vmul.f32 %v68, %v92
  %v137 = vmul.f32 %v69, %v92
  %v138 = vmul.f32 %v70, %v92
  %v139 = vmul.f32 %v71, %v92
  %v140 = vmul.f32 %v72, %v92
  %v141 = vmul.f32 %v73, %v92
  %v142 = vmul.f32 %v74, %v92
  %v143 = vmul.f32 %v75, %v92
  %v144 = vmul.f32 %v76, %v92
  %v145 = vmul.f32 %v77, %v92
  %v146 = vmul.f32 %v78, %v92
  %v147 = vmul.f32 %v79, %v92
  %v148 = vmul.f32 %v80, %v92
  %v149 = vmul.f32 %v81, %v92
  %v150 = vmul.f32 %v82, %v92
  %v151 = vmul.f32 %v83, %v92
  %v152 = vmul.f32 %v84, %v92
  %v153 = vmul.f32 %v85, %v92
  %v154 = vmul.f32 %v86, %v92
  %v155 = vmul.f32 %v87, %v92
  %v156 = vmul.f32 %v88, %v92
  %v157 = vmul.f32 %v89, %v92
  %v158 = vld [vmem:[%s3] sm:$0x1]
  %v160 = vperm.slane %v158, 0
  %v162 = vadd.f32 %v94, %v160
  %v163 = vadd.f32 %v95, %v160
  %v164 = vadd.f32 %v96, %v160
  %v165 = vadd.f32 %v97, %v160
  %v166 = vadd.f32 %v98, %v160
  %v167 = vadd.f32 %v99, %v160
  %v168 = vadd.f32 %v100, %v160
  %v169 = vadd.f32 %v101, %v160
  %v170 = vadd.f32 %v102, %v160
  %v171 = vadd.f32 %v103, %v160
  %v172 = vadd.f32 %v104, %v160
  %v173 = vadd.f32 %v105, %v160
  %v174 = vadd.f32 %v106, %v160
  %v175 = vadd.f32 %v107, %v160
  %v176 = vadd.f32 %v108, %v160
  %v177 = vadd.f32 %v109, %v160
  %v178 = vadd.f32 %v110, %v160
  %v179 = vadd.f32 %v111, %v160
  %v180 = vadd.f32 %v112, %v160
  %v181 = vadd.f32 %v113, %v160
  %v182 = vadd.f32 %v114, %v160
  %v183 = vadd.f32 %v115, %v160
  %v184 = vadd.f32 %v116, %v160
  %v185 = vadd.f32 %v117, %v160
  %v186 = vadd.f32 %v118, %v160
  %v187 = vadd.f32 %v119, %v160
  %v188 = vadd.f32 %v120, %v160
  %v189 = vadd.f32 %v121, %v160
  %v190 = vadd.f32 %v122, %v160
  %v191 = vadd.f32 %v123, %v160
  %v192 = vadd.f32 %v124, %v160
  %v193 = vadd.f32 %v125, %v160
  %v194 = vadd.f32 %v126, %v160
  %v195 = vadd.f32 %v127, %v160
  %v196 = vadd.f32 %v128, %v160
  %v197 = vadd.f32 %v129, %v160
  %v198 = vadd.f32 %v130, %v160
  %v199 = vadd.f32 %v131, %v160
  %v200 = vadd.f32 %v132, %v160
  %v201 = vadd.f32 %v133, %v160
  %v202 = vadd.f32 %v134, %v160
  %v203 = vadd.f32 %v135, %v160
  %v204 = vadd.f32 %v136, %v160
  %v205 = vadd.f32 %v137, %v160
  %v206 = vadd.f32 %v138, %v160
  %v207 = vadd.f32 %v139, %v160
  %v208 = vadd.f32 %v140, %v160
  %v209 = vadd.f32 %v141, %v160
  %v210 = vadd.f32 %v142, %v160
  %v211 = vadd.f32 %v143, %v160
  %v212 = vadd.f32 %v144, %v160
  %v213 = vadd.f32 %v145, %v160
  %v214 = vadd.f32 %v146, %v160
  %v215 = vadd.f32 %v147, %v160
  %v216 = vadd.f32 %v148, %v160
  %v217 = vadd.f32 %v149, %v160
  %v218 = vadd.f32 %v150, %v160
  %v219 = vadd.f32 %v151, %v160
  %v220 = vadd.f32 %v152, %v160
  %v221 = vadd.f32 %v153, %v160
  %v222 = vadd.f32 %v154, %v160
  %v223 = vadd.f32 %v155, %v160
  %v224 = vadd.f32 %v156, %v160
  %v225 = vadd.f32 %v157, %v160
  %v226 = vmax.f32 %v162, 0.0
  %v227 = vmax.f32 %v163, 0.0
  %v228 = vmax.f32 %v164, 0.0
  %v229 = vmax.f32 %v165, 0.0
  %v230 = vmax.f32 %v166, 0.0
  %v231 = vmax.f32 %v167, 0.0
  %v232 = vmax.f32 %v168, 0.0
  %v233 = vmax.f32 %v169, 0.0
  %v234 = vmax.f32 %v170, 0.0
  %v235 = vmax.f32 %v171, 0.0
  %v236 = vmax.f32 %v172, 0.0
  %v237 = vmax.f32 %v173, 0.0
  %v238 = vmax.f32 %v174, 0.0
  %v239 = vmax.f32 %v175, 0.0
  %v240 = vmax.f32 %v176, 0.0
  %v241 = vmax.f32 %v177, 0.0
  %v242 = vmax.f32 %v178, 0.0
  %v243 = vmax.f32 %v179, 0.0
  %v244 = vmax.f32 %v180, 0.0
  %v245 = vmax.f32 %v181, 0.0
  %v246 = vmax.f32 %v182, 0.0
  %v247 = vmax.f32 %v183, 0.0
  %v248 = vmax.f32 %v184, 0.0
  %v249 = vmax.f32 %v185, 0.0
  %v250 = vmax.f32 %v186, 0.0
  %v251 = vmax.f32 %v187, 0.0
  %v252 = vmax.f32 %v188, 0.0
  %v253 = vmax.f32 %v189, 0.0
  %v254 = vmax.f32 %v190, 0.0
  %v255 = vmax.f32 %v191, 0.0
  %v256 = vmax.f32 %v192, 0.0
  %v257 = vmax.f32 %v193, 0.0
  %v258 = vmax.f32 %v194, 0.0
  %v259 = vmax.f32 %v195, 0.0
  %v260 = vmax.f32 %v196, 0.0
  %v261 = vmax.f32 %v197, 0.0
  %v262 = vmax.f32 %v198, 0.0
  %v263 = vmax.f32 %v199, 0.0
  %v264 = vmax.f32 %v200, 0.0
  %v265 = vmax.f32 %v201, 0.0
  %v266 = vmax.f32 %v202, 0.0
  %v267 = vmax.f32 %v203, 0.0
  %v268 = vmax.f32 %v204, 0.0
  %v269 = vmax.f32 %v205, 0.0
  %v270 = vmax.f32 %v206, 0.0
  %v271 = vmax.f32 %v207, 0.0
  %v272 = vmax.f32 %v208, 0.0
  %v273 = vmax.f32 %v209, 0.0
  %v274 = vmax.f32 %v210, 0.0
  %v275 = vmax.f32 %v211, 0.0
  %v276 = vmax.f32 %v212, 0.0
  %v277 = vmax.f32 %v213, 0.0
  %v278 = vmax.f32 %v214, 0.0
  %v279 = vmax.f32 %v215, 0.0
  %v280 = vmax.f32 %v216, 0.0
  %v281 = vmax.f32 %v217, 0.0
  %v282 = vmax.f32 %v218, 0.0
  %v283 = vmax.f32 %v219, 0.0
  %v284 = vmax.f32 %v220, 0.0
  %v285 = vmax.f32 %v221, 0.0
  %v286 = vmax.f32 %v222, 0.0
  %v287 = vmax.f32 %v223, 0.0
  %v288 = vmax.f32 %v224, 0.0
  %v289 = vmax.f32 %v225, 0.0
  %v290 = vld [vmem:[%s4] sm:$0xff]
  %v291 = vld [vmem:[%s4 + $0x8] sm:$0xff]
  %v292 = vld [vmem:[%s4 + $0x10] sm:$0xff]
  %v293 = vld [vmem:[%s4 + $0x18] sm:$0xff]
  %v294 = vld [vmem:[%s4 + $0x20] sm:$0xff]
  %v295 = vld [vmem:[%s4 + $0x28] sm:$0xff]
  %v296 = vld [vmem:[%s4 + $0x30] sm:$0xff]
  %v297 = vld [vmem:[%s4 + $0x38] sm:$0xff]
  %v298 = vld [vmem:[%s4 + $0x40] sm:$0xff]
  %v299 = vld [vmem:[%s4 + $0x48] sm:$0xff]
  %v300 = vld [vmem:[%s4 + $0x50] sm:$0xff]
  %v301 = vld [vmem:[%s4 + $0x58] sm:$0xff]
  %v302 = vld [vmem:[%s4 + $0x60] sm:$0xff]
  %v303 = vld [vmem:[%s4 + $0x68] sm:$0xff]
  %v304 = vld [vmem:[%s4 + $0x70] sm:$0xff]
  %v305 = vld [vmem:[%s4 + $0x78] sm:$0xff]
  %306 = vmatpush.msra.mxu0 %v305
  %307 = vmatpush.msra.mxu0 %v304
  %308 = vmatpush.msra.mxu0 %v303
  %309 = vmatpush.msra.mxu0 %v302
  %310 = vmatpush.msra.mxu0 %v301
  %311 = vmatpush.msra.mxu0 %v300
  %312 = vmatpush.msra.mxu0 %v299
  %313 = vmatpush.msra.mxu0 %v298
  %314 = vmatpush.msra.mxu0 %v297
  %315 = vmatpush.msra.mxu0 %v296
  %316 = vmatpush.msra.mxu0 %v295
  %317 = vmatpush.msra.mxu0 %v294
  %318 = vmatpush.msra.mxu0 %v293
  %319 = vmatpush.msra.mxu0 %v292
  %320 = vmatpush.msra.mxu0 %v291
  %321 = vmatpush.msra.mxu0 %v290
  %322 = vmatmul.f32.gmra.mxu0 %v226
  %v323 = vpop.f32.mrf.mxu0
  %v324 = vadd.f32 0.0, %v323
  %325 = vmatmul.f32.gmra.mxu0 %v227
  %v326 = vpop.f32.mrf.mxu0
  %v327 = vadd.f32 0.0, %v326
  %328 = vmatmul.f32.gmra.mxu0 %v228
  %v329 = vpop.f32.mrf.mxu0
  %v330 = vadd.f32 0.0, %v329
  %331 = vmatmul.f32.gmra.mxu0 %v229
  %v332 = vpop.f32.mrf.mxu0
  %v333 = vadd.f32 0.0, %v332
  %334 = vmatmul.f32.gmra.mxu0 %v230
  %v335 = vpop.f32.mrf.mxu0
  %v336 = vadd.f32 0.0, %v335
  %337 = vmatmul.f32.gmra.mxu0 %v231
  %v338 = vpop.f32.mrf.mxu0
  %v339 = vadd.f32 0.0, %v338
  %340 = vmatmul.f32.gmra.mxu0 %v232
  %v341 = vpop.f32.mrf.mxu0
  %v342 = vadd.f32 0.0, %v341
  %343 = vmatmul.f32.gmra.mxu0 %v233
  %v344 = vpop.f32.mrf.mxu0
  %v345 = vadd.f32 0.0, %v344
  %346 = vmatmul.f32.gmra.mxu0 %v234
  %v347 = vpop.f32.mrf.mxu0
  %v348 = vadd.f32 0.0, %v347
  %349 = vmatmul.f32.gmra.mxu0 %v235
  %v350 = vpop.f32.mrf.mxu0
  %v351 = vadd.f32 0.0, %v350
  %352 = vmatmul.f32.gmra.mxu0 %v236
  %v353 = vpop.f32.mrf.mxu0
  %v354 = vadd.f32 0.0, %v353
  %355 = vmatmul.f32.gmra.mxu0 %v237
  %v356 = vpop.f32.mrf.mxu0
  %v357 = vadd.f32 0.0, %v356
  %358 = vmatmul.f32.gmra.mxu0 %v238
  %v359 = vpop.f32.mrf.mxu0
  %v360 = vadd.f32 0.0, %v359
  %361 = vmatmul.f32.gmra.mxu0 %v239
  %v362 = vpop.f32.mrf.mxu0
  %v363 = vadd.f32 0.0, %v362
  %364 = vmatmul.f32.gmra.mxu0 %v240
  %v365 = vpop.f32.mrf.mxu0
  %v366 = vadd.f32 0.0, %v365
  %367 = vmatmul.f32.gmra.mxu0 %v241
  %v368 = vpop.f32.mrf.mxu0
  %v369 = vadd.f32 0.0, %v368
  %370 = vmatmul.f32.gmra.mxu0 %v242
  %v371 = vpop.f32.mrf.mxu0
  %v372 = vadd.f32 0.0, %v371
  %373 = vmatmul.f32.gmra.mxu0 %v243
  %v374 = vpop.f32.mrf.mxu0
  %v375 = vadd.f32 0.0, %v374
  %376 = vmatmul.f32.gmra.mxu0 %v244
  %v377 = vpop.f32.mrf.mxu0
  %v378 = vadd.f32 0.0, %v377
  %379 = vmatmul.f32.gmra.mxu0 %v245
  %v380 = vpop.f32.mrf.mxu0
  %v381 = vadd.f32 0.0, %v380
  %382 = vmatmul.f32.gmra.mxu0 %v246
  %v383 = vpop.f32.mrf.mxu0
  %v384 = vadd.f32 0.0, %v383
  %385 = vmatmul.f32.gmra.mxu0 %v247
  %v386 = vpop.f32.mrf.mxu0
  %v387 = vadd.f32 0.0, %v386
  %388 = vmatmul.f32.gmra.mxu0 %v248
  %v389 = vpop.f32.mrf.mxu0
  %v390 = vadd.f32 0.0, %v389
  %391 = vmatmul.f32.gmra.mxu0 %v249
  %v392 = vpop.f32.mrf.mxu0
  %v393 = vadd.f32 0.0, %v392
  %394 = vmatmul.f32.gmra.mxu0 %v250
  %v395 = vpop.f32.mrf.mxu0
  %v396 = vadd.f32 0.0, %v395
  %397 = vmatmul.f32.gmra.mxu0 %v251
  %v398 = vpop.f32.mrf.mxu0
  %v399 = vadd.f32 0.0, %v398
  %400 = vmatmul.f32.gmra.mxu0 %v252
  %v401 = vpop.f32.mrf.mxu0
  %v402 = vadd.f32 0.0, %v401
  %403 = vmatmul.f32.gmra.mxu0 %v253
  %v404 = vpop.f32.mrf.mxu0
  %v405 = vadd.f32 0.0, %v404
  %406 = vmatmul.f32.gmra.mxu0 %v254
  %v407 = vpop.f32.mrf.mxu0
  %v408 = vadd.f32 0.0, %v407
  %409 = vmatmul.f32.gmra.mxu0 %v255
  %v410 = vpop.f32.mrf.mxu0
  %v411 = vadd.f32 0.0, %v410
  %412 = vmatmul.f32.gmra.mxu0 %v256
  %v413 = vpop.f32.mrf.mxu0
  %v414 = vadd.f32 0.0, %v413
  %415 = vmatmul.f32.gmra.mxu0 %v257
  %v416 = vpop.f32.mrf.mxu0
  %v417 = vadd.f32 0.0, %v416
  %418 = vmatmul.f32.gmra.mxu0 %v258
  %v419 = vpop.f32.mrf.mxu0
  %v420 = vadd.f32 0.0, %v419
  %421 = vmatmul.f32.gmra.mxu0 %v259
  %v422 = vpop.f32.mrf.mxu0
  %v423 = vadd.f32 0.0, %v422
  %424 = vmatmul.f32.gmra.mxu0 %v260
  %v425 = vpop.f32.mrf.mxu0
  %v426 = vadd.f32 0.0, %v425
  %427 = vmatmul.f32.gmra.mxu0 %v261
  %v428 = vpop.f32.mrf.mxu0
  %v429 = vadd.f32 0.0, %v428
  %430 = vmatmul.f32.gmra.mxu0 %v262
  %v431 = vpop.f32.mrf.mxu0
  %v432 = vadd.f32 0.0, %v431
  %433 = vmatmul.f32.gmra.mxu0 %v263
  %v434 = vpop.f32.mrf.mxu0
  %v435 = vadd.f32 0.0, %v434
  %436 = vmatmul.f32.gmra.mxu0 %v264
  %v437 = vpop.f32.mrf.mxu0
  %v438 = vadd.f32 0.0, %v437
  %439 = vmatmul.f32.gmra.mxu0 %v265
  %v440 = vpop.f32.mrf.mxu0
  %v441 = vadd.f32 0.0, %v440
  %442 = vmatmul.f32.gmra.mxu0 %v266
  %v443 = vpop.f32.mrf.mxu0
  %v444 = vadd.f32 0.0, %v443
  %445 = vmatmul.f32.gmra.mxu0 %v267
  %v446 = vpop.f32.mrf.mxu0
  %v447 = vadd.f32 0.0, %v446
  %448 = vmatmul.f32.gmra.mxu0 %v268
  %v449 = vpop.f32.mrf.mxu0
  %v450 = vadd.f32 0.0, %v449
  %451 = vmatmul.f32.gmra.mxu0 %v269
  %v452 = vpop.f32.mrf.mxu0
  %v453 = vadd.f32 0.0, %v452
  %454 = vmatmul.f32.gmra.mxu0 %v270
  %v455 = vpop.f32.mrf.mxu0
  %v456 = vadd.f32 0.0, %v455
  %457 = vmatmul.f32.gmra.mxu0 %v271
  %v458 = vpop.f32.mrf.mxu0
  %v459 = vadd.f32 0.0, %v458
  %460 = vmatmul.f32.gmra.mxu0 %v272
  %v461 = vpop.f32.mrf.mxu0
  %v462 = vadd.f32 0.0, %v461
  %463 = vmatmul.f32.gmra.mxu0 %v273
  %v464 = vpop.f32.mrf.mxu0
  %v465 = vadd.f32 0.0, %v464
  %466 = vmatmul.f32.gmra.mxu0 %v274
  %v467 = vpop.f32.mrf.mxu0
  %v468 = vadd.f32 0.0, %v467
  %469 = vmatmul.f32.gmra.mxu0 %v275
  %v470 = vpop.f32.mrf.mxu0
  %v471 = vadd.f32 0.0, %v470
  %472 = vmatmul.f32.gmra.mxu0 %v276
  %v473 = vpop.f32.mrf.mxu0
  %v474 = vadd.f32 0.0, %v473
  %475 = vmatmul.f32.gmra.mxu0 %v277
  %v476 = vpop.f32.mrf.mxu0
  %v477 = vadd.f32 0.0, %v476
  %478 = vmatmul.f32.gmra.mxu0 %v278
  %v479 = vpop.f32.mrf.mxu0
  %v480 = vadd.f32 0.0, %v479
  %481 = vmatmul.f32.gmra.mxu0 %v279
  %v482 = vpop.f32.mrf.mxu0
  %v483 = vadd.f32 0.0, %v482
  %484 = vmatmul.f32.gmra.mxu0 %v280
  %v485 = vpop.f32.mrf.mxu0
  %v486 = vadd.f32 0.0, %v485
  %487 = vmatmul.f32.gmra.mxu0 %v281
  %v488 = vpop.f32.mrf.mxu0
  %v489 = vadd.f32 0.0, %v488
  %490 = vmatmul.f32.gmra.mxu0 %v282
  %v491 = vpop.f32.mrf.mxu0
  %v492 = vadd.f32 0.0, %v491
  %493 = vmatmul.f32.gmra.mxu0 %v283
  %v494 = vpop.f32.mrf.mxu0
  %v495 = vadd.f32 0.0, %v494
  %496 = vmatmul.f32.gmra.mxu0 %v284
  %v497 = vpop.f32.mrf.mxu0
  %v498 = vadd.f32 0.0, %v497
  %499 = vmatmul.f32.gmra.mxu0 %v285
  %v500 = vpop.f32.mrf.mxu0
  %v501 = vadd.f32 0.0, %v500
  %502 = vmatmul.f32.gmra.mxu0 %v286
  %v503 = vpop.f32.mrf.mxu0
  %v504 = vadd.f32 0.0, %v503
  %505 = vmatmul.f32.gmra.mxu0 %v287
  %v506 = vpop.f32.mrf.mxu0
  %v507 = vadd.f32 0.0, %v506
  %508 = vmatmul.f32.gmra.mxu0 %v288
  %v509 = vpop.f32.mrf.mxu0
  %v510 = vadd.f32 0.0, %v509
  %511 = vmatmul.f32.gmra.mxu0 %v289
  %v512 = vpop.f32.mrf.mxu0
  %v513 = vadd.f32 0.0, %v512
  %514 = vdwg.mxu0
  %v515 = vld [vmem:[%s5] sm:$0x1]
  %v517 = vperm.slane %v515, 0
  %v519 = vmul.f32 %v324, %v517
  %v520 = vmul.f32 %v327, %v517
  %v521 = vmul.f32 %v330, %v517
  %v522 = vmul.f32 %v333, %v517
  %v523 = vmul.f32 %v336, %v517
  %v524 = vmul.f32 %v339, %v517
  %v525 = vmul.f32 %v342, %v517
  %v526 = vmul.f32 %v345, %v517
  %v527 = vmul.f32 %v348, %v517
  %v528 = vmul.f32 %v351, %v517
  %v529 = vmul.f32 %v354, %v517
  %v530 = vmul.f32 %v357, %v517
  %v531 = vmul.f32 %v360, %v517
  %v532 = vmul.f32 %v363, %v517
  %v533 = vmul.f32 %v366, %v517
  %v534 = vmul.f32 %v369, %v517
  %v535 = vmul.f32 %v372, %v517
  %v536 = vmul.f32 %v375, %v517
  %v537 = vmul.f32 %v378, %v517
  %v538 = vmul.f32 %v381, %v517
  %v539 = vmul.f32 %v384, %v517
  %v540 = vmul.f32 %v387, %v517
  %v541 = vmul.f32 %v390, %v517
  %v542 = vmul.f32 %v393, %v517
  %v543 = vmul.f32 %v396, %v517
  %v544 = vmul.f32 %v399, %v517
  %v545 = vmul.f32 %v402, %v517
  %v546 = vmul.f32 %v405, %v517
  %v547 = vmul.f32 %v408, %v517
  %v548 = vmul.f32 %v411, %v517
  %v549 = vmul.f32 %v414, %v517
  %v550 = vmul.f32 %v417, %v517
  %v551 = vmul.f32 %v420, %v517
  %v552 = vmul.f32 %v423, %v517
  %v553 = vmul.f32 %v426, %v517
  %v554 = vmul.f32 %v429, %v517
  %v555 = vmul.f32 %v432, %v517
  %v556 = vmul.f32 %v435, %v517
  %v557 = vmul.f32 %v438, %v517
  %v558 = vmul.f32 %v441, %v517
  %v559 = vmul.f32 %v444, %v517
  %v560 = vmul.f32 %v447, %v517
  %v561 = vmul.f32 %v450, %v517
  %v562 = vmul.f32 %v453, %v517
  %v563 = vmul.f32 %v456, %v517
  %v564 = vmul.f32 %v459, %v517
  %v565 = vmul.f32 %v462, %v517
  %v566 = vmul.f32 %v465, %v517
  %v567 = vmul.f32 %v468, %v517
  %v568 = vmul.f32 %v471, %v517
  %v569 = vmul.f32 %v474, %v517
  %v570 = vmul.f32 %v477, %v517
  %v571 = vmul.f32 %v480, %v517
  %v572 = vmul.f32 %v483, %v517
  %v573 = vmul.f32 %v486, %v517
  %v574 = vmul.f32 %v489, %v517
  %v575 = vmul.f32 %v492, %v517
  %v576 = vmul.f32 %v495, %v517
  %v577 = vmul.f32 %v498, %v517
  %v578 = vmul.f32 %v501, %v517
  %v579 = vmul.f32 %v504, %v517
  %v580 = vmul.f32 %v507, %v517
  %v581 = vmul.f32 %v510, %v517
  %v582 = vmul.f32 %v513, %v517
  %v583 = vld [vmem:[%s6] sm:$0x1]
  %v585 = vperm.slane %v583, 0
  %v587 = vadd.f32 %v519, %v585
  %v588 = vadd.f32 %v520, %v585
  %v589 = vadd.f32 %v521, %v585
  %v590 = vadd.f32 %v522, %v585
  %v591 = vadd.f32 %v523, %v585
  %v592 = vadd.f32 %v524, %v585
  %v593 = vadd.f32 %v525, %v585
  %v594 = vadd.f32 %v526, %v585
  %v595 = vadd.f32 %v527, %v585
  %v596 = vadd.f32 %v528, %v585
  %v597 = vadd.f32 %v529, %v585
  %v598 = vadd.f32 %v530, %v585
  %v599 = vadd.f32 %v531, %v585
  %v600 = vadd.f32 %v532, %v585
  %v601 = vadd.f32 %v533, %v585
  %v602 = vadd.f32 %v534, %v585
  %v603 = vadd.f32 %v535, %v585
  %v604 = vadd.f32 %v536, %v585
  %v605 = vadd.f32 %v537, %v585
  %v606 = vadd.f32 %v538, %v585
  %v607 = vadd.f32 %v539, %v585
  %v608 = vadd.f32 %v540, %v585
  %v609 = vadd.f32 %v541, %v585
  %v610 = vadd.f32 %v542, %v585
  %v611 = vadd.f32 %v543, %v585
  %v612 = vadd.f32 %v544, %v585
  %v613 = vadd.f32 %v545, %v585
  %v614 = vadd.f32 %v546, %v585
  %v615 = vadd.f32 %v547, %v585
  %v616 = vadd.f32 %v548, %v585
  %v617 = vadd.f32 %v549, %v585
  %v618 = vadd.f32 %v550, %v585
  %v619 = vadd.f32 %v551, %v585
  %v620 = vadd.f32 %v552, %v585
  %v621 = vadd.f32 %v553, %v585
  %v622 = vadd.f32 %v554, %v585
  %v623 = vadd.f32 %v555, %v585
  %v624 = vadd.f32 %v556, %v585
  %v625 = vadd.f32 %v557, %v585
  %v626 = vadd.f32 %v558, %v585
  %v627 = vadd.f32 %v559, %v585
  %v628 = vadd.f32 %v560, %v585
  %v629 = vadd.f32 %v561, %v585
  %v630 = vadd.f32 %v562, %v585
  %v631 = vadd.f32 %v563, %v585
  %v632 = vadd.f32 %v564, %v585
  %v633 = vadd.f32 %v565, %v585
  %v634 = vadd.f32 %v566, %v585
  %v635 = vadd.f32 %v567, %v585
  %v636 = vadd.f32 %v568, %v585
  %v637 = vadd.f32 %v569, %v585
  %v638 = vadd.f32 %v570, %v585
  %v639 = vadd.f32 %v571, %v585
  %v640 = vadd.f32 %v572, %v585
  %v641 = vadd.f32 %v573, %v585
  %v642 = vadd.f32 %v574, %v585
  %v643 = vadd.f32 %v575, %v585
  %v644 = vadd.f32 %v576, %v585
  %v645 = vadd.f32 %v577, %v585
  %v646 = vadd.f32 %v578, %v585
  %v647 = vadd.f32 %v579, %v585
  %v648 = vadd.f32 %v580, %v585
  %v649 = vadd.f32 %v581, %v585
  %v650 = vadd.f32 %v582, %v585
  %v651 = vld [vmem:[%s1] sm:$0xff]
  %v652 = vld [vmem:[%s1 + $0x8] sm:$0xff]
  %v653 = vld [vmem:[%s1 + $0x10] sm:$0xff]
  %v654 = vld [vmem:[%s1 + $0x18] sm:$0xff]
  %v655 = vld [vmem:[%s1 + $0x20] sm:$0xff]
  %v656 = vld [vmem:[%s1 + $0x28] sm:$0xff]
  %v657 = vld [vmem:[%s1 + $0x30] sm:$0xff]
  %v658 = vld [vmem:[%s1 + $0x38] sm:$0xff]
  %v659 = vld [vmem:[%s1 + $0x40] sm:$0xff]
  %v660 = vld [vmem:[%s1 + $0x48] sm:$0xff]
  %v661 = vld [vmem:[%s1 + $0x50] sm:$0xff]
  %v662 = vld [vmem:[%s1 + $0x58] sm:$0xff]
  %v663 = vld [vmem:[%s1 + $0x60] sm:$0xff]
  %v664 = vld [vmem:[%s1 + $0x68] sm:$0xff]
  %v665 = vld [vmem:[%s1 + $0x70] sm:$0xff]
  %v666 = vld [vmem:[%s1 + $0x78] sm:$0xff]
  %v667 = vld [vmem:[%s1 + $0x80] sm:$0xff]
  %v668 = vld [vmem:[%s1 + $0x88] sm:$0xff]
  %v669 = vld [vmem:[%s1 + $0x90] sm:$0xff]
  %v670 = vld [vmem:[%s1 + $0x98] sm:$0xff]
  %v671 = vld [vmem:[%s1 + $0xa0] sm:$0xff]
  %v672 = vld [vmem:[%s1 + $0xa8] sm:$0xff]
  %v673 = vld [vmem:[%s1 + $0xb0] sm:$0xff]
  %v674 = vld [vmem:[%s1 + $0xb8] sm:$0xff]
  %v675 = vld [vmem:[%s1 + $0xc0] sm:$0xff]
  %v676 = vld [vmem:[%s1 + $0xc8] sm:$0xff]
  %v677 = vld [vmem:[%s1 + $0xd0] sm:$0xff]
  %v678 = vld [vmem:[%s1 + $0xd8] sm:$0xff]
  %v679 = vld [vmem:[%s1 + $0xe0] sm:$0xff]
  %v680 = vld [vmem:[%s1 + $0xe8] sm:$0xff]
  %v681 = vld [vmem:[%s1 + $0xf0] sm:$0xff]
  %v682 = vld [vmem:[%s1 + $0xf8] sm:$0xff]
  %v683 = vld [vmem:[%s1 + $0x100] sm:$0xff]
  %v684 = vld [vmem:[%s1 + $0x108] sm:$0xff]
  %v685 = vld [vmem:[%s1 + $0x110] sm:$0xff]
  %v686 = vld [vmem:[%s1 + $0x118] sm:$0xff]
  %v687 = vld [vmem:[%s1 + $0x120] sm:$0xff]
  %v688 = vld [vmem:[%s1 + $0x128] sm:$0xff]
  %v689 = vld [vmem:[%s1 + $0x130] sm:$0xff]
  %v690 = vld [vmem:[%s1 + $0x138] sm:$0xff]
  %v691 = vld [vmem:[%s1 + $0x140] sm:$0xff]
  %v692 = vld [vmem:[%s1 + $0x148] sm:$0xff]
  %v693 = vld [vmem:[%s1 + $0x150] sm:$0xff]
  %v694 = vld [vmem:[%s1 + $0x158] sm:$0xff]
  %v695 = vld [vmem:[%s1 + $0x160] sm:$0xff]
  %v696 = vld [vmem:[%s1 + $0x168] sm:$0xff]
  %v697 = vld [vmem:[%s1 + $0x170] sm:$0xff]
  %v698 = vld [vmem:[%s1 + $0x178] sm:$0xff]
  %v699 = vld [vmem:[%s1 + $0x180] sm:$0xff]
  %v700 = vld [vmem:[%s1 + $0x188] sm:$0xff]
  %v701 = vld [vmem:[%s1 + $0x190] sm:$0xff]
  %v702 = vld [vmem:[%s1 + $0x198] sm:$0xff]
  %v703 = vld [vmem:[%s1 + $0x1a0] sm:$0xff]
  %v704 = vld [vmem:[%s1 + $0x1a8] sm:$0xff]
  %v705 = vld [vmem:[%s1 + $0x1b0] sm:$0xff]
  %v706 = vld [vmem:[%s1 + $0x1b8] sm:$0xff]
  %v707 = vld [vmem:[%s1 + $0x1c0] sm:$0xff]
  %v708 = vld [vmem:[%s1 + $0x1c8] sm:$0xff]
  %v709 = vld [vmem:[%s1 + $0x1d0] sm:$0xff]
  %v710 = vld [vmem:[%s1 + $0x1d8] sm:$0xff]
  %v711 = vld [vmem:[%s1 + $0x1e0] sm:$0xff]
  %v712 = vld [vmem:[%s1 + $0x1e8] sm:$0xff]
  %v713 = vld [vmem:[%s1 + $0x1f0] sm:$0xff]
  %v714 = vld [vmem:[%s1 + $0x1f8] sm:$0xff]
  %v715 = vadd.f32 %v587, %v651
  %v716 = vadd.f32 %v588, %v652
  %v717 = vadd.f32 %v589, %v653
  %v718 = vadd.f32 %v590, %v654
  %v719 = vadd.f32 %v591, %v655
  %v720 = vadd.f32 %v592, %v656
  %v721 = vadd.f32 %v593, %v657
  %v722 = vadd.f32 %v594, %v658
  %v723 = vadd.f32 %v595, %v659
  %v724 = vadd.f32 %v596, %v660
  %v725 = vadd.f32 %v597, %v661
  %v726 = vadd.f32 %v598, %v662
  %v727 = vadd.f32 %v599, %v663
  %v728 = vadd.f32 %v600, %v664
  %v729 = vadd.f32 %v601, %v665
  %v730 = vadd.f32 %v602, %v666
  %v731 = vadd.f32 %v603, %v667
  %v732 = vadd.f32 %v604, %v668
  %v733 = vadd.f32 %v605, %v669
  %v734 = vadd.f32 %v606, %v670
  %v735 = vadd.f32 %v607, %v671
  %v736 = vadd.f32 %v608, %v672
  %v737 = vadd.f32 %v609, %v673
  %v738 = vadd.f32 %v610, %v674
  %v739 = vadd.f32 %v611, %v675
  %v740 = vadd.f32 %v612, %v676
  %v741 = vadd.f32 %v613, %v677
  %v742 = vadd.f32 %v614, %v678
  %v743 = vadd.f32 %v615, %v679
  %v744 = vadd.f32 %v616, %v680
  %v745 = vadd.f32 %v617, %v681
  %v746 = vadd.f32 %v618, %v682
  %v747 = vadd.f32 %v619, %v683
  %v748 = vadd.f32 %v620, %v684
  %v749 = vadd.f32 %v621, %v685
  %v750 = vadd.f32 %v622, %v686
  %v751 = vadd.f32 %v623, %v687
  %v752 = vadd.f32 %v624, %v688
  %v753 = vadd.f32 %v625, %v689
  %v754 = vadd.f32 %v626, %v690
  %v755 = vadd.f32 %v627, %v691
  %v756 = vadd.f32 %v628, %v692
  %v757 = vadd.f32 %v629, %v693
  %v758 = vadd.f32 %v630, %v694
  %v759 = vadd.f32 %v631, %v695
  %v760 = vadd.f32 %v632, %v696
  %v761 = vadd.f32 %v633, %v697
  %v762 = vadd.f32 %v634, %v698
  %v763 = vadd.f32 %v635, %v699
  %v764 = vadd.f32 %v636, %v700
  %v765 = vadd.f32 %v637, %v701
  %v766 = vadd.f32 %v638, %v702
  %v767 = vadd.f32 %v639, %v703
  %v768 = vadd.f32 %v640, %v704
  %v769 = vadd.f32 %v641, %v705
  %v770 = vadd.f32 %v642, %v706
  %v771 = vadd.f32 %v643, %v707
  %v772 = vadd.f32 %v644, %v708
  %v773 = vadd.f32 %v645, %v709
  %v774 = vadd.f32 %v646, %v710
  %v775 = vadd.f32 %v647, %v711
  %v776 = vadd.f32 %v648, %v712
  %v777 = vadd.f32 %v649, %v713
  %v778 = vadd.f32 %v650, %v714
  %v779 = vmax.f32 %v715, 0.0
  %v780 = vmax.f32 %v716, 0.0
  %v781 = vmax.f32 %v717, 0.0
  %v782 = vmax.f32 %v718, 0.0
  %v783 = vmax.f32 %v719, 0.0
  %v784 = vmax.f32 %v720, 0.0
  %v785 = vmax.f32 %v721, 0.0
  %v786 = vmax.f32 %v722, 0.0
  %v787 = vmax.f32 %v723, 0.0
  %v788 = vmax.f32 %v724, 0.0
  %v789 = vmax.f32 %v725, 0.0
  %v790 = vmax.f32 %v726, 0.0
  %v791 = vmax.f32 %v727, 0.0
  %v792 = vmax.f32 %v728, 0.0
  %v793 = vmax.f32 %v729, 0.0
  %v794 = vmax.f32 %v730, 0.0
  %v795 = vmax.f32 %v731, 0.0
  %v796 = vmax.f32 %v732, 0.0
  %v797 = vmax.f32 %v733, 0.0
  %v798 = vmax.f32 %v734, 0.0
  %v799 = vmax.f32 %v735, 0.0
  %v800 = vmax.f32 %v736, 0.0
  %v801 = vmax.f32 %v737, 0.0
  %v802 = vmax.f32 %v738, 0.0
  %v803 = vmax.f32 %v739, 0.0
  %v804 = vmax.f32 %v740, 0.0
  %v805 = vmax.f32 %v741, 0.0
  %v806 = vmax.f32 %v742, 0.0
  %v807 = vmax.f32 %v743, 0.0
  %v808 = vmax.f32 %v744, 0.0
  %v809 = vmax.f32 %v745, 0.0
  %v810 = vmax.f32 %v746, 0.0
  %v811 = vmax.f32 %v747, 0.0
  %v812 = vmax.f32 %v748, 0.0
  %v813 = vmax.f32 %v749, 0.0
  %v814 = vmax.f32 %v750, 0.0
  %v815 = vmax.f32 %v751, 0.0
  %v816 = vmax.f32 %v752, 0.0
  %v817 = vmax.f32 %v753, 0.0
  %v818 = vmax.f32 %v754, 0.0
  %v819 = vmax.f32 %v755, 0.0
  %v820 = vmax.f32 %v756, 0.0
  %v821 = vmax.f32 %v757, 0.0
  %v822 = vmax.f32 %v758, 0.0
  %v823 = vmax.f32 %v759, 0.0
  %v824 = vmax.f32 %v760, 0.0
  %v825 = vmax.f32 %v761, 0.0
  %v826 = vmax.f32 %v762, 0.0
  %v827 = vmax.f32 %v763, 0.0
  %v828 = vmax.f32 %v764, 0.0
  %v829 = vmax.f32 %v765, 0.0
  %v830 = vmax.f32 %v766, 0.0
  %v831 = vmax.f32 %v767, 0.0
  %v832 = vmax.f32 %v768, 0.0
  %v833 = vmax.f32 %v769, 0.0
  %v834 = vmax.f32 %v770, 0.0
  %v835 = vmax.f32 %v771, 0.0
  %v836 = vmax.f32 %v772, 0.0
  %v837 = vmax.f32 %v773, 0.0
  %v838 = vmax.f32 %v774, 0.0
  %v839 = vmax.f32 %v775, 0.0
  %v840 = vmax.f32 %v776, 0.0
  %v841 = vmax.f32 %v777, 0.0
  %v842 = vmax.f32 %v778, 0.0
  %843 = vst [vmem:[%s7] sm:$0xff] %v779
  %844 = vst [vmem:[%s7 + $0x8] sm:$0xff] %v780
  %845 = vst [vmem:[%s7 + $0x10] sm:$0xff] %v781
  %846 = vst [vmem:[%s7 + $0x18] sm:$0xff] %v782
  %847 = vst [vmem:[%s7 + $0x20] sm:$0xff] %v783
  %848 = vst [vmem:[%s7 + $0x28] sm:$0xff] %v784
  %849 = vst [vmem:[%s7 + $0x30] sm:$0xff] %v785
  %850 = vst [vmem:[%s7 + $0x38] sm:$0xff] %v786
  %851 = vst [vmem:[%s7 + $0x40] sm:$0xff] %v787
  %852 = vst [vmem:[%s7 + $0x48] sm:$0xff] %v788
  %853 = vst [vmem:[%s7 + $0x50] sm:$0xff] %v789
  %854 = vst [vmem:[%s7 + $0x58] sm:$0xff] %v790
  %855 = vst [vmem:[%s7 + $0x60] sm:$0xff] %v791
  %856 = vst [vmem:[%s7 + $0x68] sm:$0xff] %v792
  %857 = vst [vmem:[%s7 + $0x70] sm:$0xff] %v793
  %858 = vst [vmem:[%s7 + $0x78] sm:$0xff] %v794
  %859 = vst [vmem:[%s7 + $0x80] sm:$0xff] %v795
  %860 = vst [vmem:[%s7 + $0x88] sm:$0xff] %v796
  %861 = vst [vmem:[%s7 + $0x90] sm:$0xff] %v797
  %862 = vst [vmem:[%s7 + $0x98] sm:$0xff] %v798
  %863 = vst [vmem:[%s7 + $0xa0] sm:$0xff] %v799
  %864 = vst [vmem:[%s7 + $0xa8] sm:$0xff] %v800
  %865 = vst [vmem:[%s7 + $0xb0] sm:$0xff] %v801
  %866 = vst [vmem:[%s7 + $0xb8] sm:$0xff] %v802
  %867 = vst [vmem:[%s7 + $0xc0] sm:$0xff] %v803
  %868 = vst [vmem:[%s7 + $0xc8] sm:$0xff] %v804
  %869 = vst [vmem:[%s7 + $0xd0] sm:$0xff] %v805
  %870 = vst [vmem:[%s7 + $0xd8] sm:$0xff] %v806
  %871 = vst [vmem:[%s7 + $0xe0] sm:$0xff] %v807
  %872 = vst [vmem:[%s7 + $0xe8] sm:$0xff] %v808
  %873 = vst [vmem:[%s7 + $0xf0] sm:$0xff] %v809
  %874 = vst [vmem:[%s7 + $0xf8] sm:$0xff] %v810
  %875 = vst [vmem:[%s7 + $0x100] sm:$0xff] %v811
  %876 = vst [vmem:[%s7 + $0x108] sm:$0xff] %v812
  %877 = vst [vmem:[%s7 + $0x110] sm:$0xff] %v813
  %878 = vst [vmem:[%s7 + $0x118] sm:$0xff] %v814
  %879 = vst [vmem:[%s7 + $0x120] sm:$0xff] %v815
  %880 = vst [vmem:[%s7 + $0x128] sm:$0xff] %v816
  %881 = vst [vmem:[%s7 + $0x130] sm:$0xff] %v817
  %882 = vst [vmem:[%s7 + $0x138] sm:$0xff] %v818
  %883 = vst [vmem:[%s7 + $0x140] sm:$0xff] %v819
  %884 = vst [vmem:[%s7 + $0x148] sm:$0xff] %v820
  %885 = vst [vmem:[%s7 + $0x150] sm:$0xff] %v821
  %886 = vst [vmem:[%s7 + $0x158] sm:$0xff] %v822
  %887 = vst [vmem:[%s7 + $0x160] sm:$0xff] %v823
  %888 = vst [vmem:[%s7 + $0x168] sm:$0xff] %v824
  %889 = vst [vmem:[%s7 + $0x170] sm:$0xff] %v825
  %890 = vst [vmem:[%s7 + $0x178] sm:$0xff] %v826
  %891 = vst [vmem:[%s7 + $0x180] sm:$0xff] %v827
  %892 = vst [vmem:[%s7 + $0x188] sm:$0xff] %v828
  %893 = vst [vmem:[%s7 + $0x190] sm:$0xff] %v829
  %894 = vst [vmem:[%s7 + $0x198] sm:$0xff] %v830
  %895 = vst [vmem:[%s7 + $0x1a0] sm:$0xff] %v831
  %896 = vst [vmem:[%s7 + $0x1a8] sm:$0xff] %v832
  %897 = vst [vmem:[%s7 + $0x1b0] sm:$0xff] %v833
  %898 = vst [vmem:[%s7 + $0x1b8] sm:$0xff] %v834
  %899 = vst [vmem:[%s7 + $0x1c0] sm:$0xff] %v835
  %900 = vst [vmem:[%s7 + $0x1c8] sm:$0xff] %v836
  %901 = vst [vmem:[%s7 + $0x1d0] sm:$0xff] %v837
  %902 = vst [vmem:[%s7 + $0x1d8] sm:$0xff] %v838
  %903 = vst [vmem:[%s7 + $0x1e0] sm:$0xff] %v839
  %904 = vst [vmem:[%s7 + $0x1e8] sm:$0xff] %v840
  %905 = vst [vmem:[%s7 + $0x1f0] sm:$0xff] %v841
  %906 = vst [vmem:[%s7 + $0x1f8] sm:$0xff] %v842
  // Predicated region
  $region30: #{res_bottle_block.7} parent=0 // pred_check
    _
  $region31: #{res_bottle_block.7} parent=0 // pred_check_branch
    %908 = sbr.rel (0) target = $region33
  $region32: #{res_bottle_block.7} parent=0 // pred_region
    _
  $region33: #{res_bottle_block.7} parent=0 // pred_fallthru
    _
  // Predicated region
  $region34: #{res_bottle_block.7} parent=0 // pred_check
    _
  $region35: #{res_bottle_block.7} parent=0 // pred_check_branch
    %910 = sbr.rel (0) target = $region37
  $region36: #{res_bottle_block.7} parent=0 // pred_region
    _
  $region37: #{res_bottle_block.7} parent=0 // pred_fallthru
    _

// kernel: res_bottle_block.5
$region0: #{res_bottle_block.5}
  #allocation0 [shape = 'u32[]', space=smem, size = 0x4, offset = 0x4, fixed_abs, tag = 'smem constant byte address 0x4 - core index']
  #allocation1 [shape = 'u32[72,128]{1,0:T(1,128)}', space=vmem, size = 0x9000, scoped, tag = 'internal scratch']
  #allocation2 [shape = 'f32[2,18,24,128]{3,2,1,0:T(8,128)}', space=vmem, size = 0x6c000, scoped, tag = 'scratch operand']
  #allocation3 [shape = 'f32[18,24,128]{2,1,0:T(8,128)}', space=vmem, size = 0x36000, scoped, tag = 'scratch operand']
  #allocation4 [shape = 's32[2]{0}', space=sflag, size = 0x8, scoped, tag = 'scratch operand']
  #allocation5 [shape = 's32[]', space=sflag, size = 0x4, offset = 0, fixed_abs, tag = 'sflag constant byte address 0x0 - dummy sync flag']
  #allocation6 [shape = 's32[]', space=sflag, size = 0x4, offset = 0, fixed_abs, tag = 'sflag constant byte address 0x0 - dummy sync flag']
  %s0 = inlined_call_operand.vmem [shape: f32[2,18,24,128], index: 0, kind: input, shape index: {}]
  %s1 = inlined_call_operand.vmem [shape: f32[128,128], index: 1, kind: input, shape index: {}]
  %s2 = inlined_call_operand.vmem [shape: f32[1,128], index: 2, kind: input, shape index: {}]
  %s3 = inlined_call_operand.vmem [shape: f32[1,128], index: 3, kind: input, shape index: {}]
  %s4 = inlined_call_operand.vmem [shape: f32[9,128,128], index: 4, kind: input, shape index: {}]
  %s5 = inlined_call_operand.vmem [shape: f32[512,128], index: 5, kind: output, shape index: {0}]
  %s6 = inlined_call_operand.vmem [shape: f32[2,1,128], index: 6, kind: output, shape index: {1}]
  %s7 = inlined_call_operand.vmem [shape: f32[2,1,128], index: 7, kind: output, shape index: {2}]
  %8 = xla_tuple %s5, %s6, %s7
  %s9 = sld [smem:[#allocation0]]
  $region115: #{res_bottle_block.5} parent=0
    _
  %s11 = ssub.s32 1, %s9
  %s12 = scalar_select 0, %s11, %s9
  loop: start=0, step=1, limit=4
  $region2: #{res_bottle_block.5} parent=0 // loop_pre_header
    _
  $region3: #{res_bottle_block.5} parent=0 // loop_header
    %s14 = sphi 0, %s18
    %p15 = scmp.ge.s32.totalorder %s14, 4
    %s21 = sphi 0, %s33
    %s22 = sphi 0, %s29
    %s23 = sphi 0, %s21
    %s24 = sphi 0, %s22
    %s25 = sphi 0, %s23
    %s26 = sphi 0, %s24
    %s34 = sphi 0, %s34
    %s36 = sphi 0, %s34
    %s37 = sphi 0, %s36
    %s51 = sphi 0, %s37
    %s55 = sphi 0, %s55
    %s57 = sphi 0, %s55
    %s58 = sphi 0, %s57
    %s72 = sphi 0, %s58
    %s76 = sphi 0, %s76
    %s78 = sphi 0, %s76
    %s79 = sphi 0, %s78
    %s93 = sphi 0, %s79
    %s97 = sphi 0, %s97
    %s99 = sphi 0, %s97
    %s100 = sphi 0, %s99
    %s114 = sphi 0, %s100
    %s122 = sphi 0, %s124
    %s125 = sphi 0, %s122
    %s126 = sphi 0, %s125
    %s142 = sphi 0, %s126
    %s150 = sphi 0, %s152
    %s153 = sphi 0, %s150
    %s154 = sphi 0, %s153
    %s170 = sphi 0, %s154
    %s178 = sphi 0, %s180
    %s181 = sphi 0, %s178
    %s182 = sphi 0, %s181
    %s198 = sphi 0, %s182
  $region4: #{res_bottle_block.5} parent=0 // loop_header_branch
    %17 = sbr.rel (%p15) target = $region8
  $region5: #{res_bottle_block.5} parent=0 // loop_body
    %s19 = ssub.s32 %s14, 1
    %s20 = ssub.s32 %s14, 2
    %s27 = sadd.s32 1, %s22
    %p28 = scmp.ge.s32.totalorder %s27, 1
    %s29 = scalar_select %p28, 0, %s27
    %s30 = sadd.s32 1, %s21
    %s31 = scalar_select %p28, %s30, %s21
    %p32 = scmp.ge.s32.totalorder %s31, 2
    %s33 = scalar_select %p32, 0, %s31
    %s35 = sadd.s32 %s34, 1
    %p38 = scmp.eq.s32.totalorder %s14, 1
    %p39 = scmp.ne.s32.totalorder %s34, %s36
    %p40 = scmp.eq.s32.totalorder %s14, 0
    %p41 = por %p39, %p40
    %p42 = scmp.ne.s32.totalorder %s34, %s36
    %p43 = scmp.eq.s32.totalorder %s19, 1
    %p44 = por %p42, %p43
    %p45 = scmp.ne.s32.totalorder %s36, %s37
    %p46 = scmp.eq.s32.totalorder %s19, 0
    %p47 = por %p45, %p46
    %p48 = scmp.ne.s32.totalorder %s36, %s37
    %p49 = scmp.eq.s32.totalorder %s20, 1
    %p50 = por %p48, %p49
    %p52 = scmp.ne.s32.totalorder %s37, %s51
    %p53 = scmp.eq.s32.totalorder %s20, 0
    %p54 = por %p52, %p53
    %s56 = sadd.s32 %s55, 1
    %p59 = scmp.eq.s32.totalorder %s14, 1
    %p60 = scmp.ne.s32.totalorder %s55, %s57
    %p61 = scmp.eq.s32.totalorder %s14, 0
    %p62 = por %p60, %p61
    %p63 = scmp.ne.s32.totalorder %s55, %s57
    %p64 = scmp.eq.s32.totalorder %s19, 1
    %p65 = por %p63, %p64
    %p66 = scmp.ne.s32.totalorder %s57, %s58
    %p67 = scmp.eq.s32.totalorder %s19, 0
    %p68 = por %p66, %p67
    %p69 = scmp.ne.s32.totalorder %s57, %s58
    %p70 = scmp.eq.s32.totalorder %s20, 1
    %p71 = por %p69, %p70
    %p73 = scmp.ne.s32.totalorder %s58, %s72
    %p74 = scmp.eq.s32.totalorder %s20, 0
    %p75 = por %p73, %p74
    %s77 = sadd.s32 %s76, 1
    %p80 = scmp.eq.s32.totalorder %s14, 1
    %p81 = scmp.ne.s32.totalorder %s76, %s78
    %p82 = scmp.eq.s32.totalorder %s14, 0
    %p83 = por %p81, %p82
    %p84 = scmp.ne.s32.totalorder %s76, %s78
    %p85 = scmp.eq.s32.totalorder %s19, 1
    %p86 = por %p84, %p85
    %p87 = scmp.ne.s32.totalorder %s78, %s79
    %p88 = scmp.eq.s32.totalorder %s19, 0
    %p89 = por %p87, %p88
    %p90 = scmp.ne.s32.totalorder %s78, %s79
    %p91 = scmp.eq.s32.totalorder %s20, 1
    %p92 = por %p90, %p91
    %p94 = scmp.ne.s32.totalorder %s79, %s93
    %p95 = scmp.eq.s32.totalorder %s20, 0
    %p96 = por %p94, %p95
    %s98 = sadd.s32 %s97, 1
    %p101 = scmp.eq.s32.totalorder %s14, 1
    %p102 = scmp.ne.s32.totalorder %s97, %s99
    %p103 = scmp.eq.s32.totalorder %s14, 0
    %p104 = por %p102, %p103
    %p105 = scmp.ne.s32.totalorder %s97, %s99
    %p106 = scmp.eq.s32.totalorder %s19, 1
    %p107 = por %p105, %p106
    %p108 = scmp.ne.s32.totalorder %s99, %s100
    %p109 = scmp.eq.s32.totalorder %s19, 0
    %p110 = por %p108, %p109
    %p111 = scmp.ne.s32.totalorder %s99, %s100
    %p112 = scmp.eq.s32.totalorder %s20, 1
    %p113 = por %p111, %p112
    %p115 = scmp.ne.s32.totalorder %s100, %s114
    %p116 = scmp.eq.s32.totalorder %s20, 0
    %p117 = por %p115, %p116
    %s118 = sadd.s32 %s21, %s22
    %s119 = sadd.s32 %s33, %s29
    %s120 = ssub.s32 %s118, %s119
    %p121 = scmp.eq.s32.totalorder %s120, 0
    %s123 = sadd.s32 %s122, 1
    %s124 = scalar_select %p121, %s122, %s123
    %p127 = pneg %p121
    %p128 = scmp.eq.s32.totalorder %s14, 1
    %p129 = por %p127, %p128
    %p130 = scmp.ne.s32.totalorder %s122, %s125
    %p131 = scmp.eq.s32.totalorder %s14, 0
    %p132 = por %p130, %p131
    %p133 = scmp.ne.s32.totalorder %s122, %s125
    %p134 = scmp.eq.s32.totalorder %s19, 1
    %p135 = por %p133, %p134
    %p136 = scmp.ne.s32.totalorder %s125, %s126
    %p137 = scmp.eq.s32.totalorder %s19, 0
    %p138 = por %p136, %p137
    %p139 = scmp.ne.s32.totalorder %s125, %s126
    %p140 = scmp.eq.s32.totalorder %s20, 1
    %p141 = por %p139, %p140
    %p143 = scmp.ne.s32.totalorder %s126, %s142
    %p144 = scmp.eq.s32.totalorder %s20, 0
    %p145 = por %p143, %p144
    %s146 = sadd.s32 %s21, %s22
    %s147 = sadd.s32 %s33, %s29
    %s148 = ssub.s32 %s146, %s147
    %p149 = scmp.eq.s32.totalorder %s148, 0
    %s151 = sadd.s32 %s150, 1
    %s152 = scalar_select %p149, %s150, %s151
    %p155 = pneg %p149
    %p156 = scmp.eq.s32.totalorder %s14, 1
    %p157 = por %p155, %p156
    %p158 = scmp.ne.s32.totalorder %s150, %s153
    %p159 = scmp.eq.s32.totalorder %s14, 0
    %p160 = por %p158, %p159
    %p161 = scmp.ne.s32.totalorder %s150, %s153
    %p162 = scmp.eq.s32.totalorder %s19, 1
    %p163 = por %p161, %p162
    %p164 = scmp.ne.s32.totalorder %s153, %s154
    %p165 = scmp.eq.s32.totalorder %s19, 0
    %p166 = por %p164, %p165
    %p167 = scmp.ne.s32.totalorder %s153, %s154
    %p168 = scmp.eq.s32.totalorder %s20, 1
    %p169 = por %p167, %p168
    %p171 = scmp.ne.s32.totalorder %s154, %s170
    %p172 = scmp.eq.s32.totalorder %s20, 0
    %p173 = por %p171, %p172
    %s174 = sadd.s32 %s21, %s22
    %s175 = sadd.s32 %s33, %s29
    %s176 = ssub.s32 %s174, %s175
    %p177 = scmp.eq.s32.totalorder %s176, 0
    %s179 = sadd.s32 %s178, 1
    %s180 = scalar_select %p177, %s178, %s179
    %p183 = pneg %p177
    %p184 = scmp.eq.s32.totalorder %s14, 1
    %p185 = por %p183, %p184
    %p186 = scmp.ne.s32.totalorder %s178, %s181
    %p187 = scmp.eq.s32.totalorder %s14, 0
    %p188 = por %p186, %p187
    %p189 = scmp.ne.s32.totalorder %s178, %s181
    %p190 = scmp.eq.s32.totalorder %s19, 1
    %p191 = por %p189, %p190
    %p192 = scmp.ne.s32.totalorder %s181, %s182
    %p193 = scmp.eq.s32.totalorder %s19, 0
    %p194 = por %p192, %p193
    %p195 = scmp.ne.s32.totalorder %s181, %s182
    %p196 = scmp.eq.s32.totalorder %s20, 1
    %p197 = por %p195, %p196
    %p199 = scmp.ne.s32.totalorder %s182, %s198
    %p200 = scmp.eq.s32.totalorder %s20, 0
    %p201 = por %p199, %p200
    %p202 = scmp.le.s32.totalorder 1, %s14
    %p203 = scmp.lt.s32.totalorder %s14, 3
    %p204 = pnand %p202, %p203
    %p205 = pneg %p204
    // Predicated region
    $region9: #{res_bottle_block.5} parent=5 // pred_check
      _
    $region10: #{res_bottle_block.5} parent=5 // pred_check_branch
      %207 = sbr.rel (%p204) target = $region12
    $region11: #{res_bottle_block.5} parent=5 // pred_region
      %s208 = ssub.s32 %s14, 1
      // Predicated region
      $region13: #{res_bottle_block.5} parent=11 // pred_check
        %p209 = pneg %p47
      $region14: #{res_bottle_block.5} parent=11 // pred_check_branch
        %211 = sbr.rel (%p209) target = $region16
      $region15: #{res_bottle_block.5} parent=11 // pred_region
        _
      $region16: #{res_bottle_block.5} parent=11 // pred_fallthru
        _
      // Predicated region
      $region17: #{res_bottle_block.5} parent=11 // pred_check
        %p212 = pneg %p68
      $region18: #{res_bottle_block.5} parent=11 // pred_check_branch
        %214 = sbr.rel (%p212) target = $region20
      $region19: #{res_bottle_block.5} parent=11 // pred_region
        _
      $region20: #{res_bottle_block.5} parent=11 // pred_fallthru
        _
      // Predicated region
      $region21: #{res_bottle_block.5} parent=11 // pred_check
        %p215 = pneg %p89
      $region22: #{res_bottle_block.5} parent=11 // pred_check_branch
        %217 = sbr.rel (%p215) target = $region24
      $region23: #{res_bottle_block.5} parent=11 // pred_region
        _
      $region24: #{res_bottle_block.5} parent=11 // pred_fallthru
        _
      // Predicated region
      $region25: #{res_bottle_block.5} parent=11 // pred_check
        %p218 = pneg %p110
      $region26: #{res_bottle_block.5} parent=11 // pred_check_branch
        %220 = sbr.rel (%p218) target = $region28
      $region27: #{res_bottle_block.5} parent=11 // pred_region
        _
      $region28: #{res_bottle_block.5} parent=11 // pred_fallthru
        _
    $region12: #{res_bottle_block.5} parent=5 // pred_fallthru
      _
    %p221 = scmp.lt.s32.totalorder %s14, 2
    // Predicated region
    $region29: #{res_bottle_block.5} parent=5 // pred_check
      %p222 = pneg %p221
    $region30: #{res_bottle_block.5} parent=5 // pred_check_branch
      %224 = sbr.rel (%p222) target = $region32
    $region31: #{res_bottle_block.5} parent=5 // pred_region
      _
    $region32: #{res_bottle_block.5} parent=5 // pred_fallthru
      _
    %p225 = scmp.le.s32.totalorder 1, %s14
    %p226 = scmp.lt.s32.totalorder %s14, 3
    %p227 = pnand %p225, %p226
    %p228 = pneg %p227
    // Predicated region
    $region33: #{res_bottle_block.5} parent=5 // pred_check
      _
    $region34: #{res_bottle_block.5} parent=5 // pred_check_branch
      %230 = sbr.rel (%p227) target = $region36
    $region35: #{res_bottle_block.5} parent=5 // pred_region
      %s231 = ssub.s32 %s14, 1
      %p232 = pneg %p47
      %p233 = pneg %p44
      %p234 = pneg %p68
      %p235 = pneg %p65
      %p236 = pneg %p89
      %p237 = pneg %p86
      %p238 = pneg %p110
      %p239 = pneg %p107
      %p240 = pneg %p138
      %p241 = pneg %p135
      %s242 = sadd.s32 %s23, %s24
      %s243 = smul.u32 32, %s242
      %p244 = scmp.lt.s32.totalorder %s243, 63
      %s245 = scalar_select %p244, %s243, 63
      %s246 = smul.addr %s245, 8
      %s247 = scalar_lea.vmem %s5, %s246
      %p248 = pneg %p166
      %p249 = pneg %p163
      %s250 = sadd.s32 %s23, %s24
      %p251 = scmp.lt.s32.totalorder %s250, 1
      %s252 = scalar_select %p251, %s250, 1
      %s253 = scalar_lea.vmem %s6, %s252
      %p254 = pneg %p194
      %p255 = pneg %p191
      %s256 = sadd.s32 %s23, %s24
      %p257 = scmp.lt.s32.totalorder %s256, 1
      %s258 = scalar_select %p257, %s256, 1
      %s259 = scalar_lea.vmem %s7, %s258
      %s260 = sadd.s32 %s23, %s24
      %s261 = smul.u32 32, %s260
      %p262 = scmp.lt.s32.totalorder %s261, 63
      %s263 = scalar_select %p262, %s261, 63
      %s264 = smul.addr %s263, 8
      %s265 = scalar_lea.vmem %s5, %s264
      %s266 = sadd.s32 %s23, %s24
      %s267 = smul.u32 32, %s266
      %s268 = sadd.s32 %s23, %s24
      %p269 = scmp.lt.s32.totalorder %s268, 1
      %s270 = scalar_select %p269, %s268, 1
      %s271 = scalar_lea.vmem %s6, %s270
      %s272 = sadd.s32 %s23, %s24
      %s273 = sadd.s32 %s23, %s24
      %p274 = scmp.lt.s32.totalorder %s273, 1
      %s275 = scalar_select %p274, %s273, 1
      %s276 = scalar_lea.vmem %s7, %s275
      %s277 = sadd.s32 %s23, %s24
      %s278 = sadd.s32 %s23, %s24
      %p279 = scmp.lt.s32.totalorder %s278, 0
      %s280 = ssub.s32 0, %s278
      %s281 = scalar_select %p279, %s280, %s278
      %s282 = sand.u32 %s281, 1
      %s283 = ssub.s32 0, %s282
      %s284 = scalar_select %p279, %s283, %s282
      %p285 = scmp.ne.s32.totalorder %s284, 0
      %p286 = scmp.lt.s32.totalorder %s284, 0
      %p287 = pnand %p286, %p285
      %p288 = pneg %p287
      %s289 = sadd.s32 %s284, 2
      %s290 = scalar_select %p288, %s289, %s284
      %p291 = scmp.eq.s32.totalorder %s278, 0
      // Predicated region
      $region37: #{res_bottle_block.5} parent=35 // pred_check
        %p292 = pneg %p291
      $region38: #{res_bottle_block.5} parent=35 // pred_check_branch
        %294 = sbr.rel (%p292) target = $region40
      $region39: #{res_bottle_block.5} parent=35 // pred_region
        %s295 = smul.u32 %s24, 16
        %s296 = smul.u32 %s295, 24
        %s297 = smul.u32 %s23, 432
        %s298 = sadd.s32 %s296, %s297
        %s299 = scalar_lea.vmem %s0, %s298
        %s300 = smul.u32 %s290, 432
        %s301 = scalar_lea.vmem [#allocation2], %s300
        %s302 = scalar_lea.sflag [#allocation4], %s290
        // Predicated region
        $region41: #{res_bottle_block.5} parent=39 // pred_check
          _
        $region42: #{res_bottle_block.5} parent=39 // pred_check_branch
          %304 = sbr.rel (0) target = $region44
        $region43: #{res_bottle_block.5} parent=39 // pred_region
          loop: start=0, step=1, limit=1
          $region45: #{res_bottle_block.5} parent=43 // loop_pre_header
            _
          $region46: #{res_bottle_block.5} parent=43 // loop_header
            %s306 = sphi 0, %s310
            %p307 = scmp.ge.s32.totalorder %s306, 1
            %s311 = sphi %s299, %s299
            %s312 = sphi %s301, %s301
          $region47: #{res_bottle_block.5} parent=43 // loop_header_branch
            %309 = sbr.rel (%p307) target = $region51
          $region48: #{res_bottle_block.5} parent=43 // loop_body
            %v313 = vld [vmem:[%s311] sm:$0xff]
            %314 = vst [vmem:[%s312] sm:$0xff] %v313
            %v315 = vld [vmem:[%s311 + $0x8] sm:$0xff]
            %316 = vst [vmem:[%s312 + $0x8] sm:$0xff] %v315
            %v317 = vld [vmem:[%s311 + $0x10] sm:$0xff]
            %318 = vst [vmem:[%s312 + $0x10] sm:$0xff] %v317
            %v319 = vld [vmem:[%s311 + $0x18] sm:$0xff]
            %320 = vst [vmem:[%s312 + $0x18] sm:$0xff] %v319
            %v321 = vld [vmem:[%s311 + $0x20] sm:$0xff]
            %322 = vst [vmem:[%s312 + $0x20] sm:$0xff] %v321
            %v323 = vld [vmem:[%s311 + $0x28] sm:$0xff]
            %324 = vst [vmem:[%s312 + $0x28] sm:$0xff] %v323
            %v325 = vld [vmem:[%s311 + $0x30] sm:$0xff]
            %326 = vst [vmem:[%s312 + $0x30] sm:$0xff] %v325
            %v327 = vld [vmem:[%s311 + $0x38] sm:$0xff]
            %328 = vst [vmem:[%s312 + $0x38] sm:$0xff] %v327
            %v329 = vld [vmem:[%s311 + $0x40] sm:$0xff]
            %330 = vst [vmem:[%s312 + $0x40] sm:$0xff] %v329
            %v331 = vld [vmem:[%s311 + $0x48] sm:$0xff]
            %332 = vst [vmem:[%s312 + $0x48] sm:$0xff] %v331
            %v333 = vld [vmem:[%s311 + $0x50] sm:$0xff]
            %334 = vst [vmem:[%s312 + $0x50] sm:$0xff] %v333
            %v335 = vld [vmem:[%s311 + $0x58] sm:$0xff]
            %336 = vst [vmem:[%s312 + $0x58] sm:$0xff] %v335
            %v337 = vld [vmem:[%s311 + $0x60] sm:$0xff]
            %338 = vst [vmem:[%s312 + $0x60] sm:$0xff] %v337
            %v339 = vld [vmem:[%s311 + $0x68] sm:$0xff]
            %340 = vst [vmem:[%s312 + $0x68] sm:$0xff] %v339
            %v341 = vld [vmem:[%s311 + $0x70] sm:$0xff]
            %342 = vst [vmem:[%s312 + $0x70] sm:$0xff] %v341
            %v343 = vld [vmem:[%s311 + $0x78] sm:$0xff]
            %344 = vst [vmem:[%s312 + $0x78] sm:$0xff] %v343
            %v345 = vld [vmem:[%s311 + $0x80] sm:$0xff]
            %346 = vst [vmem:[%s312 + $0x80] sm:$0xff] %v345
            %v347 = vld [vmem:[%s311 + $0x88] sm:$0xff]
            %348 = vst [vmem:[%s312 + $0x88] sm:$0xff] %v347
            %v349 = vld [vmem:[%s311 + $0x90] sm:$0xff]
            %350 = vst [vmem:[%s312 + $0x90] sm:$0xff] %v349
            %v351 = vld [vmem:[%s311 + $0x98] sm:$0xff]
            %352 = vst [vmem:[%s312 + $0x98] sm:$0xff] %v351
            %v353 = vld [vmem:[%s311 + $0xa0] sm:$0xff]
            %354 = vst [vmem:[%s312 + $0xa0] sm:$0xff] %v353
            %v355 = vld [vmem:[%s311 + $0xa8] sm:$0xff]
            %356 = vst [vmem:[%s312 + $0xa8] sm:$0xff] %v355
            %v357 = vld [vmem:[%s311 + $0xb0] sm:$0xff]
            %358 = vst [vmem:[%s312 + $0xb0] sm:$0xff] %v357
            %v359 = vld [vmem:[%s311 + $0xb8] sm:$0xff]
            %360 = vst [vmem:[%s312 + $0xb8] sm:$0xff] %v359
            %v361 = vld [vmem:[%s311 + $0xc0] sm:$0xff]
            %362 = vst [vmem:[%s312 + $0xc0] sm:$0xff] %v361
            %v363 = vld [vmem:[%s311 + $0xc8] sm:$0xff]
            %364 = vst [vmem:[%s312 + $0xc8] sm:$0xff] %v363
            %v365 = vld [vmem:[%s311 + $0xd0] sm:$0xff]
            %366 = vst [vmem:[%s312 + $0xd0] sm:$0xff] %v365
            %v367 = vld [vmem:[%s311 + $0xd8] sm:$0xff]
            %368 = vst [vmem:[%s312 + $0xd8] sm:$0xff] %v367
            %v369 = vld [vmem:[%s311 + $0xe0] sm:$0xff]
            %370 = vst [vmem:[%s312 + $0xe0] sm:$0xff] %v369
            %v371 = vld [vmem:[%s311 + $0xe8] sm:$0xff]
            %372 = vst [vmem:[%s312 + $0xe8] sm:$0xff] %v371
            %v373 = vld [vmem:[%s311 + $0xf0] sm:$0xff]
            %374 = vst [vmem:[%s312 + $0xf0] sm:$0xff] %v373
            %v375 = vld [vmem:[%s311 + $0xf8] sm:$0xff]
            %376 = vst [vmem:[%s312 + $0xf8] sm:$0xff] %v375
            %v377 = vld [vmem:[%s311 + $0x100] sm:$0xff]
            %378 = vst [vmem:[%s312 + $0x100] sm:$0xff] %v377
            %v379 = vld [vmem:[%s311 + $0x108] sm:$0xff]
            %380 = vst [vmem:[%s312 + $0x108] sm:$0xff] %v379
            %v381 = vld [vmem:[%s311 + $0x110] sm:$0xff]
            %382 = vst [vmem:[%s312 + $0x110] sm:$0xff] %v381
            %v383 = vld [vmem:[%s311 + $0x118] sm:$0xff]
            %384 = vst [vmem:[%s312 + $0x118] sm:$0xff] %v383
            %v385 = vld [vmem:[%s311 + $0x120] sm:$0xff]
            %386 = vst [vmem:[%s312 + $0x120] sm:$0xff] %v385
            %v387 = vld [vmem:[%s311 + $0x128] sm:$0xff]
            %388 = vst [vmem:[%s312 + $0x128] sm:$0xff] %v387
            %v389 = vld [vmem:[%s311 + $0x130] sm:$0xff]
            %390 = vst [vmem:[%s312 + $0x130] sm:$0xff] %v389
            %v391 = vld [vmem:[%s311 + $0x138] sm:$0xff]
            %392 = vst [vmem:[%s312 + $0x138] sm:$0xff] %v391
            %v393 = vld [vmem:[%s311 + $0x140] sm:$0xff]
            %394 = vst [vmem:[%s312 + $0x140] sm:$0xff] %v393
            %v395 = vld [vmem:[%s311 + $0x148] sm:$0xff]
            %396 = vst [vmem:[%s312 + $0x148] sm:$0xff] %v395
            %v397 = vld [vmem:[%s311 + $0x150] sm:$0xff]
            %398 = vst [vmem:[%s312 + $0x150] sm:$0xff] %v397
            %v399 = vld [vmem:[%s311 + $0x158] sm:$0xff]
            %400 = vst [vmem:[%s312 + $0x158] sm:$0xff] %v399
            %v401 = vld [vmem:[%s311 + $0x160] sm:$0xff]
            %402 = vst [vmem:[%s312 + $0x160] sm:$0xff] %v401
            %v403 = vld [vmem:[%s311 + $0x168] sm:$0xff]
            %404 = vst [vmem:[%s312 + $0x168] sm:$0xff] %v403
            %v405 = vld [vmem:[%s311 + $0x170] sm:$0xff]
            %406 = vst [vmem:[%s312 + $0x170] sm:$0xff] %v405
            %v407 = vld [vmem:[%s311 + $0x178] sm:$0xff]
            %408 = vst [vmem:[%s312 + $0x178] sm:$0xff] %v407
            %v409 = vld [vmem:[%s311 + $0x180] sm:$0xff]
            %410 = vst [vmem:[%s312 + $0x180] sm:$0xff] %v409
            %v411 = vld [vmem:[%s311 + $0x188] sm:$0xff]
            %412 = vst [vmem:[%s312 + $0x188] sm:$0xff] %v411
            %v413 = vld [vmem:[%s311 + $0x190] sm:$0xff]
            %414 = vst [vmem:[%s312 + $0x190] sm:$0xff] %v413
            %v415 = vld [vmem:[%s311 + $0x198] sm:$0xff]
            %416 = vst [vmem:[%s312 + $0x198] sm:$0xff] %v415
            %v417 = vld [vmem:[%s311 + $0x1a0] sm:$0xff]
            %418 = vst [vmem:[%s312 + $0x1a0] sm:$0xff] %v417
            %v419 = vld [vmem:[%s311 + $0x1a8] sm:$0xff]
            %420 = vst [vmem:[%s312 + $0x1a8] sm:$0xff] %v419
          $region49: #{res_bottle_block.5} parent=43 // loop_footer
            %s310 = sadd.s32 1, %s306
          $region50: #{res_bottle_block.5} parent=43 // loop_footer_branch
            %305 = sbr.rel target = $region46
          $region51: #{res_bottle_block.5} parent=43 // loop_exit
            _
        $region44: #{res_bottle_block.5} parent=39 // pred_fallthru
          _
        // Predicated region
        $region52: #{res_bottle_block.5} parent=39 // pred_check
          _
        $region53: #{res_bottle_block.5} parent=39 // pred_check_branch
          %422 = sbr.rel target = $region55
        $region54: #{res_bottle_block.5} parent=39 // pred_region
          _
        $region55: #{res_bottle_block.5} parent=39 // pred_fallthru
          _
        // Predicated region
        $region56: #{res_bottle_block.5} parent=39 // pred_check
          _
        $region57: #{res_bottle_block.5} parent=39 // pred_check_branch
          %425 = sbr.rel (0) target = $region59
        $region58: #{res_bottle_block.5} parent=39 // pred_region
          %426 = vsyncadd %s302, 6912
        $region59: #{res_bottle_block.5} parent=39 // pred_fallthru
          _
      $region40: #{res_bottle_block.5} parent=35 // pred_fallthru
        _
      %s427 = sadd.s32 %s278, 1
      %p428 = scmp.lt.s32.totalorder %s427, 2
      // Predicated region
      $region60: #{res_bottle_block.5} parent=35 // pred_check
        %p429 = pneg %p428
      $region61: #{res_bottle_block.5} parent=35 // pred_check_branch
        %431 = sbr.rel (%p429) target = $region63
      $region62: #{res_bottle_block.5} parent=35 // pred_region
        %p432 = scmp.eq.s32.totalorder %s24, 0
        %s433 = sadd.s32 %s23, 1
        %s434 = scalar_select %p432, %s433, %s23
        %s435 = sadd.s32 %s24, 1
        %s436 = scalar_select %p432, 0, %s435
        %s437 = ssub.s32 1, %s290
        %s438 = smul.u32 %s436, 16
        %s439 = smul.u32 %s438, 24
        %s440 = smul.u32 %s434, 432
        %s441 = sadd.s32 %s439, %s440
        %s442 = scalar_lea.vmem %s0, %s441
        %s443 = smul.u32 %s437, 432
        %s444 = scalar_lea.vmem [#allocation2], %s443
        %s445 = scalar_lea.sflag [#allocation4], %s437
        // Predicated region
        $region64: #{res_bottle_block.5} parent=62 // pred_check
          _
        $region65: #{res_bottle_block.5} parent=62 // pred_check_branch
          %447 = sbr.rel (0) target = $region67
        $region66: #{res_bottle_block.5} parent=62 // pred_region
          loop: start=0, step=1, limit=1
          $region68: #{res_bottle_block.5} parent=66 // loop_pre_header
            _
          $region69: #{res_bottle_block.5} parent=66 // loop_header
            %s449 = sphi 0, %s453
            %p450 = scmp.ge.s32.totalorder %s449, 1
            %s454 = sphi %s442, %s442
            %s455 = sphi %s444, %s444
          $region70: #{res_bottle_block.5} parent=66 // loop_header_branch
            %452 = sbr.rel (%p450) target = $region74
          $region71: #{res_bottle_block.5} parent=66 // loop_body
            %v456 = vld [vmem:[%s454] sm:$0xff]
            %457 = vst [vmem:[%s455] sm:$0xff] %v456
            %v458 = vld [vmem:[%s454 + $0x8] sm:$0xff]
            %459 = vst [vmem:[%s455 + $0x8] sm:$0xff] %v458
            %v460 = vld [vmem:[%s454 + $0x10] sm:$0xff]
            %461 = vst [vmem:[%s455 + $0x10] sm:$0xff] %v460
            %v462 = vld [vmem:[%s454 + $0x18] sm:$0xff]
            %463 = vst [vmem:[%s455 + $0x18] sm:$0xff] %v462
            %v464 = vld [vmem:[%s454 + $0x20] sm:$0xff]
            %465 = vst [vmem:[%s455 + $0x20] sm:$0xff] %v464
            %v466 = vld [vmem:[%s454 + $0x28] sm:$0xff]
            %467 = vst [vmem:[%s455 + $0x28] sm:$0xff] %v466
            %v468 = vld [vmem:[%s454 + $0x30] sm:$0xff]
            %469 = vst [vmem:[%s455 + $0x30] sm:$0xff] %v468
            %v470 = vld [vmem:[%s454 + $0x38] sm:$0xff]
            %471 = vst [vmem:[%s455 + $0x38] sm:$0xff] %v470
            %v472 = vld [vmem:[%s454 + $0x40] sm:$0xff]
            %473 = vst [vmem:[%s455 + $0x40] sm:$0xff] %v472
            %v474 = vld [vmem:[%s454 + $0x48] sm:$0xff]
            %475 = vst [vmem:[%s455 + $0x48] sm:$0xff] %v474
            %v476 = vld [vmem:[%s454 + $0x50] sm:$0xff]
            %477 = vst [vmem:[%s455 + $0x50] sm:$0xff] %v476
            %v478 = vld [vmem:[%s454 + $0x58] sm:$0xff]
            %479 = vst [vmem:[%s455 + $0x58] sm:$0xff] %v478
            %v480 = vld [vmem:[%s454 + $0x60] sm:$0xff]
            %481 = vst [vmem:[%s455 + $0x60] sm:$0xff] %v480
            %v482 = vld [vmem:[%s454 + $0x68] sm:$0xff]
            %483 = vst [vmem:[%s455 + $0x68] sm:$0xff] %v482
            %v484 = vld [vmem:[%s454 + $0x70] sm:$0xff]
            %485 = vst [vmem:[%s455 + $0x70] sm:$0xff] %v484
            %v486 = vld [vmem:[%s454 + $0x78] sm:$0xff]
            %487 = vst [vmem:[%s455 + $0x78] sm:$0xff] %v486
            %v488 = vld [vmem:[%s454 + $0x80] sm:$0xff]
            %489 = vst [vmem:[%s455 + $0x80] sm:$0xff] %v488
            %v490 = vld [vmem:[%s454 + $0x88] sm:$0xff]
            %491 = vst [vmem:[%s455 + $0x88] sm:$0xff] %v490
            %v492 = vld [vmem:[%s454 + $0x90] sm:$0xff]
            %493 = vst [vmem:[%s455 + $0x90] sm:$0xff] %v492
            %v494 = vld [vmem:[%s454 + $0x98] sm:$0xff]
            %495 = vst [vmem:[%s455 + $0x98] sm:$0xff] %v494
            %v496 = vld [vmem:[%s454 + $0xa0] sm:$0xff]
            %497 = vst [vmem:[%s455 + $0xa0] sm:$0xff] %v496
            %v498 = vld [vmem:[%s454 + $0xa8] sm:$0xff]
            %499 = vst [vmem:[%s455 + $0xa8] sm:$0xff] %v498
            %v500 = vld [vmem:[%s454 + $0xb0] sm:$0xff]
            %501 = vst [vmem:[%s455 + $0xb0] sm:$0xff] %v500
            %v502 = vld [vmem:[%s454 + $0xb8] sm:$0xff]
            %503 = vst [vmem:[%s455 + $0xb8] sm:$0xff] %v502
            %v504 = vld [vmem:[%s454 + $0xc0] sm:$0xff]
            %505 = vst [vmem:[%s455 + $0xc0] sm:$0xff] %v504
            %v506 = vld [vmem:[%s454 + $0xc8] sm:$0xff]
            %507 = vst [vmem:[%s455 + $0xc8] sm:$0xff] %v506
            %v508 = vld [vmem:[%s454 + $0xd0] sm:$0xff]
            %509 = vst [vmem:[%s455 + $0xd0] sm:$0xff] %v508
            %v510 = vld [vmem:[%s454 + $0xd8] sm:$0xff]
            %511 = vst [vmem:[%s455 + $0xd8] sm:$0xff] %v510
            %v512 = vld [vmem:[%s454 + $0xe0] sm:$0xff]
            %513 = vst [vmem:[%s455 + $0xe0] sm:$0xff] %v512
            %v514 = vld [vmem:[%s454 + $0xe8] sm:$0xff]
            %515 = vst [vmem:[%s455 + $0xe8] sm:$0xff] %v514
            %v516 = vld [vmem:[%s454 + $0xf0] sm:$0xff]
            %517 = vst [vmem:[%s455 + $0xf0] sm:$0xff] %v516
            %v518 = vld [vmem:[%s454 + $0xf8] sm:$0xff]
            %519 = vst [vmem:[%s455 + $0xf8] sm:$0xff] %v518
            %v520 = vld [vmem:[%s454 + $0x100] sm:$0xff]
            %521 = vst [vmem:[%s455 + $0x100] sm:$0xff] %v520
            %v522 = vld [vmem:[%s454 + $0x108] sm:$0xff]
            %523 = vst [vmem:[%s455 + $0x108] sm:$0xff] %v522
            %v524 = vld [vmem:[%s454 + $0x110] sm:$0xff]
            %525 = vst [vmem:[%s455 + $0x110] sm:$0xff] %v524
            %v526 = vld [vmem:[%s454 + $0x118] sm:$0xff]
            %527 = vst [vmem:[%s455 + $0x118] sm:$0xff] %v526
            %v528 = vld [vmem:[%s454 + $0x120] sm:$0xff]
            %529 = vst [vmem:[%s455 + $0x120] sm:$0xff] %v528
            %v530 = vld [vmem:[%s454 + $0x128] sm:$0xff]
            %531 = vst [vmem:[%s455 + $0x128] sm:$0xff] %v530
            %v532 = vld [vmem:[%s454 + $0x130] sm:$0xff]
            %533 = vst [vmem:[%s455 + $0x130] sm:$0xff] %v532
            %v534 = vld [vmem:[%s454 + $0x138] sm:$0xff]
            %535 = vst [vmem:[%s455 + $0x138] sm:$0xff] %v534
            %v536 = vld [vmem:[%s454 + $0x140] sm:$0xff]
            %537 = vst [vmem:[%s455 + $0x140] sm:$0xff] %v536
            %v538 = vld [vmem:[%s454 + $0x148] sm:$0xff]
            %539 = vst [vmem:[%s455 + $0x148] sm:$0xff] %v538
            %v540 = vld [vmem:[%s454 + $0x150] sm:$0xff]
            %541 = vst [vmem:[%s455 + $0x150] sm:$0xff] %v540
            %v542 = vld [vmem:[%s454 + $0x158] sm:$0xff]
            %543 = vst [vmem:[%s455 + $0x158] sm:$0xff] %v542
            %v544 = vld [vmem:[%s454 + $0x160] sm:$0xff]
            %545 = vst [vmem:[%s455 + $0x160] sm:$0xff] %v544
            %v546 = vld [vmem:[%s454 + $0x168] sm:$0xff]
            %547 = vst [vmem:[%s455 + $0x168] sm:$0xff] %v546
            %v548 = vld [vmem:[%s454 + $0x170] sm:$0xff]
            %549 = vst [vmem:[%s455 + $0x170] sm:$0xff] %v548
            %v550 = vld [vmem:[%s454 + $0x178] sm:$0xff]
            %551 = vst [vmem:[%s455 + $0x178] sm:$0xff] %v550
            %v552 = vld [vmem:[%s454 + $0x180] sm:$0xff]
            %553 = vst [vmem:[%s455 + $0x180] sm:$0xff] %v552
            %v554 = vld [vmem:[%s454 + $0x188] sm:$0xff]
            %555 = vst [vmem:[%s455 + $0x188] sm:$0xff] %v554
            %v556 = vld [vmem:[%s454 + $0x190] sm:$0xff]
            %557 = vst [vmem:[%s455 + $0x190] sm:$0xff] %v556
            %v558 = vld [vmem:[%s454 + $0x198] sm:$0xff]
            %559 = vst [vmem:[%s455 + $0x198] sm:$0xff] %v558
            %v560 = vld [vmem:[%s454 + $0x1a0] sm:$0xff]
            %561 = vst [vmem:[%s455 + $0x1a0] sm:$0xff] %v560
            %v562 = vld [vmem:[%s454 + $0x1a8] sm:$0xff]
            %563 = vst [vmem:[%s455 + $0x1a8] sm:$0xff] %v562
          $region72: #{res_bottle_block.5} parent=66 // loop_footer
            %s453 = sadd.s32 1, %s449
          $region73: #{res_bottle_block.5} parent=66 // loop_footer_branch
            %448 = sbr.rel target = $region69
          $region74: #{res_bottle_block.5} parent=66 // loop_exit
            _
        $region67: #{res_bottle_block.5} parent=62 // pred_fallthru
          _
        // Predicated region
        $region75: #{res_bottle_block.5} parent=62 // pred_check
          _
        $region76: #{res_bottle_block.5} parent=62 // pred_check_branch
          %565 = sbr.rel target = $region78
        $region77: #{res_bottle_block.5} parent=62 // pred_region
          _
        $region78: #{res_bottle_block.5} parent=62 // pred_fallthru
          _
        // Predicated region
        $region79: #{res_bottle_block.5} parent=62 // pred_check
          _
        $region80: #{res_bottle_block.5} parent=62 // pred_check_branch
          %568 = sbr.rel (0) target = $region82
        $region81: #{res_bottle_block.5} parent=62 // pred_region
          %569 = vsyncadd %s445, 6912
        $region82: #{res_bottle_block.5} parent=62 // pred_fallthru
          _
      $region63: #{res_bottle_block.5} parent=35 // pred_fallthru
        _
      %s570 = smul.u32 %s290, 432
      %s571 = scalar_lea.vmem [#allocation2], %s570
      %s572 = scalar_lea.sflag [#allocation4], %s290
      %s573 = smul.u32 18, 24
      %s574 = smul.u32 %s573, 1
      %s575 = sshll.u32 %s574, 4
      %576 = dma.done %s572, %s575
      %v577 = vld [vmem:[%s571] sm:$0xff]
      %v578 = vld [vmem:[%s571 + $0x8] sm:$0xff]
      %v579 = vld [vmem:[%s571 + $0x10] sm:$0xff]
      %v580 = vld [vmem:[%s571 + $0x18] sm:$0xff]
      %v581 = vld [vmem:[%s571 + $0x20] sm:$0xff]
      %v582 = vld [vmem:[%s571 + $0x28] sm:$0xff]
      %v583 = vld [vmem:[%s571 + $0x30] sm:$0xff]
      %v584 = vld [vmem:[%s571 + $0x38] sm:$0xff]
      %v585 = vld [vmem:[%s571 + $0x40] sm:$0xff]
      %v586 = vld [vmem:[%s571 + $0x48] sm:$0xff]
      %v587 = vld [vmem:[%s571 + $0x50] sm:$0xff]
      %v588 = vld [vmem:[%s571 + $0x58] sm:$0xff]
      %v589 = vld [vmem:[%s571 + $0x60] sm:$0xff]
      %v590 = vld [vmem:[%s571 + $0x68] sm:$0xff]
      %v591 = vld [vmem:[%s571 + $0x70] sm:$0xff]
      %v592 = vld [vmem:[%s571 + $0x78] sm:$0xff]
      %v593 = vld [vmem:[%s571 + $0x80] sm:$0xff]
      %v594 = vld [vmem:[%s571 + $0x88] sm:$0xff]
      %v595 = vld [vmem:[%s571 + $0x90] sm:$0xff]
      %v596 = vld [vmem:[%s571 + $0x98] sm:$0xff]
      %v597 = vld [vmem:[%s571 + $0xa0] sm:$0xff]
      %v598 = vld [vmem:[%s571 + $0xa8] sm:$0xff]
      %v599 = vld [vmem:[%s571 + $0xb0] sm:$0xff]
      %v600 = vld [vmem:[%s571 + $0xb8] sm:$0xff]
      %v601 = vld [vmem:[%s571 + $0xc0] sm:$0xff]
      %v602 = vld [vmem:[%s571 + $0xc8] sm:$0xff]
      %v603 = vld [vmem:[%s571 + $0xd0] sm:$0xff]
      %v604 = vld [vmem:[%s571 + $0xd8] sm:$0xff]
      %v605 = vld [vmem:[%s571 + $0xe0] sm:$0xff]
      %v606 = vld [vmem:[%s571 + $0xe8] sm:$0xff]
      %v607 = vld [vmem:[%s571 + $0xf0] sm:$0xff]
      %v608 = vld [vmem:[%s571 + $0xf8] sm:$0xff]
      %v609 = vld [vmem:[%s571 + $0x100] sm:$0xff]
      %v610 = vld [vmem:[%s571 + $0x108] sm:$0xff]
      %v611 = vld [vmem:[%s571 + $0x110] sm:$0xff]
      %v612 = vld [vmem:[%s571 + $0x118] sm:$0xff]
      %v613 = vld [vmem:[%s571 + $0x120] sm:$0xff]
      %v614 = vld [vmem:[%s571 + $0x128] sm:$0xff]
      %v615 = vld [vmem:[%s571 + $0x130] sm:$0xff]
      %v616 = vld [vmem:[%s571 + $0x138] sm:$0xff]
      %v617 = vld [vmem:[%s571 + $0x140] sm:$0xff]
      %v618 = vld [vmem:[%s571 + $0x148] sm:$0xff]
      %v619 = vld [vmem:[%s571 + $0x150] sm:$0xff]
      %v620 = vld [vmem:[%s571 + $0x158] sm:$0xff]
      %v621 = vld [vmem:[%s571 + $0x160] sm:$0xff]
      %v622 = vld [vmem:[%s571 + $0x168] sm:$0xff]
      %v623 = vld [vmem:[%s571 + $0x170] sm:$0xff]
      %v624 = vld [vmem:[%s571 + $0x178] sm:$0xff]
      %v625 = vld [vmem:[%s571 + $0x180] sm:$0xff]
      %v626 = vld [vmem:[%s571 + $0x188] sm:$0xff]
      %v627 = vld [vmem:[%s571 + $0x190] sm:$0xff]
      %v628 = vld [vmem:[%s571 + $0x198] sm:$0xff]
      %v629 = vld [vmem:[%s571 + $0x1a0] sm:$0xff]
      %v630 = vld [vmem:[%s571 + $0x1a8] sm:$0xff]
      %v631 = vld [vmem:[%s1] sm:$0xff]
      %v632 = vld [vmem:[%s1 + $0x8] sm:$0xff]
      %v633 = vld [vmem:[%s1 + $0x10] sm:$0xff]
      %v634 = vld [vmem:[%s1 + $0x18] sm:$0xff]
      %v635 = vld [vmem:[%s1 + $0x20] sm:$0xff]
      %v636 = vld [vmem:[%s1 + $0x28] sm:$0xff]
      %v637 = vld [vmem:[%s1 + $0x30] sm:$0xff]
      %v638 = vld [vmem:[%s1 + $0x38] sm:$0xff]
      %v639 = vld [vmem:[%s1 + $0x40] sm:$0xff]
      %v640 = vld [vmem:[%s1 + $0x48] sm:$0xff]
      %v641 = vld [vmem:[%s1 + $0x50] sm:$0xff]
      %v642 = vld [vmem:[%s1 + $0x58] sm:$0xff]
      %v643 = vld [vmem:[%s1 + $0x60] sm:$0xff]
      %v644 = vld [vmem:[%s1 + $0x68] sm:$0xff]
      %v645 = vld [vmem:[%s1 + $0x70] sm:$0xff]
      %v646 = vld [vmem:[%s1 + $0x78] sm:$0xff]
      %647 = vmatpush.msra.mxu0 %v646
      %648 = vmatpush.msra.mxu0 %v645
      %649 = vmatpush.msra.mxu0 %v644
      %650 = vmatpush.msra.mxu0 %v643
      %651 = vmatpush.msra.mxu0 %v642
      %652 = vmatpush.msra.mxu0 %v641
      %653 = vmatpush.msra.mxu0 %v640
      %654 = vmatpush.msra.mxu0 %v639
      %655 = vmatpush.msra.mxu0 %v638
      %656 = vmatpush.msra.mxu0 %v637
      %657 = vmatpush.msra.mxu0 %v636
      %658 = vmatpush.msra.mxu0 %v635
      %659 = vmatpush.msra.mxu0 %v634
      %660 = vmatpush.msra.mxu0 %v633
      %661 = vmatpush.msra.mxu0 %v632
      %662 = vmatpush.msra.mxu0 %v631
      %663 = vmatmul.f32.gmra.mxu0 %v577
      %v664 = vpop.f32.mrf.mxu0
      %v665 = vadd.f32 0.0, %v664
      %666 = vmatmul.f32.gmra.mxu0 %v578
      %v667 = vpop.f32.mrf.mxu0
      %v668 = vadd.f32 0.0, %v667
      %669 = vmatmul.f32.gmra.mxu0 %v579
      %v670 = vpop.f32.mrf.mxu0
      %v671 = vadd.f32 0.0, %v670
      %672 = vmatmul.f32.gmra.mxu0 %v580
      %v673 = vpop.f32.mrf.mxu0
      %v674 = vadd.f32 0.0, %v673
      %675 = vmatmul.f32.gmra.mxu0 %v581
      %v676 = vpop.f32.mrf.mxu0
      %v677 = vadd.f32 0.0, %v676
      %678 = vmatmul.f32.gmra.mxu0 %v582
      %v679 = vpop.f32.mrf.mxu0
      %v680 = vadd.f32 0.0, %v679
      %681 = vmatmul.f32.gmra.mxu0 %v583
      %v682 = vpop.f32.mrf.mxu0
      %v683 = vadd.f32 0.0, %v682
      %684 = vmatmul.f32.gmra.mxu0 %v584
      %v685 = vpop.f32.mrf.mxu0
      %v686 = vadd.f32 0.0, %v685
      %687 = vmatmul.f32.gmra.mxu0 %v585
      %v688 = vpop.f32.mrf.mxu0
      %v689 = vadd.f32 0.0, %v688
      %690 = vmatmul.f32.gmra.mxu0 %v586
      %v691 = vpop.f32.mrf.mxu0
      %v692 = vadd.f32 0.0, %v691
      %693 = vmatmul.f32.gmra.mxu0 %v587
      %v694 = vpop.f32.mrf.mxu0
      %v695 = vadd.f32 0.0, %v694
      %696 = vmatmul.f32.gmra.mxu0 %v588
      %v697 = vpop.f32.mrf.mxu0
      %v698 = vadd.f32 0.0, %v697
      %699 = vmatmul.f32.gmra.mxu0 %v589
      %v700 = vpop.f32.mrf.mxu0
      %v701 = vadd.f32 0.0, %v700
      %702 = vmatmul.f32.gmra.mxu0 %v590
      %v703 = vpop.f32.mrf.mxu0
      %v704 = vadd.f32 0.0, %v703
      %705 = vmatmul.f32.gmra.mxu0 %v591
      %v706 = vpop.f32.mrf.mxu0
      %v707 = vadd.f32 0.0, %v706
      %708 = vmatmul.f32.gmra.mxu0 %v592
      %v709 = vpop.f32.mrf.mxu0
      %v710 = vadd.f32 0.0, %v709
      %711 = vmatmul.f32.gmra.mxu0 %v593
      %v712 = vpop.f32.mrf.mxu0
      %v713 = vadd.f32 0.0, %v712
      %714 = vmatmul.f32.gmra.mxu0 %v594
      %v715 = vpop.f32.mrf.mxu0
      %v716 = vadd.f32 0.0, %v715
      %717 = vmatmul.f32.gmra.mxu0 %v595
      %v718 = vpop.f32.mrf.mxu0
      %v719 = vadd.f32 0.0, %v718
      %720 = vmatmul.f32.gmra.mxu0 %v596
      %v721 = vpop.f32.mrf.mxu0
      %v722 = vadd.f32 0.0, %v721
      %723 = vmatmul.f32.gmra.mxu0 %v597
      %v724 = vpop.f32.mrf.mxu0
      %v725 = vadd.f32 0.0, %v724
      %726 = vmatmul.f32.gmra.mxu0 %v598
      %v727 = vpop.f32.mrf.mxu0
      %v728 = vadd.f32 0.0, %v727
      %729 = vmatmul.f32.gmra.mxu0 %v599
      %v730 = vpop.f32.mrf.mxu0
      %v731 = vadd.f32 0.0, %v730
      %732 = vmatmul.f32.gmra.mxu0 %v600
      %v733 = vpop.f32.mrf.mxu0
      %v734 = vadd.f32 0.0, %v733
      %735 = vmatmul.f32.gmra.mxu0 %v601
      %v736 = vpop.f32.mrf.mxu0
      %v737 = vadd.f32 0.0, %v736
      %738 = vmatmul.f32.gmra.mxu0 %v602
      %v739 = vpop.f32.mrf.mxu0
      %v740 = vadd.f32 0.0, %v739
      %741 = vmatmul.f32.gmra.mxu0 %v603
      %v742 = vpop.f32.mrf.mxu0
      %v743 = vadd.f32 0.0, %v742
      %744 = vmatmul.f32.gmra.mxu0 %v604
      %v745 = vpop.f32.mrf.mxu0
      %v746 = vadd.f32 0.0, %v745
      %747 = vmatmul.f32.gmra.mxu0 %v605
      %v748 = vpop.f32.mrf.mxu0
      %v749 = vadd.f32 0.0, %v748
      %750 = vmatmul.f32.gmra.mxu0 %v606
      %v751 = vpop.f32.mrf.mxu0
      %v752 = vadd.f32 0.0, %v751
      %753 = vmatmul.f32.gmra.mxu0 %v607
      %v754 = vpop.f32.mrf.mxu0
      %v755 = vadd.f32 0.0, %v754
      %756 = vmatmul.f32.gmra.mxu0 %v608
      %v757 = vpop.f32.mrf.mxu0
      %v758 = vadd.f32 0.0, %v757
      %759 = vmatmul.f32.gmra.mxu0 %v609
      %v760 = vpop.f32.mrf.mxu0
      %v761 = vadd.f32 0.0, %v760
      %762 = vmatmul.f32.gmra.mxu0 %v610
      %v763 = vpop.f32.mrf.mxu0
      %v764 = vadd.f32 0.0, %v763
      %765 = vmatmul.f32.gmra.mxu0 %v611
      %v766 = vpop.f32.mrf.mxu0
      %v767 = vadd.f32 0.0, %v766
      %768 = vmatmul.f32.gmra.mxu0 %v612
      %v769 = vpop.f32.mrf.mxu0
      %v770 = vadd.f32 0.0, %v769
      %771 = vmatmul.f32.gmra.mxu0 %v613
      %v772 = vpop.f32.mrf.mxu0
      %v773 = vadd.f32 0.0, %v772
      %774 = vmatmul.f32.gmra.mxu0 %v614
      %v775 = vpop.f32.mrf.mxu0
      %v776 = vadd.f32 0.0, %v775
      %777 = vmatmul.f32.gmra.mxu0 %v615
      %v778 = vpop.f32.mrf.mxu0
      %v779 = vadd.f32 0.0, %v778
      %780 = vmatmul.f32.gmra.mxu0 %v616
      %v781 = vpop.f32.mrf.mxu0
      %v782 = vadd.f32 0.0, %v781
      %783 = vmatmul.f32.gmra.mxu0 %v617
      %v784 = vpop.f32.mrf.mxu0
      %v785 = vadd.f32 0.0, %v784
      %786 = vmatmul.f32.gmra.mxu0 %v618
      %v787 = vpop.f32.mrf.mxu0
      %v788 = vadd.f32 0.0, %v787
      %789 = vmatmul.f32.gmra.mxu0 %v619
      %v790 = vpop.f32.mrf.mxu0
      %v791 = vadd.f32 0.0, %v790
      %792 = vmatmul.f32.gmra.mxu0 %v620
      %v793 = vpop.f32.mrf.mxu0
      %v794 = vadd.f32 0.0, %v793
      %795 = vmatmul.f32.gmra.mxu0 %v621
      %v796 = vpop.f32.mrf.mxu0
      %v797 = vadd.f32 0.0, %v796
      %798 = vmatmul.f32.gmra.mxu0 %v622
      %v799 = vpop.f32.mrf.mxu0
      %v800 = vadd.f32 0.0, %v799
      %801 = vmatmul.f32.gmra.mxu0 %v623
      %v802 = vpop.f32.mrf.mxu0
      %v803 = vadd.f32 0.0, %v802
      %804 = vmatmul.f32.gmra.mxu0 %v624
      %v805 = vpop.f32.mrf.mxu0
      %v806 = vadd.f32 0.0, %v805
      %807 = vmatmul.f32.gmra.mxu0 %v625
      %v808 = vpop.f32.mrf.mxu0
      %v809 = vadd.f32 0.0, %v808
      %810 = vmatmul.f32.gmra.mxu0 %v626
      %v811 = vpop.f32.mrf.mxu0
      %v812 = vadd.f32 0.0, %v811
      %813 = vmatmul.f32.gmra.mxu0 %v627
      %v814 = vpop.f32.mrf.mxu0
      %v815 = vadd.f32 0.0, %v814
      %816 = vmatmul.f32.gmra.mxu0 %v628
      %v817 = vpop.f32.mrf.mxu0
      %v818 = vadd.f32 0.0, %v817
      %819 = vmatmul.f32.gmra.mxu0 %v629
      %v820 = vpop.f32.mrf.mxu0
      %v821 = vadd.f32 0.0, %v820
      %822 = vmatmul.f32.gmra.mxu0 %v630
      %v823 = vpop.f32.mrf.mxu0
      %v824 = vadd.f32 0.0, %v823
      %825 = vdwg.mxu0
      %v826 = vld [vmem:[%s2] sm:$0x1]
      %v828 = vperm.slane %v826, 0
      %v830 = vmul.f32 %v665, %v828
      %v831 = vmul.f32 %v668, %v828
      %v832 = vmul.f32 %v671, %v828
      %v833 = vmul.f32 %v674, %v828
      %v834 = vmul.f32 %v677, %v828
      %v835 = vmul.f32 %v680, %v828
      %v836 = vmul.f32 %v683, %v828
      %v837 = vmul.f32 %v686, %v828
      %v838 = vmul.f32 %v689, %v828
      %v839 = vmul.f32 %v692, %v828
      %v840 = vmul.f32 %v695, %v828
      %v841 = vmul.f32 %v698, %v828
      %v842 = vmul.f32 %v701, %v828
      %v843 = vmul.f32 %v704, %v828
      %v844 = vmul.f32 %v707, %v828
      %v845 = vmul.f32 %v710, %v828
      %v846 = vmul.f32 %v713, %v828
      %v847 = vmul.f32 %v716, %v828
      %v848 = vmul.f32 %v719, %v828
      %v849 = vmul.f32 %v722, %v828
      %v850 = vmul.f32 %v725, %v828
      %v851 = vmul.f32 %v728, %v828
      %v852 = vmul.f32 %v731, %v828
      %v853 = vmul.f32 %v734, %v828
      %v854 = vmul.f32 %v737, %v828
      %v855 = vmul.f32 %v740, %v828
      %v856 = vmul.f32 %v743, %v828
      %v857 = vmul.f32 %v746, %v828
      %v858 = vmul.f32 %v749, %v828
      %v859 = vmul.f32 %v752, %v828
      %v860 = vmul.f32 %v755, %v828
      %v861 = vmul.f32 %v758, %v828
      %v862 = vmul.f32 %v761, %v828
      %v863 = vmul.f32 %v764, %v828
      %v864 = vmul.f32 %v767, %v828
      %v865 = vmul.f32 %v770, %v828
      %v866 = vmul.f32 %v773, %v828
      %v867 = vmul.f32 %v776, %v828
      %v868 = vmul.f32 %v779, %v828
      %v869 = vmul.f32 %v782, %v828
      %v870 = vmul.f32 %v785, %v828
      %v871 = vmul.f32 %v788, %v828
      %v872 = vmul.f32 %v791, %v828
      %v873 = vmul.f32 %v794, %v828
      %v874 = vmul.f32 %v797, %v828
      %v875 = vmul.f32 %v800, %v828
      %v876 = vmul.f32 %v803, %v828
      %v877 = vmul.f32 %v806, %v828
      %v878 = vmul.f32 %v809, %v828
      %v879 = vmul.f32 %v812, %v828
      %v880 = vmul.f32 %v815, %v828
      %v881 = vmul.f32 %v818, %v828
      %v882 = vmul.f32 %v821, %v828
      %v883 = vmul.f32 %v824, %v828
      %v884 = vld [vmem:[%s3] sm:$0x1]
      %v886 = vperm.slane %v884, 0
      %v888 = vadd.f32 %v830, %v886
      %v889 = vadd.f32 %v831, %v886
      %v890 = vadd.f32 %v832, %v886
      %v891 = vadd.f32 %v833, %v886
      %v892 = vadd.f32 %v834, %v886
      %v893 = vadd.f32 %v835, %v886
      %v894 = vadd.f32 %v836, %v886
      %v895 = vadd.f32 %v837, %v886
      %v896 = vadd.f32 %v838, %v886
      %v897 = vadd.f32 %v839, %v886
      %v898 = vadd.f32 %v840, %v886
      %v899 = vadd.f32 %v841, %v886
      %v900 = vadd.f32 %v842, %v886
      %v901 = vadd.f32 %v843, %v886
      %v902 = vadd.f32 %v844, %v886
      %v903 = vadd.f32 %v845, %v886
      %v904 = vadd.f32 %v846, %v886
      %v905 = vadd.f32 %v847, %v886
      %v906 = vadd.f32 %v848, %v886
      %v907 = vadd.f32 %v849, %v886
      %v908 = vadd.f32 %v850, %v886
      %v909 = vadd.f32 %v851, %v886
      %v910 = vadd.f32 %v852, %v886
      %v911 = vadd.f32 %v853, %v886
      %v912 = vadd.f32 %v854, %v886
      %v913 = vadd.f32 %v855, %v886
      %v914 = vadd.f32 %v856, %v886
      %v915 = vadd.f32 %v857, %v886
      %v916 = vadd.f32 %v858, %v886
      %v917 = vadd.f32 %v859, %v886
      %v918 = vadd.f32 %v860, %v886
      %v919 = vadd.f32 %v861, %v886
      %v920 = vadd.f32 %v862, %v886
      %v921 = vadd.f32 %v863, %v886
      %v922 = vadd.f32 %v864, %v886
      %v923 = vadd.f32 %v865, %v886
      %v924 = vadd.f32 %v866, %v886
      %v925 = vadd.f32 %v867, %v886
      %v926 = vadd.f32 %v868, %v886
      %v927 = vadd.f32 %v869, %v886
      %v928 = vadd.f32 %v870, %v886
      %v929 = vadd.f32 %v871, %v886
      %v930 = vadd.f32 %v872, %v886
      %v931 = vadd.f32 %v873, %v886
      %v932 = vadd.f32 %v874, %v886
      %v933 = vadd.f32 %v875, %v886
      %v934 = vadd.f32 %v876, %v886
      %v935 = vadd.f32 %v877, %v886
      %v936 = vadd.f32 %v878, %v886
      %v937 = vadd.f32 %v879, %v886
      %v938 = vadd.f32 %v880, %v886
      %v939 = vadd.f32 %v881, %v886
      %v940 = vadd.f32 %v882, %v886
      %v941 = vadd.f32 %v883, %v886
      %v942 = vmax.f32 %v888, 0.0
      %v943 = vmax.f32 %v889, 0.0
      %v944 = vmax.f32 %v890, 0.0
      %v945 = vmax.f32 %v891, 0.0
      %v946 = vmax.f32 %v892, 0.0
      %v947 = vmax.f32 %v893, 0.0
      %v948 = vmax.f32 %v894, 0.0
      %v949 = vmax.f32 %v895, 0.0
      %v950 = vmax.f32 %v896, 0.0
      %v951 = vmax.f32 %v897, 0.0
      %v952 = vmax.f32 %v898, 0.0
      %v953 = vmax.f32 %v899, 0.0
      %v954 = vmax.f32 %v900, 0.0
      %v955 = vmax.f32 %v901, 0.0
      %v956 = vmax.f32 %v902, 0.0
      %v957 = vmax.f32 %v903, 0.0
      %v958 = vmax.f32 %v904, 0.0
      %v959 = vmax.f32 %v905, 0.0
      %v960 = vmax.f32 %v906, 0.0
      %v961 = vmax.f32 %v907, 0.0
      %v962 = vmax.f32 %v908, 0.0
      %v963 = vmax.f32 %v909, 0.0
      %v964 = vmax.f32 %v910, 0.0
      %v965 = vmax.f32 %v911, 0.0
      %v966 = vmax.f32 %v912, 0.0
      %v967 = vmax.f32 %v913, 0.0
      %v968 = vmax.f32 %v914, 0.0
      %v969 = vmax.f32 %v915, 0.0
      %v970 = vmax.f32 %v916, 0.0
      %v971 = vmax.f32 %v917, 0.0
      %v972 = vmax.f32 %v918, 0.0
      %v973 = vmax.f32 %v919, 0.0
      %v974 = vmax.f32 %v920, 0.0
      %v975 = vmax.f32 %v921, 0.0
      %v976 = vmax.f32 %v922, 0.0
      %v977 = vmax.f32 %v923, 0.0
      %v978 = vmax.f32 %v924, 0.0
      %v979 = vmax.f32 %v925, 0.0
      %v980 = vmax.f32 %v926, 0.0
      %v981 = vmax.f32 %v927, 0.0
      %v982 = vmax.f32 %v928, 0.0
      %v983 = vmax.f32 %v929, 0.0
      %v984 = vmax.f32 %v930, 0.0
      %v985 = vmax.f32 %v931, 0.0
      %v986 = vmax.f32 %v932, 0.0
      %v987 = vmax.f32 %v933, 0.0
      %v988 = vmax.f32 %v934, 0.0
      %v989 = vmax.f32 %v935, 0.0
      %v990 = vmax.f32 %v936, 0.0
      %v991 = vmax.f32 %v937, 0.0
      %v992 = vmax.f32 %v938, 0.0
      %v993 = vmax.f32 %v939, 0.0
      %v994 = vmax.f32 %v940, 0.0
      %v995 = vmax.f32 %v941, 0.0
      %v996 = vlaneseq
      %v997 = vshrl.u32 %v996, 7
      %v998 = vadd.s32 %v997, 8
      %v999 = vadd.s32 %v997, 16
      %vm1000 = vcmp.ge.s32.totalorder %v997, 1
      %vm1001 = vcmp.ge.s32.totalorder %v998, 1
      %vm1002 = vcmp.ge.s32.totalorder %v999, 1
      %vm1003 = vcmp.le.s32.totalorder %v997, 16
      %vm1004 = vcmp.le.s32.totalorder %v998, 16
      %vm1005 = vcmp.le.s32.totalorder %v999, 16
      %vm1006 = vmand %vm1000, %vm1003
      %vm1007 = vmand %vm1001, %vm1004
      %vm1008 = vmand %vm1002, %vm1005
      %v1009 = vsel %vm1006, 1, 0
      %v1010 = vsel %vm1007, 1, 0
      %v1011 = vsel %vm1008, 1, 0
      %vm1012 = vcmp.eq.s32.totalorder %v1009, 1
      %vm1013 = vcmp.eq.s32.totalorder %v1010, 1
      %vm1014 = vcmp.eq.s32.totalorder %v1011, 1
      %v1015 = vsel %vm1012, %v942, 0.0
      %v1016 = vsel %vm1013, %v943, 0.0
      %v1017 = vsel %vm1014, %v944, 0.0
      %v1018 = vsel %vm1012, %v945, 0.0
      %v1019 = vsel %vm1013, %v946, 0.0
      %v1020 = vsel %vm1014, %v947, 0.0
      %v1021 = vsel %vm1012, %v948, 0.0
      %v1022 = vsel %vm1013, %v949, 0.0
      %v1023 = vsel %vm1014, %v950, 0.0
      %v1024 = vsel %vm1012, %v951, 0.0
      %v1025 = vsel %vm1013, %v952, 0.0
      %v1026 = vsel %vm1014, %v953, 0.0
      %v1027 = vsel %vm1012, %v954, 0.0
      %v1028 = vsel %vm1013, %v955, 0.0
      %v1029 = vsel %vm1014, %v956, 0.0
      %v1030 = vsel %vm1012, %v957, 0.0
      %v1031 = vsel %vm1013, %v958, 0.0
      %v1032 = vsel %vm1014, %v959, 0.0
      %v1033 = vsel %vm1012, %v960, 0.0
      %v1034 = vsel %vm1013, %v961, 0.0
      %v1035 = vsel %vm1014, %v962, 0.0
      %v1036 = vsel %vm1012, %v963, 0.0
      %v1037 = vsel %vm1013, %v964, 0.0
      %v1038 = vsel %vm1014, %v965, 0.0
      %v1039 = vsel %vm1012, %v966, 0.0
      %v1040 = vsel %vm1013, %v967, 0.0
      %v1041 = vsel %vm1014, %v968, 0.0
      %v1042 = vsel %vm1012, %v969, 0.0
      %v1043 = vsel %vm1013, %v970, 0.0
      %v1044 = vsel %vm1014, %v971, 0.0
      %v1045 = vsel %vm1012, %v972, 0.0
      %v1046 = vsel %vm1013, %v973, 0.0
      %v1047 = vsel %vm1014, %v974, 0.0
      %v1048 = vsel %vm1012, %v975, 0.0
      %v1049 = vsel %vm1013, %v976, 0.0
      %v1050 = vsel %vm1014, %v977, 0.0
      %v1051 = vsel %vm1012, %v978, 0.0
      %v1052 = vsel %vm1013, %v979, 0.0
      %v1053 = vsel %vm1014, %v980, 0.0
      %v1054 = vsel %vm1012, %v981, 0.0
      %v1055 = vsel %vm1013, %v982, 0.0
      %v1056 = vsel %vm1014, %v983, 0.0
      %v1057 = vsel %vm1012, %v984, 0.0
      %v1058 = vsel %vm1013, %v985, 0.0
      %v1059 = vsel %vm1014, %v986, 0.0
      %v1060 = vsel %vm1012, %v987, 0.0
      %v1061 = vsel %vm1013, %v988, 0.0
      %v1062 = vsel %vm1014, %v989, 0.0
      %v1063 = vsel %vm1012, %v990, 0.0
      %v1064 = vsel %vm1013, %v991, 0.0
      %v1065 = vsel %vm1014, %v992, 0.0
      %v1066 = vsel %vm1012, %v993, 0.0
      %v1067 = vsel %vm1013, %v994, 0.0
      %v1068 = vsel %vm1014, %v995, 0.0
      %1069 = vst [vmem:[#allocation3] sm:$0xff] %v1015
      %1070 = vst [vmem:[#allocation3 + $0x8] sm:$0xff] %v1016
      %1071 = vst [vmem:[#allocation3 + $0x10] sm:$0xff] %v1017
      %1072 = vst [vmem:[#allocation3 + $0x18] sm:$0xff] %v1018
      %1073 = vst [vmem:[#allocation3 + $0x20] sm:$0xff] %v1019
      %1074 = vst [vmem:[#allocation3 + $0x28] sm:$0xff] %v1020
      %1075 = vst [vmem:[#allocation3 + $0x30] sm:$0xff] %v1021
      %1076 = vst [vmem:[#allocation3 + $0x38] sm:$0xff] %v1022
      %1077 = vst [vmem:[#allocation3 + $0x40] sm:$0xff] %v1023
      %1078 = vst [vmem:[#allocation3 + $0x48] sm:$0xff] %v1024
      %1079 = vst [vmem:[#allocation3 + $0x50] sm:$0xff] %v1025
      %1080 = vst [vmem:[#allocation3 + $0x58] sm:$0xff] %v1026
      %1081 = vst [vmem:[#allocation3 + $0x60] sm:$0xff] %v1027
      %1082 = vst [vmem:[#allocation3 + $0x68] sm:$0xff] %v1028
      %1083 = vst [vmem:[#allocation3 + $0x70] sm:$0xff] %v1029
      %1084 = vst [vmem:[#allocation3 + $0x78] sm:$0xff] %v1030
      %1085 = vst [vmem:[#allocation3 + $0x80] sm:$0xff] %v1031
      %1086 = vst [vmem:[#allocation3 + $0x88] sm:$0xff] %v1032
      %1087 = vst [vmem:[#allocation3 + $0x90] sm:$0xff] %v1033
      %1088 = vst [vmem:[#allocation3 + $0x98] sm:$0xff] %v1034
      %1089 = vst [vmem:[#allocation3 + $0xa0] sm:$0xff] %v1035
      %1090 = vst [vmem:[#allocation3 + $0xa8] sm:$0xff] %v1036
      %1091 = vst [vmem:[#allocation3 + $0xb0] sm:$0xff] %v1037
      %1092 = vst [vmem:[#allocation3 + $0xb8] sm:$0xff] %v1038
      %1093 = vst [vmem:[#allocation3 + $0xc0] sm:$0xff] %v1039
      %1094 = vst [vmem:[#allocation3 + $0xc8] sm:$0xff] %v1040
      %1095 = vst [vmem:[#allocation3 + $0xd0] sm:$0xff] %v1041
      %1096 = vst [vmem:[#allocation3 + $0xd8] sm:$0xff] %v1042
      %1097 = vst [vmem:[#allocation3 + $0xe0] sm:$0xff] %v1043
      %1098 = vst [vmem:[#allocation3 + $0xe8] sm:$0xff] %v1044
      %1099 = vst [vmem:[#allocation3 + $0xf0] sm:$0xff] %v1045
      %1100 = vst [vmem:[#allocation3 + $0xf8] sm:$0xff] %v1046
      %1101 = vst [vmem:[#allocation3 + $0x100] sm:$0xff] %v1047
      %1102 = vst [vmem:[#allocation3 + $0x108] sm:$0xff] %v1048
      %1103 = vst [vmem:[#allocation3 + $0x110] sm:$0xff] %v1049
      %1104 = vst [vmem:[#allocation3 + $0x118] sm:$0xff] %v1050
      %1105 = vst [vmem:[#allocation3 + $0x120] sm:$0xff] %v1051
      %1106 = vst [vmem:[#allocation3 + $0x128] sm:$0xff] %v1052
      %1107 = vst [vmem:[#allocation3 + $0x130] sm:$0xff] %v1053
      %1108 = vst [vmem:[#allocation3 + $0x138] sm:$0xff] %v1054
      %1109 = vst [vmem:[#allocation3 + $0x140] sm:$0xff] %v1055
      %1110 = vst [vmem:[#allocation3 + $0x148] sm:$0xff] %v1056
      %1111 = vst [vmem:[#allocation3 + $0x150] sm:$0xff] %v1057
      %1112 = vst [vmem:[#allocation3 + $0x158] sm:$0xff] %v1058
      %1113 = vst [vmem:[#allocation3 + $0x160] sm:$0xff] %v1059
      %1114 = vst [vmem:[#allocation3 + $0x168] sm:$0xff] %v1060
      %1115 = vst [vmem:[#allocation3 + $0x170] sm:$0xff] %v1061
      %1116 = vst [vmem:[#allocation3 + $0x178] sm:$0xff] %v1062
      %1117 = vst [vmem:[#allocation3 + $0x180] sm:$0xff] %v1063
      %1118 = vst [vmem:[#allocation3 + $0x188] sm:$0xff] %v1064
      %1119 = vst [vmem:[#allocation3 + $0x190] sm:$0xff] %v1065
      %1120 = vst [vmem:[#allocation3 + $0x198] sm:$0xff] %v1066
      %1121 = vst [vmem:[#allocation3 + $0x1a0] sm:$0xff] %v1067
      %1122 = vst [vmem:[#allocation3 + $0x1a8] sm:$0xff] %v1068
      %p1123 = scmp.eq.s32.totalorder %s24, 0
      // Predicated region
      $region83: #{res_bottle_block.5} parent=35 // pred_check
        %p1124 = pneg %p1123
      $region84: #{res_bottle_block.5} parent=35 // pred_check_branch
        %1126 = sbr.rel (%p1124) target = $region86
      $region85: #{res_bottle_block.5} parent=35 // pred_region
        %1127 = vst [vmem:[#allocation3] sm:$0xff] 0.0
        %1128 = vst [vmem:[#allocation3 + $0x8] sm:$0xff] 0.0
        %1129 = vst [vmem:[#allocation3 + $0x10] sm:$0xff] 0.0
        %s1130 = scalar_lea.vmem [#allocation3], 408
        %1131 = vst [vmem:[%s1130] sm:$0xff] 0.0
        %1132 = vst [vmem:[%s1130 + $0x8] sm:$0xff] 0.0
        %1133 = vst [vmem:[%s1130 + $0x10] sm:$0xff] 0.0
      $region86: #{res_bottle_block.5} parent=35 // pred_fallthru
        _
      %v1134 = vld [vmem:[#allocation3] sm:$0xff]
      %v1135 = vld [vmem:[#allocation3 + $0x8] sm:$0xff]
      %v1136 = vld [vmem:[#allocation3 + $0x18] sm:$0xff]
      %v1137 = vld [vmem:[#allocation3 + $0x20] sm:$0xff]
      %v1138 = vld [vmem:[#allocation3 + $0x30] sm:$0xff]
      %v1139 = vld [vmem:[#allocation3 + $0x38] sm:$0xff]
      %v1140 = vld [vmem:[#allocation3 + $0x48] sm:$0xff]
      %v1141 = vld [vmem:[#allocation3 + $0x50] sm:$0xff]
      %v1142 = vld [vmem:[#allocation3 + $0x60] sm:$0xff]
      %v1143 = vld [vmem:[#allocation3 + $0x68] sm:$0xff]
      %v1144 = vld [vmem:[#allocation3 + $0x78] sm:$0xff]
      %v1145 = vld [vmem:[#allocation3 + $0x80] sm:$0xff]
      %v1146 = vld [vmem:[#allocation3 + $0x90] sm:$0xff]
      %v1147 = vld [vmem:[#allocation3 + $0x98] sm:$0xff]
      %v1148 = vld [vmem:[#allocation3 + $0xa8] sm:$0xff]
      %v1149 = vld [vmem:[#allocation3 + $0xb0] sm:$0xff]
      %v1150 = vld [vmem:[#allocation3 + $0xc0] sm:$0xff]
      %v1151 = vld [vmem:[#allocation3 + $0xc8] sm:$0xff]
      %v1152 = vld [vmem:[#allocation3 + $0xd8] sm:$0xff]
      %v1153 = vld [vmem:[#allocation3 + $0xe0] sm:$0xff]
      %v1154 = vld [vmem:[#allocation3 + $0xf0] sm:$0xff]
      %v1155 = vld [vmem:[#allocation3 + $0xf8] sm:$0xff]
      %v1156 = vld [vmem:[#allocation3 + $0x108] sm:$0xff]
      %v1157 = vld [vmem:[#allocation3 + $0x110] sm:$0xff]
      %v1158 = vld [vmem:[#allocation3 + $0x120] sm:$0xff]
      %v1159 = vld [vmem:[#allocation3 + $0x128] sm:$0xff]
      %v1160 = vld [vmem:[#allocation3 + $0x138] sm:$0xff]
      %v1161 = vld [vmem:[#allocation3 + $0x140] sm:$0xff]
      %v1162 = vld [vmem:[#allocation3 + $0x150] sm:$0xff]
      %v1163 = vld [vmem:[#allocation3 + $0x158] sm:$0xff]
      %v1164 = vld [vmem:[#allocation3 + $0x168] sm:$0xff]
      %v1165 = vld [vmem:[#allocation3 + $0x170] sm:$0xff]
      %v1166 = vld [vmem:[%s4] sm:$0xff]
      %v1167 = vld [vmem:[%s4 + $0x8] sm:$0xff]
      %v1168 = vld [vmem:[%s4 + $0x10] sm:$0xff]
      %v1169 = vld [vmem:[%s4 + $0x18] sm:$0xff]
      %v1170 = vld [vmem:[%s4 + $0x20] sm:$0xff]
      %v1171 = vld [vmem:[%s4 + $0x28] sm:$0xff]
      %v1172 = vld [vmem:[%s4 + $0x30] sm:$0xff]
      %v1173 = vld [vmem:[%s4 + $0x38] sm:$0xff]
      %v1174 = vld [vmem:[%s4 + $0x40] sm:$0xff]
      %v1175 = vld [vmem:[%s4 + $0x48] sm:$0xff]
      %v1176 = vld [vmem:[%s4 + $0x50] sm:$0xff]
      %v1177 = vld [vmem:[%s4 + $0x58] sm:$0xff]
      %v1178 = vld [vmem:[%s4 + $0x60] sm:$0xff]
      %v1179 = vld [vmem:[%s4 + $0x68] sm:$0xff]
      %v1180 = vld [vmem:[%s4 + $0x70] sm:$0xff]
      %v1181 = vld [vmem:[%s4 + $0x78] sm:$0xff]
      %v1182 = vld [vmem:[#allocation3 + $0x1] sm:$0xff]
      %v1183 = vld [vmem:[#allocation3 + $0x9] sm:$0xff]
      %v1184 = vld [vmem:[#allocation3 + $0x19] sm:$0xff]
      %v1185 = vld [vmem:[#allocation3 + $0x21] sm:$0xff]
      %v1186 = vld [vmem:[#allocation3 + $0x31] sm:$0xff]
      %v1187 = vld [vmem:[#allocation3 + $0x39] sm:$0xff]
      %v1188 = vld [vmem:[#allocation3 + $0x49] sm:$0xff]
      %v1189 = vld [vmem:[#allocation3 + $0x51] sm:$0xff]
      %v1190 = vld [vmem:[#allocation3 + $0x61] sm:$0xff]
      %v1191 = vld [vmem:[#allocation3 + $0x69] sm:$0xff]
      %v1192 = vld [vmem:[#allocation3 + $0x79] sm:$0xff]
      %v1193 = vld [vmem:[#allocation3 + $0x81] sm:$0xff]
      %v1194 = vld [vmem:[#allocation3 + $0x91] sm:$0xff]
      %v1195 = vld [vmem:[#allocation3 + $0x99] sm:$0xff]
      %v1196 = vld [vmem:[#allocation3 + $0xa9] sm:$0xff]
      %v1197 = vld [vmem:[#allocation3 + $0xb1] sm:$0xff]
      %v1198 = vld [vmem:[#allocation3 + $0xc1] sm:$0xff]
      %v1199 = vld [vmem:[#allocation3 + $0xc9] sm:$0xff]
      %v1200 = vld [vmem:[#allocation3 + $0xd9] sm:$0xff]
      %v1201 = vld [vmem:[#allocation3 + $0xe1] sm:$0xff]
      %v1202 = vld [vmem:[#allocation3 + $0xf1] sm:$0xff]
      %v1203 = vld [vmem:[#allocation3 + $0xf9] sm:$0xff]
      %v1204 = vld [vmem:[#allocation3 + $0x109] sm:$0xff]
      %v1205 = vld [vmem:[#allocation3 + $0x111] sm:$0xff]
      %v1206 = vld [vmem:[#allocation3 + $0x121] sm:$0xff]
      %v1207 = vld [vmem:[#allocation3 + $0x129] sm:$0xff]
      %v1208 = vld [vmem:[#allocation3 + $0x139] sm:$0xff]
      %v1209 = vld [vmem:[#allocation3 + $0x141] sm:$0xff]
      %v1210 = vld [vmem:[#allocation3 + $0x151] sm:$0xff]
      %v1211 = vld [vmem:[#allocation3 + $0x159] sm:$0xff]
      %v1212 = vld [vmem:[#allocation3 + $0x169] sm:$0xff]
      %v1213 = vld [vmem:[#allocation3 + $0x171] sm:$0xff]
      %s1214 = scalar_lea.vmem %s4, 128
      %v1215 = vld [vmem:[%s1214] sm:$0xff]
      %v1216 = vld [vmem:[%s1214 + $0x8] sm:$0xff]
      %v1217 = vld [vmem:[%s1214 + $0x10] sm:$0xff]
      %v1218 = vld [vmem:[%s1214 + $0x18] sm:$0xff]
      %v1219 = vld [vmem:[%s1214 + $0x20] sm:$0xff]
      %v1220 = vld [vmem:[%s1214 + $0x28] sm:$0xff]
      %v1221 = vld [vmem:[%s1214 + $0x30] sm:$0xff]
      %v1222 = vld [vmem:[%s1214 + $0x38] sm:$0xff]
      %v1223 = vld [vmem:[%s1214 + $0x40] sm:$0xff]
      %v1224 = vld [vmem:[%s1214 + $0x48] sm:$0xff]
      %v1225 = vld [vmem:[%s1214 + $0x50] sm:$0xff]
      %v1226 = vld [vmem:[%s1214 + $0x58] sm:$0xff]
      %v1227 = vld [vmem:[%s1214 + $0x60] sm:$0xff]
      %v1228 = vld [vmem:[%s1214 + $0x68] sm:$0xff]
      %v1229 = vld [vmem:[%s1214 + $0x70] sm:$0xff]
      %v1230 = vld [vmem:[%s1214 + $0x78] sm:$0xff]
      %1231 = vmatpush.msra.mxu0 %v1230
      %1232 = vmatpush.msra.mxu0 %v1229
      %1233 = vmatpush.msra.mxu0 %v1228
      %1234 = vmatpush.msra.mxu0 %v1227
      %1235 = vmatpush.msra.mxu0 %v1226
      %1236 = vmatpush.msra.mxu0 %v1225
      %1237 = vmatpush.msra.mxu0 %v1224
      %1238 = vmatpush.msra.mxu0 %v1223
      %1239 = vmatpush.msra.mxu0 %v1222
      %1240 = vmatpush.msra.mxu0 %v1221
      %1241 = vmatpush.msra.mxu0 %v1220
      %1242 = vmatpush.msra.mxu0 %v1219
      %1243 = vmatpush.msra.mxu0 %v1218
      %1244 = vmatpush.msra.mxu0 %v1217
      %1245 = vmatpush.msra.mxu0 %v1216
      %1246 = vmatpush.msra.mxu0 %v1215
      %1247 = vmatmul.f32.gmra.mxu0 %v1182
      %v1248 = vpop.f32.mrf.mxu0
      %v1249 = vadd.f32 0.0, %v1248
      %1250 = vmatmul.f32.gmra.mxu0 %v1183
      %v1251 = vpop.f32.mrf.mxu0
      %v1252 = vadd.f32 0.0, %v1251
      %1253 = vmatmul.f32.gmra.mxu0 %v1184
      %v1254 = vpop.f32.mrf.mxu0
      %v1255 = vadd.f32 0.0, %v1254
      %1256 = vmatmul.f32.gmra.mxu0 %v1185
      %v1257 = vpop.f32.mrf.mxu0
      %v1258 = vadd.f32 0.0, %v1257
      %1259 = vmatmul.f32.gmra.mxu0 %v1186
      %v1260 = vpop.f32.mrf.mxu0
      %v1261 = vadd.f32 0.0, %v1260
      %1262 = vmatmul.f32.gmra.mxu0 %v1187
      %v1263 = vpop.f32.mrf.mxu0
      %v1264 = vadd.f32 0.0, %v1263
      %1265 = vmatmul.f32.gmra.mxu0 %v1188
      %v1266 = vpop.f32.mrf.mxu0
      %v1267 = vadd.f32 0.0, %v1266
      %1268 = vmatmul.f32.gmra.mxu0 %v1189
      %v1269 = vpop.f32.mrf.mxu0
      %v1270 = vadd.f32 0.0, %v1269
      %1271 = vmatmul.f32.gmra.mxu0 %v1190
      %v1272 = vpop.f32.mrf.mxu0
      %v1273 = vadd.f32 0.0, %v1272
      %1274 = vmatmul.f32.gmra.mxu0 %v1191
      %v1275 = vpop.f32.mrf.mxu0
      %v1276 = vadd.f32 0.0, %v1275
      %1277 = vmatmul.f32.gmra.mxu0 %v1192
      %v1278 = vpop.f32.mrf.mxu0
      %v1279 = vadd.f32 0.0, %v1278
      %1280 = vmatmul.f32.gmra.mxu0 %v1193
      %v1281 = vpop.f32.mrf.mxu0
      %v1282 = vadd.f32 0.0, %v1281
      %1283 = vmatmul.f32.gmra.mxu0 %v1194
      %v1284 = vpop.f32.mrf.mxu0
      %v1285 = vadd.f32 0.0, %v1284
      %1286 = vmatmul.f32.gmra.mxu0 %v1195
      %v1287 = vpop.f32.mrf.mxu0
      %v1288 = vadd.f32 0.0, %v1287
      %1289 = vmatmul.f32.gmra.mxu0 %v1196
      %v1290 = vpop.f32.mrf.mxu0
      %v1291 = vadd.f32 0.0, %v1290
      %1292 = vmatmul.f32.gmra.mxu0 %v1197
      %v1293 = vpop.f32.mrf.mxu0
      %v1294 = vadd.f32 0.0, %v1293
      %1295 = vmatmul.f32.gmra.mxu0 %v1198
      %v1296 = vpop.f32.mrf.mxu0
      %v1297 = vadd.f32 0.0, %v1296
      %1298 = vmatmul.f32.gmra.mxu0 %v1199
      %v1299 = vpop.f32.mrf.mxu0
      %v1300 = vadd.f32 0.0, %v1299
      %1301 = vmatmul.f32.gmra.mxu0 %v1200
      %v1302 = vpop.f32.mrf.mxu0
      %v1303 = vadd.f32 0.0, %v1302
      %1304 = vmatmul.f32.gmra.mxu0 %v1201
      %v1305 = vpop.f32.mrf.mxu0
      %v1306 = vadd.f32 0.0, %v1305
      %1307 = vmatmul.f32.gmra.mxu0 %v1202
      %v1308 = vpop.f32.mrf.mxu0
      %v1309 = vadd.f32 0.0, %v1308
      %1310 = vmatmul.f32.gmra.mxu0 %v1203
      %v1311 = vpop.f32.mrf.mxu0
      %v1312 = vadd.f32 0.0, %v1311
      %1313 = vmatmul.f32.gmra.mxu0 %v1204
      %v1314 = vpop.f32.mrf.mxu0
      %v1315 = vadd.f32 0.0, %v1314
      %1316 = vmatmul.f32.gmra.mxu0 %v1205
      %v1317 = vpop.f32.mrf.mxu0
      %v1318 = vadd.f32 0.0, %v1317
      %1319 = vmatmul.f32.gmra.mxu0 %v1206
      %v1320 = vpop.f32.mrf.mxu0
      %v1321 = vadd.f32 0.0, %v1320
      %1322 = vmatmul.f32.gmra.mxu0 %v1207
      %v1323 = vpop.f32.mrf.mxu0
      %v1324 = vadd.f32 0.0, %v1323
      %1325 = vmatmul.f32.gmra.mxu0 %v1208
      %v1326 = vpop.f32.mrf.mxu0
      %v1327 = vadd.f32 0.0, %v1326
      %1328 = vmatmul.f32.gmra.mxu0 %v1209
      %v1329 = vpop.f32.mrf.mxu0
      %v1330 = vadd.f32 0.0, %v1329
      %1331 = vmatmul.f32.gmra.mxu0 %v1210
      %v1332 = vpop.f32.mrf.mxu0
      %v1333 = vadd.f32 0.0, %v1332
      %1334 = vmatmul.f32.gmra.mxu0 %v1211
      %v1335 = vpop.f32.mrf.mxu0
      %v1336 = vadd.f32 0.0, %v1335
      %1337 = vmatmul.f32.gmra.mxu0 %v1212
      %v1338 = vpop.f32.mrf.mxu0
      %v1339 = vadd.f32 0.0, %v1338
      %1340 = vmatmul.f32.gmra.mxu0 %v1213
      %v1341 = vpop.f32.mrf.mxu0
      %v1342 = vadd.f32 0.0, %v1341
      %1343 = vdwg.mxu0
      %1344 = vmatpush.msra.mxu0 %v1181
      %1345 = vmatpush.msra.mxu0 %v1180
      %1346 = vmatpush.msra.mxu0 %v1179
      %1347 = vmatpush.msra.mxu0 %v1178
      %1348 = vmatpush.msra.mxu0 %v1177
      %1349 = vmatpush.msra.mxu0 %v1176
      %1350 = vmatpush.msra.mxu0 %v1175
      %1351 = vmatpush.msra.mxu0 %v1174
      %1352 = vmatpush.msra.mxu0 %v1173
      %1353 = vmatpush.msra.mxu0 %v1172
      %1354 = vmatpush.msra.mxu0 %v1171
      %1355 = vmatpush.msra.mxu0 %v1170
      %1356 = vmatpush.msra.mxu0 %v1169
      %1357 = vmatpush.msra.mxu0 %v1168
      %1358 = vmatpush.msra.mxu0 %v1167
      %1359 = vmatpush.msra.mxu0 %v1166
      %1360 = vmatmul.f32.gmra.mxu0 %v1134
      %v1361 = vpop.f32.mrf.mxu0
      %v1362 = vadd.f32 %v1249, %v1361
      %1363 = vmatmul.f32.gmra.mxu0 %v1135
      %v1364 = vpop.f32.mrf.mxu0
      %v1365 = vadd.f32 %v1252, %v1364
      %1366 = vmatmul.f32.gmra.mxu0 %v1136
      %v1367 = vpop.f32.mrf.mxu0
      %v1368 = vadd.f32 %v1255, %v1367
      %1369 = vmatmul.f32.gmra.mxu0 %v1137
      %v1370 = vpop.f32.mrf.mxu0
      %v1371 = vadd.f32 %v1258, %v1370
      %1372 = vmatmul.f32.gmra.mxu0 %v1138
      %v1373 = vpop.f32.mrf.mxu0
      %v1374 = vadd.f32 %v1261, %v1373
      %1375 = vmatmul.f32.gmra.mxu0 %v1139
      %v1376 = vpop.f32.mrf.mxu0
      %v1377 = vadd.f32 %v1264, %v1376
      %1378 = vmatmul.f32.gmra.mxu0 %v1140
      %v1379 = vpop.f32.mrf.mxu0
      %v1380 = vadd.f32 %v1267, %v1379
      %1381 = vmatmul.f32.gmra.mxu0 %v1141
      %v1382 = vpop.f32.mrf.mxu0
      %v1383 = vadd.f32 %v1270, %v1382
      %1384 = vmatmul.f32.gmra.mxu0 %v1142
      %v1385 = vpop.f32.mrf.mxu0
      %v1386 = vadd.f32 %v1273, %v1385
      %1387 = vmatmul.f32.gmra.mxu0 %v1143
      %v1388 = vpop.f32.mrf.mxu0
      %v1389 = vadd.f32 %v1276, %v1388
      %1390 = vmatmul.f32.gmra.mxu0 %v1144
      %v1391 = vpop.f32.mrf.mxu0
      %v1392 = vadd.f32 %v1279, %v1391
      %1393 = vmatmul.f32.gmra.mxu0 %v1145
      %v1394 = vpop.f32.mrf.mxu0
      %v1395 = vadd.f32 %v1282, %v1394
      %1396 = vmatmul.f32.gmra.mxu0 %v1146
      %v1397 = vpop.f32.mrf.mxu0
      %v1398 = vadd.f32 %v1285, %v1397
      %1399 = vmatmul.f32.gmra.mxu0 %v1147
      %v1400 = vpop.f32.mrf.mxu0
      %v1401 = vadd.f32 %v1288, %v1400
      %1402 = vmatmul.f32.gmra.mxu0 %v1148
      %v1403 = vpop.f32.mrf.mxu0
      %v1404 = vadd.f32 %v1291, %v1403
      %1405 = vmatmul.f32.gmra.mxu0 %v1149
      %v1406 = vpop.f32.mrf.mxu0
      %v1407 = vadd.f32 %v1294, %v1406
      %1408 = vmatmul.f32.gmra.mxu0 %v1150
      %v1409 = vpop.f32.mrf.mxu0
      %v1410 = vadd.f32 %v1297, %v1409
      %1411 = vmatmul.f32.gmra.mxu0 %v1151
      %v1412 = vpop.f32.mrf.mxu0
      %v1413 = vadd.f32 %v1300, %v1412
      %1414 = vmatmul.f32.gmra.mxu0 %v1152
      %v1415 = vpop.f32.mrf.mxu0
      %v1416 = vadd.f32 %v1303, %v1415
      %1417 = vmatmul.f32.gmra.mxu0 %v1153
      %v1418 = vpop.f32.mrf.mxu0
      %v1419 = vadd.f32 %v1306, %v1418
      %1420 = vmatmul.f32.gmra.mxu0 %v1154
      %v1421 = vpop.f32.mrf.mxu0
      %v1422 = vadd.f32 %v1309, %v1421
      %1423 = vmatmul.f32.gmra.mxu0 %v1155
      %v1424 = vpop.f32.mrf.mxu0
      %v1425 = vadd.f32 %v1312, %v1424
      %1426 = vmatmul.f32.gmra.mxu0 %v1156
      %v1427 = vpop.f32.mrf.mxu0
      %v1428 = vadd.f32 %v1315, %v1427
      %1429 = vmatmul.f32.gmra.mxu0 %v1157
      %v1430 = vpop.f32.mrf.mxu0
      %v1431 = vadd.f32 %v1318, %v1430
      %1432 = vmatmul.f32.gmra.mxu0 %v1158
      %v1433 = vpop.f32.mrf.mxu0
      %v1434 = vadd.f32 %v1321, %v1433
      %1435 = vmatmul.f32.gmra.mxu0 %v1159
      %v1436 = vpop.f32.mrf.mxu0
      %v1437 = vadd.f32 %v1324, %v1436
      %1438 = vmatmul.f32.gmra.mxu0 %v1160
      %v1439 = vpop.f32.mrf.mxu0
      %v1440 = vadd.f32 %v1327, %v1439
      %1441 = vmatmul.f32.gmra.mxu0 %v1161
      %v1442 = vpop.f32.mrf.mxu0
      %v1443 = vadd.f32 %v1330, %v1442
      %1444 = vmatmul.f32.gmra.mxu0 %v1162
      %v1445 = vpop.f32.mrf.mxu0
      %v1446 = vadd.f32 %v1333, %v1445
      %1447 = vmatmul.f32.gmra.mxu0 %v1163
      %v1448 = vpop.f32.mrf.mxu0
      %v1449 = vadd.f32 %v1336, %v1448
      %1450 = vmatmul.f32.gmra.mxu0 %v1164
      %v1451 = vpop.f32.mrf.mxu0
      %v1452 = vadd.f32 %v1339, %v1451
      %1453 = vmatmul.f32.gmra.mxu0 %v1165
      %v1454 = vpop.f32.mrf.mxu0
      %v1455 = vadd.f32 %v1342, %v1454
      %1456 = vdwg.mxu0
      %v1457 = vld [vmem:[#allocation3 + $0x2] sm:$0xff]
      %v1458 = vld [vmem:[#allocation3 + $0xa] sm:$0xff]
      %v1459 = vld [vmem:[#allocation3 + $0x1a] sm:$0xff]
      %v1460 = vld [vmem:[#allocation3 + $0x22] sm:$0xff]
      %v1461 = vld [vmem:[#allocation3 + $0x32] sm:$0xff]
      %v1462 = vld [vmem:[#allocation3 + $0x3a] sm:$0xff]
      %v1463 = vld [vmem:[#allocation3 + $0x4a] sm:$0xff]
      %v1464 = vld [vmem:[#allocation3 + $0x52] sm:$0xff]
      %v1465 = vld [vmem:[#allocation3 + $0x62] sm:$0xff]
      %v1466 = vld [vmem:[#allocation3 + $0x6a] sm:$0xff]
      %v1467 = vld [vmem:[#allocation3 + $0x7a] sm:$0xff]
      %v1468 = vld [vmem:[#allocation3 + $0x82] sm:$0xff]
      %v1469 = vld [vmem:[#allocation3 + $0x92] sm:$0xff]
      %v1470 = vld [vmem:[#allocation3 + $0x9a] sm:$0xff]
      %v1471 = vld [vmem:[#allocation3 + $0xaa] sm:$0xff]
      %v1472 = vld [vmem:[#allocation3 + $0xb2] sm:$0xff]
      %v1473 = vld [vmem:[#allocation3 + $0xc2] sm:$0xff]
      %v1474 = vld [vmem:[#allocation3 + $0xca] sm:$0xff]
      %v1475 = vld [vmem:[#allocation3 + $0xda] sm:$0xff]
      %v1476 = vld [vmem:[#allocation3 + $0xe2] sm:$0xff]
      %v1477 = vld [vmem:[#allocation3 + $0xf2] sm:$0xff]
      %v1478 = vld [vmem:[#allocation3 + $0xfa] sm:$0xff]
      %v1479 = vld [vmem:[#allocation3 + $0x10a] sm:$0xff]
      %v1480 = vld [vmem:[#allocation3 + $0x112] sm:$0xff]
      %v1481 = vld [vmem:[#allocation3 + $0x122] sm:$0xff]
      %v1482 = vld [vmem:[#allocation3 + $0x12a] sm:$0xff]
      %v1483 = vld [vmem:[#allocation3 + $0x13a] sm:$0xff]
      %v1484 = vld [vmem:[#allocation3 + $0x142] sm:$0xff]
      %v1485 = vld [vmem:[#allocation3 + $0x152] sm:$0xff]
      %v1486 = vld [vmem:[#allocation3 + $0x15a] sm:$0xff]
      %v1487 = vld [vmem:[#allocation3 + $0x16a] sm:$0xff]
      %v1488 = vld [vmem:[#allocation3 + $0x172] sm:$0xff]
      %s1489 = scalar_lea.vmem %s4, 256
      %v1490 = vld [vmem:[%s1489] sm:$0xff]
      %v1491 = vld [vmem:[%s1489 + $0x8] sm:$0xff]
      %v1492 = vld [vmem:[%s1489 + $0x10] sm:$0xff]
      %v1493 = vld [vmem:[%s1489 + $0x18] sm:$0xff]
      %v1494 = vld [vmem:[%s1489 + $0x20] sm:$0xff]
      %v1495 = vld [vmem:[%s1489 + $0x28] sm:$0xff]
      %v1496 = vld [vmem:[%s1489 + $0x30] sm:$0xff]
      %v1497 = vld [vmem:[%s1489 + $0x38] sm:$0xff]
      %v1498 = vld [vmem:[%s1489 + $0x40] sm:$0xff]
      %v1499 = vld [vmem:[%s1489 + $0x48] sm:$0xff]
      %v1500 = vld [vmem:[%s1489 + $0x50] sm:$0xff]
      %v1501 = vld [vmem:[%s1489 + $0x58] sm:$0xff]
      %v1502 = vld [vmem:[%s1489 + $0x60] sm:$0xff]
      %v1503 = vld [vmem:[%s1489 + $0x68] sm:$0xff]
      %v1504 = vld [vmem:[%s1489 + $0x70] sm:$0xff]
      %v1505 = vld [vmem:[%s1489 + $0x78] sm:$0xff]
      %1506 = vmatpush.msra.mxu0 %v1505
      %1507 = vmatpush.msra.mxu0 %v1504
      %1508 = vmatpush.msra.mxu0 %v1503
      %1509 = vmatpush.msra.mxu0 %v1502
      %1510 = vmatpush.msra.mxu0 %v1501
      %1511 = vmatpush.msra.mxu0 %v1500
      %1512 = vmatpush.msra.mxu0 %v1499
      %1513 = vmatpush.msra.mxu0 %v1498
      %1514 = vmatpush.msra.mxu0 %v1497
      %1515 = vmatpush.msra.mxu0 %v1496
      %1516 = vmatpush.msra.mxu0 %v1495
      %1517 = vmatpush.msra.mxu0 %v1494
      %1518 = vmatpush.msra.mxu0 %v1493
      %1519 = vmatpush.msra.mxu0 %v1492
      %1520 = vmatpush.msra.mxu0 %v1491
      %1521 = vmatpush.msra.mxu0 %v1490
      %1522 = vmatmul.f32.gmra.mxu0 %v1457
      %v1523 = vpop.f32.mrf.mxu0
      %v1524 = vadd.f32 0.0, %v1523
      %1525 = vmatmul.f32.gmra.mxu0 %v1458
      %v1526 = vpop.f32.mrf.mxu0
      %v1527 = vadd.f32 0.0, %v1526
      %1528 = vmatmul.f32.gmra.mxu0 %v1459
      %v1529 = vpop.f32.mrf.mxu0
      %v1530 = vadd.f32 0.0, %v1529
      %1531 = vmatmul.f32.gmra.mxu0 %v1460
      %v1532 = vpop.f32.mrf.mxu0
      %v1533 = vadd.f32 0.0, %v1532
      %1534 = vmatmul.f32.gmra.mxu0 %v1461
      %v1535 = vpop.f32.mrf.mxu0
      %v1536 = vadd.f32 0.0, %v1535
      %1537 = vmatmul.f32.gmra.mxu0 %v1462
      %v1538 = vpop.f32.mrf.mxu0
      %v1539 = vadd.f32 0.0, %v1538
      %1540 = vmatmul.f32.gmra.mxu0 %v1463
      %v1541 = vpop.f32.mrf.mxu0
      %v1542 = vadd.f32 0.0, %v1541
      %1543 = vmatmul.f32.gmra.mxu0 %v1464
      %v1544 = vpop.f32.mrf.mxu0
      %v1545 = vadd.f32 0.0, %v1544
      %1546 = vmatmul.f32.gmra.mxu0 %v1465
      %v1547 = vpop.f32.mrf.mxu0
      %v1548 = vadd.f32 0.0, %v1547
      %1549 = vmatmul.f32.gmra.mxu0 %v1466
      %v1550 = vpop.f32.mrf.mxu0
      %v1551 = vadd.f32 0.0, %v1550
      %1552 = vmatmul.f32.gmra.mxu0 %v1467
      %v1553 = vpop.f32.mrf.mxu0
      %v1554 = vadd.f32 0.0, %v1553
      %1555 = vmatmul.f32.gmra.mxu0 %v1468
      %v1556 = vpop.f32.mrf.mxu0
      %v1557 = vadd.f32 0.0, %v1556
      %1558 = vmatmul.f32.gmra.mxu0 %v1469
      %v1559 = vpop.f32.mrf.mxu0
      %v1560 = vadd.f32 0.0, %v1559
      %1561 = vmatmul.f32.gmra.mxu0 %v1470
      %v1562 = vpop.f32.mrf.mxu0
      %v1563 = vadd.f32 0.0, %v1562
      %1564 = vmatmul.f32.gmra.mxu0 %v1471
      %v1565 = vpop.f32.mrf.mxu0
      %v1566 = vadd.f32 0.0, %v1565
      %1567 = vmatmul.f32.gmra.mxu0 %v1472
      %v1568 = vpop.f32.mrf.mxu0
      %v1569 = vadd.f32 0.0, %v1568
      %1570 = vmatmul.f32.gmra.mxu0 %v1473
      %v1571 = vpop.f32.mrf.mxu0
      %v1572 = vadd.f32 0.0, %v1571
      %1573 = vmatmul.f32.gmra.mxu0 %v1474
      %v1574 = vpop.f32.mrf.mxu0
      %v1575 = vadd.f32 0.0, %v1574
      %1576 = vmatmul.f32.gmra.mxu0 %v1475
      %v1577 = vpop.f32.mrf.mxu0
      %v1578 = vadd.f32 0.0, %v1577
      %1579 = vmatmul.f32.gmra.mxu0 %v1476
      %v1580 = vpop.f32.mrf.mxu0
      %v1581 = vadd.f32 0.0, %v1580
      %1582 = vmatmul.f32.gmra.mxu0 %v1477
      %v1583 = vpop.f32.mrf.mxu0
      %v1584 = vadd.f32 0.0, %v1583
      %1585 = vmatmul.f32.gmra.mxu0 %v1478
      %v1586 = vpop.f32.mrf.mxu0
      %v1587 = vadd.f32 0.0, %v1586
      %1588 = vmatmul.f32.gmra.mxu0 %v1479
      %v1589 = vpop.f32.mrf.mxu0
      %v1590 = vadd.f32 0.0, %v1589
      %1591 = vmatmul.f32.gmra.mxu0 %v1480
      %v1592 = vpop.f32.mrf.mxu0
      %v1593 = vadd.f32 0.0, %v1592
      %1594 = vmatmul.f32.gmra.mxu0 %v1481
      %v1595 = vpop.f32.mrf.mxu0
      %v1596 = vadd.f32 0.0, %v1595
      %1597 = vmatmul.f32.gmra.mxu0 %v1482
      %v1598 = vpop.f32.mrf.mxu0
      %v1599 = vadd.f32 0.0, %v1598
      %1600 = vmatmul.f32.gmra.mxu0 %v1483
      %v1601 = vpop.f32.mrf.mxu0
      %v1602 = vadd.f32 0.0, %v1601
      %1603 = vmatmul.f32.gmra.mxu0 %v1484
      %v1604 = vpop.f32.mrf.mxu0
      %v1605 = vadd.f32 0.0, %v1604
      %1606 = vmatmul.f32.gmra.mxu0 %v1485
      %v1607 = vpop.f32.mrf.mxu0
      %v1608 = vadd.f32 0.0, %v1607
      %1609 = vmatmul.f32.gmra.mxu0 %v1486
      %v1610 = vpop.f32.mrf.mxu0
      %v1611 = vadd.f32 0.0, %v1610
      %1612 = vmatmul.f32.gmra.mxu0 %v1487
      %v1613 = vpop.f32.mrf.mxu0
      %v1614 = vadd.f32 0.0, %v1613
      %1615 = vmatmul.f32.gmra.mxu0 %v1488
      %v1616 = vpop.f32.mrf.mxu0
      %v1617 = vadd.f32 0.0, %v1616
      %1618 = vdwg.mxu0
      %v1619 = vadd.f32 %v1362, %v1524
      %v1620 = vadd.f32 %v1365, %v1527
      %v1621 = vadd.f32 %v1368, %v1530
      %v1622 = vadd.f32 %v1371, %v1533
      %v1623 = vadd.f32 %v1374, %v1536
      %v1624 = vadd.f32 %v1377, %v1539
      %v1625 = vadd.f32 %v1380, %v1542
      %v1626 = vadd.f32 %v1383, %v1545
      %v1627 = vadd.f32 %v1386, %v1548
      %v1628 = vadd.f32 %v1389, %v1551
      %v1629 = vadd.f32 %v1392, %v1554
      %v1630 = vadd.f32 %v1395, %v1557
      %v1631 = vadd.f32 %v1398, %v1560
      %v1632 = vadd.f32 %v1401, %v1563
      %v1633 = vadd.f32 %v1404, %v1566
      %v1634 = vadd.f32 %v1407, %v1569
      %v1635 = vadd.f32 %v1410, %v1572
      %v1636 = vadd.f32 %v1413, %v1575
      %v1637 = vadd.f32 %v1416, %v1578
      %v1638 = vadd.f32 %v1419, %v1581
      %v1639 = vadd.f32 %v1422, %v1584
      %v1640 = vadd.f32 %v1425, %v1587
      %v1641 = vadd.f32 %v1428, %v1590
      %v1642 = vadd.f32 %v1431, %v1593
      %v1643 = vadd.f32 %v1434, %v1596
      %v1644 = vadd.f32 %v1437, %v1599
      %v1645 = vadd.f32 %v1440, %v1602
      %v1646 = vadd.f32 %v1443, %v1605
      %v1647 = vadd.f32 %v1446, %v1608
      %v1648 = vadd.f32 %v1449, %v1611
      %v1649 = vadd.f32 %v1452, %v1614
      %v1650 = vadd.f32 %v1455, %v1617
      %s1651 = scalar_lea.vmem [#allocation3], 24
      %v1652 = vld [vmem:[%s1651] sm:$0xff]
      %v1653 = vld [vmem:[%s1651 + $0x8] sm:$0xff]
      %v1654 = vld [vmem:[%s1651 + $0x18] sm:$0xff]
      %v1655 = vld [vmem:[%s1651 + $0x20] sm:$0xff]
      %v1656 = vld [vmem:[%s1651 + $0x30] sm:$0xff]
      %v1657 = vld [vmem:[%s1651 + $0x38] sm:$0xff]
      %v1658 = vld [vmem:[%s1651 + $0x48] sm:$0xff]
      %v1659 = vld [vmem:[%s1651 + $0x50] sm:$0xff]
      %v1660 = vld [vmem:[%s1651 + $0x60] sm:$0xff]
      %v1661 = vld [vmem:[%s1651 + $0x68] sm:$0xff]
      %v1662 = vld [vmem:[%s1651 + $0x78] sm:$0xff]
      %v1663 = vld [vmem:[%s1651 + $0x80] sm:$0xff]
      %v1664 = vld [vmem:[%s1651 + $0x90] sm:$0xff]
      %v1665 = vld [vmem:[%s1651 + $0x98] sm:$0xff]
      %v1666 = vld [vmem:[%s1651 + $0xa8] sm:$0xff]
      %v1667 = vld [vmem:[%s1651 + $0xb0] sm:$0xff]
      %v1668 = vld [vmem:[%s1651 + $0xc0] sm:$0xff]
      %v1669 = vld [vmem:[%s1651 + $0xc8] sm:$0xff]
      %v1670 = vld [vmem:[%s1651 + $0xd8] sm:$0xff]
      %v1671 = vld [vmem:[%s1651 + $0xe0] sm:$0xff]
      %v1672 = vld [vmem:[%s1651 + $0xf0] sm:$0xff]
      %v1673 = vld [vmem:[%s1651 + $0xf8] sm:$0xff]
      %v1674 = vld [vmem:[%s1651 + $0x108] sm:$0xff]
      %v1675 = vld [vmem:[%s1651 + $0x110] sm:$0xff]
      %v1676 = vld [vmem:[%s1651 + $0x120] sm:$0xff]
      %v1677 = vld [vmem:[%s1651 + $0x128] sm:$0xff]
      %v1678 = vld [vmem:[%s1651 + $0x138] sm:$0xff]
      %v1679 = vld [vmem:[%s1651 + $0x140] sm:$0xff]
      %v1680 = vld [vmem:[%s1651 + $0x150] sm:$0xff]
      %v1681 = vld [vmem:[%s1651 + $0x158] sm:$0xff]
      %v1682 = vld [vmem:[%s1651 + $0x168] sm:$0xff]
      %v1683 = vld [vmem:[%s1651 + $0x170] sm:$0xff]
      %s1684 = scalar_lea.vmem %s4, 384
      %v1685 = vld [vmem:[%s1684] sm:$0xff]
      %v1686 = vld [vmem:[%s1684 + $0x8] sm:$0xff]
      %v1687 = vld [vmem:[%s1684 + $0x10] sm:$0xff]
      %v1688 = vld [vmem:[%s1684 + $0x18] sm:$0xff]
      %v1689 = vld [vmem:[%s1684 + $0x20] sm:$0xff]
      %v1690 = vld [vmem:[%s1684 + $0x28] sm:$0xff]
      %v1691 = vld [vmem:[%s1684 + $0x30] sm:$0xff]
      %v1692 = vld [vmem:[%s1684 + $0x38] sm:$0xff]
      %v1693 = vld [vmem:[%s1684 + $0x40] sm:$0xff]
      %v1694 = vld [vmem:[%s1684 + $0x48] sm:$0xff]
      %v1695 = vld [vmem:[%s1684 + $0x50] sm:$0xff]
      %v1696 = vld [vmem:[%s1684 + $0x58] sm:$0xff]
      %v1697 = vld [vmem:[%s1684 + $0x60] sm:$0xff]
      %v1698 = vld [vmem:[%s1684 + $0x68] sm:$0xff]
      %v1699 = vld [vmem:[%s1684 + $0x70] sm:$0xff]
      %v1700 = vld [vmem:[%s1684 + $0x78] sm:$0xff]
      %1701 = vmatpush.msra.mxu0 %v1700
      %1702 = vmatpush.msra.mxu0 %v1699
      %1703 = vmatpush.msra.mxu0 %v1698
      %1704 = vmatpush.msra.mxu0 %v1697
      %1705 = vmatpush.msra.mxu0 %v1696
      %1706 = vmatpush.msra.mxu0 %v1695
      %1707 = vmatpush.msra.mxu0 %v1694
      %1708 = vmatpush.msra.mxu0 %v1693
      %1709 = vmatpush.msra.mxu0 %v1692
      %1710 = vmatpush.msra.mxu0 %v1691
      %1711 = vmatpush.msra.mxu0 %v1690
      %1712 = vmatpush.msra.mxu0 %v1689
      %1713 = vmatpush.msra.mxu0 %v1688
      %1714 = vmatpush.msra.mxu0 %v1687
      %1715 = vmatpush.msra.mxu0 %v1686
      %1716 = vmatpush.msra.mxu0 %v1685
      %1717 = vmatmul.f32.gmra.mxu0 %v1652
      %v1718 = vpop.f32.mrf.mxu0
      %v1719 = vadd.f32 0.0, %v1718
      %1720 = vmatmul.f32.gmra.mxu0 %v1653
      %v1721 = vpop.f32.mrf.mxu0
      %v1722 = vadd.f32 0.0, %v1721
      %1723 = vmatmul.f32.gmra.mxu0 %v1654
      %v1724 = vpop.f32.mrf.mxu0
      %v1725 = vadd.f32 0.0, %v1724
      %1726 = vmatmul.f32.gmra.mxu0 %v1655
      %v1727 = vpop.f32.mrf.mxu0
      %v1728 = vadd.f32 0.0, %v1727
      %1729 = vmatmul.f32.gmra.mxu0 %v1656
      %v1730 = vpop.f32.mrf.mxu0
      %v1731 = vadd.f32 0.0, %v1730
      %1732 = vmatmul.f32.gmra.mxu0 %v1657
      %v1733 = vpop.f32.mrf.mxu0
      %v1734 = vadd.f32 0.0, %v1733
      %1735 = vmatmul.f32.gmra.mxu0 %v1658
      %v1736 = vpop.f32.mrf.mxu0
      %v1737 = vadd.f32 0.0, %v1736
      %1738 = vmatmul.f32.gmra.mxu0 %v1659
      %v1739 = vpop.f32.mrf.mxu0
      %v1740 = vadd.f32 0.0, %v1739
      %1741 = vmatmul.f32.gmra.mxu0 %v1660
      %v1742 = vpop.f32.mrf.mxu0
      %v1743 = vadd.f32 0.0, %v1742
      %1744 = vmatmul.f32.gmra.mxu0 %v1661
      %v1745 = vpop.f32.mrf.mxu0
      %v1746 = vadd.f32 0.0, %v1745
      %1747 = vmatmul.f32.gmra.mxu0 %v1662
      %v1748 = vpop.f32.mrf.mxu0
      %v1749 = vadd.f32 0.0, %v1748
      %1750 = vmatmul.f32.gmra.mxu0 %v1663
      %v1751 = vpop.f32.mrf.mxu0
      %v1752 = vadd.f32 0.0, %v1751
      %1753 = vmatmul.f32.gmra.mxu0 %v1664
      %v1754 = vpop.f32.mrf.mxu0
      %v1755 = vadd.f32 0.0, %v1754
      %1756 = vmatmul.f32.gmra.mxu0 %v1665
      %v1757 = vpop.f32.mrf.mxu0
      %v1758 = vadd.f32 0.0, %v1757
      %1759 = vmatmul.f32.gmra.mxu0 %v1666
      %v1760 = vpop.f32.mrf.mxu0
      %v1761 = vadd.f32 0.0, %v1760
      %1762 = vmatmul.f32.gmra.mxu0 %v1667
      %v1763 = vpop.f32.mrf.mxu0
      %v1764 = vadd.f32 0.0, %v1763
      %1765 = vmatmul.f32.gmra.mxu0 %v1668
      %v1766 = vpop.f32.mrf.mxu0
      %v1767 = vadd.f32 0.0, %v1766
      %1768 = vmatmul.f32.gmra.mxu0 %v1669
      %v1769 = vpop.f32.mrf.mxu0
      %v1770 = vadd.f32 0.0, %v1769
      %1771 = vmatmul.f32.gmra.mxu0 %v1670
      %v1772 = vpop.f32.mrf.mxu0
      %v1773 = vadd.f32 0.0, %v1772
      %1774 = vmatmul.f32.gmra.mxu0 %v1671
      %v1775 = vpop.f32.mrf.mxu0
      %v1776 = vadd.f32 0.0, %v1775
      %1777 = vmatmul.f32.gmra.mxu0 %v1672
      %v1778 = vpop.f32.mrf.mxu0
      %v1779 = vadd.f32 0.0, %v1778
      %1780 = vmatmul.f32.gmra.mxu0 %v1673
      %v1781 = vpop.f32.mrf.mxu0
      %v1782 = vadd.f32 0.0, %v1781
      %1783 = vmatmul.f32.gmra.mxu0 %v1674
      %v1784 = vpop.f32.mrf.mxu0
      %v1785 = vadd.f32 0.0, %v1784
      %1786 = vmatmul.f32.gmra.mxu0 %v1675
      %v1787 = vpop.f32.mrf.mxu0
      %v1788 = vadd.f32 0.0, %v1787
      %1789 = vmatmul.f32.gmra.mxu0 %v1676
      %v1790 = vpop.f32.mrf.mxu0
      %v1791 = vadd.f32 0.0, %v1790
      %1792 = vmatmul.f32.gmra.mxu0 %v1677
      %v1793 = vpop.f32.mrf.mxu0
      %v1794 = vadd.f32 0.0, %v1793
      %1795 = vmatmul.f32.gmra.mxu0 %v1678
      %v1796 = vpop.f32.mrf.mxu0
      %v1797 = vadd.f32 0.0, %v1796
      %1798 = vmatmul.f32.gmra.mxu0 %v1679
      %v1799 = vpop.f32.mrf.mxu0
      %v1800 = vadd.f32 0.0, %v1799
      %1801 = vmatmul.f32.gmra.mxu0 %v1680
      %v1802 = vpop.f32.mrf.mxu0
      %v1803 = vadd.f32 0.0, %v1802
      %1804 = vmatmul.f32.gmra.mxu0 %v1681
      %v1805 = vpop.f32.mrf.mxu0
      %v1806 = vadd.f32 0.0, %v1805
      %1807 = vmatmul.f32.gmra.mxu0 %v1682
      %v1808 = vpop.f32.mrf.mxu0
      %v1809 = vadd.f32 0.0, %v1808
      %1810 = vmatmul.f32.gmra.mxu0 %v1683
      %v1811 = vpop.f32.mrf.mxu0
      %v1812 = vadd.f32 0.0, %v1811
      %1813 = vdwg.mxu0
      %v1814 = vadd.f32 %v1619, %v1719
      %v1815 = vadd.f32 %v1620, %v1722
      %v1816 = vadd.f32 %v1621, %v1725
      %v1817 = vadd.f32 %v1622, %v1728
      %v1818 = vadd.f32 %v1623, %v1731
      %v1819 = vadd.f32 %v1624, %v1734
      %v1820 = vadd.f32 %v1625, %v1737
      %v1821 = vadd.f32 %v1626, %v1740
      %v1822 = vadd.f32 %v1627, %v1743
      %v1823 = vadd.f32 %v1628, %v1746
      %v1824 = vadd.f32 %v1629, %v1749
      %v1825 = vadd.f32 %v1630, %v1752
      %v1826 = vadd.f32 %v1631, %v1755
      %v1827 = vadd.f32 %v1632, %v1758
      %v1828 = vadd.f32 %v1633, %v1761
      %v1829 = vadd.f32 %v1634, %v1764
      %v1830 = vadd.f32 %v1635, %v1767
      %v1831 = vadd.f32 %v1636, %v1770
      %v1832 = vadd.f32 %v1637, %v1773
      %v1833 = vadd.f32 %v1638, %v1776
      %v1834 = vadd.f32 %v1639, %v1779
      %v1835 = vadd.f32 %v1640, %v1782
      %v1836 = vadd.f32 %v1641, %v1785
      %v1837 = vadd.f32 %v1642, %v1788
      %v1838 = vadd.f32 %v1643, %v1791
      %v1839 = vadd.f32 %v1644, %v1794
      %v1840 = vadd.f32 %v1645, %v1797
      %v1841 = vadd.f32 %v1646, %v1800
      %v1842 = vadd.f32 %v1647, %v1803
      %v1843 = vadd.f32 %v1648, %v1806
      %v1844 = vadd.f32 %v1649, %v1809
      %v1845 = vadd.f32 %v1650, %v1812
      %v1846 = vld [vmem:[%s1651 + $0x1] sm:$0xff]
      %v1847 = vld [vmem:[%s1651 + $0x9] sm:$0xff]
      %v1848 = vld [vmem:[%s1651 + $0x19] sm:$0xff]
      %v1849 = vld [vmem:[%s1651 + $0x21] sm:$0xff]
      %v1850 = vld [vmem:[%s1651 + $0x31] sm:$0xff]
      %v1851 = vld [vmem:[%s1651 + $0x39] sm:$0xff]
      %v1852 = vld [vmem:[%s1651 + $0x49] sm:$0xff]
      %v1853 = vld [vmem:[%s1651 + $0x51] sm:$0xff]
      %v1854 = vld [vmem:[%s1651 + $0x61] sm:$0xff]
      %v1855 = vld [vmem:[%s1651 + $0x69] sm:$0xff]
      %v1856 = vld [vmem:[%s1651 + $0x79] sm:$0xff]
      %v1857 = vld [vmem:[%s1651 + $0x81] sm:$0xff]
      %v1858 = vld [vmem:[%s1651 + $0x91] sm:$0xff]
      %v1859 = vld [vmem:[%s1651 + $0x99] sm:$0xff]
      %v1860 = vld [vmem:[%s1651 + $0xa9] sm:$0xff]
      %v1861 = vld [vmem:[%s1651 + $0xb1] sm:$0xff]
      %v1862 = vld [vmem:[%s1651 + $0xc1] sm:$0xff]
      %v1863 = vld [vmem:[%s1651 + $0xc9] sm:$0xff]
      %v1864 = vld [vmem:[%s1651 + $0xd9] sm:$0xff]
      %v1865 = vld [vmem:[%s1651 + $0xe1] sm:$0xff]
      %v1866 = vld [vmem:[%s1651 + $0xf1] sm:$0xff]
      %v1867 = vld [vmem:[%s1651 + $0xf9] sm:$0xff]
      %v1868 = vld [vmem:[%s1651 + $0x109] sm:$0xff]
      %v1869 = vld [vmem:[%s1651 + $0x111] sm:$0xff]
      %v1870 = vld [vmem:[%s1651 + $0x121] sm:$0xff]
      %v1871 = vld [vmem:[%s1651 + $0x129] sm:$0xff]
      %v1872 = vld [vmem:[%s1651 + $0x139] sm:$0xff]
      %v1873 = vld [vmem:[%s1651 + $0x141] sm:$0xff]
      %v1874 = vld [vmem:[%s1651 + $0x151] sm:$0xff]
      %v1875 = vld [vmem:[%s1651 + $0x159] sm:$0xff]
      %v1876 = vld [vmem:[%s1651 + $0x169] sm:$0xff]
      %v1877 = vld [vmem:[%s1651 + $0x171] sm:$0xff]
      %s1878 = scalar_lea.vmem %s4, 512
      %v1879 = vld [vmem:[%s1878] sm:$0xff]
      %v1880 = vld [vmem:[%s1878 + $0x8] sm:$0xff]
      %v1881 = vld [vmem:[%s1878 + $0x10] sm:$0xff]
      %v1882 = vld [vmem:[%s1878 + $0x18] sm:$0xff]
      %v1883 = vld [vmem:[%s1878 + $0x20] sm:$0xff]
      %v1884 = vld [vmem:[%s1878 + $0x28] sm:$0xff]
      %v1885 = vld [vmem:[%s1878 + $0x30] sm:$0xff]
      %v1886 = vld [vmem:[%s1878 + $0x38] sm:$0xff]
      %v1887 = vld [vmem:[%s1878 + $0x40] sm:$0xff]
      %v1888 = vld [vmem:[%s1878 + $0x48] sm:$0xff]
      %v1889 = vld [vmem:[%s1878 + $0x50] sm:$0xff]
      %v1890 = vld [vmem:[%s1878 + $0x58] sm:$0xff]
      %v1891 = vld [vmem:[%s1878 + $0x60] sm:$0xff]
      %v1892 = vld [vmem:[%s1878 + $0x68] sm:$0xff]
      %v1893 = vld [vmem:[%s1878 + $0x70] sm:$0xff]
      %v1894 = vld [vmem:[%s1878 + $0x78] sm:$0xff]
      %1895 = vmatpush.msra.mxu0 %v1894
      %1896 = vmatpush.msra.mxu0 %v1893
      %1897 = vmatpush.msra.mxu0 %v1892
      %1898 = vmatpush.msra.mxu0 %v1891
      %1899 = vmatpush.msra.mxu0 %v1890
      %1900 = vmatpush.msra.mxu0 %v1889
      %1901 = vmatpush.msra.mxu0 %v1888
      %1902 = vmatpush.msra.mxu0 %v1887
      %1903 = vmatpush.msra.mxu0 %v1886
      %1904 = vmatpush.msra.mxu0 %v1885
      %1905 = vmatpush.msra.mxu0 %v1884
      %1906 = vmatpush.msra.mxu0 %v1883
      %1907 = vmatpush.msra.mxu0 %v1882
      %1908 = vmatpush.msra.mxu0 %v1881
      %1909 = vmatpush.msra.mxu0 %v1880
      %1910 = vmatpush.msra.mxu0 %v1879
      %1911 = vmatmul.f32.gmra.mxu0 %v1846
      %v1912 = vpop.f32.mrf.mxu0
      %v1913 = vadd.f32 0.0, %v1912
      %1914 = vmatmul.f32.gmra.mxu0 %v1847
      %v1915 = vpop.f32.mrf.mxu0
      %v1916 = vadd.f32 0.0, %v1915
      %1917 = vmatmul.f32.gmra.mxu0 %v1848
      %v1918 = vpop.f32.mrf.mxu0
      %v1919 = vadd.f32 0.0, %v1918
      %1920 = vmatmul.f32.gmra.mxu0 %v1849
      %v1921 = vpop.f32.mrf.mxu0
      %v1922 = vadd.f32 0.0, %v1921
      %1923 = vmatmul.f32.gmra.mxu0 %v1850
      %v1924 = vpop.f32.mrf.mxu0
      %v1925 = vadd.f32 0.0, %v1924
      %1926 = vmatmul.f32.gmra.mxu0 %v1851
      %v1927 = vpop.f32.mrf.mxu0
      %v1928 = vadd.f32 0.0, %v1927
      %1929 = vmatmul.f32.gmra.mxu0 %v1852
      %v1930 = vpop.f32.mrf.mxu0
      %v1931 = vadd.f32 0.0, %v1930
      %1932 = vmatmul.f32.gmra.mxu0 %v1853
      %v1933 = vpop.f32.mrf.mxu0
      %v1934 = vadd.f32 0.0, %v1933
      %1935 = vmatmul.f32.gmra.mxu0 %v1854
      %v1936 = vpop.f32.mrf.mxu0
      %v1937 = vadd.f32 0.0, %v1936
      %1938 = vmatmul.f32.gmra.mxu0 %v1855
      %v1939 = vpop.f32.mrf.mxu0
      %v1940 = vadd.f32 0.0, %v1939
      %1941 = vmatmul.f32.gmra.mxu0 %v1856
      %v1942 = vpop.f32.mrf.mxu0
      %v1943 = vadd.f32 0.0, %v1942
      %1944 = vmatmul.f32.gmra.mxu0 %v1857
      %v1945 = vpop.f32.mrf.mxu0
      %v1946 = vadd.f32 0.0, %v1945
      %1947 = vmatmul.f32.gmra.mxu0 %v1858
      %v1948 = vpop.f32.mrf.mxu0
      %v1949 = vadd.f32 0.0, %v1948
      %1950 = vmatmul.f32.gmra.mxu0 %v1859
      %v1951 = vpop.f32.mrf.mxu0
      %v1952 = vadd.f32 0.0, %v1951
      %1953 = vmatmul.f32.gmra.mxu0 %v1860
      %v1954 = vpop.f32.mrf.mxu0
      %v1955 = vadd.f32 0.0, %v1954
      %1956 = vmatmul.f32.gmra.mxu0 %v1861
      %v1957 = vpop.f32.mrf.mxu0
      %v1958 = vadd.f32 0.0, %v1957
      %1959 = vmatmul.f32.gmra.mxu0 %v1862
      %v1960 = vpop.f32.mrf.mxu0
      %v1961 = vadd.f32 0.0, %v1960
      %1962 = vmatmul.f32.gmra.mxu0 %v1863
      %v1963 = vpop.f32.mrf.mxu0
      %v1964 = vadd.f32 0.0, %v1963
      %1965 = vmatmul.f32.gmra.mxu0 %v1864
      %v1966 = vpop.f32.mrf.mxu0
      %v1967 = vadd.f32 0.0, %v1966
      %1968 = vmatmul.f32.gmra.mxu0 %v1865
      %v1969 = vpop.f32.mrf.mxu0
      %v1970 = vadd.f32 0.0, %v1969
      %1971 = vmatmul.f32.gmra.mxu0 %v1866
      %v1972 = vpop.f32.mrf.mxu0
      %v1973 = vadd.f32 0.0, %v1972
      %1974 = vmatmul.f32.gmra.mxu0 %v1867
      %v1975 = vpop.f32.mrf.mxu0
      %v1976 = vadd.f32 0.0, %v1975
      %1977 = vmatmul.f32.gmra.mxu0 %v1868
      %v1978 = vpop.f32.mrf.mxu0
      %v1979 = vadd.f32 0.0, %v1978
      %1980 = vmatmul.f32.gmra.mxu0 %v1869
      %v1981 = vpop.f32.mrf.mxu0
      %v1982 = vadd.f32 0.0, %v1981
      %1983 = vmatmul.f32.gmra.mxu0 %v1870
      %v1984 = vpop.f32.mrf.mxu0
      %v1985 = vadd.f32 0.0, %v1984
      %1986 = vmatmul.f32.gmra.mxu0 %v1871
      %v1987 = vpop.f32.mrf.mxu0
      %v1988 = vadd.f32 0.0, %v1987
      %1989 = vmatmul.f32.gmra.mxu0 %v1872
      %v1990 = vpop.f32.mrf.mxu0
      %v1991 = vadd.f32 0.0, %v1990
      %1992 = vmatmul.f32.gmra.mxu0 %v1873
      %v1993 = vpop.f32.mrf.mxu0
      %v1994 = vadd.f32 0.0, %v1993
      %1995 = vmatmul.f32.gmra.mxu0 %v1874
      %v1996 = vpop.f32.mrf.mxu0
      %v1997 = vadd.f32 0.0, %v1996
      %1998 = vmatmul.f32.gmra.mxu0 %v1875
      %v1999 = vpop.f32.mrf.mxu0
      %v2000 = vadd.f32 0.0, %v1999
      %2001 = vmatmul.f32.gmra.mxu0 %v1876
      %v2002 = vpop.f32.mrf.mxu0
      %v2003 = vadd.f32 0.0, %v2002
      %2004 = vmatmul.f32.gmra.mxu0 %v1877
      %v2005 = vpop.f32.mrf.mxu0
      %v2006 = vadd.f32 0.0, %v2005
      %2007 = vdwg.mxu0
      %v2008 = vadd.f32 %v1814, %v1913
      %v2009 = vadd.f32 %v1815, %v1916
      %v2010 = vadd.f32 %v1816, %v1919
      %v2011 = vadd.f32 %v1817, %v1922
      %v2012 = vadd.f32 %v1818, %v1925
      %v2013 = vadd.f32 %v1819, %v1928
      %v2014 = vadd.f32 %v1820, %v1931
      %v2015 = vadd.f32 %v1821, %v1934
      %v2016 = vadd.f32 %v1822, %v1937
      %v2017 = vadd.f32 %v1823, %v1940
      %v2018 = vadd.f32 %v1824, %v1943
      %v2019 = vadd.f32 %v1825, %v1946
      %v2020 = vadd.f32 %v1826, %v1949
      %v2021 = vadd.f32 %v1827, %v1952
      %v2022 = vadd.f32 %v1828, %v1955
      %v2023 = vadd.f32 %v1829, %v1958
      %v2024 = vadd.f32 %v1830, %v1961
      %v2025 = vadd.f32 %v1831, %v1964
      %v2026 = vadd.f32 %v1832, %v1967
      %v2027 = vadd.f32 %v1833, %v1970
      %v2028 = vadd.f32 %v1834, %v1973
      %v2029 = vadd.f32 %v1835, %v1976
      %v2030 = vadd.f32 %v1836, %v1979
      %v2031 = vadd.f32 %v1837, %v1982
      %v2032 = vadd.f32 %v1838, %v1985
      %v2033 = vadd.f32 %v1839, %v1988
      %v2034 = vadd.f32 %v1840, %v1991
      %v2035 = vadd.f32 %v1841, %v1994
      %v2036 = vadd.f32 %v1842, %v1997
      %v2037 = vadd.f32 %v1843, %v2000
      %v2038 = vadd.f32 %v1844, %v2003
      %v2039 = vadd.f32 %v1845, %v2006
      %v2040 = vld [vmem:[%s1651 + $0x2] sm:$0xff]
      %v2041 = vld [vmem:[%s1651 + $0xa] sm:$0xff]
      %v2042 = vld [vmem:[%s1651 + $0x1a] sm:$0xff]
      %v2043 = vld [vmem:[%s1651 + $0x22] sm:$0xff]
      %v2044 = vld [vmem:[%s1651 + $0x32] sm:$0xff]
      %v2045 = vld [vmem:[%s1651 + $0x3a] sm:$0xff]
      %v2046 = vld [vmem:[%s1651 + $0x4a] sm:$0xff]
      %v2047 = vld [vmem:[%s1651 + $0x52] sm:$0xff]
      %v2048 = vld [vmem:[%s1651 + $0x62] sm:$0xff]
      %v2049 = vld [vmem:[%s1651 + $0x6a] sm:$0xff]
      %v2050 = vld [vmem:[%s1651 + $0x7a] sm:$0xff]
      %v2051 = vld [vmem:[%s1651 + $0x82] sm:$0xff]
      %v2052 = vld [vmem:[%s1651 + $0x92] sm:$0xff]
      %v2053 = vld [vmem:[%s1651 + $0x9a] sm:$0xff]
      %v2054 = vld [vmem:[%s1651 + $0xaa] sm:$0xff]
      %v2055 = vld [vmem:[%s1651 + $0xb2] sm:$0xff]
      %v2056 = vld [vmem:[%s1651 + $0xc2] sm:$0xff]
      %v2057 = vld [vmem:[%s1651 + $0xca] sm:$0xff]
      %v2058 = vld [vmem:[%s1651 + $0xda] sm:$0xff]
      %v2059 = vld [vmem:[%s1651 + $0xe2] sm:$0xff]
      %v2060 = vld [vmem:[%s1651 + $0xf2] sm:$0xff]
      %v2061 = vld [vmem:[%s1651 + $0xfa] sm:$0xff]
      %v2062 = vld [vmem:[%s1651 + $0x10a] sm:$0xff]
      %v2063 = vld [vmem:[%s1651 + $0x112] sm:$0xff]
      %v2064 = vld [vmem:[%s1651 + $0x122] sm:$0xff]
      %v2065 = vld [vmem:[%s1651 + $0x12a] sm:$0xff]
      %v2066 = vld [vmem:[%s1651 + $0x13a] sm:$0xff]
      %v2067 = vld [vmem:[%s1651 + $0x142] sm:$0xff]
      %v2068 = vld [vmem:[%s1651 + $0x152] sm:$0xff]
      %v2069 = vld [vmem:[%s1651 + $0x15a] sm:$0xff]
      %v2070 = vld [vmem:[%s1651 + $0x16a] sm:$0xff]
      %v2071 = vld [vmem:[%s1651 + $0x172] sm:$0xff]
      %s2072 = scalar_lea.vmem %s4, 640
      %v2073 = vld [vmem:[%s2072] sm:$0xff]
      %v2074 = vld [vmem:[%s2072 + $0x8] sm:$0xff]
      %v2075 = vld [vmem:[%s2072 + $0x10] sm:$0xff]
      %v2076 = vld [vmem:[%s2072 + $0x18] sm:$0xff]
      %v2077 = vld [vmem:[%s2072 + $0x20] sm:$0xff]
      %v2078 = vld [vmem:[%s2072 + $0x28] sm:$0xff]
      %v2079 = vld [vmem:[%s2072 + $0x30] sm:$0xff]
      %v2080 = vld [vmem:[%s2072 + $0x38] sm:$0xff]
      %v2081 = vld [vmem:[%s2072 + $0x40] sm:$0xff]
      %v2082 = vld [vmem:[%s2072 + $0x48] sm:$0xff]
      %v2083 = vld [vmem:[%s2072 + $0x50] sm:$0xff]
      %v2084 = vld [vmem:[%s2072 + $0x58] sm:$0xff]
      %v2085 = vld [vmem:[%s2072 + $0x60] sm:$0xff]
      %v2086 = vld [vmem:[%s2072 + $0x68] sm:$0xff]
      %v2087 = vld [vmem:[%s2072 + $0x70] sm:$0xff]
      %v2088 = vld [vmem:[%s2072 + $0x78] sm:$0xff]
      %2089 = vmatpush.msra.mxu0 %v2088
      %2090 = vmatpush.msra.mxu0 %v2087
      %2091 = vmatpush.msra.mxu0 %v2086
      %2092 = vmatpush.msra.mxu0 %v2085
      %2093 = vmatpush.msra.mxu0 %v2084
      %2094 = vmatpush.msra.mxu0 %v2083
      %2095 = vmatpush.msra.mxu0 %v2082
      %2096 = vmatpush.msra.mxu0 %v2081
      %2097 = vmatpush.msra.mxu0 %v2080
      %2098 = vmatpush.msra.mxu0 %v2079
      %2099 = vmatpush.msra.mxu0 %v2078
      %2100 = vmatpush.msra.mxu0 %v2077
      %2101 = vmatpush.msra.mxu0 %v2076
      %2102 = vmatpush.msra.mxu0 %v2075
      %2103 = vmatpush.msra.mxu0 %v2074
      %2104 = vmatpush.msra.mxu0 %v2073
      %2105 = vmatmul.f32.gmra.mxu0 %v2040
      %v2106 = vpop.f32.mrf.mxu0
      %v2107 = vadd.f32 0.0, %v2106
      %2108 = vmatmul.f32.gmra.mxu0 %v2041
      %v2109 = vpop.f32.mrf.mxu0
      %v2110 = vadd.f32 0.0, %v2109
      %2111 = vmatmul.f32.gmra.mxu0 %v2042
      %v2112 = vpop.f32.mrf.mxu0
      %v2113 = vadd.f32 0.0, %v2112
      %2114 = vmatmul.f32.gmra.mxu0 %v2043
      %v2115 = vpop.f32.mrf.mxu0
      %v2116 = vadd.f32 0.0, %v2115
      %2117 = vmatmul.f32.gmra.mxu0 %v2044
      %v2118 = vpop.f32.mrf.mxu0
      %v2119 = vadd.f32 0.0, %v2118
      %2120 = vmatmul.f32.gmra.mxu0 %v2045
      %v2121 = vpop.f32.mrf.mxu0
      %v2122 = vadd.f32 0.0, %v2121
      %2123 = vmatmul.f32.gmra.mxu0 %v2046
      %v2124 = vpop.f32.mrf.mxu0
      %v2125 = vadd.f32 0.0, %v2124
      %2126 = vmatmul.f32.gmra.mxu0 %v2047
      %v2127 = vpop.f32.mrf.mxu0
      %v2128 = vadd.f32 0.0, %v2127
      %2129 = vmatmul.f32.gmra.mxu0 %v2048
      %v2130 = vpop.f32.mrf.mxu0
      %v2131 = vadd.f32 0.0, %v2130
      %2132 = vmatmul.f32.gmra.mxu0 %v2049
      %v2133 = vpop.f32.mrf.mxu0
      %v2134 = vadd.f32 0.0, %v2133
      %2135 = vmatmul.f32.gmra.mxu0 %v2050
      %v2136 = vpop.f32.mrf.mxu0
      %v2137 = vadd.f32 0.0, %v2136
      %2138 = vmatmul.f32.gmra.mxu0 %v2051
      %v2139 = vpop.f32.mrf.mxu0
      %v2140 = vadd.f32 0.0, %v2139
      %2141 = vmatmul.f32.gmra.mxu0 %v2052
      %v2142 = vpop.f32.mrf.mxu0
      %v2143 = vadd.f32 0.0, %v2142
      %2144 = vmatmul.f32.gmra.mxu0 %v2053
      %v2145 = vpop.f32.mrf.mxu0
      %v2146 = vadd.f32 0.0, %v2145
      %2147 = vmatmul.f32.gmra.mxu0 %v2054
      %v2148 = vpop.f32.mrf.mxu0
      %v2149 = vadd.f32 0.0, %v2148
      %2150 = vmatmul.f32.gmra.mxu0 %v2055
      %v2151 = vpop.f32.mrf.mxu0
      %v2152 = vadd.f32 0.0, %v2151
      %2153 = vmatmul.f32.gmra.mxu0 %v2056
      %v2154 = vpop.f32.mrf.mxu0
      %v2155 = vadd.f32 0.0, %v2154
      %2156 = vmatmul.f32.gmra.mxu0 %v2057
      %v2157 = vpop.f32.mrf.mxu0
      %v2158 = vadd.f32 0.0, %v2157
      %2159 = vmatmul.f32.gmra.mxu0 %v2058
      %v2160 = vpop.f32.mrf.mxu0
      %v2161 = vadd.f32 0.0, %v2160
      %2162 = vmatmul.f32.gmra.mxu0 %v2059
      %v2163 = vpop.f32.mrf.mxu0
      %v2164 = vadd.f32 0.0, %v2163
      %2165 = vmatmul.f32.gmra.mxu0 %v2060
      %v2166 = vpop.f32.mrf.mxu0
      %v2167 = vadd.f32 0.0, %v2166
      %2168 = vmatmul.f32.gmra.mxu0 %v2061
      %v2169 = vpop.f32.mrf.mxu0
      %v2170 = vadd.f32 0.0, %v2169
      %2171 = vmatmul.f32.gmra.mxu0 %v2062
      %v2172 = vpop.f32.mrf.mxu0
      %v2173 = vadd.f32 0.0, %v2172
      %2174 = vmatmul.f32.gmra.mxu0 %v2063
      %v2175 = vpop.f32.mrf.mxu0
      %v2176 = vadd.f32 0.0, %v2175
      %2177 = vmatmul.f32.gmra.mxu0 %v2064
      %v2178 = vpop.f32.mrf.mxu0
      %v2179 = vadd.f32 0.0, %v2178
      %2180 = vmatmul.f32.gmra.mxu0 %v2065
      %v2181 = vpop.f32.mrf.mxu0
      %v2182 = vadd.f32 0.0, %v2181
      %2183 = vmatmul.f32.gmra.mxu0 %v2066
      %v2184 = vpop.f32.mrf.mxu0
      %v2185 = vadd.f32 0.0, %v2184
      %2186 = vmatmul.f32.gmra.mxu0 %v2067
      %v2187 = vpop.f32.mrf.mxu0
      %v2188 = vadd.f32 0.0, %v2187
      %2189 = vmatmul.f32.gmra.mxu0 %v2068
      %v2190 = vpop.f32.mrf.mxu0
      %v2191 = vadd.f32 0.0, %v2190
      %2192 = vmatmul.f32.gmra.mxu0 %v2069
      %v2193 = vpop.f32.mrf.mxu0
      %v2194 = vadd.f32 0.0, %v2193
      %2195 = vmatmul.f32.gmra.mxu0 %v2070
      %v2196 = vpop.f32.mrf.mxu0
      %v2197 = vadd.f32 0.0, %v2196
      %2198 = vmatmul.f32.gmra.mxu0 %v2071
      %v2199 = vpop.f32.mrf.mxu0
      %v2200 = vadd.f32 0.0, %v2199
      %2201 = vdwg.mxu0
      %v2202 = vadd.f32 %v2008, %v2107
      %v2203 = vadd.f32 %v2009, %v2110
      %v2204 = vadd.f32 %v2010, %v2113
      %v2205 = vadd.f32 %v2011, %v2116
      %v2206 = vadd.f32 %v2012, %v2119
      %v2207 = vadd.f32 %v2013, %v2122
      %v2208 = vadd.f32 %v2014, %v2125
      %v2209 = vadd.f32 %v2015, %v2128
      %v2210 = vadd.f32 %v2016, %v2131
      %v2211 = vadd.f32 %v2017, %v2134
      %v2212 = vadd.f32 %v2018, %v2137
      %v2213 = vadd.f32 %v2019, %v2140
      %v2214 = vadd.f32 %v2020, %v2143
      %v2215 = vadd.f32 %v2021, %v2146
      %v2216 = vadd.f32 %v2022, %v2149
      %v2217 = vadd.f32 %v2023, %v2152
      %v2218 = vadd.f32 %v2024, %v2155
      %v2219 = vadd.f32 %v2025, %v2158
      %v2220 = vadd.f32 %v2026, %v2161
      %v2221 = vadd.f32 %v2027, %v2164
      %v2222 = vadd.f32 %v2028, %v2167
      %v2223 = vadd.f32 %v2029, %v2170
      %v2224 = vadd.f32 %v2030, %v2173
      %v2225 = vadd.f32 %v2031, %v2176
      %v2226 = vadd.f32 %v2032, %v2179
      %v2227 = vadd.f32 %v2033, %v2182
      %v2228 = vadd.f32 %v2034, %v2185
      %v2229 = vadd.f32 %v2035, %v2188
      %v2230 = vadd.f32 %v2036, %v2191
      %v2231 = vadd.f32 %v2037, %v2194
      %v2232 = vadd.f32 %v2038, %v2197
      %v2233 = vadd.f32 %v2039, %v2200
      %s2234 = scalar_lea.vmem [#allocation3], 48
      %v2235 = vld [vmem:[%s2234] sm:$0xff]
      %v2236 = vld [vmem:[%s2234 + $0x8] sm:$0xff]
      %v2237 = vld [vmem:[%s2234 + $0x18] sm:$0xff]
      %v2238 = vld [vmem:[%s2234 + $0x20] sm:$0xff]
      %v2239 = vld [vmem:[%s2234 + $0x30] sm:$0xff]
      %v2240 = vld [vmem:[%s2234 + $0x38] sm:$0xff]
      %v2241 = vld [vmem:[%s2234 + $0x48] sm:$0xff]
      %v2242 = vld [vmem:[%s2234 + $0x50] sm:$0xff]
      %v2243 = vld [vmem:[%s2234 + $0x60] sm:$0xff]
      %v2244 = vld [vmem:[%s2234 + $0x68] sm:$0xff]
      %v2245 = vld [vmem:[%s2234 + $0x78] sm:$0xff]
      %v2246 = vld [vmem:[%s2234 + $0x80] sm:$0xff]
      %v2247 = vld [vmem:[%s2234 + $0x90] sm:$0xff]
      %v2248 = vld [vmem:[%s2234 + $0x98] sm:$0xff]
      %v2249 = vld [vmem:[%s2234 + $0xa8] sm:$0xff]
      %v2250 = vld [vmem:[%s2234 + $0xb0] sm:$0xff]
      %v2251 = vld [vmem:[%s2234 + $0xc0] sm:$0xff]
      %v2252 = vld [vmem:[%s2234 + $0xc8] sm:$0xff]
      %v2253 = vld [vmem:[%s2234 + $0xd8] sm:$0xff]
      %v2254 = vld [vmem:[%s2234 + $0xe0] sm:$0xff]
      %v2255 = vld [vmem:[%s2234 + $0xf0] sm:$0xff]
      %v2256 = vld [vmem:[%s2234 + $0xf8] sm:$0xff]
      %v2257 = vld [vmem:[%s2234 + $0x108] sm:$0xff]
      %v2258 = vld [vmem:[%s2234 + $0x110] sm:$0xff]
      %v2259 = vld [vmem:[%s2234 + $0x120] sm:$0xff]
      %v2260 = vld [vmem:[%s2234 + $0x128] sm:$0xff]
      %v2261 = vld [vmem:[%s2234 + $0x138] sm:$0xff]
      %v2262 = vld [vmem:[%s2234 + $0x140] sm:$0xff]
      %v2263 = vld [vmem:[%s2234 + $0x150] sm:$0xff]
      %v2264 = vld [vmem:[%s2234 + $0x158] sm:$0xff]
      %v2265 = vld [vmem:[%s2234 + $0x168] sm:$0xff]
      %v2266 = vld [vmem:[%s2234 + $0x170] sm:$0xff]
      %s2267 = scalar_lea.vmem %s4, 768
      %v2268 = vld [vmem:[%s2267] sm:$0xff]
      %v2269 = vld [vmem:[%s2267 + $0x8] sm:$0xff]
      %v2270 = vld [vmem:[%s2267 + $0x10] sm:$0xff]
      %v2271 = vld [vmem:[%s2267 + $0x18] sm:$0xff]
      %v2272 = vld [vmem:[%s2267 + $0x20] sm:$0xff]
      %v2273 = vld [vmem:[%s2267 + $0x28] sm:$0xff]
      %v2274 = vld [vmem:[%s2267 + $0x30] sm:$0xff]
      %v2275 = vld [vmem:[%s2267 + $0x38] sm:$0xff]
      %v2276 = vld [vmem:[%s2267 + $0x40] sm:$0xff]
      %v2277 = vld [vmem:[%s2267 + $0x48] sm:$0xff]
      %v2278 = vld [vmem:[%s2267 + $0x50] sm:$0xff]
      %v2279 = vld [vmem:[%s2267 + $0x58] sm:$0xff]
      %v2280 = vld [vmem:[%s2267 + $0x60] sm:$0xff]
      %v2281 = vld [vmem:[%s2267 + $0x68] sm:$0xff]
      %v2282 = vld [vmem:[%s2267 + $0x70] sm:$0xff]
      %v2283 = vld [vmem:[%s2267 + $0x78] sm:$0xff]
      %2284 = vmatpush.msra.mxu0 %v2283
      %2285 = vmatpush.msra.mxu0 %v2282
      %2286 = vmatpush.msra.mxu0 %v2281
      %2287 = vmatpush.msra.mxu0 %v2280
      %2288 = vmatpush.msra.mxu0 %v2279
      %2289 = vmatpush.msra.mxu0 %v2278
      %2290 = vmatpush.msra.mxu0 %v2277
      %2291 = vmatpush.msra.mxu0 %v2276
      %2292 = vmatpush.msra.mxu0 %v2275
      %2293 = vmatpush.msra.mxu0 %v2274
      %2294 = vmatpush.msra.mxu0 %v2273
      %2295 = vmatpush.msra.mxu0 %v2272
      %2296 = vmatpush.msra.mxu0 %v2271
      %2297 = vmatpush.msra.mxu0 %v2270
      %2298 = vmatpush.msra.mxu0 %v2269
      %2299 = vmatpush.msra.mxu0 %v2268
      %2300 = vmatmul.f32.gmra.mxu0 %v2235
      %v2301 = vpop.f32.mrf.mxu0
      %v2302 = vadd.f32 0.0, %v2301
      %2303 = vmatmul.f32.gmra.mxu0 %v2236
      %v2304 = vpop.f32.mrf.mxu0
      %v2305 = vadd.f32 0.0, %v2304
      %2306 = vmatmul.f32.gmra.mxu0 %v2237
      %v2307 = vpop.f32.mrf.mxu0
      %v2308 = vadd.f32 0.0, %v2307
      %2309 = vmatmul.f32.gmra.mxu0 %v2238
      %v2310 = vpop.f32.mrf.mxu0
      %v2311 = vadd.f32 0.0, %v2310
      %2312 = vmatmul.f32.gmra.mxu0 %v2239
      %v2313 = vpop.f32.mrf.mxu0
      %v2314 = vadd.f32 0.0, %v2313
      %2315 = vmatmul.f32.gmra.mxu0 %v2240
      %v2316 = vpop.f32.mrf.mxu0
      %v2317 = vadd.f32 0.0, %v2316
      %2318 = vmatmul.f32.gmra.mxu0 %v2241
      %v2319 = vpop.f32.mrf.mxu0
      %v2320 = vadd.f32 0.0, %v2319
      %2321 = vmatmul.f32.gmra.mxu0 %v2242
      %v2322 = vpop.f32.mrf.mxu0
      %v2323 = vadd.f32 0.0, %v2322
      %2324 = vmatmul.f32.gmra.mxu0 %v2243
      %v2325 = vpop.f32.mrf.mxu0
      %v2326 = vadd.f32 0.0, %v2325
      %2327 = vmatmul.f32.gmra.mxu0 %v2244
      %v2328 = vpop.f32.mrf.mxu0
      %v2329 = vadd.f32 0.0, %v2328
      %2330 = vmatmul.f32.gmra.mxu0 %v2245
      %v2331 = vpop.f32.mrf.mxu0
      %v2332 = vadd.f32 0.0, %v2331
      %2333 = vmatmul.f32.gmra.mxu0 %v2246
      %v2334 = vpop.f32.mrf.mxu0
      %v2335 = vadd.f32 0.0, %v2334
      %2336 = vmatmul.f32.gmra.mxu0 %v2247
      %v2337 = vpop.f32.mrf.mxu0
      %v2338 = vadd.f32 0.0, %v2337
      %2339 = vmatmul.f32.gmra.mxu0 %v2248
      %v2340 = vpop.f32.mrf.mxu0
      %v2341 = vadd.f32 0.0, %v2340
      %2342 = vmatmul.f32.gmra.mxu0 %v2249
      %v2343 = vpop.f32.mrf.mxu0
      %v2344 = vadd.f32 0.0, %v2343
      %2345 = vmatmul.f32.gmra.mxu0 %v2250
      %v2346 = vpop.f32.mrf.mxu0
      %v2347 = vadd.f32 0.0, %v2346
      %2348 = vmatmul.f32.gmra.mxu0 %v2251
      %v2349 = vpop.f32.mrf.mxu0
      %v2350 = vadd.f32 0.0, %v2349
      %2351 = vmatmul.f32.gmra.mxu0 %v2252
      %v2352 = vpop.f32.mrf.mxu0
      %v2353 = vadd.f32 0.0, %v2352
      %2354 = vmatmul.f32.gmra.mxu0 %v2253
      %v2355 = vpop.f32.mrf.mxu0
      %v2356 = vadd.f32 0.0, %v2355
      %2357 = vmatmul.f32.gmra.mxu0 %v2254
      %v2358 = vpop.f32.mrf.mxu0
      %v2359 = vadd.f32 0.0, %v2358
      %2360 = vmatmul.f32.gmra.mxu0 %v2255
      %v2361 = vpop.f32.mrf.mxu0
      %v2362 = vadd.f32 0.0, %v2361
      %2363 = vmatmul.f32.gmra.mxu0 %v2256
      %v2364 = vpop.f32.mrf.mxu0
      %v2365 = vadd.f32 0.0, %v2364
      %2366 = vmatmul.f32.gmra.mxu0 %v2257
      %v2367 = vpop.f32.mrf.mxu0
      %v2368 = vadd.f32 0.0, %v2367
      %2369 = vmatmul.f32.gmra.mxu0 %v2258
      %v2370 = vpop.f32.mrf.mxu0
      %v2371 = vadd.f32 0.0, %v2370
      %2372 = vmatmul.f32.gmra.mxu0 %v2259
      %v2373 = vpop.f32.mrf.mxu0
      %v2374 = vadd.f32 0.0, %v2373
      %2375 = vmatmul.f32.gmra.mxu0 %v2260
      %v2376 = vpop.f32.mrf.mxu0
      %v2377 = vadd.f32 0.0, %v2376
      %2378 = vmatmul.f32.gmra.mxu0 %v2261
      %v2379 = vpop.f32.mrf.mxu0
      %v2380 = vadd.f32 0.0, %v2379
      %2381 = vmatmul.f32.gmra.mxu0 %v2262
      %v2382 = vpop.f32.mrf.mxu0
      %v2383 = vadd.f32 0.0, %v2382
      %2384 = vmatmul.f32.gmra.mxu0 %v2263
      %v2385 = vpop.f32.mrf.mxu0
      %v2386 = vadd.f32 0.0, %v2385
      %2387 = vmatmul.f32.gmra.mxu0 %v2264
      %v2388 = vpop.f32.mrf.mxu0
      %v2389 = vadd.f32 0.0, %v2388
      %2390 = vmatmul.f32.gmra.mxu0 %v2265
      %v2391 = vpop.f32.mrf.mxu0
      %v2392 = vadd.f32 0.0, %v2391
      %2393 = vmatmul.f32.gmra.mxu0 %v2266
      %v2394 = vpop.f32.mrf.mxu0
      %v2395 = vadd.f32 0.0, %v2394
      %2396 = vdwg.mxu0
      %v2397 = vadd.f32 %v2202, %v2302
      %v2398 = vadd.f32 %v2203, %v2305
      %v2399 = vadd.f32 %v2204, %v2308
      %v2400 = vadd.f32 %v2205, %v2311
      %v2401 = vadd.f32 %v2206, %v2314
      %v2402 = vadd.f32 %v2207, %v2317
      %v2403 = vadd.f32 %v2208, %v2320
      %v2404 = vadd.f32 %v2209, %v2323
      %v2405 = vadd.f32 %v2210, %v2326
      %v2406 = vadd.f32 %v2211, %v2329
      %v2407 = vadd.f32 %v2212, %v2332
      %v2408 = vadd.f32 %v2213, %v2335
      %v2409 = vadd.f32 %v2214, %v2338
      %v2410 = vadd.f32 %v2215, %v2341
      %v2411 = vadd.f32 %v2216, %v2344
      %v2412 = vadd.f32 %v2217, %v2347
      %v2413 = vadd.f32 %v2218, %v2350
      %v2414 = vadd.f32 %v2219, %v2353
      %v2415 = vadd.f32 %v2220, %v2356
      %v2416 = vadd.f32 %v2221, %v2359
      %v2417 = vadd.f32 %v2222, %v2362
      %v2418 = vadd.f32 %v2223, %v2365
      %v2419 = vadd.f32 %v2224, %v2368
      %v2420 = vadd.f32 %v2225, %v2371
      %v2421 = vadd.f32 %v2226, %v2374
      %v2422 = vadd.f32 %v2227, %v2377
      %v2423 = vadd.f32 %v2228, %v2380
      %v2424 = vadd.f32 %v2229, %v2383
      %v2425 = vadd.f32 %v2230, %v2386
      %v2426 = vadd.f32 %v2231, %v2389
      %v2427 = vadd.f32 %v2232, %v2392
      %v2428 = vadd.f32 %v2233, %v2395
      %v2429 = vld [vmem:[%s2234 + $0x1] sm:$0xff]
      %v2430 = vld [vmem:[%s2234 + $0x9] sm:$0xff]
      %v2431 = vld [vmem:[%s2234 + $0x19] sm:$0xff]
      %v2432 = vld [vmem:[%s2234 + $0x21] sm:$0xff]
      %v2433 = vld [vmem:[%s2234 + $0x31] sm:$0xff]
      %v2434 = vld [vmem:[%s2234 + $0x39] sm:$0xff]
      %v2435 = vld [vmem:[%s2234 + $0x49] sm:$0xff]
      %v2436 = vld [vmem:[%s2234 + $0x51] sm:$0xff]
      %v2437 = vld [vmem:[%s2234 + $0x61] sm:$0xff]
      %v2438 = vld [vmem:[%s2234 + $0x69] sm:$0xff]
      %v2439 = vld [vmem:[%s2234 + $0x79] sm:$0xff]
      %v2440 = vld [vmem:[%s2234 + $0x81] sm:$0xff]
      %v2441 = vld [vmem:[%s2234 + $0x91] sm:$0xff]
      %v2442 = vld [vmem:[%s2234 + $0x99] sm:$0xff]
      %v2443 = vld [vmem:[%s2234 + $0xa9] sm:$0xff]
      %v2444 = vld [vmem:[%s2234 + $0xb1] sm:$0xff]
      %v2445 = vld [vmem:[%s2234 + $0xc1] sm:$0xff]
      %v2446 = vld [vmem:[%s2234 + $0xc9] sm:$0xff]
      %v2447 = vld [vmem:[%s2234 + $0xd9] sm:$0xff]
      %v2448 = vld [vmem:[%s2234 + $0xe1] sm:$0xff]
      %v2449 = vld [vmem:[%s2234 + $0xf1] sm:$0xff]
      %v2450 = vld [vmem:[%s2234 + $0xf9] sm:$0xff]
      %v2451 = vld [vmem:[%s2234 + $0x109] sm:$0xff]
      %v2452 = vld [vmem:[%s2234 + $0x111] sm:$0xff]
      %v2453 = vld [vmem:[%s2234 + $0x121] sm:$0xff]
      %v2454 = vld [vmem:[%s2234 + $0x129] sm:$0xff]
      %v2455 = vld [vmem:[%s2234 + $0x139] sm:$0xff]
      %v2456 = vld [vmem:[%s2234 + $0x141] sm:$0xff]
      %v2457 = vld [vmem:[%s2234 + $0x151] sm:$0xff]
      %v2458 = vld [vmem:[%s2234 + $0x159] sm:$0xff]
      %v2459 = vld [vmem:[%s2234 + $0x169] sm:$0xff]
      %v2460 = vld [vmem:[%s2234 + $0x171] sm:$0xff]
      %s2461 = scalar_lea.vmem %s4, 896
      %v2462 = vld [vmem:[%s2461] sm:$0xff]
      %v2463 = vld [vmem:[%s2461 + $0x8] sm:$0xff]
      %v2464 = vld [vmem:[%s2461 + $0x10] sm:$0xff]
      %v2465 = vld [vmem:[%s2461 + $0x18] sm:$0xff]
      %v2466 = vld [vmem:[%s2461 + $0x20] sm:$0xff]
      %v2467 = vld [vmem:[%s2461 + $0x28] sm:$0xff]
      %v2468 = vld [vmem:[%s2461 + $0x30] sm:$0xff]
      %v2469 = vld [vmem:[%s2461 + $0x38] sm:$0xff]
      %v2470 = vld [vmem:[%s2461 + $0x40] sm:$0xff]
      %v2471 = vld [vmem:[%s2461 + $0x48] sm:$0xff]
      %v2472 = vld [vmem:[%s2461 + $0x50] sm:$0xff]
      %v2473 = vld [vmem:[%s2461 + $0x58] sm:$0xff]
      %v2474 = vld [vmem:[%s2461 + $0x60] sm:$0xff]
      %v2475 = vld [vmem:[%s2461 + $0x68] sm:$0xff]
      %v2476 = vld [vmem:[%s2461 + $0x70] sm:$0xff]
      %v2477 = vld [vmem:[%s2461 + $0x78] sm:$0xff]
      %2478 = vmatpush.msra.mxu0 %v2477
      %2479 = vmatpush.msra.mxu0 %v2476
      %2480 = vmatpush.msra.mxu0 %v2475
      %2481 = vmatpush.msra.mxu0 %v2474
      %2482 = vmatpush.msra.mxu0 %v2473
      %2483 = vmatpush.msra.mxu0 %v2472
      %2484 = vmatpush.msra.mxu0 %v2471
      %2485 = vmatpush.msra.mxu0 %v2470
      %2486 = vmatpush.msra.mxu0 %v2469
      %2487 = vmatpush.msra.mxu0 %v2468
      %2488 = vmatpush.msra.mxu0 %v2467
      %2489 = vmatpush.msra.mxu0 %v2466
      %2490 = vmatpush.msra.mxu0 %v2465
      %2491 = vmatpush.msra.mxu0 %v2464
      %2492 = vmatpush.msra.mxu0 %v2463
      %2493 = vmatpush.msra.mxu0 %v2462
      %2494 = vmatmul.f32.gmra.mxu0 %v2429
      %v2495 = vpop.f32.mrf.mxu0
      %v2496 = vadd.f32 0.0, %v2495
      %2497 = vmatmul.f32.gmra.mxu0 %v2430
      %v2498 = vpop.f32.mrf.mxu0
      %v2499 = vadd.f32 0.0, %v2498
      %2500 = vmatmul.f32.gmra.mxu0 %v2431
      %v2501 = vpop.f32.mrf.mxu0
      %v2502 = vadd.f32 0.0, %v2501
      %2503 = vmatmul.f32.gmra.mxu0 %v2432
      %v2504 = vpop.f32.mrf.mxu0
      %v2505 = vadd.f32 0.0, %v2504
      %2506 = vmatmul.f32.gmra.mxu0 %v2433
      %v2507 = vpop.f32.mrf.mxu0
      %v2508 = vadd.f32 0.0, %v2507
      %2509 = vmatmul.f32.gmra.mxu0 %v2434
      %v2510 = vpop.f32.mrf.mxu0
      %v2511 = vadd.f32 0.0, %v2510
      %2512 = vmatmul.f32.gmra.mxu0 %v2435
      %v2513 = vpop.f32.mrf.mxu0
      %v2514 = vadd.f32 0.0, %v2513
      %2515 = vmatmul.f32.gmra.mxu0 %v2436
      %v2516 = vpop.f32.mrf.mxu0
      %v2517 = vadd.f32 0.0, %v2516
      %2518 = vmatmul.f32.gmra.mxu0 %v2437
      %v2519 = vpop.f32.mrf.mxu0
      %v2520 = vadd.f32 0.0, %v2519
      %2521 = vmatmul.f32.gmra.mxu0 %v2438
      %v2522 = vpop.f32.mrf.mxu0
      %v2523 = vadd.f32 0.0, %v2522
      %2524 = vmatmul.f32.gmra.mxu0 %v2439
      %v2525 = vpop.f32.mrf.mxu0
      %v2526 = vadd.f32 0.0, %v2525
      %2527 = vmatmul.f32.gmra.mxu0 %v2440
      %v2528 = vpop.f32.mrf.mxu0
      %v2529 = vadd.f32 0.0, %v2528
      %2530 = vmatmul.f32.gmra.mxu0 %v2441
      %v2531 = vpop.f32.mrf.mxu0
      %v2532 = vadd.f32 0.0, %v2531
      %2533 = vmatmul.f32.gmra.mxu0 %v2442
      %v2534 = vpop.f32.mrf.mxu0
      %v2535 = vadd.f32 0.0, %v2534
      %2536 = vmatmul.f32.gmra.mxu0 %v2443
      %v2537 = vpop.f32.mrf.mxu0
      %v2538 = vadd.f32 0.0, %v2537
      %2539 = vmatmul.f32.gmra.mxu0 %v2444
      %v2540 = vpop.f32.mrf.mxu0
      %v2541 = vadd.f32 0.0, %v2540
      %2542 = vmatmul.f32.gmra.mxu0 %v2445
      %v2543 = vpop.f32.mrf.mxu0
      %v2544 = vadd.f32 0.0, %v2543
      %2545 = vmatmul.f32.gmra.mxu0 %v2446
      %v2546 = vpop.f32.mrf.mxu0
      %v2547 = vadd.f32 0.0, %v2546
      %2548 = vmatmul.f32.gmra.mxu0 %v2447
      %v2549 = vpop.f32.mrf.mxu0
      %v2550 = vadd.f32 0.0, %v2549
      %2551 = vmatmul.f32.gmra.mxu0 %v2448
      %v2552 = vpop.f32.mrf.mxu0
      %v2553 = vadd.f32 0.0, %v2552
      %2554 = vmatmul.f32.gmra.mxu0 %v2449
      %v2555 = vpop.f32.mrf.mxu0
      %v2556 = vadd.f32 0.0, %v2555
      %2557 = vmatmul.f32.gmra.mxu0 %v2450
      %v2558 = vpop.f32.mrf.mxu0
      %v2559 = vadd.f32 0.0, %v2558
      %2560 = vmatmul.f32.gmra.mxu0 %v2451
      %v2561 = vpop.f32.mrf.mxu0
      %v2562 = vadd.f32 0.0, %v2561
      %2563 = vmatmul.f32.gmra.mxu0 %v2452
      %v2564 = vpop.f32.mrf.mxu0
      %v2565 = vadd.f32 0.0, %v2564
      %2566 = vmatmul.f32.gmra.mxu0 %v2453
      %v2567 = vpop.f32.mrf.mxu0
      %v2568 = vadd.f32 0.0, %v2567
      %2569 = vmatmul.f32.gmra.mxu0 %v2454
      %v2570 = vpop.f32.mrf.mxu0
      %v2571 = vadd.f32 0.0, %v2570
      %2572 = vmatmul.f32.gmra.mxu0 %v2455
      %v2573 = vpop.f32.mrf.mxu0
      %v2574 = vadd.f32 0.0, %v2573
      %2575 = vmatmul.f32.gmra.mxu0 %v2456
      %v2576 = vpop.f32.mrf.mxu0
      %v2577 = vadd.f32 0.0, %v2576
      %2578 = vmatmul.f32.gmra.mxu0 %v2457
      %v2579 = vpop.f32.mrf.mxu0
      %v2580 = vadd.f32 0.0, %v2579
      %2581 = vmatmul.f32.gmra.mxu0 %v2458
      %v2582 = vpop.f32.mrf.mxu0
      %v2583 = vadd.f32 0.0, %v2582
      %2584 = vmatmul.f32.gmra.mxu0 %v2459
      %v2585 = vpop.f32.mrf.mxu0
      %v2586 = vadd.f32 0.0, %v2585
      %2587 = vmatmul.f32.gmra.mxu0 %v2460
      %v2588 = vpop.f32.mrf.mxu0
      %v2589 = vadd.f32 0.0, %v2588
      %2590 = vdwg.mxu0
      %v2591 = vadd.f32 %v2397, %v2496
      %v2592 = vadd.f32 %v2398, %v2499
      %v2593 = vadd.f32 %v2399, %v2502
      %v2594 = vadd.f32 %v2400, %v2505
      %v2595 = vadd.f32 %v2401, %v2508
      %v2596 = vadd.f32 %v2402, %v2511
      %v2597 = vadd.f32 %v2403, %v2514
      %v2598 = vadd.f32 %v2404, %v2517
      %v2599 = vadd.f32 %v2405, %v2520
      %v2600 = vadd.f32 %v2406, %v2523
      %v2601 = vadd.f32 %v2407, %v2526
      %v2602 = vadd.f32 %v2408, %v2529
      %v2603 = vadd.f32 %v2409, %v2532
      %v2604 = vadd.f32 %v2410, %v2535
      %v2605 = vadd.f32 %v2411, %v2538
      %v2606 = vadd.f32 %v2412, %v2541
      %v2607 = vadd.f32 %v2413, %v2544
      %v2608 = vadd.f32 %v2414, %v2547
      %v2609 = vadd.f32 %v2415, %v2550
      %v2610 = vadd.f32 %v2416, %v2553
      %v2611 = vadd.f32 %v2417, %v2556
      %v2612 = vadd.f32 %v2418, %v2559
      %v2613 = vadd.f32 %v2419, %v2562
      %v2614 = vadd.f32 %v2420, %v2565
      %v2615 = vadd.f32 %v2421, %v2568
      %v2616 = vadd.f32 %v2422, %v2571
      %v2617 = vadd.f32 %v2423, %v2574
      %v2618 = vadd.f32 %v2424, %v2577
      %v2619 = vadd.f32 %v2425, %v2580
      %v2620 = vadd.f32 %v2426, %v2583
      %v2621 = vadd.f32 %v2427, %v2586
      %v2622 = vadd.f32 %v2428, %v2589
      %v2623 = vld [vmem:[%s2234 + $0x2] sm:$0xff]
      %v2624 = vld [vmem:[%s2234 + $0xa] sm:$0xff]
      %v2625 = vld [vmem:[%s2234 + $0x1a] sm:$0xff]
      %v2626 = vld [vmem:[%s2234 + $0x22] sm:$0xff]
      %v2627 = vld [vmem:[%s2234 + $0x32] sm:$0xff]
      %v2628 = vld [vmem:[%s2234 + $0x3a] sm:$0xff]
      %v2629 = vld [vmem:[%s2234 + $0x4a] sm:$0xff]
      %v2630 = vld [vmem:[%s2234 + $0x52] sm:$0xff]
      %v2631 = vld [vmem:[%s2234 + $0x62] sm:$0xff]
      %v2632 = vld [vmem:[%s2234 + $0x6a] sm:$0xff]
      %v2633 = vld [vmem:[%s2234 + $0x7a] sm:$0xff]
      %v2634 = vld [vmem:[%s2234 + $0x82] sm:$0xff]
      %v2635 = vld [vmem:[%s2234 + $0x92] sm:$0xff]
      %v2636 = vld [vmem:[%s2234 + $0x9a] sm:$0xff]
      %v2637 = vld [vmem:[%s2234 + $0xaa] sm:$0xff]
      %v2638 = vld [vmem:[%s2234 + $0xb2] sm:$0xff]
      %v2639 = vld [vmem:[%s2234 + $0xc2] sm:$0xff]
      %v2640 = vld [vmem:[%s2234 + $0xca] sm:$0xff]
      %v2641 = vld [vmem:[%s2234 + $0xda] sm:$0xff]
      %v2642 = vld [vmem:[%s2234 + $0xe2] sm:$0xff]
      %v2643 = vld [vmem:[%s2234 + $0xf2] sm:$0xff]
      %v2644 = vld [vmem:[%s2234 + $0xfa] sm:$0xff]
      %v2645 = vld [vmem:[%s2234 + $0x10a] sm:$0xff]
      %v2646 = vld [vmem:[%s2234 + $0x112] sm:$0xff]
      %v2647 = vld [vmem:[%s2234 + $0x122] sm:$0xff]
      %v2648 = vld [vmem:[%s2234 + $0x12a] sm:$0xff]
      %v2649 = vld [vmem:[%s2234 + $0x13a] sm:$0xff]
      %v2650 = vld [vmem:[%s2234 + $0x142] sm:$0xff]
      %v2651 = vld [vmem:[%s2234 + $0x152] sm:$0xff]
      %v2652 = vld [vmem:[%s2234 + $0x15a] sm:$0xff]
      %v2653 = vld [vmem:[%s2234 + $0x16a] sm:$0xff]
      %v2654 = vld [vmem:[%s2234 + $0x172] sm:$0xff]
      %s2655 = scalar_lea.vmem %s4, 1024
      %v2656 = vld [vmem:[%s2655] sm:$0xff]
      %v2657 = vld [vmem:[%s2655 + $0x8] sm:$0xff]
      %v2658 = vld [vmem:[%s2655 + $0x10] sm:$0xff]
      %v2659 = vld [vmem:[%s2655 + $0x18] sm:$0xff]
      %v2660 = vld [vmem:[%s2655 + $0x20] sm:$0xff]
      %v2661 = vld [vmem:[%s2655 + $0x28] sm:$0xff]
      %v2662 = vld [vmem:[%s2655 + $0x30] sm:$0xff]
      %v2663 = vld [vmem:[%s2655 + $0x38] sm:$0xff]
      %v2664 = vld [vmem:[%s2655 + $0x40] sm:$0xff]
      %v2665 = vld [vmem:[%s2655 + $0x48] sm:$0xff]
      %v2666 = vld [vmem:[%s2655 + $0x50] sm:$0xff]
      %v2667 = vld [vmem:[%s2655 + $0x58] sm:$0xff]
      %v2668 = vld [vmem:[%s2655 + $0x60] sm:$0xff]
      %v2669 = vld [vmem:[%s2655 + $0x68] sm:$0xff]
      %v2670 = vld [vmem:[%s2655 + $0x70] sm:$0xff]
      %v2671 = vld [vmem:[%s2655 + $0x78] sm:$0xff]
      %2672 = vmatpush.msra.mxu0 %v2671
      %2673 = vmatpush.msra.mxu0 %v2670
      %2674 = vmatpush.msra.mxu0 %v2669
      %2675 = vmatpush.msra.mxu0 %v2668
      %2676 = vmatpush.msra.mxu0 %v2667
      %2677 = vmatpush.msra.mxu0 %v2666
      %2678 = vmatpush.msra.mxu0 %v2665
      %2679 = vmatpush.msra.mxu0 %v2664
      %2680 = vmatpush.msra.mxu0 %v2663
      %2681 = vmatpush.msra.mxu0 %v2662
      %2682 = vmatpush.msra.mxu0 %v2661
      %2683 = vmatpush.msra.mxu0 %v2660
      %2684 = vmatpush.msra.mxu0 %v2659
      %2685 = vmatpush.msra.mxu0 %v2658
      %2686 = vmatpush.msra.mxu0 %v2657
      %2687 = vmatpush.msra.mxu0 %v2656
      %2688 = vmatmul.f32.gmra.mxu0 %v2623
      %v2689 = vpop.f32.mrf.mxu0
      %v2690 = vadd.f32 0.0, %v2689
      %2691 = vmatmul.f32.gmra.mxu0 %v2624
      %v2692 = vpop.f32.mrf.mxu0
      %v2693 = vadd.f32 0.0, %v2692
      %2694 = vmatmul.f32.gmra.mxu0 %v2625
      %v2695 = vpop.f32.mrf.mxu0
      %v2696 = vadd.f32 0.0, %v2695
      %2697 = vmatmul.f32.gmra.mxu0 %v2626
      %v2698 = vpop.f32.mrf.mxu0
      %v2699 = vadd.f32 0.0, %v2698
      %2700 = vmatmul.f32.gmra.mxu0 %v2627
      %v2701 = vpop.f32.mrf.mxu0
      %v2702 = vadd.f32 0.0, %v2701
      %2703 = vmatmul.f32.gmra.mxu0 %v2628
      %v2704 = vpop.f32.mrf.mxu0
      %v2705 = vadd.f32 0.0, %v2704
      %2706 = vmatmul.f32.gmra.mxu0 %v2629
      %v2707 = vpop.f32.mrf.mxu0
      %v2708 = vadd.f32 0.0, %v2707
      %2709 = vmatmul.f32.gmra.mxu0 %v2630
      %v2710 = vpop.f32.mrf.mxu0
      %v2711 = vadd.f32 0.0, %v2710
      %2712 = vmatmul.f32.gmra.mxu0 %v2631
      %v2713 = vpop.f32.mrf.mxu0
      %v2714 = vadd.f32 0.0, %v2713
      %2715 = vmatmul.f32.gmra.mxu0 %v2632
      %v2716 = vpop.f32.mrf.mxu0
      %v2717 = vadd.f32 0.0, %v2716
      %2718 = vmatmul.f32.gmra.mxu0 %v2633
      %v2719 = vpop.f32.mrf.mxu0
      %v2720 = vadd.f32 0.0, %v2719
      %2721 = vmatmul.f32.gmra.mxu0 %v2634
      %v2722 = vpop.f32.mrf.mxu0
      %v2723 = vadd.f32 0.0, %v2722
      %2724 = vmatmul.f32.gmra.mxu0 %v2635
      %v2725 = vpop.f32.mrf.mxu0
      %v2726 = vadd.f32 0.0, %v2725
      %2727 = vmatmul.f32.gmra.mxu0 %v2636
      %v2728 = vpop.f32.mrf.mxu0
      %v2729 = vadd.f32 0.0, %v2728
      %2730 = vmatmul.f32.gmra.mxu0 %v2637
      %v2731 = vpop.f32.mrf.mxu0
      %v2732 = vadd.f32 0.0, %v2731
      %2733 = vmatmul.f32.gmra.mxu0 %v2638
      %v2734 = vpop.f32.mrf.mxu0
      %v2735 = vadd.f32 0.0, %v2734
      %2736 = vmatmul.f32.gmra.mxu0 %v2639
      %v2737 = vpop.f32.mrf.mxu0
      %v2738 = vadd.f32 0.0, %v2737
      %2739 = vmatmul.f32.gmra.mxu0 %v2640
      %v2740 = vpop.f32.mrf.mxu0
      %v2741 = vadd.f32 0.0, %v2740
      %2742 = vmatmul.f32.gmra.mxu0 %v2641
      %v2743 = vpop.f32.mrf.mxu0
      %v2744 = vadd.f32 0.0, %v2743
      %2745 = vmatmul.f32.gmra.mxu0 %v2642
      %v2746 = vpop.f32.mrf.mxu0
      %v2747 = vadd.f32 0.0, %v2746
      %2748 = vmatmul.f32.gmra.mxu0 %v2643
      %v2749 = vpop.f32.mrf.mxu0
      %v2750 = vadd.f32 0.0, %v2749
      %2751 = vmatmul.f32.gmra.mxu0 %v2644
      %v2752 = vpop.f32.mrf.mxu0
      %v2753 = vadd.f32 0.0, %v2752
      %2754 = vmatmul.f32.gmra.mxu0 %v2645
      %v2755 = vpop.f32.mrf.mxu0
      %v2756 = vadd.f32 0.0, %v2755
      %2757 = vmatmul.f32.gmra.mxu0 %v2646
      %v2758 = vpop.f32.mrf.mxu0
      %v2759 = vadd.f32 0.0, %v2758
      %2760 = vmatmul.f32.gmra.mxu0 %v2647
      %v2761 = vpop.f32.mrf.mxu0
      %v2762 = vadd.f32 0.0, %v2761
      %2763 = vmatmul.f32.gmra.mxu0 %v2648
      %v2764 = vpop.f32.mrf.mxu0
      %v2765 = vadd.f32 0.0, %v2764
      %2766 = vmatmul.f32.gmra.mxu0 %v2649
      %v2767 = vpop.f32.mrf.mxu0
      %v2768 = vadd.f32 0.0, %v2767
      %2769 = vmatmul.f32.gmra.mxu0 %v2650
      %v2770 = vpop.f32.mrf.mxu0
      %v2771 = vadd.f32 0.0, %v2770
      %2772 = vmatmul.f32.gmra.mxu0 %v2651
      %v2773 = vpop.f32.mrf.mxu0
      %v2774 = vadd.f32 0.0, %v2773
      %2775 = vmatmul.f32.gmra.mxu0 %v2652
      %v2776 = vpop.f32.mrf.mxu0
      %v2777 = vadd.f32 0.0, %v2776
      %2778 = vmatmul.f32.gmra.mxu0 %v2653
      %v2779 = vpop.f32.mrf.mxu0
      %v2780 = vadd.f32 0.0, %v2779
      %2781 = vmatmul.f32.gmra.mxu0 %v2654
      %v2782 = vpop.f32.mrf.mxu0
      %v2783 = vadd.f32 0.0, %v2782
      %2784 = vdwg.mxu0
      %v2785 = vadd.f32 %v2591, %v2690
      %v2786 = vadd.f32 %v2592, %v2693
      %v2787 = vadd.f32 %v2593, %v2696
      %v2788 = vadd.f32 %v2594, %v2699
      %v2789 = vadd.f32 %v2595, %v2702
      %v2790 = vadd.f32 %v2596, %v2705
      %v2791 = vadd.f32 %v2597, %v2708
      %v2792 = vadd.f32 %v2598, %v2711
      %v2793 = vadd.f32 %v2599, %v2714
      %v2794 = vadd.f32 %v2600, %v2717
      %v2795 = vadd.f32 %v2601, %v2720
      %v2796 = vadd.f32 %v2602, %v2723
      %v2797 = vadd.f32 %v2603, %v2726
      %v2798 = vadd.f32 %v2604, %v2729
      %v2799 = vadd.f32 %v2605, %v2732
      %v2800 = vadd.f32 %v2606, %v2735
      %v2801 = vadd.f32 %v2607, %v2738
      %v2802 = vadd.f32 %v2608, %v2741
      %v2803 = vadd.f32 %v2609, %v2744
      %v2804 = vadd.f32 %v2610, %v2747
      %v2805 = vadd.f32 %v2611, %v2750
      %v2806 = vadd.f32 %v2612, %v2753
      %v2807 = vadd.f32 %v2613, %v2756
      %v2808 = vadd.f32 %v2614, %v2759
      %v2809 = vadd.f32 %v2615, %v2762
      %v2810 = vadd.f32 %v2616, %v2765
      %v2811 = vadd.f32 %v2617, %v2768
      %v2812 = vadd.f32 %v2618, %v2771
      %v2813 = vadd.f32 %v2619, %v2774
      %v2814 = vadd.f32 %v2620, %v2777
      %v2815 = vadd.f32 %v2621, %v2780
      %v2816 = vadd.f32 %v2622, %v2783
      %2817 = vst [vmem:[%s265] sm:$0xff] %v2785
      %2818 = vst [vmem:[%s265 + $0x8] sm:$0xff] %v2786
      %2819 = vst [vmem:[%s265 + $0x10] sm:$0xff] %v2787
      %2820 = vst [vmem:[%s265 + $0x18] sm:$0xff] %v2788
      %2821 = vst [vmem:[%s265 + $0x20] sm:$0xff] %v2789
      %2822 = vst [vmem:[%s265 + $0x28] sm:$0xff] %v2790
      %2823 = vst [vmem:[%s265 + $0x30] sm:$0xff] %v2791
      %2824 = vst [vmem:[%s265 + $0x38] sm:$0xff] %v2792
      %2825 = vst [vmem:[%s265 + $0x40] sm:$0xff] %v2793
      %2826 = vst [vmem:[%s265 + $0x48] sm:$0xff] %v2794
      %2827 = vst [vmem:[%s265 + $0x50] sm:$0xff] %v2795
      %2828 = vst [vmem:[%s265 + $0x58] sm:$0xff] %v2796
      %2829 = vst [vmem:[%s265 + $0x60] sm:$0xff] %v2797
      %2830 = vst [vmem:[%s265 + $0x68] sm:$0xff] %v2798
      %2831 = vst [vmem:[%s265 + $0x70] sm:$0xff] %v2799
      %2832 = vst [vmem:[%s265 + $0x78] sm:$0xff] %v2800
      %2833 = vst [vmem:[%s265 + $0x80] sm:$0xff] %v2801
      %2834 = vst [vmem:[%s265 + $0x88] sm:$0xff] %v2802
      %2835 = vst [vmem:[%s265 + $0x90] sm:$0xff] %v2803
      %2836 = vst [vmem:[%s265 + $0x98] sm:$0xff] %v2804
      %2837 = vst [vmem:[%s265 + $0xa0] sm:$0xff] %v2805
      %2838 = vst [vmem:[%s265 + $0xa8] sm:$0xff] %v2806
      %2839 = vst [vmem:[%s265 + $0xb0] sm:$0xff] %v2807
      %2840 = vst [vmem:[%s265 + $0xb8] sm:$0xff] %v2808
      %2841 = vst [vmem:[%s265 + $0xc0] sm:$0xff] %v2809
      %2842 = vst [vmem:[%s265 + $0xc8] sm:$0xff] %v2810
      %2843 = vst [vmem:[%s265 + $0xd0] sm:$0xff] %v2811
      %2844 = vst [vmem:[%s265 + $0xd8] sm:$0xff] %v2812
      %2845 = vst [vmem:[%s265 + $0xe0] sm:$0xff] %v2813
      %2846 = vst [vmem:[%s265 + $0xe8] sm:$0xff] %v2814
      %2847 = vst [vmem:[%s265 + $0xf0] sm:$0xff] %v2815
      %2848 = vst [vmem:[%s265 + $0xf8] sm:$0xff] %v2816
      %v2849 = vadd.f32 %v2785, %v2786
      %v2850 = vadd.f32 %v2849, %v2787
      %v2851 = vadd.f32 %v2850, %v2788
      %v2852 = vadd.f32 %v2851, %v2789
      %v2853 = vadd.f32 %v2852, %v2790
      %v2854 = vadd.f32 %v2853, %v2791
      %v2855 = vadd.f32 %v2854, %v2792
      %v2856 = vadd.f32 %v2855, %v2793
      %v2857 = vadd.f32 %v2856, %v2794
      %v2858 = vadd.f32 %v2857, %v2795
      %v2859 = vadd.f32 %v2858, %v2796
      %v2860 = vadd.f32 %v2859, %v2797
      %v2861 = vadd.f32 %v2860, %v2798
      %v2862 = vadd.f32 %v2861, %v2799
      %v2863 = vadd.f32 %v2862, %v2800
      %v2864 = vadd.f32 %v2863, %v2801
      %v2865 = vadd.f32 %v2864, %v2802
      %v2866 = vadd.f32 %v2865, %v2803
      %v2867 = vadd.f32 %v2866, %v2804
      %v2868 = vadd.f32 %v2867, %v2805
      %v2869 = vadd.f32 %v2868, %v2806
      %v2870 = vadd.f32 %v2869, %v2807
      %v2871 = vadd.f32 %v2870, %v2808
      %v2872 = vadd.f32 %v2871, %v2809
      %v2873 = vadd.f32 %v2872, %v2810
      %v2874 = vadd.f32 %v2873, %v2811
      %v2875 = vadd.f32 %v2874, %v2812
      %v2876 = vadd.f32 %v2875, %v2813
      %v2877 = vadd.f32 %v2876, %v2814
      %v2878 = vadd.f32 %v2877, %v2815
      %v2879 = vadd.f32 %v2878, %v2816
      %v2880 = vrot.slane %v2879, 4
      %v2881 = vadd.f32 %v2879, %v2880
      %v2882 = vrot.slane %v2881, 2
      %v2883 = vadd.f32 %v2881, %v2882
      %v2884 = vrot.slane %v2883, 1
      %v2885 = vadd.f32 %v2883, %v2884
      %2886 = vst [vmem:[%s271] sm:$0x1] %v2885
      %v2887 = vmul.f32 %v2785, %v2785
      %v2888 = vmul.f32 %v2786, %v2786
      %v2889 = vmul.f32 %v2787, %v2787
      %v2890 = vmul.f32 %v2788, %v2788
      %v2891 = vmul.f32 %v2789, %v2789
      %v2892 = vmul.f32 %v2790, %v2790
      %v2893 = vmul.f32 %v2791, %v2791
      %v2894 = vmul.f32 %v2792, %v2792
      %v2895 = vmul.f32 %v2793, %v2793
      %v2896 = vmul.f32 %v2794, %v2794
      %v2897 = vmul.f32 %v2795, %v2795
      %v2898 = vmul.f32 %v2796, %v2796
      %v2899 = vmul.f32 %v2797, %v2797
      %v2900 = vmul.f32 %v2798, %v2798
      %v2901 = vmul.f32 %v2799, %v2799
      %v2902 = vmul.f32 %v2800, %v2800
      %v2903 = vmul.f32 %v2801, %v2801
      %v2904 = vmul.f32 %v2802, %v2802
      %v2905 = vmul.f32 %v2803, %v2803
      %v2906 = vmul.f32 %v2804, %v2804
      %v2907 = vmul.f32 %v2805, %v2805
      %v2908 = vmul.f32 %v2806, %v2806
      %v2909 = vmul.f32 %v2807, %v2807
      %v2910 = vmul.f32 %v2808, %v2808
      %v2911 = vmul.f32 %v2809, %v2809
      %v2912 = vmul.f32 %v2810, %v2810
      %v2913 = vmul.f32 %v2811, %v2811
      %v2914 = vmul.f32 %v2812, %v2812
      %v2915 = vmul.f32 %v2813, %v2813
      %v2916 = vmul.f32 %v2814, %v2814
      %v2917 = vmul.f32 %v2815, %v2815
      %v2918 = vmul.f32 %v2816, %v2816
      %v2919 = vadd.f32 %v2887, %v2888
      %v2920 = vadd.f32 %v2919, %v2889
      %v2921 = vadd.f32 %v2920, %v2890
      %v2922 = vadd.f32 %v2921, %v2891
      %v2923 = vadd.f32 %v2922, %v2892
      %v2924 = vadd.f32 %v2923, %v2893
      %v2925 = vadd.f32 %v2924, %v2894
      %v2926 = vadd.f32 %v2925, %v2895
      %v2927 = vadd.f32 %v2926, %v2896
      %v2928 = vadd.f32 %v2927, %v2897
      %v2929 = vadd.f32 %v2928, %v2898
      %v2930 = vadd.f32 %v2929, %v2899
      %v2931 = vadd.f32 %v2930, %v2900
      %v2932 = vadd.f32 %v2931, %v2901
      %v2933 = vadd.f32 %v2932, %v2902
      %v2934 = vadd.f32 %v2933, %v2903
      %v2935 = vadd.f32 %v2934, %v2904
      %v2936 = vadd.f32 %v2935, %v2905
      %v2937 = vadd.f32 %v2936, %v2906
      %v2938 = vadd.f32 %v2937, %v2907
      %v2939 = vadd.f32 %v2938, %v2908
      %v2940 = vadd.f32 %v2939, %v2909
      %v2941 = vadd.f32 %v2940, %v2910
      %v2942 = vadd.f32 %v2941, %v2911
      %v2943 = vadd.f32 %v2942, %v2912
      %v2944 = vadd.f32 %v2943, %v2913
      %v2945 = vadd.f32 %v2944, %v2914
      %v2946 = vadd.f32 %v2945, %v2915
      %v2947 = vadd.f32 %v2946, %v2916
      %v2948 = vadd.f32 %v2947, %v2917
      %v2949 = vadd.f32 %v2948, %v2918
      %v2950 = vrot.slane %v2949, 4
      %v2951 = vadd.f32 %v2949, %v2950
      %v2952 = vrot.slane %v2951, 2
      %v2953 = vadd.f32 %v2951, %v2952
      %v2954 = vrot.slane %v2953, 1
      %v2955 = vadd.f32 %v2953, %v2954
      %2956 = vst [vmem:[%s276] sm:$0x1] %v2955
      %s2957 = sadd.s32 %s23, %s24
      %s2958 = smul.u32 32, %s2957
      %p2959 = scmp.lt.s32.totalorder %s2958, 63
      %s2960 = scalar_select %p2959, %s2958, 63
      %s2961 = smul.addr %s2960, 8
      %s2962 = scalar_lea.vmem %s5, %s2961
      %s2963 = sadd.s32 %s23, %s24
      %p2964 = scmp.lt.s32.totalorder %s2963, 1
      %s2965 = scalar_select %p2964, %s2963, 1
      %s2966 = scalar_lea.vmem %s6, %s2965
      %s2967 = sadd.s32 %s23, %s24
      %p2968 = scmp.lt.s32.totalorder %s2967, 1
      %s2969 = scalar_select %p2968, %s2967, 1
      %s2970 = scalar_lea.vmem %s7, %s2969
      // Predicated region
      $region87: #{res_bottle_block.5} parent=35 // pred_check
        %p2971 = pneg %p135
      $region88: #{res_bottle_block.5} parent=35 // pred_check_branch
        %2973 = sbr.rel (%p2971) target = $region90
      $region89: #{res_bottle_block.5} parent=35 // pred_region
        %s2974 = sadd.s32 %s23, %s24
        %s2975 = smul.u32 32, %s2974
      $region90: #{res_bottle_block.5} parent=35 // pred_fallthru
        _
      // Predicated region
      $region91: #{res_bottle_block.5} parent=35 // pred_check
        %p2976 = pneg %p163
      $region92: #{res_bottle_block.5} parent=35 // pred_check_branch
        %2978 = sbr.rel (%p2976) target = $region94
      $region93: #{res_bottle_block.5} parent=35 // pred_region
        %s2979 = sadd.s32 %s23, %s24
      $region94: #{res_bottle_block.5} parent=35 // pred_fallthru
        _
      // Predicated region
      $region95: #{res_bottle_block.5} parent=35 // pred_check
        %p2980 = pneg %p191
      $region96: #{res_bottle_block.5} parent=35 // pred_check_branch
        %2982 = sbr.rel (%p2980) target = $region98
      $region97: #{res_bottle_block.5} parent=35 // pred_region
        %s2983 = sadd.s32 %s23, %s24
      $region98: #{res_bottle_block.5} parent=35 // pred_fallthru
        _
    $region36: #{res_bottle_block.5} parent=5 // pred_fallthru
      _
    %p2984 = scmp.le.s32.totalorder 2, %s14
    // Predicated region
    $region99: #{res_bottle_block.5} parent=5 // pred_check
      %p2985 = pneg %p2984
    $region100: #{res_bottle_block.5} parent=5 // pred_check_branch
      %2987 = sbr.rel (%p2985) target = $region102
    $region101: #{res_bottle_block.5} parent=5 // pred_region
      %s2988 = ssub.s32 %s14, 2
      // Predicated region
      $region103: #{res_bottle_block.5} parent=101 // pred_check
        %p2989 = pneg %p141
      $region104: #{res_bottle_block.5} parent=101 // pred_check_branch
        %2991 = sbr.rel (%p2989) target = $region106
      $region105: #{res_bottle_block.5} parent=101 // pred_region
        %s2992 = sadd.s32 %s25, %s26
        %s2993 = smul.u32 32, %s2992
        %p2994 = scmp.lt.s32.totalorder %s2993, 63
        %s2995 = scalar_select %p2994, %s2993, 63
        %s2996 = smul.addr %s2995, 8
        %s2997 = scalar_lea.vmem %s5, %s2996
      $region106: #{res_bottle_block.5} parent=101 // pred_fallthru
        _
      // Predicated region
      $region107: #{res_bottle_block.5} parent=101 // pred_check
        %p2998 = pneg %p169
      $region108: #{res_bottle_block.5} parent=101 // pred_check_branch
        %3000 = sbr.rel (%p2998) target = $region110
      $region109: #{res_bottle_block.5} parent=101 // pred_region
        %s3001 = sadd.s32 %s25, %s26
        %p3002 = scmp.lt.s32.totalorder %s3001, 1
        %s3003 = scalar_select %p3002, %s3001, 1
        %s3004 = scalar_lea.vmem %s6, %s3003
      $region110: #{res_bottle_block.5} parent=101 // pred_fallthru
        _
      // Predicated region
      $region111: #{res_bottle_block.5} parent=101 // pred_check
        %p3005 = pneg %p197
      $region112: #{res_bottle_block.5} parent=101 // pred_check_branch
        %3007 = sbr.rel (%p3005) target = $region114
      $region113: #{res_bottle_block.5} parent=101 // pred_region
        %s3008 = sadd.s32 %s25, %s26
        %p3009 = scmp.lt.s32.totalorder %s3008, 1
        %s3010 = scalar_select %p3009, %s3008, 1
        %s3011 = scalar_lea.vmem %s7, %s3010
      $region114: #{res_bottle_block.5} parent=101 // pred_fallthru
        _
    $region102: #{res_bottle_block.5} parent=5 // pred_fallthru
      _
  $region6: #{res_bottle_block.5} parent=0 // loop_footer
    %s18 = sadd.s32 1, %s14
  $region7: #{res_bottle_block.5} parent=0 // loop_footer_branch
    %13 = sbr.rel target = $region3
  $region8: #{res_bottle_block.5} parent=0 // loop_exit
    _
  %3012 = vsyncmov [#allocation4]
  %s3013 = vpop.sfrf %3012
  %p3014 = scmp.eq.s32.totalorder %s3013, 0
  %p3015 = pneg %p3014
  %3017 = shalt.err (%p3015)
  %s3018 = scalar_lea.sflag [#allocation4], 1
  %3019 = vsyncmov %s3018
  %s3020 = vpop.sfrf %3019
  %p3021 = scmp.eq.s32.totalorder %s3020, 0
  %p3022 = pneg %p3021
  %3024 = shalt.err (%p3022)

</llo_original>
